<compile_context>
chip_gen: v5e
topology: v5e:2x2
jax: 0.10.0
libtpu: 0.0.40
codegen_flags: <defaults>
</compile_context>

<pallas_src>
import functools

import jax
import jax.numpy as jnp
from jax.experimental import pallas as pl
from jax.experimental.pallas import tpu as pltpu


# ------------------------- fused StockLSTM kernel -----------------------------

def _make_stock_lstm_kernel(num_layers, hidden_size, seq_len, batch_p, mm_dtype):
    L, H, T, Bp = num_layers, hidden_size, seq_len, batch_p

    def kernel(*refs):
        # ---- unpack refs: inputs, output, scratch (order fixed by wrapper) ----
        x_ref = refs[0]                           # (T*Bp, D)   time-major, flat
        wih0_ref = refs[1]                        # (D, 4H)     W_ih_l0^T
        whh0_ref = refs[2]                        # (H, 4H)     W_hh_l0^T
        b0_ref = refs[3]                          # (1, 4H)     b_ih + b_hh (f32)
        lyr = refs[4:4 + 3 * (L - 1)]             # per upper layer: (H,4H),(H,4H),(1,4H)
        idx_fc = 4 + 3 * (L - 1)
        wfc_ref = refs[idx_fc]                    # (1, H)
        bfc_ref = refs[idx_fc + 1]                # (1, 1)
        out_ref = refs[idx_fc + 2]                # (Bp, 1)
        xp_ref = refs[idx_fc + 3]                 # (T*Bp, 4H)  scratch (f32)
        h_refs = refs[idx_fc + 4: idx_fc + 4 + L]          # L x (Bp, H) f32
        c_refs = refs[idx_fc + 4 + L: idx_fc + 4 + 2 * L]  # L x (Bp, H) f32

        # Layer-0 input projection + bias for ALL timesteps in one MXU pass.
        xp_ref[...] = (jnp.dot(x_ref[...], wih0_ref[...],
                               preferred_element_type=jnp.float32)
                       + b0_ref[...])

        for l in range(L):
            h_refs[l][...] = jnp.zeros_like(h_refs[l])
            c_refs[l][...] = jnp.zeros_like(c_refs[l])

        # Hoist upper-layer bias broadcasts out of the serial time loop.
        upper_bias = [jnp.broadcast_to(lyr[3 * (l - 1) + 2][...], (Bp, 4 * H))
                      for l in range(1, L)]

        def lstm_cell(gates, h_ref, c_ref):
            # PyTorch gate order [i, f, g, o]; H a multiple of 128 keeps each
            # slice a full aligned lane block.
            i_g = jax.nn.sigmoid(gates[:, 0 * H:1 * H])
            f_g = jax.nn.sigmoid(gates[:, 1 * H:2 * H])
            g_g = jnp.tanh(gates[:, 2 * H:3 * H])
            o_g = jax.nn.sigmoid(gates[:, 3 * H:4 * H])
            c_new = f_g * c_ref[...] + i_g * g_g
            h_new = o_g * jnp.tanh(c_new)
            c_ref[...] = c_new
            h_ref[...] = h_new
            return h_new

        def step(t, carry):
            # Layer 0: recurrent matmul only (input part + bias precomputed above).
            row = pl.multiple_of(t * Bp, Bp)
            g0 = (xp_ref[pl.ds(row, Bp), :]
                  + jnp.dot(h_refs[0][...].astype(mm_dtype), whh0_ref[...],
                            preferred_element_type=jnp.float32))
            h_out = lstm_cell(g0, h_refs[0], c_refs[0])
            # Upper layers: two independent dots (no concat; h_prev @ W_hh only
            # depends on the previous timestep, so it can overlap layer-0 work).
            # (Inter-layer dropout is identity at inference.)
            for l in range(1, L):
                wih_ref = lyr[3 * (l - 1)]
                whh_ref = lyr[3 * (l - 1) + 1]
                g = (jnp.dot(h_out.astype(mm_dtype), wih_ref[...],
                             preferred_element_type=jnp.float32)
                     + jnp.dot(h_refs[l][...].astype(mm_dtype), whh_ref[...],
                               preferred_element_type=jnp.float32)
                     + upper_bias[l - 1])
                h_out = lstm_cell(g, h_refs[l], c_refs[l])
            return carry

        # Full unroll only for tiny T; partial unroll keeps LLO visibility
        # without blowing up vreg pressure for longer sequences.
        jax.lax.fori_loop(0, T, step, 0, unroll=(T if T <= 8 else 4))

        # Fused FC head on the final hidden state: VPU multiply + lane reduce.
        out_ref[...] = (jnp.sum(h_refs[L - 1][...] * wfc_ref[...],
                                axis=1, keepdims=True)
                        + bfc_ref[...]).astype(out_ref.dtype)

    return kernel


# ------------------------------- Model wrapper --------------------------------

def init_params(key, input_size, hidden_size, num_layers):
    params = {}
    bound = 1.0 / jnp.sqrt(hidden_size)
    for l in range(num_layers):
        d_in = input_size if l == 0 else hidden_size
        k1, k2, k3, k4, key = jax.random.split(key, 5)
        params[f"w_ih_{l}"] = jax.random.uniform(
            k1, (4 * hidden_size, d_in), jnp.float32, -bound, bound)
        params[f"w_hh_{l}"] = jax.random.uniform(
            k2, (4 * hidden_size, hidden_size), jnp.float32, -bound, bound)
        b_ih = jax.random.uniform(k3, (4 * hidden_size,), jnp.float32, -bound, bound)
        b_hh = jax.random.uniform(k4, (4 * hidden_size,), jnp.float32, -bound, bound)
        params[f"b_{l}"] = (b_ih + b_hh).reshape(1, 4 * hidden_size)
    k1, k2, key = jax.random.split(key, 3)
    fb = 1.0 / jnp.sqrt(hidden_size)
    params["fc_w"] = jax.random.uniform(k1, (1, hidden_size), jnp.float32, -fb, fb)
    params["fc_b"] = jax.random.uniform(k2, (1, 1), jnp.float32, -fb, fb)
    return params


@functools.partial(jax.jit,
                   static_argnames=("hidden_size", "num_layers", "use_bf16_matmul"))
def stock_lstm_forward(params, x_btd, hidden_size, num_layers,
                       use_bf16_matmul=False):
    """x_btd: (B, T, D) batch_first like PyTorch -> (B, 1)."""
    B, T, D = x_btd.shape
    H = hidden_size
    mm_dtype = jnp.bfloat16 if use_bf16_matmul else jnp.float32

    # Pad batch up to a sublane multiple (8 rows f32) so every per-step xp slice
    # inside the kernel stays sublane-aligned for any B.
    Bp = ((B + 7) // 8) * 8
    if Bp != B:
        x_btd = jnp.pad(x_btd, ((0, Bp - B), (0, 0), (0, 0)))

    # Time-major, flattened rows (one-time cheap XLA op). Matmul operands are
    # optionally bf16 (MXU-native on v6e/v7x); accumulation / state stay f32.
    x2d = jnp.transpose(x_btd, (1, 0, 2)).reshape(T * Bp, D).astype(mm_dtype)

    # Pre-transpose weights once in the wrapper; keep W_ih / W_hh of the upper
    # layers as SEPARATE (H, 4H) refs (no concat — two dots in the kernel).
    inputs = [
        x2d,
        params["w_ih_0"].T.astype(mm_dtype),     # (D, 4H)
        params["w_hh_0"].T.astype(mm_dtype),     # (H, 4H)
        params["b_0"],                           # (1, 4H) f32, folded into xp
    ]
    for l in range(1, num_layers):
        inputs += [
            params[f"w_ih_{l}"].T.astype(mm_dtype),   # (H, 4H)
            params[f"w_hh_{l}"].T.astype(mm_dtype),   # (H, 4H)
            params[f"b_{l}"],                         # (1, 4H) f32
        ]
    inputs += [params["fc_w"], params["fc_b"]]   # (1, H), (1, 1)

    kernel = _make_stock_lstm_kernel(num_layers, H, T, Bp, mm_dtype)

    grid_spec = pltpu.PrefetchScalarGridSpec(
        num_scalar_prefetch=0,
        grid=(1,),
        in_specs=[pl.BlockSpec(a.shape, lambda i: (0, 0)) for a in inputs],
        out_specs=pl.BlockSpec((Bp, 1), lambda i: (0, 0)),
        scratch_shapes=(
            [pltpu.VMEM((T * Bp, 4 * H), jnp.float32)]                        # xp
            + [pltpu.VMEM((Bp, H), jnp.float32) for _ in range(num_layers)]   # h
            + [pltpu.VMEM((Bp, H), jnp.float32) for _ in range(num_layers)]   # c
        ),
    )
    out = pl.pallas_call(
        kernel,
        out_shape=jax.ShapeDtypeStruct((Bp, 1), jnp.float32),
        grid_spec=grid_spec,
        compiler_params=pltpu.CompilerParams(
            dimension_semantics=("arbitrary",)),
    )(*inputs)
    return out[:B]


# -------------------------- pure-JAX reference check --------------------------

def _ref_forward(params, x_btd, hidden_size, num_layers):
    B, T, _ = x_btd.shape
    h_seq = x_btd.astype(jnp.float32)
    H = hidden_size
    for l in range(num_layers):
        w_ih = params[f"w_ih_{l}"]; w_hh = params[f"w_hh_{l}"]; b = params[f"b_{l}"][0]
        h = jnp.zeros((B, H), jnp.float32)
        c = jnp.zeros((B, H), jnp.float32)
        outs = []
        for t in range(T):
            g = h_seq[:, t, :] @ w_ih.T + h @ w_hh.T + b
            i = jax.nn.sigmoid(g[:, 0*H:1*H]); f = jax.nn.sigmoid(g[:, 1*H:2*H])
            gg = jnp.tanh(g[:, 2*H:3*H]);      o = jax.nn.sigmoid(g[:, 3*H:4*H])
            c = f * c + i * gg
            h = o * jnp.tanh(c)
            outs.append(h)
        h_seq = jnp.stack(outs, axis=1)
    return h_seq[:, -1, :] @ params["fc_w"].T + params["fc_b"]


if __name__ == "__main__":
    INPUT_SIZE = 16
    HIDDEN = 128        # PyTorch module default; keeps gate slices lane-dense
    LAYERS = 2
    B, T = 8, 8

    key = jax.random.PRNGKey(0)
    pkey, xkey = jax.random.split(key)
    params = init_params(pkey, INPUT_SIZE, HIDDEN, LAYERS)
    x = jax.random.normal(xkey, (B, T, INPUT_SIZE), jnp.float32)

    ref = _ref_forward(params, x, HIDDEN, LAYERS)

    # f32 matmul path (bit-faithful to the PyTorch forward semantics).
    out = stock_lstm_forward(params, x, HIDDEN, LAYERS, use_bf16_matmul=False)
    out = jax.block_until_ready(out)
    assert out.shape == (B, 1), out.shape
    assert jnp.allclose(out, ref, atol=1e-3, rtol=1e-3), (out, ref)

    # bf16 matmul-operand path (v6e/v7x MXU-native); f32 accumulation + f32
    # cell state / gate math, so only operand rounding differs.
    out_bf = stock_lstm_forward(params, x, HIDDEN, LAYERS, use_bf16_matmul=True)
    out_bf = jax.block_until_ready(out_bf)
    assert out_bf.shape == (B, 1), out_bf.shape
    assert jnp.allclose(out_bf, ref, atol=5e-2, rtol=5e-2), (out_bf, ref)

    print("KERNEL_OK")
</pallas_src>

<mosaic_0001>
module attributes {stable_mosaic.version = 11 : i64} {
  func.func @kernel(%arg0: i32, %arg1: memref<64x16xf32, #tpu.memory_space<vmem>>, %arg2: memref<16x512xf32, #tpu.memory_space<vmem>>, %arg3: memref<128x512xf32, #tpu.memory_space<vmem>>, %arg4: memref<1x512xf32, #tpu.memory_space<vmem>>, %arg5: memref<128x512xf32, #tpu.memory_space<vmem>>, %arg6: memref<128x512xf32, #tpu.memory_space<vmem>>, %arg7: memref<1x512xf32, #tpu.memory_space<vmem>>, %arg8: memref<1x128xf32, #tpu.memory_space<vmem>>, %arg9: memref<1x1xf32, #tpu.memory_space<vmem>>, %arg10: memref<8x1xf32, #tpu.memory_space<vmem>>, %arg11: memref<64x512xf32, #tpu.memory_space<vmem>>, %arg12: memref<8x128xf32, #tpu.memory_space<vmem>>, %arg13: memref<8x128xf32, #tpu.memory_space<vmem>>, %arg14: memref<8x128xf32, #tpu.memory_space<vmem>>, %arg15: memref<8x128xf32, #tpu.memory_space<vmem>>) attributes {dimension_semantics = [#tpu.dimension_semantics<arbitrary>], iteration_bounds = array<i64: 1>, scalar_prefetch = 0 : i64, scratch_operands = 5 : i64, tpu.core_type = #tpu.core_type<tc>, window_params = [{pipeline_mode = #tpu.pipeline_mode<synchronous>, transform_indices = @transform_0, window_bounds = array<i64: 64, 16>}, {pipeline_mode = #tpu.pipeline_mode<synchronous>, transform_indices = @transform_1, window_bounds = array<i64: 16, 512>}, {pipeline_mode = #tpu.pipeline_mode<synchronous>, transform_indices = @transform_2, window_bounds = array<i64: 128, 512>}, {pipeline_mode = #tpu.pipeline_mode<synchronous>, transform_indices = @transform_3, window_bounds = array<i64: 1, 512>}, {pipeline_mode = #tpu.pipeline_mode<synchronous>, transform_indices = @transform_4, window_bounds = array<i64: 128, 512>}, {pipeline_mode = #tpu.pipeline_mode<synchronous>, transform_indices = @transform_5, window_bounds = array<i64: 128, 512>}, {pipeline_mode = #tpu.pipeline_mode<synchronous>, transform_indices = @transform_6, window_bounds = array<i64: 1, 512>}, {pipeline_mode = #tpu.pipeline_mode<synchronous>, transform_indices = @transform_7, window_bounds = array<i64: 1, 128>}, {pipeline_mode = #tpu.pipeline_mode<synchronous>, transform_indices = @transform_8, window_bounds = array<i64: 1, 1>}, {pipeline_mode = #tpu.pipeline_mode<synchronous>, transform_indices = @transform_9, window_bounds = array<i64: 8, 1>}]} {
    %c0 = arith.constant 0 : index
    %c0_0 = arith.constant 0 : index
    %0 = vector.load %arg1[%c0, %c0_0] : memref<64x16xf32, #tpu.memory_space<vmem>>, vector<64x16xf32>
    %c0_1 = arith.constant 0 : index
    %c0_2 = arith.constant 0 : index
    %1 = vector.load %arg2[%c0_1, %c0_2] : memref<16x512xf32, #tpu.memory_space<vmem>>, vector<16x512xf32>
    %cst = arith.constant dense<0.000000e+00> : vector<64x512xf32>
    %2 = tpu.matmul %0, %1, %cst {dimension_numbers = #tpu.dot_dimension_numbers<[1], [0], [0], [1], [0, 0, 1, 1], [], []>} : vector<64x16xf32>, vector<16x512xf32>, vector<64x512xf32> -> vector<64x512xf32>
    %c0_3 = arith.constant 0 : index
    %c0_4 = arith.constant 0 : index
    %3 = vector.load %arg4[%c0_3, %c0_4] : memref<1x512xf32, #tpu.memory_space<vmem>>, vector<1x512xf32>
    %4 = vector.broadcast %3 : vector<1x512xf32> to vector<64x512xf32>
    %5 = arith.addf %2, %4 : vector<64x512xf32>
    %c0_5 = arith.constant 0 : index
    %c0_6 = arith.constant 0 : index
    %6 = vector.load %arg11[%c0_5, %c0_6] : memref<64x512xf32, #tpu.memory_space<vmem>>, vector<64x512xf32>
    tpu.vector_store %arg11[%c0_5, %c0_6], %5 {strides = array<i32>} : memref<64x512xf32, #tpu.memory_space<vmem>>, vector<64x512xf32>,
    %cst_7 = arith.constant 0.000000e+00 : f32
    %7 = vector.broadcast %cst_7 : f32 to vector<8x128xf32>
    %c0_8 = arith.constant 0 : index
    %c0_9 = arith.constant 0 : index
    %8 = vector.load %arg12[%c0_8, %c0_9] : memref<8x128xf32, #tpu.memory_space<vmem>>, vector<8x128xf32>
    tpu.vector_store %arg12[%c0_8, %c0_9], %7 {strides = array<i32>} : memref<8x128xf32, #tpu.memory_space<vmem>>, vector<8x128xf32>,
    %cst_10 = arith.constant 0.000000e+00 : f32
    %9 = vector.broadcast %cst_10 : f32 to vector<8x128xf32>
    %c0_11 = arith.constant 0 : index
    %c0_12 = arith.constant 0 : index
    %10 = vector.load %arg14[%c0_11, %c0_12] : memref<8x128xf32, #tpu.memory_space<vmem>>, vector<8x128xf32>
    tpu.vector_store %arg14[%c0_11, %c0_12], %9 {strides = array<i32>} : memref<8x128xf32, #tpu.memory_space<vmem>>, vector<8x128xf32>,
    %cst_13 = arith.constant 0.000000e+00 : f32
    %11 = vector.broadcast %cst_13 : f32 to vector<8x128xf32>
    %c0_14 = arith.constant 0 : index
    %c0_15 = arith.constant 0 : index
    %12 = vector.load %arg13[%c0_14, %c0_15] : memref<8x128xf32, #tpu.memory_space<vmem>>, vector<8x128xf32>
    tpu.vector_store %arg13[%c0_14, %c0_15], %11 {strides = array<i32>} : memref<8x128xf32, #tpu.memory_space<vmem>>, vector<8x128xf32>,
    %cst_16 = arith.constant 0.000000e+00 : f32
    %13 = vector.broadcast %cst_16 : f32 to vector<8x128xf32>
    %c0_17 = arith.constant 0 : index
    %c0_18 = arith.constant 0 : index
    %14 = vector.load %arg15[%c0_17, %c0_18] : memref<8x128xf32, #tpu.memory_space<vmem>>, vector<8x128xf32>
    tpu.vector_store %arg15[%c0_17, %c0_18], %13 {strides = array<i32>} : memref<8x128xf32, #tpu.memory_space<vmem>>, vector<8x128xf32>,
    %c0_19 = arith.constant 0 : index
    %c0_20 = arith.constant 0 : index
    %15 = vector.load %arg7[%c0_19, %c0_20] : memref<1x512xf32, #tpu.memory_space<vmem>>, vector<1x512xf32>
    %16 = vector.shape_cast %15 : vector<1x512xf32> to vector<1x512xf32>
    %17 = vector.broadcast %16 : vector<1x512xf32> to vector<8x512xf32>
    %c0_i32 = arith.constant 0 : i32
    %c8_i32 = arith.constant 8 : i32
    %18 = arith.muli %c0_i32, %c8_i32 : i32
    %19 = tpu.assume_multiple %18, 8 : i32
    %20 = arith.index_cast %19 : i32 to index
    %c0_21 = arith.constant 0 : index
    %21 = vector.load %arg11[%20, %c0_21] : memref<64x512xf32, #tpu.memory_space<vmem>>, vector<8x512xf32>
    %c0_22 = arith.constant 0 : index
    %c0_23 = arith.constant 0 : index
    %22 = vector.load %arg12[%c0_22, %c0_23] : memref<8x128xf32, #tpu.memory_space<vmem>>, vector<8x128xf32>
    %c0_24 = arith.constant 0 : index
    %c0_25 = arith.constant 0 : index
    %23 = vector.load %arg3[%c0_24, %c0_25] : memref<128x512xf32, #tpu.memory_space<vmem>>, vector<128x512xf32>
    %cst_26 = arith.constant dense<0.000000e+00> : vector<8x512xf32>
    %24 = tpu.matmul %22, %23, %cst_26 {dimension_numbers = #tpu.dot_dimension_numbers<[1], [0], [0], [1], [0, 0, 1, 1], [], []>} : vector<8x128xf32>, vector<128x512xf32>, vector<8x512xf32> -> vector<8x512xf32>
    %25 = arith.addf %21, %24 : vector<8x512xf32>
    %26 = vector.extract_strided_slice %25 {offsets = [0, 0], sizes = [8, 128], strides = [1, 1]} : vector<8x512xf32> to vector<8x128xf32>
    %27 = arith.negf %26 : vector<8x128xf32>
    %28 = math.exp %27 : vector<8x128xf32>
    %cst_27 = arith.constant 1.000000e+00 : f32
    %29 = vector.broadcast %cst_27 : f32 to vector<8x128xf32>
    %30 = arith.addf %29, %28 : vector<8x128xf32>
    %31 = arith.divf %29, %30 : vector<8x128xf32>
    %32 = vector.extract_strided_slice %25 {offsets = [0, 128], sizes = [8, 128], strides = [1, 1]} : vector<8x512xf32> to vector<8x128xf32>
    %33 = arith.negf %32 : vector<8x128xf32>
    %34 = math.exp %33 : vector<8x128xf32>
    %cst_28 = arith.constant 1.000000e+00 : f32
    %35 = vector.broadcast %cst_28 : f32 to vector<8x128xf32>
    %36 = arith.addf %35, %34 : vector<8x128xf32>
    %37 = arith.divf %35, %36 : vector<8x128xf32>
    %38 = vector.extract_strided_slice %25 {offsets = [0, 256], sizes = [8, 128], strides = [1, 1]} : vector<8x512xf32> to vector<8x128xf32>
    %39 = math.tanh %38 : vector<8x128xf32>
    %40 = vector.extract_strided_slice %25 {offsets = [0, 384], sizes = [8, 128], strides = [1, 1]} : vector<8x512xf32> to vector<8x128xf32>
    %41 = arith.negf %40 : vector<8x128xf32>
    %42 = math.exp %41 : vector<8x128xf32>
    %cst_29 = arith.constant 1.000000e+00 : f32
    %43 = vector.broadcast %cst_29 : f32 to vector<8x128xf32>
    %44 = arith.addf %43, %42 : vector<8x128xf32>
    %45 = arith.divf %43, %44 : vector<8x128xf32>
    %c0_30 = arith.constant 0 : index
    %c0_31 = arith.constant 0 : index
    %46 = vector.load %arg14[%c0_30, %c0_31] : memref<8x128xf32, #tpu.memory_space<vmem>>, vector<8x128xf32>
    %47 = arith.mulf %37, %46 : vector<8x128xf32>
    %48 = arith.mulf %31, %39 : vector<8x128xf32>
    %49 = arith.addf %47, %48 : vector<8x128xf32>
    %50 = math.tanh %49 : vector<8x128xf32>
    %51 = arith.mulf %45, %50 : vector<8x128xf32>
    %c0_32 = arith.constant 0 : index
    %c0_33 = arith.constant 0 : index
    %52 = vector.load %arg14[%c0_32, %c0_33] : memref<8x128xf32, #tpu.memory_space<vmem>>, vector<8x128xf32>
    tpu.vector_store %arg14[%c0_32, %c0_33], %49 {strides = array<i32>} : memref<8x128xf32, #tpu.memory_space<vmem>>, vector<8x128xf32>,
    %c0_34 = arith.constant 0 : index
    %c0_35 = arith.constant 0 : index
    %53 = vector.load %arg12[%c0_34, %c0_35] : memref<8x128xf32, #tpu.memory_space<vmem>>, vector<8x128xf32>
    tpu.vector_store %arg12[%c0_34, %c0_35], %51 {strides = array<i32>} : memref<8x128xf32, #tpu.memory_space<vmem>>, vector<8x128xf32>,
    %c0_36 = arith.constant 0 : index
    %c0_37 = arith.constant 0 : index
    %54 = vector.load %arg5[%c0_36, %c0_37] : memref<128x512xf32, #tpu.memory_space<vmem>>, vector<128x512xf32>
    %cst_38 = arith.constant dense<0.000000e+00> : vector<8x512xf32>
    %55 = tpu.matmul %51, %54, %cst_38 {dimension_numbers = #tpu.dot_dimension_numbers<[1], [0], [0], [1], [0, 0, 1, 1], [], []>} : vector<8x128xf32>, vector<128x512xf32>, vector<8x512xf32> -> vector<8x512xf32>
    %c0_39 = arith.constant 0 : index
    %c0_40 = arith.constant 0 : index
    %56 = vector.load %arg13[%c0_39, %c0_40] : memref<8x128xf32, #tpu.memory_space<vmem>>, vector<8x128xf32>
    %c0_41 = arith.constant 0 : index
    %c0_42 = arith.constant 0 : index
    %57 = vector.load %arg6[%c0_41, %c0_42] : memref<128x512xf32, #tpu.memory_space<vmem>>, vector<128x512xf32>
    %cst_43 = arith.constant dense<0.000000e+00> : vector<8x512xf32>
    %58 = tpu.matmul %56, %57, %cst_43 {dimension_numbers = #tpu.dot_dimension_numbers<[1], [0], [0], [1], [0, 0, 1, 1], [], []>} : vector<8x128xf32>, vector<128x512xf32>, vector<8x512xf32> -> vector<8x512xf32>
    %59 = arith.addf %55, %58 : vector<8x512xf32>
    %60 = arith.addf %59, %17 : vector<8x512xf32>
    %61 = vector.extract_strided_slice %60 {offsets = [0, 0], sizes = [8, 128], strides = [1, 1]} : vector<8x512xf32> to vector<8x128xf32>
    %62 = arith.negf %61 : vector<8x128xf32>
    %63 = math.exp %62 : vector<8x128xf32>
    %cst_44 = arith.constant 1.000000e+00 : f32
    %64 = vector.broadcast %cst_44 : f32 to vector<8x128xf32>
    %65 = arith.addf %64, %63 : vector<8x128xf32>
    %66 = arith.divf %64, %65 : vector<8x128xf32>
    %67 = vector.extract_strided_slice %60 {offsets = [0, 128], sizes = [8, 128], strides = [1, 1]} : vector<8x512xf32> to vector<8x128xf32>
    %68 = arith.negf %67 : vector<8x128xf32>
    %69 = math.exp %68 : vector<8x128xf32>
    %cst_45 = arith.constant 1.000000e+00 : f32
    %70 = vector.broadcast %cst_45 : f32 to vector<8x128xf32>
    %71 = arith.addf %70, %69 : vector<8x128xf32>
    %72 = arith.divf %70, %71 : vector<8x128xf32>
    %73 = vector.extract_strided_slice %60 {offsets = [0, 256], sizes = [8, 128], strides = [1, 1]} : vector<8x512xf32> to vector<8x128xf32>
    %74 = math.tanh %73 : vector<8x128xf32>
    %75 = vector.extract_strided_slice %60 {offsets = [0, 384], sizes = [8, 128], strides = [1, 1]} : vector<8x512xf32> to vector<8x128xf32>
    %76 = arith.negf %75 : vector<8x128xf32>
    %77 = math.exp %76 : vector<8x128xf32>
    %cst_46 = arith.constant 1.000000e+00 : f32
    %78 = vector.broadcast %cst_46 : f32 to vector<8x128xf32>
    %79 = arith.addf %78, %77 : vector<8x128xf32>
    %80 = arith.divf %78, %79 : vector<8x128xf32>
    %c0_47 = arith.constant 0 : index
    %c0_48 = arith.constant 0 : index
    %81 = vector.load %arg15[%c0_47, %c0_48] : memref<8x128xf32, #tpu.memory_space<vmem>>, vector<8x128xf32>
    %82 = arith.mulf %72, %81 : vector<8x128xf32>
    %83 = arith.mulf %66, %74 : vector<8x128xf32>
    %84 = arith.addf %82, %83 : vector<8x128xf32>
    %85 = math.tanh %84 : vector<8x128xf32>
    %86 = arith.mulf %80, %85 : vector<8x128xf32>
    %c0_49 = arith.constant 0 : index
    %c0_50 = arith.constant 0 : index
    %87 = vector.load %arg15[%c0_49, %c0_50] : memref<8x128xf32, #tpu.memory_space<vmem>>, vector<8x128xf32>
    tpu.vector_store %arg15[%c0_49, %c0_50], %84 {strides = array<i32>} : memref<8x128xf32, #tpu.memory_space<vmem>>, vector<8x128xf32>,
    %c0_51 = arith.constant 0 : index
    %c0_52 = arith.constant 0 : index
    %88 = vector.load %arg13[%c0_51, %c0_52] : memref<8x128xf32, #tpu.memory_space<vmem>>, vector<8x128xf32>
    tpu.vector_store %arg13[%c0_51, %c0_52], %86 {strides = array<i32>} : memref<8x128xf32, #tpu.memory_space<vmem>>, vector<8x128xf32>,
    %c1_i32 = arith.constant 1 : i32
    %c8_i32_53 = arith.constant 8 : i32
    %89 = arith.muli %c1_i32, %c8_i32_53 : i32
    %90 = tpu.assume_multiple %89, 8 : i32
    %91 = arith.index_cast %90 : i32 to index
    %c0_54 = arith.constant 0 : index
    %92 = vector.load %arg11[%91, %c0_54] : memref<64x512xf32, #tpu.memory_space<vmem>>, vector<8x512xf32>
    %c0_55 = arith.constant 0 : index
    %c0_56 = arith.constant 0 : index
    %93 = vector.load %arg12[%c0_55, %c0_56] : memref<8x128xf32, #tpu.memory_space<vmem>>, vector<8x128xf32>
    %c0_57 = arith.constant 0 : index
    %c0_58 = arith.constant 0 : index
    %94 = vector.load %arg3[%c0_57, %c0_58] : memref<128x512xf32, #tpu.memory_space<vmem>>, vector<128x512xf32>
    %cst_59 = arith.constant dense<0.000000e+00> : vector<8x512xf32>
    %95 = tpu.matmul %93, %94, %cst_59 {dimension_numbers = #tpu.dot_dimension_numbers<[1], [0], [0], [1], [0, 0, 1, 1], [], []>} : vector<8x128xf32>, vector<128x512xf32>, vector<8x512xf32> -> vector<8x512xf32>
    %96 = arith.addf %92, %95 : vector<8x512xf32>
    %97 = vector.extract_strided_slice %96 {offsets = [0, 0], sizes = [8, 128], strides = [1, 1]} : vector<8x512xf32> to vector<8x128xf32>
    %98 = arith.negf %97 : vector<8x128xf32>
    %99 = math.exp %98 : vector<8x128xf32>
    %cst_60 = arith.constant 1.000000e+00 : f32
    %100 = vector.broadcast %cst_60 : f32 to vector<8x128xf32>
    %101 = arith.addf %100, %99 : vector<8x128xf32>
    %102 = arith.divf %100, %101 : vector<8x128xf32>
    %103 = vector.extract_strided_slice %96 {offsets = [0, 128], sizes = [8, 128], strides = [1, 1]} : vector<8x512xf32> to vector<8x128xf32>
    %104 = arith.negf %103 : vector<8x128xf32>
    %105 = math.exp %104 : vector<8x128xf32>
    %cst_61 = arith.constant 1.000000e+00 : f32
    %106 = vector.broadcast %cst_61 : f32 to vector<8x128xf32>
    %107 = arith.addf %106, %105 : vector<8x128xf32>
    %108 = arith.divf %106, %107 : vector<8x128xf32>
    %109 = vector.extract_strided_slice %96 {offsets = [0, 256], sizes = [8, 128], strides = [1, 1]} : vector<8x512xf32> to vector<8x128xf32>
    %110 = math.tanh %109 : vector<8x128xf32>
    %111 = vector.extract_strided_slice %96 {offsets = [0, 384], sizes = [8, 128], strides = [1, 1]} : vector<8x512xf32> to vector<8x128xf32>
    %112 = arith.negf %111 : vector<8x128xf32>
    %113 = math.exp %112 : vector<8x128xf32>
    %cst_62 = arith.constant 1.000000e+00 : f32
    %114 = vector.broadcast %cst_62 : f32 to vector<8x128xf32>
    %115 = arith.addf %114, %113 : vector<8x128xf32>
    %116 = arith.divf %114, %115 : vector<8x128xf32>
    %c0_63 = arith.constant 0 : index
    %c0_64 = arith.constant 0 : index
    %117 = vector.load %arg14[%c0_63, %c0_64] : memref<8x128xf32, #tpu.memory_space<vmem>>, vector<8x128xf32>
    %118 = arith.mulf %108, %117 : vector<8x128xf32>
    %119 = arith.mulf %102, %110 : vector<8x128xf32>
    %120 = arith.addf %118, %119 : vector<8x128xf32>
    %121 = math.tanh %120 : vector<8x128xf32>
    %122 = arith.mulf %116, %121 : vector<8x128xf32>
    %c0_65 = arith.constant 0 : index
    %c0_66 = arith.constant 0 : index
    %123 = vector.load %arg14[%c0_65, %c0_66] : memref<8x128xf32, #tpu.memory_space<vmem>>, vector<8x128xf32>
    tpu.vector_store %arg14[%c0_65, %c0_66], %120 {strides = array<i32>} : memref<8x128xf32, #tpu.memory_space<vmem>>, vector<8x128xf32>,
    %c0_67 = arith.constant 0 : index
    %c0_68 = arith.constant 0 : index
    %124 = vector.load %arg12[%c0_67, %c0_68] : memref<8x128xf32, #tpu.memory_space<vmem>>, vector<8x128xf32>
    tpu.vector_store %arg12[%c0_67, %c0_68], %122 {strides = array<i32>} : memref<8x128xf32, #tpu.memory_space<vmem>>, vector<8x128xf32>,
    %c0_69 = arith.constant 0 : index
    %c0_70 = arith.constant 0 : index
    %125 = vector.load %arg5[%c0_69, %c0_70] : memref<128x512xf32, #tpu.memory_space<vmem>>, vector<128x512xf32>
    %cst_71 = arith.constant dense<0.000000e+00> : vector<8x512xf32>
    %126 = tpu.matmul %122, %125, %cst_71 {dimension_numbers = #tpu.dot_dimension_numbers<[1], [0], [0], [1], [0, 0, 1, 1], [], []>} : vector<8x128xf32>, vector<128x512xf32>, vector<8x512xf32> -> vector<8x512xf32>
    %c0_72 = arith.constant 0 : index
    %c0_73 = arith.constant 0 : index
    %127 = vector.load %arg13[%c0_72, %c0_73] : memref<8x128xf32, #tpu.memory_space<vmem>>, vector<8x128xf32>
    %c0_74 = arith.constant 0 : index
    %c0_75 = arith.constant 0 : index
    %128 = vector.load %arg6[%c0_74, %c0_75] : memref<128x512xf32, #tpu.memory_space<vmem>>, vector<128x512xf32>
    %cst_76 = arith.constant dense<0.000000e+00> : vector<8x512xf32>
    %129 = tpu.matmul %127, %128, %cst_76 {dimension_numbers = #tpu.dot_dimension_numbers<[1], [0], [0], [1], [0, 0, 1, 1], [], []>} : vector<8x128xf32>, vector<128x512xf32>, vector<8x512xf32> -> vector<8x512xf32>
    %130 = arith.addf %126, %129 : vector<8x512xf32>
    %131 = arith.addf %130, %17 : vector<8x512xf32>
    %132 = vector.extract_strided_slice %131 {offsets = [0, 0], sizes = [8, 128], strides = [1, 1]} : vector<8x512xf32> to vector<8x128xf32>
    %133 = arith.negf %132 : vector<8x128xf32>
    %134 = math.exp %133 : vector<8x128xf32>
    %cst_77 = arith.constant 1.000000e+00 : f32
    %135 = vector.broadcast %cst_77 : f32 to vector<8x128xf32>
    %136 = arith.addf %135, %134 : vector<8x128xf32>
    %137 = arith.divf %135, %136 : vector<8x128xf32>
    %138 = vector.extract_strided_slice %131 {offsets = [0, 128], sizes = [8, 128], strides = [1, 1]} : vector<8x512xf32> to vector<8x128xf32>
    %139 = arith.negf %138 : vector<8x128xf32>
    %140 = math.exp %139 : vector<8x128xf32>
    %cst_78 = arith.constant 1.000000e+00 : f32
    %141 = vector.broadcast %cst_78 : f32 to vector<8x128xf32>
    %142 = arith.addf %141, %140 : vector<8x128xf32>
    %143 = arith.divf %141, %142 : vector<8x128xf32>
    %144 = vector.extract_strided_slice %131 {offsets = [0, 256], sizes = [8, 128], strides = [1, 1]} : vector<8x512xf32> to vector<8x128xf32>
    %145 = math.tanh %144 : vector<8x128xf32>
    %146 = vector.extract_strided_slice %131 {offsets = [0, 384], sizes = [8, 128], strides = [1, 1]} : vector<8x512xf32> to vector<8x128xf32>
    %147 = arith.negf %146 : vector<8x128xf32>
    %148 = math.exp %147 : vector<8x128xf32>
    %cst_79 = arith.constant 1.000000e+00 : f32
    %149 = vector.broadcast %cst_79 : f32 to vector<8x128xf32>
    %150 = arith.addf %149, %148 : vector<8x128xf32>
    %151 = arith.divf %149, %150 : vector<8x128xf32>
    %c0_80 = arith.constant 0 : index
    %c0_81 = arith.constant 0 : index
    %152 = vector.load %arg15[%c0_80, %c0_81] : memref<8x128xf32, #tpu.memory_space<vmem>>, vector<8x128xf32>
    %153 = arith.mulf %143, %152 : vector<8x128xf32>
    %154 = arith.mulf %137, %145 : vector<8x128xf32>
    %155 = arith.addf %153, %154 : vector<8x128xf32>
    %156 = math.tanh %155 : vector<8x128xf32>
    %157 = arith.mulf %151, %156 : vector<8x128xf32>
    %c0_82 = arith.constant 0 : index
    %c0_83 = arith.constant 0 : index
    %158 = vector.load %arg15[%c0_82, %c0_83] : memref<8x128xf32, #tpu.memory_space<vmem>>, vector<8x128xf32>
    tpu.vector_store %arg15[%c0_82, %c0_83], %155 {strides = array<i32>} : memref<8x128xf32, #tpu.memory_space<vmem>>, vector<8x128xf32>,
    %c0_84 = arith.constant 0 : index
    %c0_85 = arith.constant 0 : index
    %159 = vector.load %arg13[%c0_84, %c0_85] : memref<8x128xf32, #tpu.memory_space<vmem>>, vector<8x128xf32>
    tpu.vector_store %arg13[%c0_84, %c0_85], %157 {strides = array<i32>} : memref<8x128xf32, #tpu.memory_space<vmem>>, vector<8x128xf32>,
    %c2_i32 = arith.constant 2 : i32
    %c8_i32_86 = arith.constant 8 : i32
    %160 = arith.muli %c2_i32, %c8_i32_86 : i32
    %161 = tpu.assume_multiple %160, 8 : i32
    %162 = arith.index_cast %161 : i32 to index
    %c0_87 = arith.constant 0 : index
    %163 = vector.load %arg11[%162, %c0_87] : memref<64x512xf32, #tpu.memory_space<vmem>>, vector<8x512xf32>
    %c0_88 = arith.constant 0 : index
    %c0_89 = arith.constant 0 : index
    %164 = vector.load %arg12[%c0_88, %c0_89] : memref<8x128xf32, #tpu.memory_space<vmem>>, vector<8x128xf32>
    %c0_90 = arith.constant 0 : index
    %c0_91 = arith.constant 0 : index
    %165 = vector.load %arg3[%c0_90, %c0_91] : memref<128x512xf32, #tpu.memory_space<vmem>>, vector<128x512xf32>
    %cst_92 = arith.constant dense<0.000000e+00> : vector<8x512xf32>
    %166 = tpu.matmul %164, %165, %cst_92 {dimension_numbers = #tpu.dot_dimension_numbers<[1], [0], [0], [1], [0, 0, 1, 1], [], []>} : vector<8x128xf32>, vector<128x512xf32>, vector<8x512xf32> -> vector<8x512xf32>
    %167 = arith.addf %163, %166 : vector<8x512xf32>
    %168 = vector.extract_strided_slice %167 {offsets = [0, 0], sizes = [8, 128], strides = [1, 1]} : vector<8x512xf32> to vector<8x128xf32>
    %169 = arith.negf %168 : vector<8x128xf32>
    %170 = math.exp %169 : vector<8x128xf32>
    %cst_93 = arith.constant 1.000000e+00 : f32
    %171 = vector.broadcast %cst_93 : f32 to vector<8x128xf32>
    %172 = arith.addf %171, %170 : vector<8x128xf32>
    %173 = arith.divf %171, %172 : vector<8x128xf32>
    %174 = vector.extract_strided_slice %167 {offsets = [0, 128], sizes = [8, 128], strides = [1, 1]} : vector<8x512xf32> to vector<8x128xf32>
    %175 = arith.negf %174 : vector<8x128xf32>
    %176 = math.exp %175 : vector<8x128xf32>
    %cst_94 = arith.constant 1.000000e+00 : f32
    %177 = vector.broadcast %cst_94 : f32 to vector<8x128xf32>
    %178 = arith.addf %177, %176 : vector<8x128xf32>
    %179 = arith.divf %177, %178 : vector<8x128xf32>
    %180 = vector.extract_strided_slice %167 {offsets = [0, 256], sizes = [8, 128], strides = [1, 1]} : vector<8x512xf32> to vector<8x128xf32>
    %181 = math.tanh %180 : vector<8x128xf32>
    %182 = vector.extract_strided_slice %167 {offsets = [0, 384], sizes = [8, 128], strides = [1, 1]} : vector<8x512xf32> to vector<8x128xf32>
    %183 = arith.negf %182 : vector<8x128xf32>
    %184 = math.exp %183 : vector<8x128xf32>
    %cst_95 = arith.constant 1.000000e+00 : f32
    %185 = vector.broadcast %cst_95 : f32 to vector<8x128xf32>
    %186 = arith.addf %185, %184 : vector<8x128xf32>
    %187 = arith.divf %185, %186 : vector<8x128xf32>
    %c0_96 = arith.constant 0 : index
    %c0_97 = arith.constant 0 : index
    %188 = vector.load %arg14[%c0_96, %c0_97] : memref<8x128xf32, #tpu.memory_space<vmem>>, vector<8x128xf32>
    %189 = arith.mulf %179, %188 : vector<8x128xf32>
    %190 = arith.mulf %173, %181 : vector<8x128xf32>
    %191 = arith.addf %189, %190 : vector<8x128xf32>
    %192 = math.tanh %191 : vector<8x128xf32>
    %193 = arith.mulf %187, %192 : vector<8x128xf32>
    %c0_98 = arith.constant 0 : index
    %c0_99 = arith.constant 0 : index
    %194 = vector.load %arg14[%c0_98, %c0_99] : memref<8x128xf32, #tpu.memory_space<vmem>>, vector<8x128xf32>
    tpu.vector_store %arg14[%c0_98, %c0_99], %191 {strides = array<i32>} : memref<8x128xf32, #tpu.memory_space<vmem>>, vector<8x128xf32>,
    %c0_100 = arith.constant 0 : index
    %c0_101 = arith.constant 0 : index
    %195 = vector.load %arg12[%c0_100, %c0_101] : memref<8x128xf32, #tpu.memory_space<vmem>>, vector<8x128xf32>
    tpu.vector_store %arg12[%c0_100, %c0_101], %193 {strides = array<i32>} : memref<8x128xf32, #tpu.memory_space<vmem>>, vector<8x128xf32>,
    %c0_102 = arith.constant 0 : index
    %c0_103 = arith.constant 0 : index
    %196 = vector.load %arg5[%c0_102, %c0_103] : memref<128x512xf32, #tpu.memory_space<vmem>>, vector<128x512xf32>
    %cst_104 = arith.constant dense<0.000000e+00> : vector<8x512xf32>
    %197 = tpu.matmul %193, %196, %cst_104 {dimension_numbers = #tpu.dot_dimension_numbers<[1], [0], [0], [1], [0, 0, 1, 1], [], []>} : vector<8x128xf32>, vector<128x512xf32>, vector<8x512xf32> -> vector<8x512xf32>
    %c0_105 = arith.constant 0 : index
    %c0_106 = arith.constant 0 : index
    %198 = vector.load %arg13[%c0_105, %c0_106] : memref<8x128xf32, #tpu.memory_space<vmem>>, vector<8x128xf32>
    %c0_107 = arith.constant 0 : index
    %c0_108 = arith.constant 0 : index
    %199 = vector.load %arg6[%c0_107, %c0_108] : memref<128x512xf32, #tpu.memory_space<vmem>>, vector<128x512xf32>
    %cst_109 = arith.constant dense<0.000000e+00> : vector<8x512xf32>
    %200 = tpu.matmul %198, %199, %cst_109 {dimension_numbers = #tpu.dot_dimension_numbers<[1], [0], [0], [1], [0, 0, 1, 1], [], []>} : vector<8x128xf32>, vector<128x512xf32>, vector<8x512xf32> -> vector<8x512xf32>
    %201 = arith.addf %197, %200 : vector<8x512xf32>
    %202 = arith.addf %201, %17 : vector<8x512xf32>
    %203 = vector.extract_strided_slice %202 {offsets = [0, 0], sizes = [8, 128], strides = [1, 1]} : vector<8x512xf32> to vector<8x128xf32>
    %204 = arith.negf %203 : vector<8x128xf32>
    %205 = math.exp %204 : vector<8x128xf32>
    %cst_110 = arith.constant 1.000000e+00 : f32
    %206 = vector.broadcast %cst_110 : f32 to vector<8x128xf32>
    %207 = arith.addf %206, %205 : vector<8x128xf32>
    %208 = arith.divf %206, %207 : vector<8x128xf32>
    %209 = vector.extract_strided_slice %202 {offsets = [0, 128], sizes = [8, 128], strides = [1, 1]} : vector<8x512xf32> to vector<8x128xf32>
    %210 = arith.negf %209 : vector<8x128xf32>
    %211 = math.exp %210 : vector<8x128xf32>
    %cst_111 = arith.constant 1.000000e+00 : f32
    %212 = vector.broadcast %cst_111 : f32 to vector<8x128xf32>
    %213 = arith.addf %212, %211 : vector<8x128xf32>
    %214 = arith.divf %212, %213 : vector<8x128xf32>
    %215 = vector.extract_strided_slice %202 {offsets = [0, 256], sizes = [8, 128], strides = [1, 1]} : vector<8x512xf32> to vector<8x128xf32>
    %216 = math.tanh %215 : vector<8x128xf32>
    %217 = vector.extract_strided_slice %202 {offsets = [0, 384], sizes = [8, 128], strides = [1, 1]} : vector<8x512xf32> to vector<8x128xf32>
    %218 = arith.negf %217 : vector<8x128xf32>
    %219 = math.exp %218 : vector<8x128xf32>
    %cst_112 = arith.constant 1.000000e+00 : f32
    %220 = vector.broadcast %cst_112 : f32 to vector<8x128xf32>
    %221 = arith.addf %220, %219 : vector<8x128xf32>
    %222 = arith.divf %220, %221 : vector<8x128xf32>
    %c0_113 = arith.constant 0 : index
    %c0_114 = arith.constant 0 : index
    %223 = vector.load %arg15[%c0_113, %c0_114] : memref<8x128xf32, #tpu.memory_space<vmem>>, vector<8x128xf32>
    %224 = arith.mulf %214, %223 : vector<8x128xf32>
    %225 = arith.mulf %208, %216 : vector<8x128xf32>
    %226 = arith.addf %224, %225 : vector<8x128xf32>
    %227 = math.tanh %226 : vector<8x128xf32>
    %228 = arith.mulf %222, %227 : vector<8x128xf32>
    %c0_115 = arith.constant 0 : index
    %c0_116 = arith.constant 0 : index
    %229 = vector.load %arg15[%c0_115, %c0_116] : memref<8x128xf32, #tpu.memory_space<vmem>>, vector<8x128xf32>
    tpu.vector_store %arg15[%c0_115, %c0_116], %226 {strides = array<i32>} : memref<8x128xf32, #tpu.memory_space<vmem>>, vector<8x128xf32>,
    %c0_117 = arith.constant 0 : index
    %c0_118 = arith.constant 0 : index
    %230 = vector.load %arg13[%c0_117, %c0_118] : memref<8x128xf32, #tpu.memory_space<vmem>>, vector<8x128xf32>
    tpu.vector_store %arg13[%c0_117, %c0_118], %228 {strides = array<i32>} : memref<8x128xf32, #tpu.memory_space<vmem>>, vector<8x128xf32>,
    %c3_i32 = arith.constant 3 : i32
    %c8_i32_119 = arith.constant 8 : i32
    %231 = arith.muli %c3_i32, %c8_i32_119 : i32
    %232 = tpu.assume_multiple %231, 8 : i32
    %233 = arith.index_cast %232 : i32 to index
    %c0_120 = arith.constant 0 : index
    %234 = vector.load %arg11[%233, %c0_120] : memref<64x512xf32, #tpu.memory_space<vmem>>, vector<8x512xf32>
    %c0_121 = arith.constant 0 : index
    %c0_122 = arith.constant 0 : index
    %235 = vector.load %arg12[%c0_121, %c0_122] : memref<8x128xf32, #tpu.memory_space<vmem>>, vector<8x128xf32>
    %c0_123 = arith.constant 0 : index
    %c0_124 = arith.constant 0 : index
    %236 = vector.load %arg3[%c0_123, %c0_124] : memref<128x512xf32, #tpu.memory_space<vmem>>, vector<128x512xf32>
    %cst_125 = arith.constant dense<0.000000e+00> : vector<8x512xf32>
    %237 = tpu.matmul %235, %236, %cst_125 {dimension_numbers = #tpu.dot_dimension_numbers<[1], [0], [0], [1], [0, 0, 1, 1], [], []>} : vector<8x128xf32>, vector<128x512xf32>, vector<8x512xf32> -> vector<8x512xf32>
    %238 = arith.addf %234, %237 : vector<8x512xf32>
    %239 = vector.extract_strided_slice %238 {offsets = [0, 0], sizes = [8, 128], strides = [1, 1]} : vector<8x512xf32> to vector<8x128xf32>
    %240 = arith.negf %239 : vector<8x128xf32>
    %241 = math.exp %240 : vector<8x128xf32>
    %cst_126 = arith.constant 1.000000e+00 : f32
    %242 = vector.broadcast %cst_126 : f32 to vector<8x128xf32>
    %243 = arith.addf %242, %241 : vector<8x128xf32>
    %244 = arith.divf %242, %243 : vector<8x128xf32>
    %245 = vector.extract_strided_slice %238 {offsets = [0, 128], sizes = [8, 128], strides = [1, 1]} : vector<8x512xf32> to vector<8x128xf32>
    %246 = arith.negf %245 : vector<8x128xf32>
    %247 = math.exp %246 : vector<8x128xf32>
    %cst_127 = arith.constant 1.000000e+00 : f32
    %248 = vector.broadcast %cst_127 : f32 to vector<8x128xf32>
    %249 = arith.addf %248, %247 : vector<8x128xf32>
    %250 = arith.divf %248, %249 : vector<8x128xf32>
    %251 = vector.extract_strided_slice %238 {offsets = [0, 256], sizes = [8, 128], strides = [1, 1]} : vector<8x512xf32> to vector<8x128xf32>
    %252 = math.tanh %251 : vector<8x128xf32>
    %253 = vector.extract_strided_slice %238 {offsets = [0, 384], sizes = [8, 128], strides = [1, 1]} : vector<8x512xf32> to vector<8x128xf32>
    %254 = arith.negf %253 : vector<8x128xf32>
    %255 = math.exp %254 : vector<8x128xf32>
    %cst_128 = arith.constant 1.000000e+00 : f32
    %256 = vector.broadcast %cst_128 : f32 to vector<8x128xf32>
    %257 = arith.addf %256, %255 : vector<8x128xf32>
    %258 = arith.divf %256, %257 : vector<8x128xf32>
    %c0_129 = arith.constant 0 : index
    %c0_130 = arith.constant 0 : index
    %259 = vector.load %arg14[%c0_129, %c0_130] : memref<8x128xf32, #tpu.memory_space<vmem>>, vector<8x128xf32>
    %260 = arith.mulf %250, %259 : vector<8x128xf32>
    %261 = arith.mulf %244, %252 : vector<8x128xf32>
    %262 = arith.addf %260, %261 : vector<8x128xf32>
    %263 = math.tanh %262 : vector<8x128xf32>
    %264 = arith.mulf %258, %263 : vector<8x128xf32>
    %c0_131 = arith.constant 0 : index
    %c0_132 = arith.constant 0 : index
    %265 = vector.load %arg14[%c0_131, %c0_132] : memref<8x128xf32, #tpu.memory_space<vmem>>, vector<8x128xf32>
    tpu.vector_store %arg14[%c0_131, %c0_132], %262 {strides = array<i32>} : memref<8x128xf32, #tpu.memory_space<vmem>>, vector<8x128xf32>,
    %c0_133 = arith.constant 0 : index
    %c0_134 = arith.constant 0 : index
    %266 = vector.load %arg12[%c0_133, %c0_134] : memref<8x128xf32, #tpu.memory_space<vmem>>, vector<8x128xf32>
    tpu.vector_store %arg12[%c0_133, %c0_134], %264 {strides = array<i32>} : memref<8x128xf32, #tpu.memory_space<vmem>>, vector<8x128xf32>,
    %c0_135 = arith.constant 0 : index
    %c0_136 = arith.constant 0 : index
    %267 = vector.load %arg5[%c0_135, %c0_136] : memref<128x512xf32, #tpu.memory_space<vmem>>, vector<128x512xf32>
    %cst_137 = arith.constant dense<0.000000e+00> : vector<8x512xf32>
    %268 = tpu.matmul %264, %267, %cst_137 {dimension_numbers = #tpu.dot_dimension_numbers<[1], [0], [0], [1], [0, 0, 1, 1], [], []>} : vector<8x128xf32>, vector<128x512xf32>, vector<8x512xf32> -> vector<8x512xf32>
    %c0_138 = arith.constant 0 : index
    %c0_139 = arith.constant 0 : index
    %269 = vector.load %arg13[%c0_138, %c0_139] : memref<8x128xf32, #tpu.memory_space<vmem>>, vector<8x128xf32>
    %c0_140 = arith.constant 0 : index
    %c0_141 = arith.constant 0 : index
    %270 = vector.load %arg6[%c0_140, %c0_141] : memref<128x512xf32, #tpu.memory_space<vmem>>, vector<128x512xf32>
    %cst_142 = arith.constant dense<0.000000e+00> : vector<8x512xf32>
    %271 = tpu.matmul %269, %270, %cst_142 {dimension_numbers = #tpu.dot_dimension_numbers<[1], [0], [0], [1], [0, 0, 1, 1], [], []>} : vector<8x128xf32>, vector<128x512xf32>, vector<8x512xf32> -> vector<8x512xf32>
    %272 = arith.addf %268, %271 : vector<8x512xf32>
    %273 = arith.addf %272, %17 : vector<8x512xf32>
    %274 = vector.extract_strided_slice %273 {offsets = [0, 0], sizes = [8, 128], strides = [1, 1]} : vector<8x512xf32> to vector<8x128xf32>
    %275 = arith.negf %274 : vector<8x128xf32>
    %276 = math.exp %275 : vector<8x128xf32>
    %cst_143 = arith.constant 1.000000e+00 : f32
    %277 = vector.broadcast %cst_143 : f32 to vector<8x128xf32>
    %278 = arith.addf %277, %276 : vector<8x128xf32>
    %279 = arith.divf %277, %278 : vector<8x128xf32>
    %280 = vector.extract_strided_slice %273 {offsets = [0, 128], sizes = [8, 128], strides = [1, 1]} : vector<8x512xf32> to vector<8x128xf32>
    %281 = arith.negf %280 : vector<8x128xf32>
    %282 = math.exp %281 : vector<8x128xf32>
    %cst_144 = arith.constant 1.000000e+00 : f32
    %283 = vector.broadcast %cst_144 : f32 to vector<8x128xf32>
    %284 = arith.addf %283, %282 : vector<8x128xf32>
    %285 = arith.divf %283, %284 : vector<8x128xf32>
    %286 = vector.extract_strided_slice %273 {offsets = [0, 256], sizes = [8, 128], strides = [1, 1]} : vector<8x512xf32> to vector<8x128xf32>
    %287 = math.tanh %286 : vector<8x128xf32>
    %288 = vector.extract_strided_slice %273 {offsets = [0, 384], sizes = [8, 128], strides = [1, 1]} : vector<8x512xf32> to vector<8x128xf32>
    %289 = arith.negf %288 : vector<8x128xf32>
    %290 = math.exp %289 : vector<8x128xf32>
    %cst_145 = arith.constant 1.000000e+00 : f32
    %291 = vector.broadcast %cst_145 : f32 to vector<8x128xf32>
    %292 = arith.addf %291, %290 : vector<8x128xf32>
    %293 = arith.divf %291, %292 : vector<8x128xf32>
    %c0_146 = arith.constant 0 : index
    %c0_147 = arith.constant 0 : index
    %294 = vector.load %arg15[%c0_146, %c0_147] : memref<8x128xf32, #tpu.memory_space<vmem>>, vector<8x128xf32>
    %295 = arith.mulf %285, %294 : vector<8x128xf32>
    %296 = arith.mulf %279, %287 : vector<8x128xf32>
    %297 = arith.addf %295, %296 : vector<8x128xf32>
    %298 = math.tanh %297 : vector<8x128xf32>
    %299 = arith.mulf %293, %298 : vector<8x128xf32>
    %c0_148 = arith.constant 0 : index
    %c0_149 = arith.constant 0 : index
    %300 = vector.load %arg15[%c0_148, %c0_149] : memref<8x128xf32, #tpu.memory_space<vmem>>, vector<8x128xf32>
    tpu.vector_store %arg15[%c0_148, %c0_149], %297 {strides = array<i32>} : memref<8x128xf32, #tpu.memory_space<vmem>>, vector<8x128xf32>,
    %c0_150 = arith.constant 0 : index
    %c0_151 = arith.constant 0 : index
    %301 = vector.load %arg13[%c0_150, %c0_151] : memref<8x128xf32, #tpu.memory_space<vmem>>, vector<8x128xf32>
    tpu.vector_store %arg13[%c0_150, %c0_151], %299 {strides = array<i32>} : memref<8x128xf32, #tpu.memory_space<vmem>>, vector<8x128xf32>,
    %c4_i32 = arith.constant 4 : i32
    %c8_i32_152 = arith.constant 8 : i32
    %302 = arith.muli %c4_i32, %c8_i32_152 : i32
    %303 = tpu.assume_multiple %302, 8 : i32
    %304 = arith.index_cast %303 : i32 to index
    %c0_153 = arith.constant 0 : index
    %305 = vector.load %arg11[%304, %c0_153] : memref<64x512xf32, #tpu.memory_space<vmem>>, vector<8x512xf32>
    %c0_154 = arith.constant 0 : index
    %c0_155 = arith.constant 0 : index
    %306 = vector.load %arg12[%c0_154, %c0_155] : memref<8x128xf32, #tpu.memory_space<vmem>>, vector<8x128xf32>
    %c0_156 = arith.constant 0 : index
    %c0_157 = arith.constant 0 : index
    %307 = vector.load %arg3[%c0_156, %c0_157] : memref<128x512xf32, #tpu.memory_space<vmem>>, vector<128x512xf32>
    %cst_158 = arith.constant dense<0.000000e+00> : vector<8x512xf32>
    %308 = tpu.matmul %306, %307, %cst_158 {dimension_numbers = #tpu.dot_dimension_numbers<[1], [0], [0], [1], [0, 0, 1, 1], [], []>} : vector<8x128xf32>, vector<128x512xf32>, vector<8x512xf32> -> vector<8x512xf32>
    %309 = arith.addf %305, %308 : vector<8x512xf32>
    %310 = vector.extract_strided_slice %309 {offsets = [0, 0], sizes = [8, 128], strides = [1, 1]} : vector<8x512xf32> to vector<8x128xf32>
    %311 = arith.negf %310 : vector<8x128xf32>
    %312 = math.exp %311 : vector<8x128xf32>
    %cst_159 = arith.constant 1.000000e+00 : f32
    %313 = vector.broadcast %cst_159 : f32 to vector<8x128xf32>
    %314 = arith.addf %313, %312 : vector<8x128xf32>
    %315 = arith.divf %313, %314 : vector<8x128xf32>
    %316 = vector.extract_strided_slice %309 {offsets = [0, 128], sizes = [8, 128], strides = [1, 1]} : vector<8x512xf32> to vector<8x128xf32>
    %317 = arith.negf %316 : vector<8x128xf32>
    %318 = math.exp %317 : vector<8x128xf32>
    %cst_160 = arith.constant 1.000000e+00 : f32
    %319 = vector.broadcast %cst_160 : f32 to vector<8x128xf32>
    %320 = arith.addf %319, %318 : vector<8x128xf32>
    %321 = arith.divf %319, %320 : vector<8x128xf32>
    %322 = vector.extract_strided_slice %309 {offsets = [0, 256], sizes = [8, 128], strides = [1, 1]} : vector<8x512xf32> to vector<8x128xf32>
    %323 = math.tanh %322 : vector<8x128xf32>
    %324 = vector.extract_strided_slice %309 {offsets = [0, 384], sizes = [8, 128], strides = [1, 1]} : vector<8x512xf32> to vector<8x128xf32>
    %325 = arith.negf %324 : vector<8x128xf32>
    %326 = math.exp %325 : vector<8x128xf32>
    %cst_161 = arith.constant 1.000000e+00 : f32
    %327 = vector.broadcast %cst_161 : f32 to vector<8x128xf32>
    %328 = arith.addf %327, %326 : vector<8x128xf32>
    %329 = arith.divf %327, %328 : vector<8x128xf32>
    %c0_162 = arith.constant 0 : index
    %c0_163 = arith.constant 0 : index
    %330 = vector.load %arg14[%c0_162, %c0_163] : memref<8x128xf32, #tpu.memory_space<vmem>>, vector<8x128xf32>
    %331 = arith.mulf %321, %330 : vector<8x128xf32>
    %332 = arith.mulf %315, %323 : vector<8x128xf32>
    %333 = arith.addf %331, %332 : vector<8x128xf32>
    %334 = math.tanh %333 : vector<8x128xf32>
    %335 = arith.mulf %329, %334 : vector<8x128xf32>
    %c0_164 = arith.constant 0 : index
    %c0_165 = arith.constant 0 : index
    %336 = vector.load %arg14[%c0_164, %c0_165] : memref<8x128xf32, #tpu.memory_space<vmem>>, vector<8x128xf32>
    tpu.vector_store %arg14[%c0_164, %c0_165], %333 {strides = array<i32>} : memref<8x128xf32, #tpu.memory_space<vmem>>, vector<8x128xf32>,
    %c0_166 = arith.constant 0 : index
    %c0_167 = arith.constant 0 : index
    %337 = vector.load %arg12[%c0_166, %c0_167] : memref<8x128xf32, #tpu.memory_space<vmem>>, vector<8x128xf32>
    tpu.vector_store %arg12[%c0_166, %c0_167], %335 {strides = array<i32>} : memref<8x128xf32, #tpu.memory_space<vmem>>, vector<8x128xf32>,
    %c0_168 = arith.constant 0 : index
    %c0_169 = arith.constant 0 : index
    %338 = vector.load %arg5[%c0_168, %c0_169] : memref<128x512xf32, #tpu.memory_space<vmem>>, vector<128x512xf32>
    %cst_170 = arith.constant dense<0.000000e+00> : vector<8x512xf32>
    %339 = tpu.matmul %335, %338, %cst_170 {dimension_numbers = #tpu.dot_dimension_numbers<[1], [0], [0], [1], [0, 0, 1, 1], [], []>} : vector<8x128xf32>, vector<128x512xf32>, vector<8x512xf32> -> vector<8x512xf32>
    %c0_171 = arith.constant 0 : index
    %c0_172 = arith.constant 0 : index
    %340 = vector.load %arg13[%c0_171, %c0_172] : memref<8x128xf32, #tpu.memory_space<vmem>>, vector<8x128xf32>
    %c0_173 = arith.constant 0 : index
    %c0_174 = arith.constant 0 : index
    %341 = vector.load %arg6[%c0_173, %c0_174] : memref<128x512xf32, #tpu.memory_space<vmem>>, vector<128x512xf32>
    %cst_175 = arith.constant dense<0.000000e+00> : vector<8x512xf32>
    %342 = tpu.matmul %340, %341, %cst_175 {dimension_numbers = #tpu.dot_dimension_numbers<[1], [0], [0], [1], [0, 0, 1, 1], [], []>} : vector<8x128xf32>, vector<128x512xf32>, vector<8x512xf32> -> vector<8x512xf32>
    %343 = arith.addf %339, %342 : vector<8x512xf32>
    %344 = arith.addf %343, %17 : vector<8x512xf32>
    %345 = vector.extract_strided_slice %344 {offsets = [0, 0], sizes = [8, 128], strides = [1, 1]} : vector<8x512xf32> to vector<8x128xf32>
    %346 = arith.negf %345 : vector<8x128xf32>
    %347 = math.exp %346 : vector<8x128xf32>
    %cst_176 = arith.constant 1.000000e+00 : f32
    %348 = vector.broadcast %cst_176 : f32 to vector<8x128xf32>
    %349 = arith.addf %348, %347 : vector<8x128xf32>
    %350 = arith.divf %348, %349 : vector<8x128xf32>
    %351 = vector.extract_strided_slice %344 {offsets = [0, 128], sizes = [8, 128], strides = [1, 1]} : vector<8x512xf32> to vector<8x128xf32>
    %352 = arith.negf %351 : vector<8x128xf32>
    %353 = math.exp %352 : vector<8x128xf32>
    %cst_177 = arith.constant 1.000000e+00 : f32
    %354 = vector.broadcast %cst_177 : f32 to vector<8x128xf32>
    %355 = arith.addf %354, %353 : vector<8x128xf32>
    %356 = arith.divf %354, %355 : vector<8x128xf32>
    %357 = vector.extract_strided_slice %344 {offsets = [0, 256], sizes = [8, 128], strides = [1, 1]} : vector<8x512xf32> to vector<8x128xf32>
    %358 = math.tanh %357 : vector<8x128xf32>
    %359 = vector.extract_strided_slice %344 {offsets = [0, 384], sizes = [8, 128], strides = [1, 1]} : vector<8x512xf32> to vector<8x128xf32>
    %360 = arith.negf %359 : vector<8x128xf32>
    %361 = math.exp %360 : vector<8x128xf32>
    %cst_178 = arith.constant 1.000000e+00 : f32
    %362 = vector.broadcast %cst_178 : f32 to vector<8x128xf32>
    %363 = arith.addf %362, %361 : vector<8x128xf32>
    %364 = arith.divf %362, %363 : vector<8x128xf32>
    %c0_179 = arith.constant 0 : index
    %c0_180 = arith.constant 0 : index
    %365 = vector.load %arg15[%c0_179, %c0_180] : memref<8x128xf32, #tpu.memory_space<vmem>>, vector<8x128xf32>
    %366 = arith.mulf %356, %365 : vector<8x128xf32>
    %367 = arith.mulf %350, %358 : vector<8x128xf32>
    %368 = arith.addf %366, %367 : vector<8x128xf32>
    %369 = math.tanh %368 : vector<8x128xf32>
    %370 = arith.mulf %364, %369 : vector<8x128xf32>
    %c0_181 = arith.constant 0 : index
    %c0_182 = arith.constant 0 : index
    %371 = vector.load %arg15[%c0_181, %c0_182] : memref<8x128xf32, #tpu.memory_space<vmem>>, vector<8x128xf32>
    tpu.vector_store %arg15[%c0_181, %c0_182], %368 {strides = array<i32>} : memref<8x128xf32, #tpu.memory_space<vmem>>, vector<8x128xf32>,
    %c0_183 = arith.constant 0 : index
    %c0_184 = arith.constant 0 : index
    %372 = vector.load %arg13[%c0_183, %c0_184] : memref<8x128xf32, #tpu.memory_space<vmem>>, vector<8x128xf32>
    tpu.vector_store %arg13[%c0_183, %c0_184], %370 {strides = array<i32>} : memref<8x128xf32, #tpu.memory_space<vmem>>, vector<8x128xf32>,
    %c5_i32 = arith.constant 5 : i32
    %c8_i32_185 = arith.constant 8 : i32
    %373 = arith.muli %c5_i32, %c8_i32_185 : i32
    %374 = tpu.assume_multiple %373, 8 : i32
    %375 = arith.index_cast %374 : i32 to index
    %c0_186 = arith.constant 0 : index
    %376 = vector.load %arg11[%375, %c0_186] : memref<64x512xf32, #tpu.memory_space<vmem>>, vector<8x512xf32>
    %c0_187 = arith.constant 0 : index
    %c0_188 = arith.constant 0 : index
    %377 = vector.load %arg12[%c0_187, %c0_188] : memref<8x128xf32, #tpu.memory_space<vmem>>, vector<8x128xf32>
    %c0_189 = arith.constant 0 : index
    %c0_190 = arith.constant 0 : index
    %378 = vector.load %arg3[%c0_189, %c0_190] : memref<128x512xf32, #tpu.memory_space<vmem>>, vector<128x512xf32>
    %cst_191 = arith.constant dense<0.000000e+00> : vector<8x512xf32>
    %379 = tpu.matmul %377, %378, %cst_191 {dimension_numbers = #tpu.dot_dimension_numbers<[1], [0], [0], [1], [0, 0, 1, 1], [], []>} : vector<8x128xf32>, vector<128x512xf32>, vector<8x512xf32> -> vector<8x512xf32>
    %380 = arith.addf %376, %379 : vector<8x512xf32>
    %381 = vector.extract_strided_slice %380 {offsets = [0, 0], sizes = [8, 128], strides = [1, 1]} : vector<8x512xf32> to vector<8x128xf32>
    %382 = arith.negf %381 : vector<8x128xf32>
    %383 = math.exp %382 : vector<8x128xf32>
    %cst_192 = arith.constant 1.000000e+00 : f32
    %384 = vector.broadcast %cst_192 : f32 to vector<8x128xf32>
    %385 = arith.addf %384, %383 : vector<8x128xf32>
    %386 = arith.divf %384, %385 : vector<8x128xf32>
    %387 = vector.extract_strided_slice %380 {offsets = [0, 128], sizes = [8, 128], strides = [1, 1]} : vector<8x512xf32> to vector<8x128xf32>
    %388 = arith.negf %387 : vector<8x128xf32>
    %389 = math.exp %388 : vector<8x128xf32>
    %cst_193 = arith.constant 1.000000e+00 : f32
    %390 = vector.broadcast %cst_193 : f32 to vector<8x128xf32>
    %391 = arith.addf %390, %389 : vector<8x128xf32>
    %392 = arith.divf %390, %391 : vector<8x128xf32>
    %393 = vector.extract_strided_slice %380 {offsets = [0, 256], sizes = [8, 128], strides = [1, 1]} : vector<8x512xf32> to vector<8x128xf32>
    %394 = math.tanh %393 : vector<8x128xf32>
    %395 = vector.extract_strided_slice %380 {offsets = [0, 384], sizes = [8, 128], strides = [1, 1]} : vector<8x512xf32> to vector<8x128xf32>
    %396 = arith.negf %395 : vector<8x128xf32>
    %397 = math.exp %396 : vector<8x128xf32>
    %cst_194 = arith.constant 1.000000e+00 : f32
    %398 = vector.broadcast %cst_194 : f32 to vector<8x128xf32>
    %399 = arith.addf %398, %397 : vector<8x128xf32>
    %400 = arith.divf %398, %399 : vector<8x128xf32>
    %c0_195 = arith.constant 0 : index
    %c0_196 = arith.constant 0 : index
    %401 = vector.load %arg14[%c0_195, %c0_196] : memref<8x128xf32, #tpu.memory_space<vmem>>, vector<8x128xf32>
    %402 = arith.mulf %392, %401 : vector<8x128xf32>
    %403 = arith.mulf %386, %394 : vector<8x128xf32>
    %404 = arith.addf %402, %403 : vector<8x128xf32>
    %405 = math.tanh %404 : vector<8x128xf32>
    %406 = arith.mulf %400, %405 : vector<8x128xf32>
    %c0_197 = arith.constant 0 : index
    %c0_198 = arith.constant 0 : index
    %407 = vector.load %arg14[%c0_197, %c0_198] : memref<8x128xf32, #tpu.memory_space<vmem>>, vector<8x128xf32>
    tpu.vector_store %arg14[%c0_197, %c0_198], %404 {strides = array<i32>} : memref<8x128xf32, #tpu.memory_space<vmem>>, vector<8x128xf32>,
    %c0_199 = arith.constant 0 : index
    %c0_200 = arith.constant 0 : index
    %408 = vector.load %arg12[%c0_199, %c0_200] : memref<8x128xf32, #tpu.memory_space<vmem>>, vector<8x128xf32>
    tpu.vector_store %arg12[%c0_199, %c0_200], %406 {strides = array<i32>} : memref<8x128xf32, #tpu.memory_space<vmem>>, vector<8x128xf32>,
    %c0_201 = arith.constant 0 : index
    %c0_202 = arith.constant 0 : index
    %409 = vector.load %arg5[%c0_201, %c0_202] : memref<128x512xf32, #tpu.memory_space<vmem>>, vector<128x512xf32>
    %cst_203 = arith.constant dense<0.000000e+00> : vector<8x512xf32>
    %410 = tpu.matmul %406, %409, %cst_203 {dimension_numbers = #tpu.dot_dimension_numbers<[1], [0], [0], [1], [0, 0, 1, 1], [], []>} : vector<8x128xf32>, vector<128x512xf32>, vector<8x512xf32> -> vector<8x512xf32>
    %c0_204 = arith.constant 0 : index
    %c0_205 = arith.constant 0 : index
    %411 = vector.load %arg13[%c0_204, %c0_205] : memref<8x128xf32, #tpu.memory_space<vmem>>, vector<8x128xf32>
    %c0_206 = arith.constant 0 : index
    %c0_207 = arith.constant 0 : index
    %412 = vector.load %arg6[%c0_206, %c0_207] : memref<128x512xf32, #tpu.memory_space<vmem>>, vector<128x512xf32>
    %cst_208 = arith.constant dense<0.000000e+00> : vector<8x512xf32>
    %413 = tpu.matmul %411, %412, %cst_208 {dimension_numbers = #tpu.dot_dimension_numbers<[1], [0], [0], [1], [0, 0, 1, 1], [], []>} : vector<8x128xf32>, vector<128x512xf32>, vector<8x512xf32> -> vector<8x512xf32>
    %414 = arith.addf %410, %413 : vector<8x512xf32>
    %415 = arith.addf %414, %17 : vector<8x512xf32>
    %416 = vector.extract_strided_slice %415 {offsets = [0, 0], sizes = [8, 128], strides = [1, 1]} : vector<8x512xf32> to vector<8x128xf32>
    %417 = arith.negf %416 : vector<8x128xf32>
    %418 = math.exp %417 : vector<8x128xf32>
    %cst_209 = arith.constant 1.000000e+00 : f32
    %419 = vector.broadcast %cst_209 : f32 to vector<8x128xf32>
    %420 = arith.addf %419, %418 : vector<8x128xf32>
    %421 = arith.divf %419, %420 : vector<8x128xf32>
    %422 = vector.extract_strided_slice %415 {offsets = [0, 128], sizes = [8, 128], strides = [1, 1]} : vector<8x512xf32> to vector<8x128xf32>
    %423 = arith.negf %422 : vector<8x128xf32>
    %424 = math.exp %423 : vector<8x128xf32>
    %cst_210 = arith.constant 1.000000e+00 : f32
    %425 = vector.broadcast %cst_210 : f32 to vector<8x128xf32>
    %426 = arith.addf %425, %424 : vector<8x128xf32>
    %427 = arith.divf %425, %426 : vector<8x128xf32>
    %428 = vector.extract_strided_slice %415 {offsets = [0, 256], sizes = [8, 128], strides = [1, 1]} : vector<8x512xf32> to vector<8x128xf32>
    %429 = math.tanh %428 : vector<8x128xf32>
    %430 = vector.extract_strided_slice %415 {offsets = [0, 384], sizes = [8, 128], strides = [1, 1]} : vector<8x512xf32> to vector<8x128xf32>
    %431 = arith.negf %430 : vector<8x128xf32>
    %432 = math.exp %431 : vector<8x128xf32>
    %cst_211 = arith.constant 1.000000e+00 : f32
    %433 = vector.broadcast %cst_211 : f32 to vector<8x128xf32>
    %434 = arith.addf %433, %432 : vector<8x128xf32>
    %435 = arith.divf %433, %434 : vector<8x128xf32>
    %c0_212 = arith.constant 0 : index
    %c0_213 = arith.constant 0 : index
    %436 = vector.load %arg15[%c0_212, %c0_213] : memref<8x128xf32, #tpu.memory_space<vmem>>, vector<8x128xf32>
    %437 = arith.mulf %427, %436 : vector<8x128xf32>
    %438 = arith.mulf %421, %429 : vector<8x128xf32>
    %439 = arith.addf %437, %438 : vector<8x128xf32>
    %440 = math.tanh %439 : vector<8x128xf32>
    %441 = arith.mulf %435, %440 : vector<8x128xf32>
    %c0_214 = arith.constant 0 : index
    %c0_215 = arith.constant 0 : index
    %442 = vector.load %arg15[%c0_214, %c0_215] : memref<8x128xf32, #tpu.memory_space<vmem>>, vector<8x128xf32>
    tpu.vector_store %arg15[%c0_214, %c0_215], %439 {strides = array<i32>} : memref<8x128xf32, #tpu.memory_space<vmem>>, vector<8x128xf32>,
    %c0_216 = arith.constant 0 : index
    %c0_217 = arith.constant 0 : index
    %443 = vector.load %arg13[%c0_216, %c0_217] : memref<8x128xf32, #tpu.memory_space<vmem>>, vector<8x128xf32>
    tpu.vector_store %arg13[%c0_216, %c0_217], %441 {strides = array<i32>} : memref<8x128xf32, #tpu.memory_space<vmem>>, vector<8x128xf32>,
    %c6_i32 = arith.constant 6 : i32
    %c8_i32_218 = arith.constant 8 : i32
    %444 = arith.muli %c6_i32, %c8_i32_218 : i32
    %445 = tpu.assume_multiple %444, 8 : i32
    %446 = arith.index_cast %445 : i32 to index
    %c0_219 = arith.constant 0 : index
    %447 = vector.load %arg11[%446, %c0_219] : memref<64x512xf32, #tpu.memory_space<vmem>>, vector<8x512xf32>
    %c0_220 = arith.constant 0 : index
    %c0_221 = arith.constant 0 : index
    %448 = vector.load %arg12[%c0_220, %c0_221] : memref<8x128xf32, #tpu.memory_space<vmem>>, vector<8x128xf32>
    %c0_222 = arith.constant 0 : index
    %c0_223 = arith.constant 0 : index
    %449 = vector.load %arg3[%c0_222, %c0_223] : memref<128x512xf32, #tpu.memory_space<vmem>>, vector<128x512xf32>
    %cst_224 = arith.constant dense<0.000000e+00> : vector<8x512xf32>
    %450 = tpu.matmul %448, %449, %cst_224 {dimension_numbers = #tpu.dot_dimension_numbers<[1], [0], [0], [1], [0, 0, 1, 1], [], []>} : vector<8x128xf32>, vector<128x512xf32>, vector<8x512xf32> -> vector<8x512xf32>
    %451 = arith.addf %447, %450 : vector<8x512xf32>
    %452 = vector.extract_strided_slice %451 {offsets = [0, 0], sizes = [8, 128], strides = [1, 1]} : vector<8x512xf32> to vector<8x128xf32>
    %453 = arith.negf %452 : vector<8x128xf32>
    %454 = math.exp %453 : vector<8x128xf32>
    %cst_225 = arith.constant 1.000000e+00 : f32
    %455 = vector.broadcast %cst_225 : f32 to vector<8x128xf32>
    %456 = arith.addf %455, %454 : vector<8x128xf32>
    %457 = arith.divf %455, %456 : vector<8x128xf32>
    %458 = vector.extract_strided_slice %451 {offsets = [0, 128], sizes = [8, 128], strides = [1, 1]} : vector<8x512xf32> to vector<8x128xf32>
    %459 = arith.negf %458 : vector<8x128xf32>
    %460 = math.exp %459 : vector<8x128xf32>
    %cst_226 = arith.constant 1.000000e+00 : f32
    %461 = vector.broadcast %cst_226 : f32 to vector<8x128xf32>
    %462 = arith.addf %461, %460 : vector<8x128xf32>
    %463 = arith.divf %461, %462 : vector<8x128xf32>
    %464 = vector.extract_strided_slice %451 {offsets = [0, 256], sizes = [8, 128], strides = [1, 1]} : vector<8x512xf32> to vector<8x128xf32>
    %465 = math.tanh %464 : vector<8x128xf32>
    %466 = vector.extract_strided_slice %451 {offsets = [0, 384], sizes = [8, 128], strides = [1, 1]} : vector<8x512xf32> to vector<8x128xf32>
    %467 = arith.negf %466 : vector<8x128xf32>
    %468 = math.exp %467 : vector<8x128xf32>
    %cst_227 = arith.constant 1.000000e+00 : f32
    %469 = vector.broadcast %cst_227 : f32 to vector<8x128xf32>
    %470 = arith.addf %469, %468 : vector<8x128xf32>
    %471 = arith.divf %469, %470 : vector<8x128xf32>
    %c0_228 = arith.constant 0 : index
    %c0_229 = arith.constant 0 : index
    %472 = vector.load %arg14[%c0_228, %c0_229] : memref<8x128xf32, #tpu.memory_space<vmem>>, vector<8x128xf32>
    %473 = arith.mulf %463, %472 : vector<8x128xf32>
    %474 = arith.mulf %457, %465 : vector<8x128xf32>
    %475 = arith.addf %473, %474 : vector<8x128xf32>
    %476 = math.tanh %475 : vector<8x128xf32>
    %477 = arith.mulf %471, %476 : vector<8x128xf32>
    %c0_230 = arith.constant 0 : index
    %c0_231 = arith.constant 0 : index
    %478 = vector.load %arg14[%c0_230, %c0_231] : memref<8x128xf32, #tpu.memory_space<vmem>>, vector<8x128xf32>
    tpu.vector_store %arg14[%c0_230, %c0_231], %475 {strides = array<i32>} : memref<8x128xf32, #tpu.memory_space<vmem>>, vector<8x128xf32>,
    %c0_232 = arith.constant 0 : index
    %c0_233 = arith.constant 0 : index
    %479 = vector.load %arg12[%c0_232, %c0_233] : memref<8x128xf32, #tpu.memory_space<vmem>>, vector<8x128xf32>
    tpu.vector_store %arg12[%c0_232, %c0_233], %477 {strides = array<i32>} : memref<8x128xf32, #tpu.memory_space<vmem>>, vector<8x128xf32>,
    %c0_234 = arith.constant 0 : index
    %c0_235 = arith.constant 0 : index
    %480 = vector.load %arg5[%c0_234, %c0_235] : memref<128x512xf32, #tpu.memory_space<vmem>>, vector<128x512xf32>
    %cst_236 = arith.constant dense<0.000000e+00> : vector<8x512xf32>
    %481 = tpu.matmul %477, %480, %cst_236 {dimension_numbers = #tpu.dot_dimension_numbers<[1], [0], [0], [1], [0, 0, 1, 1], [], []>} : vector<8x128xf32>, vector<128x512xf32>, vector<8x512xf32> -> vector<8x512xf32>
    %c0_237 = arith.constant 0 : index
    %c0_238 = arith.constant 0 : index
    %482 = vector.load %arg13[%c0_237, %c0_238] : memref<8x128xf32, #tpu.memory_space<vmem>>, vector<8x128xf32>
    %c0_239 = arith.constant 0 : index
    %c0_240 = arith.constant 0 : index
    %483 = vector.load %arg6[%c0_239, %c0_240] : memref<128x512xf32, #tpu.memory_space<vmem>>, vector<128x512xf32>
    %cst_241 = arith.constant dense<0.000000e+00> : vector<8x512xf32>
    %484 = tpu.matmul %482, %483, %cst_241 {dimension_numbers = #tpu.dot_dimension_numbers<[1], [0], [0], [1], [0, 0, 1, 1], [], []>} : vector<8x128xf32>, vector<128x512xf32>, vector<8x512xf32> -> vector<8x512xf32>
    %485 = arith.addf %481, %484 : vector<8x512xf32>
    %486 = arith.addf %485, %17 : vector<8x512xf32>
    %487 = vector.extract_strided_slice %486 {offsets = [0, 0], sizes = [8, 128], strides = [1, 1]} : vector<8x512xf32> to vector<8x128xf32>
    %488 = arith.negf %487 : vector<8x128xf32>
    %489 = math.exp %488 : vector<8x128xf32>
    %cst_242 = arith.constant 1.000000e+00 : f32
    %490 = vector.broadcast %cst_242 : f32 to vector<8x128xf32>
    %491 = arith.addf %490, %489 : vector<8x128xf32>
    %492 = arith.divf %490, %491 : vector<8x128xf32>
    %493 = vector.extract_strided_slice %486 {offsets = [0, 128], sizes = [8, 128], strides = [1, 1]} : vector<8x512xf32> to vector<8x128xf32>
    %494 = arith.negf %493 : vector<8x128xf32>
    %495 = math.exp %494 : vector<8x128xf32>
    %cst_243 = arith.constant 1.000000e+00 : f32
    %496 = vector.broadcast %cst_243 : f32 to vector<8x128xf32>
    %497 = arith.addf %496, %495 : vector<8x128xf32>
    %498 = arith.divf %496, %497 : vector<8x128xf32>
    %499 = vector.extract_strided_slice %486 {offsets = [0, 256], sizes = [8, 128], strides = [1, 1]} : vector<8x512xf32> to vector<8x128xf32>
    %500 = math.tanh %499 : vector<8x128xf32>
    %501 = vector.extract_strided_slice %486 {offsets = [0, 384], sizes = [8, 128], strides = [1, 1]} : vector<8x512xf32> to vector<8x128xf32>
    %502 = arith.negf %501 : vector<8x128xf32>
    %503 = math.exp %502 : vector<8x128xf32>
    %cst_244 = arith.constant 1.000000e+00 : f32
    %504 = vector.broadcast %cst_244 : f32 to vector<8x128xf32>
    %505 = arith.addf %504, %503 : vector<8x128xf32>
    %506 = arith.divf %504, %505 : vector<8x128xf32>
    %c0_245 = arith.constant 0 : index
    %c0_246 = arith.constant 0 : index
    %507 = vector.load %arg15[%c0_245, %c0_246] : memref<8x128xf32, #tpu.memory_space<vmem>>, vector<8x128xf32>
    %508 = arith.mulf %498, %507 : vector<8x128xf32>
    %509 = arith.mulf %492, %500 : vector<8x128xf32>
    %510 = arith.addf %508, %509 : vector<8x128xf32>
    %511 = math.tanh %510 : vector<8x128xf32>
    %512 = arith.mulf %506, %511 : vector<8x128xf32>
    %c0_247 = arith.constant 0 : index
    %c0_248 = arith.constant 0 : index
    %513 = vector.load %arg15[%c0_247, %c0_248] : memref<8x128xf32, #tpu.memory_space<vmem>>, vector<8x128xf32>
    tpu.vector_store %arg15[%c0_247, %c0_248], %510 {strides = array<i32>} : memref<8x128xf32, #tpu.memory_space<vmem>>, vector<8x128xf32>,
    %c0_249 = arith.constant 0 : index
    %c0_250 = arith.constant 0 : index
    %514 = vector.load %arg13[%c0_249, %c0_250] : memref<8x128xf32, #tpu.memory_space<vmem>>, vector<8x128xf32>
    tpu.vector_store %arg13[%c0_249, %c0_250], %512 {strides = array<i32>} : memref<8x128xf32, #tpu.memory_space<vmem>>, vector<8x128xf32>,
    %c7_i32 = arith.constant 7 : i32
    %c8_i32_251 = arith.constant 8 : i32
    %515 = arith.muli %c7_i32, %c8_i32_251 : i32
    %516 = tpu.assume_multiple %515, 8 : i32
    %517 = arith.index_cast %516 : i32 to index
    %c0_252 = arith.constant 0 : index
    %518 = vector.load %arg11[%517, %c0_252] : memref<64x512xf32, #tpu.memory_space<vmem>>, vector<8x512xf32>
    %c0_253 = arith.constant 0 : index
    %c0_254 = arith.constant 0 : index
    %519 = vector.load %arg12[%c0_253, %c0_254] : memref<8x128xf32, #tpu.memory_space<vmem>>, vector<8x128xf32>
    %c0_255 = arith.constant 0 : index
    %c0_256 = arith.constant 0 : index
    %520 = vector.load %arg3[%c0_255, %c0_256] : memref<128x512xf32, #tpu.memory_space<vmem>>, vector<128x512xf32>
    %cst_257 = arith.constant dense<0.000000e+00> : vector<8x512xf32>
    %521 = tpu.matmul %519, %520, %cst_257 {dimension_numbers = #tpu.dot_dimension_numbers<[1], [0], [0], [1], [0, 0, 1, 1], [], []>} : vector<8x128xf32>, vector<128x512xf32>, vector<8x512xf32> -> vector<8x512xf32>
    %522 = arith.addf %518, %521 : vector<8x512xf32>
    %523 = vector.extract_strided_slice %522 {offsets = [0, 0], sizes = [8, 128], strides = [1, 1]} : vector<8x512xf32> to vector<8x128xf32>
    %524 = arith.negf %523 : vector<8x128xf32>
    %525 = math.exp %524 : vector<8x128xf32>
    %cst_258 = arith.constant 1.000000e+00 : f32
    %526 = vector.broadcast %cst_258 : f32 to vector<8x128xf32>
    %527 = arith.addf %526, %525 : vector<8x128xf32>
    %528 = arith.divf %526, %527 : vector<8x128xf32>
    %529 = vector.extract_strided_slice %522 {offsets = [0, 128], sizes = [8, 128], strides = [1, 1]} : vector<8x512xf32> to vector<8x128xf32>
    %530 = arith.negf %529 : vector<8x128xf32>
    %531 = math.exp %530 : vector<8x128xf32>
    %cst_259 = arith.constant 1.000000e+00 : f32
    %532 = vector.broadcast %cst_259 : f32 to vector<8x128xf32>
    %533 = arith.addf %532, %531 : vector<8x128xf32>
    %534 = arith.divf %532, %533 : vector<8x128xf32>
    %535 = vector.extract_strided_slice %522 {offsets = [0, 256], sizes = [8, 128], strides = [1, 1]} : vector<8x512xf32> to vector<8x128xf32>
    %536 = math.tanh %535 : vector<8x128xf32>
    %537 = vector.extract_strided_slice %522 {offsets = [0, 384], sizes = [8, 128], strides = [1, 1]} : vector<8x512xf32> to vector<8x128xf32>
    %538 = arith.negf %537 : vector<8x128xf32>
    %539 = math.exp %538 : vector<8x128xf32>
    %cst_260 = arith.constant 1.000000e+00 : f32
    %540 = vector.broadcast %cst_260 : f32 to vector<8x128xf32>
    %541 = arith.addf %540, %539 : vector<8x128xf32>
    %542 = arith.divf %540, %541 : vector<8x128xf32>
    %c0_261 = arith.constant 0 : index
    %c0_262 = arith.constant 0 : index
    %543 = vector.load %arg14[%c0_261, %c0_262] : memref<8x128xf32, #tpu.memory_space<vmem>>, vector<8x128xf32>
    %544 = arith.mulf %534, %543 : vector<8x128xf32>
    %545 = arith.mulf %528, %536 : vector<8x128xf32>
    %546 = arith.addf %544, %545 : vector<8x128xf32>
    %547 = math.tanh %546 : vector<8x128xf32>
    %548 = arith.mulf %542, %547 : vector<8x128xf32>
    %c0_263 = arith.constant 0 : index
    %c0_264 = arith.constant 0 : index
    %549 = vector.load %arg14[%c0_263, %c0_264] : memref<8x128xf32, #tpu.memory_space<vmem>>, vector<8x128xf32>
    tpu.vector_store %arg14[%c0_263, %c0_264], %546 {strides = array<i32>} : memref<8x128xf32, #tpu.memory_space<vmem>>, vector<8x128xf32>,
    %c0_265 = arith.constant 0 : index
    %c0_266 = arith.constant 0 : index
    %550 = vector.load %arg12[%c0_265, %c0_266] : memref<8x128xf32, #tpu.memory_space<vmem>>, vector<8x128xf32>
    tpu.vector_store %arg12[%c0_265, %c0_266], %548 {strides = array<i32>} : memref<8x128xf32, #tpu.memory_space<vmem>>, vector<8x128xf32>,
    %c0_267 = arith.constant 0 : index
    %c0_268 = arith.constant 0 : index
    %551 = vector.load %arg5[%c0_267, %c0_268] : memref<128x512xf32, #tpu.memory_space<vmem>>, vector<128x512xf32>
    %cst_269 = arith.constant dense<0.000000e+00> : vector<8x512xf32>
    %552 = tpu.matmul %548, %551, %cst_269 {dimension_numbers = #tpu.dot_dimension_numbers<[1], [0], [0], [1], [0, 0, 1, 1], [], []>} : vector<8x128xf32>, vector<128x512xf32>, vector<8x512xf32> -> vector<8x512xf32>
    %c0_270 = arith.constant 0 : index
    %c0_271 = arith.constant 0 : index
    %553 = vector.load %arg13[%c0_270, %c0_271] : memref<8x128xf32, #tpu.memory_space<vmem>>, vector<8x128xf32>
    %c0_272 = arith.constant 0 : index
    %c0_273 = arith.constant 0 : index
    %554 = vector.load %arg6[%c0_272, %c0_273] : memref<128x512xf32, #tpu.memory_space<vmem>>, vector<128x512xf32>
    %cst_274 = arith.constant dense<0.000000e+00> : vector<8x512xf32>
    %555 = tpu.matmul %553, %554, %cst_274 {dimension_numbers = #tpu.dot_dimension_numbers<[1], [0], [0], [1], [0, 0, 1, 1], [], []>} : vector<8x128xf32>, vector<128x512xf32>, vector<8x512xf32> -> vector<8x512xf32>
    %556 = arith.addf %552, %555 : vector<8x512xf32>
    %557 = arith.addf %556, %17 : vector<8x512xf32>
    %558 = vector.extract_strided_slice %557 {offsets = [0, 0], sizes = [8, 128], strides = [1, 1]} : vector<8x512xf32> to vector<8x128xf32>
    %559 = arith.negf %558 : vector<8x128xf32>
    %560 = math.exp %559 : vector<8x128xf32>
    %cst_275 = arith.constant 1.000000e+00 : f32
    %561 = vector.broadcast %cst_275 : f32 to vector<8x128xf32>
    %562 = arith.addf %561, %560 : vector<8x128xf32>
    %563 = arith.divf %561, %562 : vector<8x128xf32>
    %564 = vector.extract_strided_slice %557 {offsets = [0, 128], sizes = [8, 128], strides = [1, 1]} : vector<8x512xf32> to vector<8x128xf32>
    %565 = arith.negf %564 : vector<8x128xf32>
    %566 = math.exp %565 : vector<8x128xf32>
    %cst_276 = arith.constant 1.000000e+00 : f32
    %567 = vector.broadcast %cst_276 : f32 to vector<8x128xf32>
    %568 = arith.addf %567, %566 : vector<8x128xf32>
    %569 = arith.divf %567, %568 : vector<8x128xf32>
    %570 = vector.extract_strided_slice %557 {offsets = [0, 256], sizes = [8, 128], strides = [1, 1]} : vector<8x512xf32> to vector<8x128xf32>
    %571 = math.tanh %570 : vector<8x128xf32>
    %572 = vector.extract_strided_slice %557 {offsets = [0, 384], sizes = [8, 128], strides = [1, 1]} : vector<8x512xf32> to vector<8x128xf32>
    %573 = arith.negf %572 : vector<8x128xf32>
    %574 = math.exp %573 : vector<8x128xf32>
    %cst_277 = arith.constant 1.000000e+00 : f32
    %575 = vector.broadcast %cst_277 : f32 to vector<8x128xf32>
    %576 = arith.addf %575, %574 : vector<8x128xf32>
    %577 = arith.divf %575, %576 : vector<8x128xf32>
    %c0_278 = arith.constant 0 : index
    %c0_279 = arith.constant 0 : index
    %578 = vector.load %arg15[%c0_278, %c0_279] : memref<8x128xf32, #tpu.memory_space<vmem>>, vector<8x128xf32>
    %579 = arith.mulf %569, %578 : vector<8x128xf32>
    %580 = arith.mulf %563, %571 : vector<8x128xf32>
    %581 = arith.addf %579, %580 : vector<8x128xf32>
    %582 = math.tanh %581 : vector<8x128xf32>
    %583 = arith.mulf %577, %582 : vector<8x128xf32>
    %c0_280 = arith.constant 0 : index
    %c0_281 = arith.constant 0 : index
    %584 = vector.load %arg15[%c0_280, %c0_281] : memref<8x128xf32, #tpu.memory_space<vmem>>, vector<8x128xf32>
    tpu.vector_store %arg15[%c0_280, %c0_281], %581 {strides = array<i32>} : memref<8x128xf32, #tpu.memory_space<vmem>>, vector<8x128xf32>,
    %c0_282 = arith.constant 0 : index
    %c0_283 = arith.constant 0 : index
    %585 = vector.load %arg13[%c0_282, %c0_283] : memref<8x128xf32, #tpu.memory_space<vmem>>, vector<8x128xf32>
    tpu.vector_store %arg13[%c0_282, %c0_283], %583 {strides = array<i32>} : memref<8x128xf32, #tpu.memory_space<vmem>>, vector<8x128xf32>,
    %c8_i32_284 = arith.constant 8 : i32
    %c0_285 = arith.constant 0 : index
    %c0_286 = arith.constant 0 : index
    %586 = vector.load %arg13[%c0_285, %c0_286] : memref<8x128xf32, #tpu.memory_space<vmem>>, vector<8x128xf32>
    %c0_287 = arith.constant 0 : index
    %c0_288 = arith.constant 0 : index
    %587 = vector.load %arg8[%c0_287, %c0_288] : memref<1x128xf32, #tpu.memory_space<vmem>>, vector<1x128xf32>
    %588 = vector.broadcast %587 : vector<1x128xf32> to vector<8x128xf32>
    %589 = arith.mulf %586, %588 : vector<8x128xf32>
    %cst_289 = arith.constant dense<0.000000e+00> : vector<8xf32>
    %590 = vector.multi_reduction <add>, %589, %cst_289 [1] : vector<8x128xf32> to vector<8xf32>
    %591 = vector.shape_cast %590 : vector<8xf32> to vector<8x1xf32>
    %c0_290 = arith.constant 0 : index
    %c0_291 = arith.constant 0 : index
    %592 = vector.load %arg9[%c0_290, %c0_291] : memref<1x1xf32, #tpu.memory_space<vmem>>, vector<1x1xf32>
    %593 = vector.broadcast %592 : vector<1x1xf32> to vector<8x1xf32>
    %594 = arith.addf %591, %593 : vector<8x1xf32>
    %c0_292 = arith.constant 0 : index
    %c0_293 = arith.constant 0 : index
    %595 = vector.load %arg10[%c0_292, %c0_293] : memref<8x1xf32, #tpu.memory_space<vmem>>, vector<8x1xf32>
    tpu.vector_store %arg10[%c0_292, %c0_293], %594 {strides = array<i32>} : memref<8x1xf32, #tpu.memory_space<vmem>>, vector<8x1xf32>,
    return
  }
  func.func @transform_0(%arg0: i32) -> (i32, i32) {
    %c0_i32 = arith.constant 0 : i32
    %c0_i32_0 = arith.constant 0 : i32
    %c0_i32_1 = arith.constant 0 : i32
    return %c0_i32, %c0_i32_0 : i32, i32
  }
  func.func @transform_1(%arg0: i32) -> (i32, i32) {
    %c0_i32 = arith.constant 0 : i32
    %c0_i32_0 = arith.constant 0 : i32
    %c0_i32_1 = arith.constant 0 : i32
    return %c0_i32, %c0_i32_0 : i32, i32
  }
  func.func @transform_2(%arg0: i32) -> (i32, i32) {
    %c0_i32 = arith.constant 0 : i32
    %c0_i32_0 = arith.constant 0 : i32
    %c0_i32_1 = arith.constant 0 : i32
    return %c0_i32, %c0_i32_0 : i32, i32
  }
  func.func @transform_3(%arg0: i32) -> (i32, i32) {
    %c0_i32 = arith.constant 0 : i32
    %c0_i32_0 = arith.constant 0 : i32
    %c0_i32_1 = arith.constant 0 : i32
    return %c0_i32, %c0_i32_0 : i32, i32
  }
  func.func @transform_4(%arg0: i32) -> (i32, i32) {
    %c0_i32 = arith.constant 0 : i32
    %c0_i32_0 = arith.constant 0 : i32
    %c0_i32_1 = arith.constant 0 : i32
    return %c0_i32, %c0_i32_0 : i32, i32
  }
  func.func @transform_5(%arg0: i32) -> (i32, i32) {
    %c0_i32 = arith.constant 0 : i32
    %c0_i32_0 = arith.constant 0 : i32
    %c0_i32_1 = arith.constant 0 : i32
    return %c0_i32, %c0_i32_0 : i32, i32
  }
  func.func @transform_6(%arg0: i32) -> (i32, i32) {
    %c0_i32 = arith.constant 0 : i32
    %c0_i32_0 = arith.constant 0 : i32
    %c0_i32_1 = arith.constant 0 : i32
    return %c0_i32, %c0_i32_0 : i32, i32
  }
  func.func @transform_7(%arg0: i32) -> (i32, i32) {
    %c0_i32 = arith.constant 0 : i32
    %c0_i32_0 = arith.constant 0 : i32
    %c0_i32_1 = arith.constant 0 : i32
    return %c0_i32, %c0_i32_0 : i32, i32
  }
  func.func @transform_8(%arg0: i32) -> (i32, i32) {
    %c0_i32 = arith.constant 0 : i32
    %c0_i32_0 = arith.constant 0 : i32
    %c0_i32_1 = arith.constant 0 : i32
    return %c0_i32, %c0_i32_0 : i32, i32
  }
  func.func @transform_9(%arg0: i32) -> (i32, i32) {
    %c0_i32 = arith.constant 0 : i32
    %c0_i32_0 = arith.constant 0 : i32
    %c0_i32_1 = arith.constant 0 : i32
    return %c0_i32, %c0_i32_0 : i32, i32
  }
}

</mosaic_0001>

<llo_original>
// kernel: stock_lstm_forward.1
$region0: #{stock_lstm_forward.1}
  #allocation0 [shape = 'u32[]', space=smem, size = 0x4, offset = 0x4, fixed_abs, tag = 'smem constant byte address 0x4 - core index']
  #allocation1 [shape = 'u32[72,128]{1,0:T(1,128)}', space=vmem, size = 0x9000, scoped, tag = 'internal scratch']
  #allocation2 [shape = 'f32[64,512]{1,0:T(8,128)}', space=vmem, size = 0x20000, scoped, tag = 'scratch operand']
  #allocation3 [shape = 'f32[8,128]{1,0:T(8,128)}', space=vmem, size = 0x1000, scoped, tag = 'scratch operand']
  #allocation4 [shape = 'f32[8,128]{1,0:T(8,128)}', space=vmem, size = 0x1000, scoped, tag = 'scratch operand']
  #allocation5 [shape = 'f32[8,128]{1,0:T(8,128)}', space=vmem, size = 0x1000, scoped, tag = 'scratch operand']
  #allocation6 [shape = 'f32[8,128]{1,0:T(8,128)}', space=vmem, size = 0x1000, scoped, tag = 'scratch operand']
  #allocation7 [shape = 'f32[1,1]{1,0:T(1,128)S(1)}', space=vmem, size = 0x200, scoped, tag = 'scoped memory for stock_lstm_forward.1']
  %s0 = inlined_call_operand.vmem [shape: f32[64,16], index: 0, kind: input, shape index: {}]
  %s1 = inlined_call_operand.vmem [shape: f32[16,512], index: 1, kind: input, shape index: {}]
  %s2 = inlined_call_operand.vmem [shape: f32[128,512], index: 2, kind: input, shape index: {}]
  %s3 = inlined_call_operand.vmem [shape: f32[1,512], index: 3, kind: input, shape index: {}]
  %s4 = inlined_call_operand.vmem [shape: f32[128,512], index: 4, kind: input, shape index: {}]
  %s5 = inlined_call_operand.vmem [shape: f32[128,512], index: 5, kind: input, shape index: {}]
  %s6 = inlined_call_operand.vmem [shape: f32[1,512], index: 6, kind: input, shape index: {}]
  %s7 = inlined_call_operand.vmem [shape: f32[1,128], index: 7, kind: input, shape index: {}]
  %s8 = inlined_call_operand.<no memory space> [shape: f32[1,1], index: 8, kind: input, shape index: {}]
  %s9 = inlined_call_operand.vmem [shape: f32[8,1], index: 9, kind: output, shape index: {}]
  %s10 = sld [smem:[#allocation0]]
  $region46: #{stock_lstm_forward.1} parent=0
    _
  %s12 = ssub.s32 1, %s10
  %s13 = scalar_select 0, %s12, %s10
  %v14 = vstv %s8
  %15 = vst [vmem:[#allocation7] sm:$0x1] %v14
  // Predicated region
  $region2: #{stock_lstm_forward.1} parent=0 // pred_check
    _
  $region3: #{stock_lstm_forward.1} parent=0 // pred_check_branch
    %17 = sbr.rel (0) target = $region5
  $region4: #{stock_lstm_forward.1} parent=0 // pred_region
    _
  $region5: #{stock_lstm_forward.1} parent=0 // pred_fallthru
    _
  // Predicated region
  $region6: #{stock_lstm_forward.1} parent=0 // pred_check
    _
  $region7: #{stock_lstm_forward.1} parent=0 // pred_check_branch
    %19 = sbr.rel (0) target = $region9
  $region8: #{stock_lstm_forward.1} parent=0 // pred_region
    _
  $region9: #{stock_lstm_forward.1} parent=0 // pred_fallthru
    _
  // Predicated region
  $region10: #{stock_lstm_forward.1} parent=0 // pred_check
    _
  $region11: #{stock_lstm_forward.1} parent=0 // pred_check_branch
    %21 = sbr.rel (0) target = $region13
  $region12: #{stock_lstm_forward.1} parent=0 // pred_region
    _
  $region13: #{stock_lstm_forward.1} parent=0 // pred_fallthru
    _
  // Predicated region
  $region14: #{stock_lstm_forward.1} parent=0 // pred_check
    _
  $region15: #{stock_lstm_forward.1} parent=0 // pred_check_branch
    %23 = sbr.rel (0) target = $region17
  $region16: #{stock_lstm_forward.1} parent=0 // pred_region
    _
  $region17: #{stock_lstm_forward.1} parent=0 // pred_fallthru
    _
  // Predicated region
  $region18: #{stock_lstm_forward.1} parent=0 // pred_check
    _
  $region19: #{stock_lstm_forward.1} parent=0 // pred_check_branch
    %25 = sbr.rel (0) target = $region21
  $region20: #{stock_lstm_forward.1} parent=0 // pred_region
    _
  $region21: #{stock_lstm_forward.1} parent=0 // pred_fallthru
    _
  // Predicated region
  $region22: #{stock_lstm_forward.1} parent=0 // pred_check
    _
  $region23: #{stock_lstm_forward.1} parent=0 // pred_check_branch
    %27 = sbr.rel (0) target = $region25
  $region24: #{stock_lstm_forward.1} parent=0 // pred_region
    _
  $region25: #{stock_lstm_forward.1} parent=0 // pred_fallthru
    _
  // Predicated region
  $region26: #{stock_lstm_forward.1} parent=0 // pred_check
    _
  $region27: #{stock_lstm_forward.1} parent=0 // pred_check_branch
    %29 = sbr.rel (0) target = $region29
  $region28: #{stock_lstm_forward.1} parent=0 // pred_region
    _
  $region29: #{stock_lstm_forward.1} parent=0 // pred_fallthru
    _
  // Predicated region
  $region30: #{stock_lstm_forward.1} parent=0 // pred_check
    _
  $region31: #{stock_lstm_forward.1} parent=0 // pred_check_branch
    %31 = sbr.rel (0) target = $region33
  $region32: #{stock_lstm_forward.1} parent=0 // pred_region
    _
  $region33: #{stock_lstm_forward.1} parent=0 // pred_fallthru
    _
  // Predicated region
  $region34: #{stock_lstm_forward.1} parent=0 // pred_check
    _
  $region35: #{stock_lstm_forward.1} parent=0 // pred_check_branch
    %33 = sbr.rel (0) target = $region37
  $region36: #{stock_lstm_forward.1} parent=0 // pred_region
    _
  $region37: #{stock_lstm_forward.1} parent=0 // pred_fallthru
    _
  %v34 = vld [vmem:[%s0] sm:$0xff]
  %v35 = vld [vmem:[%s0 + $0x8] sm:$0xff]
  %v36 = vld [vmem:[%s0 + $0x10] sm:$0xff]
  %v37 = vld [vmem:[%s0 + $0x18] sm:$0xff]
  %v38 = vld [vmem:[%s0 + $0x20] sm:$0xff]
  %v39 = vld [vmem:[%s0 + $0x28] sm:$0xff]
  %v40 = vld [vmem:[%s0 + $0x30] sm:$0xff]
  %v41 = vld [vmem:[%s0 + $0x38] sm:$0xff]
  %v42 = vld [vmem:[%s1] sm:$0xff]
  %v43 = vld [vmem:[%s1 + $0x8] sm:$0xff]
  %v44 = vld [vmem:[%s1 + $0x10] sm:$0xff]
  %v45 = vld [vmem:[%s1 + $0x18] sm:$0xff]
  %v46 = vld [vmem:[%s1 + $0x20] sm:$0xff]
  %v47 = vld [vmem:[%s1 + $0x28] sm:$0xff]
  %v48 = vld [vmem:[%s1 + $0x30] sm:$0xff]
  %v49 = vld [vmem:[%s1 + $0x38] sm:$0xff]
  %v50 = vld [vmem:[%s3] sm:$0xf]
  %v52 = vperm.slane %v50, 0
  %v53 = vperm.slane %v50, 1
  %v54 = vperm.slane %v50, 2
  %v55 = vperm.slane %v50, 3
  %vm60 = vcmask 130048
  %v62 = vsel %vm60, %v34, 0
  %v65 = vsel %vm60, %v35, 0
  %v68 = vsel %vm60, %v36, 0
  %v71 = vsel %vm60, %v37, 0
  %v74 = vsel %vm60, %v38, 0
  %v77 = vsel %vm60, %v39, 0
  %v80 = vsel %vm60, %v40, 0
  %v83 = vsel %vm60, %v41, 0
  %85 = vmatpush.msra.mxu0 0.0
  %86 = vmatpush.msra.mxu0 0.0
  %87 = vmatpush.msra.mxu0 0.0
  %88 = vmatpush.msra.mxu0 0.0
  %89 = vmatpush.msra.mxu0 0.0
  %90 = vmatpush.msra.mxu0 0.0
  %91 = vmatpush.msra.mxu0 0.0
  %92 = vmatpush.msra.mxu0 0.0
  %93 = vmatpush.msra.mxu0 0.0
  %94 = vmatpush.msra.mxu0 0.0
  %95 = vmatpush.msra.mxu0 0.0
  %96 = vmatpush.msra.mxu0 0.0
  %97 = vmatpush.msra.mxu0 0.0
  %98 = vmatpush.msra.mxu0 0.0
  %99 = vmatpush.msra.mxu0 %v46
  %100 = vmatpush.msra.mxu0 %v42
  %101 = vmatmul.f32.gmra.mxu0 %v62
  %v102 = vpop.f32.mrf.mxu0
  %v103 = vadd.f32 %v52, %v102
  %104 = vmatmul.f32.gmra.mxu0 %v65
  %v105 = vpop.f32.mrf.mxu0
  %v106 = vadd.f32 %v52, %v105
  %107 = vmatmul.f32.gmra.mxu0 %v68
  %v108 = vpop.f32.mrf.mxu0
  %v109 = vadd.f32 %v52, %v108
  %110 = vmatmul.f32.gmra.mxu0 %v71
  %v111 = vpop.f32.mrf.mxu0
  %v112 = vadd.f32 %v52, %v111
  %113 = vmatmul.f32.gmra.mxu0 %v74
  %v114 = vpop.f32.mrf.mxu0
  %v115 = vadd.f32 %v52, %v114
  %116 = vmatmul.f32.gmra.mxu0 %v77
  %v117 = vpop.f32.mrf.mxu0
  %v118 = vadd.f32 %v52, %v117
  %119 = vmatmul.f32.gmra.mxu0 %v80
  %v120 = vpop.f32.mrf.mxu0
  %v121 = vadd.f32 %v52, %v120
  %122 = vmatmul.f32.gmra.mxu0 %v83
  %v123 = vpop.f32.mrf.mxu0
  %v124 = vadd.f32 %v52, %v123
  %125 = vdwg.mxu0
  %126 = vmatpush.msra.mxu0 0.0
  %127 = vmatpush.msra.mxu0 0.0
  %128 = vmatpush.msra.mxu0 0.0
  %129 = vmatpush.msra.mxu0 0.0
  %130 = vmatpush.msra.mxu0 0.0
  %131 = vmatpush.msra.mxu0 0.0
  %132 = vmatpush.msra.mxu0 0.0
  %133 = vmatpush.msra.mxu0 0.0
  %134 = vmatpush.msra.mxu0 0.0
  %135 = vmatpush.msra.mxu0 0.0
  %136 = vmatpush.msra.mxu0 0.0
  %137 = vmatpush.msra.mxu0 0.0
  %138 = vmatpush.msra.mxu0 0.0
  %139 = vmatpush.msra.mxu0 0.0
  %140 = vmatpush.msra.mxu0 %v47
  %141 = vmatpush.msra.mxu0 %v43
  %142 = vmatmul.f32.gmra.mxu0 %v62
  %v143 = vpop.f32.mrf.mxu0
  %v144 = vadd.f32 %v53, %v143
  %145 = vmatmul.f32.gmra.mxu0 %v65
  %v146 = vpop.f32.mrf.mxu0
  %v147 = vadd.f32 %v53, %v146
  %148 = vmatmul.f32.gmra.mxu0 %v68
  %v149 = vpop.f32.mrf.mxu0
  %v150 = vadd.f32 %v53, %v149
  %151 = vmatmul.f32.gmra.mxu0 %v71
  %v152 = vpop.f32.mrf.mxu0
  %v153 = vadd.f32 %v53, %v152
  %154 = vmatmul.f32.gmra.mxu0 %v74
  %v155 = vpop.f32.mrf.mxu0
  %v156 = vadd.f32 %v53, %v155
  %157 = vmatmul.f32.gmra.mxu0 %v77
  %v158 = vpop.f32.mrf.mxu0
  %v159 = vadd.f32 %v53, %v158
  %160 = vmatmul.f32.gmra.mxu0 %v80
  %v161 = vpop.f32.mrf.mxu0
  %v162 = vadd.f32 %v53, %v161
  %163 = vmatmul.f32.gmra.mxu0 %v83
  %v164 = vpop.f32.mrf.mxu0
  %v165 = vadd.f32 %v53, %v164
  %166 = vdwg.mxu0
  %167 = vmatpush.msra.mxu0 0.0
  %168 = vmatpush.msra.mxu0 0.0
  %169 = vmatpush.msra.mxu0 0.0
  %170 = vmatpush.msra.mxu0 0.0
  %171 = vmatpush.msra.mxu0 0.0
  %172 = vmatpush.msra.mxu0 0.0
  %173 = vmatpush.msra.mxu0 0.0
  %174 = vmatpush.msra.mxu0 0.0
  %175 = vmatpush.msra.mxu0 0.0
  %176 = vmatpush.msra.mxu0 0.0
  %177 = vmatpush.msra.mxu0 0.0
  %178 = vmatpush.msra.mxu0 0.0
  %179 = vmatpush.msra.mxu0 0.0
  %180 = vmatpush.msra.mxu0 0.0
  %181 = vmatpush.msra.mxu0 %v48
  %182 = vmatpush.msra.mxu0 %v44
  %183 = vmatmul.f32.gmra.mxu0 %v62
  %v184 = vpop.f32.mrf.mxu0
  %v185 = vadd.f32 %v54, %v184
  %186 = vmatmul.f32.gmra.mxu0 %v65
  %v187 = vpop.f32.mrf.mxu0
  %v188 = vadd.f32 %v54, %v187
  %189 = vmatmul.f32.gmra.mxu0 %v68
  %v190 = vpop.f32.mrf.mxu0
  %v191 = vadd.f32 %v54, %v190
  %192 = vmatmul.f32.gmra.mxu0 %v71
  %v193 = vpop.f32.mrf.mxu0
  %v194 = vadd.f32 %v54, %v193
  %195 = vmatmul.f32.gmra.mxu0 %v74
  %v196 = vpop.f32.mrf.mxu0
  %v197 = vadd.f32 %v54, %v196
  %198 = vmatmul.f32.gmra.mxu0 %v77
  %v199 = vpop.f32.mrf.mxu0
  %v200 = vadd.f32 %v54, %v199
  %201 = vmatmul.f32.gmra.mxu0 %v80
  %v202 = vpop.f32.mrf.mxu0
  %v203 = vadd.f32 %v54, %v202
  %204 = vmatmul.f32.gmra.mxu0 %v83
  %v205 = vpop.f32.mrf.mxu0
  %v206 = vadd.f32 %v54, %v205
  %207 = vdwg.mxu0
  %208 = vmatpush.msra.mxu0 0.0
  %209 = vmatpush.msra.mxu0 0.0
  %210 = vmatpush.msra.mxu0 0.0
  %211 = vmatpush.msra.mxu0 0.0
  %212 = vmatpush.msra.mxu0 0.0
  %213 = vmatpush.msra.mxu0 0.0
  %214 = vmatpush.msra.mxu0 0.0
  %215 = vmatpush.msra.mxu0 0.0
  %216 = vmatpush.msra.mxu0 0.0
  %217 = vmatpush.msra.mxu0 0.0
  %218 = vmatpush.msra.mxu0 0.0
  %219 = vmatpush.msra.mxu0 0.0
  %220 = vmatpush.msra.mxu0 0.0
  %221 = vmatpush.msra.mxu0 0.0
  %222 = vmatpush.msra.mxu0 %v49
  %223 = vmatpush.msra.mxu0 %v45
  %224 = vmatmul.f32.gmra.mxu0 %v62
  %v225 = vpop.f32.mrf.mxu0
  %v226 = vadd.f32 %v55, %v225
  %227 = vmatmul.f32.gmra.mxu0 %v65
  %v228 = vpop.f32.mrf.mxu0
  %v229 = vadd.f32 %v55, %v228
  %230 = vmatmul.f32.gmra.mxu0 %v68
  %v231 = vpop.f32.mrf.mxu0
  %v232 = vadd.f32 %v55, %v231
  %233 = vmatmul.f32.gmra.mxu0 %v71
  %v234 = vpop.f32.mrf.mxu0
  %v235 = vadd.f32 %v55, %v234
  %236 = vmatmul.f32.gmra.mxu0 %v74
  %v237 = vpop.f32.mrf.mxu0
  %v238 = vadd.f32 %v55, %v237
  %239 = vmatmul.f32.gmra.mxu0 %v77
  %v240 = vpop.f32.mrf.mxu0
  %v241 = vadd.f32 %v55, %v240
  %242 = vmatmul.f32.gmra.mxu0 %v80
  %v243 = vpop.f32.mrf.mxu0
  %v244 = vadd.f32 %v55, %v243
  %245 = vmatmul.f32.gmra.mxu0 %v83
  %v246 = vpop.f32.mrf.mxu0
  %v247 = vadd.f32 %v55, %v246
  %248 = vdwg.mxu0
  %249 = vst [vmem:[#allocation2] sm:$0xff] %v103
  %250 = vst [vmem:[#allocation2 + $0x8] sm:$0xff] %v144
  %251 = vst [vmem:[#allocation2 + $0x10] sm:$0xff] %v185
  %252 = vst [vmem:[#allocation2 + $0x18] sm:$0xff] %v226
  %253 = vst [vmem:[#allocation2 + $0x20] sm:$0xff] %v106
  %254 = vst [vmem:[#allocation2 + $0x28] sm:$0xff] %v147
  %255 = vst [vmem:[#allocation2 + $0x30] sm:$0xff] %v188
  %256 = vst [vmem:[#allocation2 + $0x38] sm:$0xff] %v229
  %257 = vst [vmem:[#allocation2 + $0x40] sm:$0xff] %v109
  %258 = vst [vmem:[#allocation2 + $0x48] sm:$0xff] %v150
  %259 = vst [vmem:[#allocation2 + $0x50] sm:$0xff] %v191
  %260 = vst [vmem:[#allocation2 + $0x58] sm:$0xff] %v232
  %261 = vst [vmem:[#allocation2 + $0x60] sm:$0xff] %v112
  %262 = vst [vmem:[#allocation2 + $0x68] sm:$0xff] %v153
  %263 = vst [vmem:[#allocation2 + $0x70] sm:$0xff] %v194
  %264 = vst [vmem:[#allocation2 + $0x78] sm:$0xff] %v235
  %265 = vst [vmem:[#allocation2 + $0x80] sm:$0xff] %v115
  %266 = vst [vmem:[#allocation2 + $0x88] sm:$0xff] %v156
  %267 = vst [vmem:[#allocation2 + $0x90] sm:$0xff] %v197
  %268 = vst [vmem:[#allocation2 + $0x98] sm:$0xff] %v238
  %269 = vst [vmem:[#allocation2 + $0xa0] sm:$0xff] %v118
  %270 = vst [vmem:[#allocation2 + $0xa8] sm:$0xff] %v159
  %271 = vst [vmem:[#allocation2 + $0xb0] sm:$0xff] %v200
  %272 = vst [vmem:[#allocation2 + $0xb8] sm:$0xff] %v241
  %273 = vst [vmem:[#allocation2 + $0xc0] sm:$0xff] %v121
  %274 = vst [vmem:[#allocation2 + $0xc8] sm:$0xff] %v162
  %275 = vst [vmem:[#allocation2 + $0xd0] sm:$0xff] %v203
  %276 = vst [vmem:[#allocation2 + $0xd8] sm:$0xff] %v244
  %277 = vst [vmem:[#allocation2 + $0xe0] sm:$0xff] %v124
  %278 = vst [vmem:[#allocation2 + $0xe8] sm:$0xff] %v165
  %279 = vst [vmem:[#allocation2 + $0xf0] sm:$0xff] %v206
  %280 = vst [vmem:[#allocation2 + $0xf8] sm:$0xff] %v247
  %281 = vst [vmem:[#allocation3] sm:$0xff] 0.0
  %282 = vst [vmem:[#allocation5] sm:$0xff] 0.0
  %283 = vst [vmem:[#allocation4] sm:$0xff] 0.0
  %284 = vst [vmem:[#allocation6] sm:$0xff] 0.0
  %v285 = vld [vmem:[%s6] sm:$0xf]
  %v287 = vperm.slane %v285, 0
  %v288 = vperm.slane %v285, 1
  %v289 = vperm.slane %v285, 2
  %v290 = vperm.slane %v285, 3
  %s295 = smul.u32 0, 4
  %s296 = smul.addr %s295, 8
  %s297 = scalar_lea.vmem [#allocation2], %s296
  %v298 = vld [vmem:[%s297] sm:$0xff]
  %v299 = vld [vmem:[%s297 + $0x8] sm:$0xff]
  %v300 = vld [vmem:[%s297 + $0x10] sm:$0xff]
  %v301 = vld [vmem:[%s297 + $0x18] sm:$0xff]
  %v302 = vld [vmem:[#allocation3] sm:$0xff]
  %v303 = vld [vmem:[%s2] sm:$0xff]
  %v304 = vld [vmem:[%s2 + $0x8] sm:$0xff]
  %v305 = vld [vmem:[%s2 + $0x10] sm:$0xff]
  %v306 = vld [vmem:[%s2 + $0x18] sm:$0xff]
  %v307 = vld [vmem:[%s2 + $0x20] sm:$0xff]
  %v308 = vld [vmem:[%s2 + $0x28] sm:$0xff]
  %v309 = vld [vmem:[%s2 + $0x30] sm:$0xff]
  %v310 = vld [vmem:[%s2 + $0x38] sm:$0xff]
  %v311 = vld [vmem:[%s2 + $0x40] sm:$0xff]
  %v312 = vld [vmem:[%s2 + $0x48] sm:$0xff]
  %v313 = vld [vmem:[%s2 + $0x50] sm:$0xff]
  %v314 = vld [vmem:[%s2 + $0x58] sm:$0xff]
  %v315 = vld [vmem:[%s2 + $0x60] sm:$0xff]
  %v316 = vld [vmem:[%s2 + $0x68] sm:$0xff]
  %v317 = vld [vmem:[%s2 + $0x70] sm:$0xff]
  %v318 = vld [vmem:[%s2 + $0x78] sm:$0xff]
  %v319 = vld [vmem:[%s2 + $0x80] sm:$0xff]
  %v320 = vld [vmem:[%s2 + $0x88] sm:$0xff]
  %v321 = vld [vmem:[%s2 + $0x90] sm:$0xff]
  %v322 = vld [vmem:[%s2 + $0x98] sm:$0xff]
  %v323 = vld [vmem:[%s2 + $0xa0] sm:$0xff]
  %v324 = vld [vmem:[%s2 + $0xa8] sm:$0xff]
  %v325 = vld [vmem:[%s2 + $0xb0] sm:$0xff]
  %v326 = vld [vmem:[%s2 + $0xb8] sm:$0xff]
  %v327 = vld [vmem:[%s2 + $0xc0] sm:$0xff]
  %v328 = vld [vmem:[%s2 + $0xc8] sm:$0xff]
  %v329 = vld [vmem:[%s2 + $0xd0] sm:$0xff]
  %v330 = vld [vmem:[%s2 + $0xd8] sm:$0xff]
  %v331 = vld [vmem:[%s2 + $0xe0] sm:$0xff]
  %v332 = vld [vmem:[%s2 + $0xe8] sm:$0xff]
  %v333 = vld [vmem:[%s2 + $0xf0] sm:$0xff]
  %v334 = vld [vmem:[%s2 + $0xf8] sm:$0xff]
  %v335 = vld [vmem:[%s2 + $0x100] sm:$0xff]
  %v336 = vld [vmem:[%s2 + $0x108] sm:$0xff]
  %v337 = vld [vmem:[%s2 + $0x110] sm:$0xff]
  %v338 = vld [vmem:[%s2 + $0x118] sm:$0xff]
  %v339 = vld [vmem:[%s2 + $0x120] sm:$0xff]
  %v340 = vld [vmem:[%s2 + $0x128] sm:$0xff]
  %v341 = vld [vmem:[%s2 + $0x130] sm:$0xff]
  %v342 = vld [vmem:[%s2 + $0x138] sm:$0xff]
  %v343 = vld [vmem:[%s2 + $0x140] sm:$0xff]
  %v344 = vld [vmem:[%s2 + $0x148] sm:$0xff]
  %v345 = vld [vmem:[%s2 + $0x150] sm:$0xff]
  %v346 = vld [vmem:[%s2 + $0x158] sm:$0xff]
  %v347 = vld [vmem:[%s2 + $0x160] sm:$0xff]
  %v348 = vld [vmem:[%s2 + $0x168] sm:$0xff]
  %v349 = vld [vmem:[%s2 + $0x170] sm:$0xff]
  %v350 = vld [vmem:[%s2 + $0x178] sm:$0xff]
  %v351 = vld [vmem:[%s2 + $0x180] sm:$0xff]
  %v352 = vld [vmem:[%s2 + $0x188] sm:$0xff]
  %v353 = vld [vmem:[%s2 + $0x190] sm:$0xff]
  %v354 = vld [vmem:[%s2 + $0x198] sm:$0xff]
  %v355 = vld [vmem:[%s2 + $0x1a0] sm:$0xff]
  %v356 = vld [vmem:[%s2 + $0x1a8] sm:$0xff]
  %v357 = vld [vmem:[%s2 + $0x1b0] sm:$0xff]
  %v358 = vld [vmem:[%s2 + $0x1b8] sm:$0xff]
  %v359 = vld [vmem:[%s2 + $0x1c0] sm:$0xff]
  %v360 = vld [vmem:[%s2 + $0x1c8] sm:$0xff]
  %v361 = vld [vmem:[%s2 + $0x1d0] sm:$0xff]
  %v362 = vld [vmem:[%s2 + $0x1d8] sm:$0xff]
  %v363 = vld [vmem:[%s2 + $0x1e0] sm:$0xff]
  %v364 = vld [vmem:[%s2 + $0x1e8] sm:$0xff]
  %v365 = vld [vmem:[%s2 + $0x1f0] sm:$0xff]
  %v366 = vld [vmem:[%s2 + $0x1f8] sm:$0xff]
  %367 = vmatpush.msra.mxu0 %v363
  %368 = vmatpush.msra.mxu0 %v359
  %369 = vmatpush.msra.mxu0 %v355
  %370 = vmatpush.msra.mxu0 %v351
  %371 = vmatpush.msra.mxu0 %v347
  %372 = vmatpush.msra.mxu0 %v343
  %373 = vmatpush.msra.mxu0 %v339
  %374 = vmatpush.msra.mxu0 %v335
  %375 = vmatpush.msra.mxu0 %v331
  %376 = vmatpush.msra.mxu0 %v327
  %377 = vmatpush.msra.mxu0 %v323
  %378 = vmatpush.msra.mxu0 %v319
  %379 = vmatpush.msra.mxu0 %v315
  %380 = vmatpush.msra.mxu0 %v311
  %381 = vmatpush.msra.mxu0 %v307
  %382 = vmatpush.msra.mxu0 %v303
  %383 = vmatmul.f32.gmra.mxu0 %v302
  %v384 = vpop.f32.mrf.mxu0
  %v385 = vadd.f32 0.0, %v384
  %386 = vdwg.mxu0
  %387 = vmatpush.msra.mxu0 %v364
  %388 = vmatpush.msra.mxu0 %v360
  %389 = vmatpush.msra.mxu0 %v356
  %390 = vmatpush.msra.mxu0 %v352
  %391 = vmatpush.msra.mxu0 %v348
  %392 = vmatpush.msra.mxu0 %v344
  %393 = vmatpush.msra.mxu0 %v340
  %394 = vmatpush.msra.mxu0 %v336
  %395 = vmatpush.msra.mxu0 %v332
  %396 = vmatpush.msra.mxu0 %v328
  %397 = vmatpush.msra.mxu0 %v324
  %398 = vmatpush.msra.mxu0 %v320
  %399 = vmatpush.msra.mxu0 %v316
  %400 = vmatpush.msra.mxu0 %v312
  %401 = vmatpush.msra.mxu0 %v308
  %402 = vmatpush.msra.mxu0 %v304
  %403 = vmatmul.f32.gmra.mxu0 %v302
  %v404 = vpop.f32.mrf.mxu0
  %v405 = vadd.f32 0.0, %v404
  %406 = vdwg.mxu0
  %407 = vmatpush.msra.mxu0 %v365
  %408 = vmatpush.msra.mxu0 %v361
  %409 = vmatpush.msra.mxu0 %v357
  %410 = vmatpush.msra.mxu0 %v353
  %411 = vmatpush.msra.mxu0 %v349
  %412 = vmatpush.msra.mxu0 %v345
  %413 = vmatpush.msra.mxu0 %v341
  %414 = vmatpush.msra.mxu0 %v337
  %415 = vmatpush.msra.mxu0 %v333
  %416 = vmatpush.msra.mxu0 %v329
  %417 = vmatpush.msra.mxu0 %v325
  %418 = vmatpush.msra.mxu0 %v321
  %419 = vmatpush.msra.mxu0 %v317
  %420 = vmatpush.msra.mxu0 %v313
  %421 = vmatpush.msra.mxu0 %v309
  %422 = vmatpush.msra.mxu0 %v305
  %423 = vmatmul.f32.gmra.mxu0 %v302
  %v424 = vpop.f32.mrf.mxu0
  %v425 = vadd.f32 0.0, %v424
  %426 = vdwg.mxu0
  %427 = vmatpush.msra.mxu0 %v366
  %428 = vmatpush.msra.mxu0 %v362
  %429 = vmatpush.msra.mxu0 %v358
  %430 = vmatpush.msra.mxu0 %v354
  %431 = vmatpush.msra.mxu0 %v350
  %432 = vmatpush.msra.mxu0 %v346
  %433 = vmatpush.msra.mxu0 %v342
  %434 = vmatpush.msra.mxu0 %v338
  %435 = vmatpush.msra.mxu0 %v334
  %436 = vmatpush.msra.mxu0 %v330
  %437 = vmatpush.msra.mxu0 %v326
  %438 = vmatpush.msra.mxu0 %v322
  %439 = vmatpush.msra.mxu0 %v318
  %440 = vmatpush.msra.mxu0 %v314
  %441 = vmatpush.msra.mxu0 %v310
  %442 = vmatpush.msra.mxu0 %v306
  %443 = vmatmul.f32.gmra.mxu0 %v302
  %v444 = vpop.f32.mrf.mxu0
  %v445 = vadd.f32 0.0, %v444
  %446 = vdwg.mxu0
  %v447 = vadd.f32 %v298, %v385
  %v448 = vadd.f32 %v299, %v405
  %v449 = vadd.f32 %v300, %v425
  %v450 = vadd.f32 %v301, %v445
  %v451 = vxor.u32 %v447, 2147483648
  %v452 = vmul.f32 %v451, 1.442695
  %v453 = vpow.pop %v452
  %v454 = vadd.f32 %v453, 1.0
  %v455 = vrcp.pop %v454
  %v456 = vmul.f32 %v454, %v455
  %v457 = vsub.f32 1.0, %v456
  %v458 = vmul.f32 %v455, %v457
  %v459 = vadd.f32 %v455, %v458
  %vm460 = vweird.f32 %v454
  %vm461 = vweird.f32 %v455
  %vm462 = vmor %vm460, %vm461
  %v463 = vsel %vm462, %v455, %v459
  %v464 = vand.u32 2147483647, %v454
  %vm465 = vcmp.eq.f32.partialorder %v464, 8.507059e+37
  %v466 = vand.u32 %v454, 2147483648
  %v467 = vor.u32 1.1754944e-38, %v466
  %v468 = vsel %vm465, %v467, %v463
  %v469 = vmul.f32 1.0, %v468
  %v470 = vxor.u32 %v448, 2147483648
  %v471 = vmul.f32 %v470, 1.442695
  %v472 = vpow.pop %v471
  %v473 = vadd.f32 %v472, 1.0
  %v474 = vrcp.pop %v473
  %v475 = vmul.f32 %v473, %v474
  %v476 = vsub.f32 1.0, %v475
  %v477 = vmul.f32 %v474, %v476
  %v478 = vadd.f32 %v474, %v477
  %vm479 = vweird.f32 %v473
  %vm480 = vweird.f32 %v474
  %vm481 = vmor %vm479, %vm480
  %v482 = vsel %vm481, %v474, %v478
  %v483 = vand.u32 2147483647, %v473
  %vm484 = vcmp.eq.f32.partialorder %v483, 8.507059e+37
  %v485 = vand.u32 %v473, 2147483648
  %v486 = vor.u32 1.1754944e-38, %v485
  %v487 = vsel %vm484, %v486, %v482
  %v488 = vmul.f32 1.0, %v487
  %v489 = vtanh.pop %v449
  %v490 = vxor.u32 %v450, 2147483648
  %v491 = vmul.f32 %v490, 1.442695
  %v492 = vpow.pop %v491
  %v493 = vadd.f32 %v492, 1.0
  %v494 = vrcp.pop %v493
  %v495 = vmul.f32 %v493, %v494
  %v496 = vsub.f32 1.0, %v495
  %v497 = vmul.f32 %v494, %v496
  %v498 = vadd.f32 %v494, %v497
  %vm499 = vweird.f32 %v493
  %vm500 = vweird.f32 %v494
  %vm501 = vmor %vm499, %vm500
  %v502 = vsel %vm501, %v494, %v498
  %v503 = vand.u32 2147483647, %v493
  %vm504 = vcmp.eq.f32.partialorder %v503, 8.507059e+37
  %v505 = vand.u32 %v493, 2147483648
  %v506 = vor.u32 1.1754944e-38, %v505
  %v507 = vsel %vm504, %v506, %v502
  %v508 = vmul.f32 1.0, %v507
  %v509 = vld [vmem:[#allocation5] sm:$0xff]
  %v510 = vmul.f32 %v488, %v509
  %v511 = vmul.f32 %v469, %v489
  %v512 = vadd.f32 %v510, %v511
  %v513 = vtanh.pop %v512
  %v514 = vmul.f32 %v508, %v513
  %515 = vst [vmem:[#allocation5] sm:$0xff] %v512
  %516 = vst [vmem:[#allocation3] sm:$0xff] %v514
  %v517 = vld [vmem:[%s4] sm:$0xff]
  %v518 = vld [vmem:[%s4 + $0x8] sm:$0xff]
  %v519 = vld [vmem:[%s4 + $0x10] sm:$0xff]
  %v520 = vld [vmem:[%s4 + $0x18] sm:$0xff]
  %v521 = vld [vmem:[%s4 + $0x20] sm:$0xff]
  %v522 = vld [vmem:[%s4 + $0x28] sm:$0xff]
  %v523 = vld [vmem:[%s4 + $0x30] sm:$0xff]
  %v524 = vld [vmem:[%s4 + $0x38] sm:$0xff]
  %v525 = vld [vmem:[%s4 + $0x40] sm:$0xff]
  %v526 = vld [vmem:[%s4 + $0x48] sm:$0xff]
  %v527 = vld [vmem:[%s4 + $0x50] sm:$0xff]
  %v528 = vld [vmem:[%s4 + $0x58] sm:$0xff]
  %v529 = vld [vmem:[%s4 + $0x60] sm:$0xff]
  %v530 = vld [vmem:[%s4 + $0x68] sm:$0xff]
  %v531 = vld [vmem:[%s4 + $0x70] sm:$0xff]
  %v532 = vld [vmem:[%s4 + $0x78] sm:$0xff]
  %v533 = vld [vmem:[%s4 + $0x80] sm:$0xff]
  %v534 = vld [vmem:[%s4 + $0x88] sm:$0xff]
  %v535 = vld [vmem:[%s4 + $0x90] sm:$0xff]
  %v536 = vld [vmem:[%s4 + $0x98] sm:$0xff]
  %v537 = vld [vmem:[%s4 + $0xa0] sm:$0xff]
  %v538 = vld [vmem:[%s4 + $0xa8] sm:$0xff]
  %v539 = vld [vmem:[%s4 + $0xb0] sm:$0xff]
  %v540 = vld [vmem:[%s4 + $0xb8] sm:$0xff]
  %v541 = vld [vmem:[%s4 + $0xc0] sm:$0xff]
  %v542 = vld [vmem:[%s4 + $0xc8] sm:$0xff]
  %v543 = vld [vmem:[%s4 + $0xd0] sm:$0xff]
  %v544 = vld [vmem:[%s4 + $0xd8] sm:$0xff]
  %v545 = vld [vmem:[%s4 + $0xe0] sm:$0xff]
  %v546 = vld [vmem:[%s4 + $0xe8] sm:$0xff]
  %v547 = vld [vmem:[%s4 + $0xf0] sm:$0xff]
  %v548 = vld [vmem:[%s4 + $0xf8] sm:$0xff]
  %v549 = vld [vmem:[%s4 + $0x100] sm:$0xff]
  %v550 = vld [vmem:[%s4 + $0x108] sm:$0xff]
  %v551 = vld [vmem:[%s4 + $0x110] sm:$0xff]
  %v552 = vld [vmem:[%s4 + $0x118] sm:$0xff]
  %v553 = vld [vmem:[%s4 + $0x120] sm:$0xff]
  %v554 = vld [vmem:[%s4 + $0x128] sm:$0xff]
  %v555 = vld [vmem:[%s4 + $0x130] sm:$0xff]
  %v556 = vld [vmem:[%s4 + $0x138] sm:$0xff]
  %v557 = vld [vmem:[%s4 + $0x140] sm:$0xff]
  %v558 = vld [vmem:[%s4 + $0x148] sm:$0xff]
  %v559 = vld [vmem:[%s4 + $0x150] sm:$0xff]
  %v560 = vld [vmem:[%s4 + $0x158] sm:$0xff]
  %v561 = vld [vmem:[%s4 + $0x160] sm:$0xff]
  %v562 = vld [vmem:[%s4 + $0x168] sm:$0xff]
  %v563 = vld [vmem:[%s4 + $0x170] sm:$0xff]
  %v564 = vld [vmem:[%s4 + $0x178] sm:$0xff]
  %v565 = vld [vmem:[%s4 + $0x180] sm:$0xff]
  %v566 = vld [vmem:[%s4 + $0x188] sm:$0xff]
  %v567 = vld [vmem:[%s4 + $0x190] sm:$0xff]
  %v568 = vld [vmem:[%s4 + $0x198] sm:$0xff]
  %v569 = vld [vmem:[%s4 + $0x1a0] sm:$0xff]
  %v570 = vld [vmem:[%s4 + $0x1a8] sm:$0xff]
  %v571 = vld [vmem:[%s4 + $0x1b0] sm:$0xff]
  %v572 = vld [vmem:[%s4 + $0x1b8] sm:$0xff]
  %v573 = vld [vmem:[%s4 + $0x1c0] sm:$0xff]
  %v574 = vld [vmem:[%s4 + $0x1c8] sm:$0xff]
  %v575 = vld [vmem:[%s4 + $0x1d0] sm:$0xff]
  %v576 = vld [vmem:[%s4 + $0x1d8] sm:$0xff]
  %v577 = vld [vmem:[%s4 + $0x1e0] sm:$0xff]
  %v578 = vld [vmem:[%s4 + $0x1e8] sm:$0xff]
  %v579 = vld [vmem:[%s4 + $0x1f0] sm:$0xff]
  %v580 = vld [vmem:[%s4 + $0x1f8] sm:$0xff]
  %v581 = vld [vmem:[#allocation4] sm:$0xff]
  %v582 = vld [vmem:[%s5] sm:$0xff]
  %v583 = vld [vmem:[%s5 + $0x8] sm:$0xff]
  %v584 = vld [vmem:[%s5 + $0x10] sm:$0xff]
  %v585 = vld [vmem:[%s5 + $0x18] sm:$0xff]
  %v586 = vld [vmem:[%s5 + $0x20] sm:$0xff]
  %v587 = vld [vmem:[%s5 + $0x28] sm:$0xff]
  %v588 = vld [vmem:[%s5 + $0x30] sm:$0xff]
  %v589 = vld [vmem:[%s5 + $0x38] sm:$0xff]
  %v590 = vld [vmem:[%s5 + $0x40] sm:$0xff]
  %v591 = vld [vmem:[%s5 + $0x48] sm:$0xff]
  %v592 = vld [vmem:[%s5 + $0x50] sm:$0xff]
  %v593 = vld [vmem:[%s5 + $0x58] sm:$0xff]
  %v594 = vld [vmem:[%s5 + $0x60] sm:$0xff]
  %v595 = vld [vmem:[%s5 + $0x68] sm:$0xff]
  %v596 = vld [vmem:[%s5 + $0x70] sm:$0xff]
  %v597 = vld [vmem:[%s5 + $0x78] sm:$0xff]
  %v598 = vld [vmem:[%s5 + $0x80] sm:$0xff]
  %v599 = vld [vmem:[%s5 + $0x88] sm:$0xff]
  %v600 = vld [vmem:[%s5 + $0x90] sm:$0xff]
  %v601 = vld [vmem:[%s5 + $0x98] sm:$0xff]
  %v602 = vld [vmem:[%s5 + $0xa0] sm:$0xff]
  %v603 = vld [vmem:[%s5 + $0xa8] sm:$0xff]
  %v604 = vld [vmem:[%s5 + $0xb0] sm:$0xff]
  %v605 = vld [vmem:[%s5 + $0xb8] sm:$0xff]
  %v606 = vld [vmem:[%s5 + $0xc0] sm:$0xff]
  %v607 = vld [vmem:[%s5 + $0xc8] sm:$0xff]
  %v608 = vld [vmem:[%s5 + $0xd0] sm:$0xff]
  %v609 = vld [vmem:[%s5 + $0xd8] sm:$0xff]
  %v610 = vld [vmem:[%s5 + $0xe0] sm:$0xff]
  %v611 = vld [vmem:[%s5 + $0xe8] sm:$0xff]
  %v612 = vld [vmem:[%s5 + $0xf0] sm:$0xff]
  %v613 = vld [vmem:[%s5 + $0xf8] sm:$0xff]
  %v614 = vld [vmem:[%s5 + $0x100] sm:$0xff]
  %v615 = vld [vmem:[%s5 + $0x108] sm:$0xff]
  %v616 = vld [vmem:[%s5 + $0x110] sm:$0xff]
  %v617 = vld [vmem:[%s5 + $0x118] sm:$0xff]
  %v618 = vld [vmem:[%s5 + $0x120] sm:$0xff]
  %v619 = vld [vmem:[%s5 + $0x128] sm:$0xff]
  %v620 = vld [vmem:[%s5 + $0x130] sm:$0xff]
  %v621 = vld [vmem:[%s5 + $0x138] sm:$0xff]
  %v622 = vld [vmem:[%s5 + $0x140] sm:$0xff]
  %v623 = vld [vmem:[%s5 + $0x148] sm:$0xff]
  %v624 = vld [vmem:[%s5 + $0x150] sm:$0xff]
  %v625 = vld [vmem:[%s5 + $0x158] sm:$0xff]
  %v626 = vld [vmem:[%s5 + $0x160] sm:$0xff]
  %v627 = vld [vmem:[%s5 + $0x168] sm:$0xff]
  %v628 = vld [vmem:[%s5 + $0x170] sm:$0xff]
  %v629 = vld [vmem:[%s5 + $0x178] sm:$0xff]
  %v630 = vld [vmem:[%s5 + $0x180] sm:$0xff]
  %v631 = vld [vmem:[%s5 + $0x188] sm:$0xff]
  %v632 = vld [vmem:[%s5 + $0x190] sm:$0xff]
  %v633 = vld [vmem:[%s5 + $0x198] sm:$0xff]
  %v634 = vld [vmem:[%s5 + $0x1a0] sm:$0xff]
  %v635 = vld [vmem:[%s5 + $0x1a8] sm:$0xff]
  %v636 = vld [vmem:[%s5 + $0x1b0] sm:$0xff]
  %v637 = vld [vmem:[%s5 + $0x1b8] sm:$0xff]
  %v638 = vld [vmem:[%s5 + $0x1c0] sm:$0xff]
  %v639 = vld [vmem:[%s5 + $0x1c8] sm:$0xff]
  %v640 = vld [vmem:[%s5 + $0x1d0] sm:$0xff]
  %v641 = vld [vmem:[%s5 + $0x1d8] sm:$0xff]
  %v642 = vld [vmem:[%s5 + $0x1e0] sm:$0xff]
  %v643 = vld [vmem:[%s5 + $0x1e8] sm:$0xff]
  %v644 = vld [vmem:[%s5 + $0x1f0] sm:$0xff]
  %v645 = vld [vmem:[%s5 + $0x1f8] sm:$0xff]
  %646 = vmatpush.msra.mxu0 %v642
  %647 = vmatpush.msra.mxu0 %v638
  %648 = vmatpush.msra.mxu0 %v634
  %649 = vmatpush.msra.mxu0 %v630
  %650 = vmatpush.msra.mxu0 %v626
  %651 = vmatpush.msra.mxu0 %v622
  %652 = vmatpush.msra.mxu0 %v618
  %653 = vmatpush.msra.mxu0 %v614
  %654 = vmatpush.msra.mxu0 %v610
  %655 = vmatpush.msra.mxu0 %v606
  %656 = vmatpush.msra.mxu0 %v602
  %657 = vmatpush.msra.mxu0 %v598
  %658 = vmatpush.msra.mxu0 %v594
  %659 = vmatpush.msra.mxu0 %v590
  %660 = vmatpush.msra.mxu0 %v586
  %661 = vmatpush.msra.mxu0 %v582
  %662 = vmatmul.f32.gmra.mxu0 %v581
  %v663 = vpop.f32.mrf.mxu0
  %v664 = vadd.f32 0.0, %v663
  %665 = vdwg.mxu0
  %666 = vmatpush.msra.mxu0 %v643
  %667 = vmatpush.msra.mxu0 %v639
  %668 = vmatpush.msra.mxu0 %v635
  %669 = vmatpush.msra.mxu0 %v631
  %670 = vmatpush.msra.mxu0 %v627
  %671 = vmatpush.msra.mxu0 %v623
  %672 = vmatpush.msra.mxu0 %v619
  %673 = vmatpush.msra.mxu0 %v615
  %674 = vmatpush.msra.mxu0 %v611
  %675 = vmatpush.msra.mxu0 %v607
  %676 = vmatpush.msra.mxu0 %v603
  %677 = vmatpush.msra.mxu0 %v599
  %678 = vmatpush.msra.mxu0 %v595
  %679 = vmatpush.msra.mxu0 %v591
  %680 = vmatpush.msra.mxu0 %v587
  %681 = vmatpush.msra.mxu0 %v583
  %682 = vmatmul.f32.gmra.mxu0 %v581
  %v683 = vpop.f32.mrf.mxu0
  %v684 = vadd.f32 0.0, %v683
  %685 = vdwg.mxu0
  %686 = vmatpush.msra.mxu0 %v644
  %687 = vmatpush.msra.mxu0 %v640
  %688 = vmatpush.msra.mxu0 %v636
  %689 = vmatpush.msra.mxu0 %v632
  %690 = vmatpush.msra.mxu0 %v628
  %691 = vmatpush.msra.mxu0 %v624
  %692 = vmatpush.msra.mxu0 %v620
  %693 = vmatpush.msra.mxu0 %v616
  %694 = vmatpush.msra.mxu0 %v612
  %695 = vmatpush.msra.mxu0 %v608
  %696 = vmatpush.msra.mxu0 %v604
  %697 = vmatpush.msra.mxu0 %v600
  %698 = vmatpush.msra.mxu0 %v596
  %699 = vmatpush.msra.mxu0 %v592
  %700 = vmatpush.msra.mxu0 %v588
  %701 = vmatpush.msra.mxu0 %v584
  %702 = vmatmul.f32.gmra.mxu0 %v581
  %v703 = vpop.f32.mrf.mxu0
  %v704 = vadd.f32 0.0, %v703
  %705 = vdwg.mxu0
  %706 = vmatpush.msra.mxu0 %v645
  %707 = vmatpush.msra.mxu0 %v641
  %708 = vmatpush.msra.mxu0 %v637
  %709 = vmatpush.msra.mxu0 %v633
  %710 = vmatpush.msra.mxu0 %v629
  %711 = vmatpush.msra.mxu0 %v625
  %712 = vmatpush.msra.mxu0 %v621
  %713 = vmatpush.msra.mxu0 %v617
  %714 = vmatpush.msra.mxu0 %v613
  %715 = vmatpush.msra.mxu0 %v609
  %716 = vmatpush.msra.mxu0 %v605
  %717 = vmatpush.msra.mxu0 %v601
  %718 = vmatpush.msra.mxu0 %v597
  %719 = vmatpush.msra.mxu0 %v593
  %720 = vmatpush.msra.mxu0 %v589
  %721 = vmatpush.msra.mxu0 %v585
  %722 = vmatmul.f32.gmra.mxu0 %v581
  %v723 = vpop.f32.mrf.mxu0
  %v724 = vadd.f32 0.0, %v723
  %725 = vdwg.mxu0
  %726 = vmatpush.msra.mxu0 %v577
  %727 = vmatpush.msra.mxu0 %v573
  %728 = vmatpush.msra.mxu0 %v569
  %729 = vmatpush.msra.mxu0 %v565
  %730 = vmatpush.msra.mxu0 %v561
  %731 = vmatpush.msra.mxu0 %v557
  %732 = vmatpush.msra.mxu0 %v553
  %733 = vmatpush.msra.mxu0 %v549
  %734 = vmatpush.msra.mxu0 %v545
  %735 = vmatpush.msra.mxu0 %v541
  %736 = vmatpush.msra.mxu0 %v537
  %737 = vmatpush.msra.mxu0 %v533
  %738 = vmatpush.msra.mxu0 %v529
  %739 = vmatpush.msra.mxu0 %v525
  %740 = vmatpush.msra.mxu0 %v521
  %741 = vmatpush.msra.mxu0 %v517
  %742 = vmatmul.f32.gmra.mxu0 %v514
  %v743 = vpop.f32.mrf.mxu0
  %v744 = vadd.f32 %v664, %v743
  %745 = vdwg.mxu0
  %746 = vmatpush.msra.mxu0 %v578
  %747 = vmatpush.msra.mxu0 %v574
  %748 = vmatpush.msra.mxu0 %v570
  %749 = vmatpush.msra.mxu0 %v566
  %750 = vmatpush.msra.mxu0 %v562
  %751 = vmatpush.msra.mxu0 %v558
  %752 = vmatpush.msra.mxu0 %v554
  %753 = vmatpush.msra.mxu0 %v550
  %754 = vmatpush.msra.mxu0 %v546
  %755 = vmatpush.msra.mxu0 %v542
  %756 = vmatpush.msra.mxu0 %v538
  %757 = vmatpush.msra.mxu0 %v534
  %758 = vmatpush.msra.mxu0 %v530
  %759 = vmatpush.msra.mxu0 %v526
  %760 = vmatpush.msra.mxu0 %v522
  %761 = vmatpush.msra.mxu0 %v518
  %762 = vmatmul.f32.gmra.mxu0 %v514
  %v763 = vpop.f32.mrf.mxu0
  %v764 = vadd.f32 %v684, %v763
  %765 = vdwg.mxu0
  %766 = vmatpush.msra.mxu0 %v579
  %767 = vmatpush.msra.mxu0 %v575
  %768 = vmatpush.msra.mxu0 %v571
  %769 = vmatpush.msra.mxu0 %v567
  %770 = vmatpush.msra.mxu0 %v563
  %771 = vmatpush.msra.mxu0 %v559
  %772 = vmatpush.msra.mxu0 %v555
  %773 = vmatpush.msra.mxu0 %v551
  %774 = vmatpush.msra.mxu0 %v547
  %775 = vmatpush.msra.mxu0 %v543
  %776 = vmatpush.msra.mxu0 %v539
  %777 = vmatpush.msra.mxu0 %v535
  %778 = vmatpush.msra.mxu0 %v531
  %779 = vmatpush.msra.mxu0 %v527
  %780 = vmatpush.msra.mxu0 %v523
  %781 = vmatpush.msra.mxu0 %v519
  %782 = vmatmul.f32.gmra.mxu0 %v514
  %v783 = vpop.f32.mrf.mxu0
  %v784 = vadd.f32 %v704, %v783
  %785 = vdwg.mxu0
  %786 = vmatpush.msra.mxu0 %v580
  %787 = vmatpush.msra.mxu0 %v576
  %788 = vmatpush.msra.mxu0 %v572
  %789 = vmatpush.msra.mxu0 %v568
  %790 = vmatpush.msra.mxu0 %v564
  %791 = vmatpush.msra.mxu0 %v560
  %792 = vmatpush.msra.mxu0 %v556
  %793 = vmatpush.msra.mxu0 %v552
  %794 = vmatpush.msra.mxu0 %v548
  %795 = vmatpush.msra.mxu0 %v544
  %796 = vmatpush.msra.mxu0 %v540
  %797 = vmatpush.msra.mxu0 %v536
  %798 = vmatpush.msra.mxu0 %v532
  %799 = vmatpush.msra.mxu0 %v528
  %800 = vmatpush.msra.mxu0 %v524
  %801 = vmatpush.msra.mxu0 %v520
  %802 = vmatmul.f32.gmra.mxu0 %v514
  %v803 = vpop.f32.mrf.mxu0
  %v804 = vadd.f32 %v724, %v803
  %805 = vdwg.mxu0
  %v806 = vadd.f32 %v744, %v287
  %v807 = vadd.f32 %v764, %v288
  %v808 = vadd.f32 %v784, %v289
  %v809 = vadd.f32 %v804, %v290
  %v810 = vxor.u32 %v806, 2147483648
  %v811 = vmul.f32 %v810, 1.442695
  %v812 = vpow.pop %v811
  %v813 = vadd.f32 %v812, 1.0
  %v814 = vrcp.pop %v813
  %v815 = vmul.f32 %v813, %v814
  %v816 = vsub.f32 1.0, %v815
  %v817 = vmul.f32 %v814, %v816
  %v818 = vadd.f32 %v814, %v817
  %vm819 = vweird.f32 %v813
  %vm820 = vweird.f32 %v814
  %vm821 = vmor %vm819, %vm820
  %v822 = vsel %vm821, %v814, %v818
  %v823 = vand.u32 2147483647, %v813
  %vm824 = vcmp.eq.f32.partialorder %v823, 8.507059e+37
  %v825 = vand.u32 %v813, 2147483648
  %v826 = vor.u32 1.1754944e-38, %v825
  %v827 = vsel %vm824, %v826, %v822
  %v828 = vmul.f32 1.0, %v827
  %v829 = vxor.u32 %v807, 2147483648
  %v830 = vmul.f32 %v829, 1.442695
  %v831 = vpow.pop %v830
  %v832 = vadd.f32 %v831, 1.0
  %v833 = vrcp.pop %v832
  %v834 = vmul.f32 %v832, %v833
  %v835 = vsub.f32 1.0, %v834
  %v836 = vmul.f32 %v833, %v835
  %v837 = vadd.f32 %v833, %v836
  %vm838 = vweird.f32 %v832
  %vm839 = vweird.f32 %v833
  %vm840 = vmor %vm838, %vm839
  %v841 = vsel %vm840, %v833, %v837
  %v842 = vand.u32 2147483647, %v832
  %vm843 = vcmp.eq.f32.partialorder %v842, 8.507059e+37
  %v844 = vand.u32 %v832, 2147483648
  %v845 = vor.u32 1.1754944e-38, %v844
  %v846 = vsel %vm843, %v845, %v841
  %v847 = vmul.f32 1.0, %v846
  %v848 = vtanh.pop %v808
  %v849 = vxor.u32 %v809, 2147483648
  %v850 = vmul.f32 %v849, 1.442695
  %v851 = vpow.pop %v850
  %v852 = vadd.f32 %v851, 1.0
  %v853 = vrcp.pop %v852
  %v854 = vmul.f32 %v852, %v853
  %v855 = vsub.f32 1.0, %v854
  %v856 = vmul.f32 %v853, %v855
  %v857 = vadd.f32 %v853, %v856
  %vm858 = vweird.f32 %v852
  %vm859 = vweird.f32 %v853
  %vm860 = vmor %vm858, %vm859
  %v861 = vsel %vm860, %v853, %v857
  %v862 = vand.u32 2147483647, %v852
  %vm863 = vcmp.eq.f32.partialorder %v862, 8.507059e+37
  %v864 = vand.u32 %v852, 2147483648
  %v865 = vor.u32 1.1754944e-38, %v864
  %v866 = vsel %vm863, %v865, %v861
  %v867 = vmul.f32 1.0, %v866
  %v868 = vld [vmem:[#allocation6] sm:$0xff]
  %v869 = vmul.f32 %v847, %v868
  %v870 = vmul.f32 %v828, %v848
  %v871 = vadd.f32 %v869, %v870
  %v872 = vtanh.pop %v871
  %v873 = vmul.f32 %v867, %v872
  %874 = vst [vmem:[#allocation6] sm:$0xff] %v871
  %875 = vst [vmem:[#allocation4] sm:$0xff] %v873
  %s876 = smul.u32 1, 4
  %s877 = smul.addr %s876, 8
  %s878 = scalar_lea.vmem [#allocation2], %s877
  %v879 = vld [vmem:[%s878] sm:$0xff]
  %v880 = vld [vmem:[%s878 + $0x8] sm:$0xff]
  %v881 = vld [vmem:[%s878 + $0x10] sm:$0xff]
  %v882 = vld [vmem:[%s878 + $0x18] sm:$0xff]
  %v883 = vld [vmem:[#allocation3] sm:$0xff]
  %v884 = vld [vmem:[%s2] sm:$0xff]
  %v885 = vld [vmem:[%s2 + $0x8] sm:$0xff]
  %v886 = vld [vmem:[%s2 + $0x10] sm:$0xff]
  %v887 = vld [vmem:[%s2 + $0x18] sm:$0xff]
  %v888 = vld [vmem:[%s2 + $0x20] sm:$0xff]
  %v889 = vld [vmem:[%s2 + $0x28] sm:$0xff]
  %v890 = vld [vmem:[%s2 + $0x30] sm:$0xff]
  %v891 = vld [vmem:[%s2 + $0x38] sm:$0xff]
  %v892 = vld [vmem:[%s2 + $0x40] sm:$0xff]
  %v893 = vld [vmem:[%s2 + $0x48] sm:$0xff]
  %v894 = vld [vmem:[%s2 + $0x50] sm:$0xff]
  %v895 = vld [vmem:[%s2 + $0x58] sm:$0xff]
  %v896 = vld [vmem:[%s2 + $0x60] sm:$0xff]
  %v897 = vld [vmem:[%s2 + $0x68] sm:$0xff]
  %v898 = vld [vmem:[%s2 + $0x70] sm:$0xff]
  %v899 = vld [vmem:[%s2 + $0x78] sm:$0xff]
  %v900 = vld [vmem:[%s2 + $0x80] sm:$0xff]
  %v901 = vld [vmem:[%s2 + $0x88] sm:$0xff]
  %v902 = vld [vmem:[%s2 + $0x90] sm:$0xff]
  %v903 = vld [vmem:[%s2 + $0x98] sm:$0xff]
  %v904 = vld [vmem:[%s2 + $0xa0] sm:$0xff]
  %v905 = vld [vmem:[%s2 + $0xa8] sm:$0xff]
  %v906 = vld [vmem:[%s2 + $0xb0] sm:$0xff]
  %v907 = vld [vmem:[%s2 + $0xb8] sm:$0xff]
  %v908 = vld [vmem:[%s2 + $0xc0] sm:$0xff]
  %v909 = vld [vmem:[%s2 + $0xc8] sm:$0xff]
  %v910 = vld [vmem:[%s2 + $0xd0] sm:$0xff]
  %v911 = vld [vmem:[%s2 + $0xd8] sm:$0xff]
  %v912 = vld [vmem:[%s2 + $0xe0] sm:$0xff]
  %v913 = vld [vmem:[%s2 + $0xe8] sm:$0xff]
  %v914 = vld [vmem:[%s2 + $0xf0] sm:$0xff]
  %v915 = vld [vmem:[%s2 + $0xf8] sm:$0xff]
  %v916 = vld [vmem:[%s2 + $0x100] sm:$0xff]
  %v917 = vld [vmem:[%s2 + $0x108] sm:$0xff]
  %v918 = vld [vmem:[%s2 + $0x110] sm:$0xff]
  %v919 = vld [vmem:[%s2 + $0x118] sm:$0xff]
  %v920 = vld [vmem:[%s2 + $0x120] sm:$0xff]
  %v921 = vld [vmem:[%s2 + $0x128] sm:$0xff]
  %v922 = vld [vmem:[%s2 + $0x130] sm:$0xff]
  %v923 = vld [vmem:[%s2 + $0x138] sm:$0xff]
  %v924 = vld [vmem:[%s2 + $0x140] sm:$0xff]
  %v925 = vld [vmem:[%s2 + $0x148] sm:$0xff]
  %v926 = vld [vmem:[%s2 + $0x150] sm:$0xff]
  %v927 = vld [vmem:[%s2 + $0x158] sm:$0xff]
  %v928 = vld [vmem:[%s2 + $0x160] sm:$0xff]
  %v929 = vld [vmem:[%s2 + $0x168] sm:$0xff]
  %v930 = vld [vmem:[%s2 + $0x170] sm:$0xff]
  %v931 = vld [vmem:[%s2 + $0x178] sm:$0xff]
  %v932 = vld [vmem:[%s2 + $0x180] sm:$0xff]
  %v933 = vld [vmem:[%s2 + $0x188] sm:$0xff]
  %v934 = vld [vmem:[%s2 + $0x190] sm:$0xff]
  %v935 = vld [vmem:[%s2 + $0x198] sm:$0xff]
  %v936 = vld [vmem:[%s2 + $0x1a0] sm:$0xff]
  %v937 = vld [vmem:[%s2 + $0x1a8] sm:$0xff]
  %v938 = vld [vmem:[%s2 + $0x1b0] sm:$0xff]
  %v939 = vld [vmem:[%s2 + $0x1b8] sm:$0xff]
  %v940 = vld [vmem:[%s2 + $0x1c0] sm:$0xff]
  %v941 = vld [vmem:[%s2 + $0x1c8] sm:$0xff]
  %v942 = vld [vmem:[%s2 + $0x1d0] sm:$0xff]
  %v943 = vld [vmem:[%s2 + $0x1d8] sm:$0xff]
  %v944 = vld [vmem:[%s2 + $0x1e0] sm:$0xff]
  %v945 = vld [vmem:[%s2 + $0x1e8] sm:$0xff]
  %v946 = vld [vmem:[%s2 + $0x1f0] sm:$0xff]
  %v947 = vld [vmem:[%s2 + $0x1f8] sm:$0xff]
  %948 = vmatpush.msra.mxu0 %v944
  %949 = vmatpush.msra.mxu0 %v940
  %950 = vmatpush.msra.mxu0 %v936
  %951 = vmatpush.msra.mxu0 %v932
  %952 = vmatpush.msra.mxu0 %v928
  %953 = vmatpush.msra.mxu0 %v924
  %954 = vmatpush.msra.mxu0 %v920
  %955 = vmatpush.msra.mxu0 %v916
  %956 = vmatpush.msra.mxu0 %v912
  %957 = vmatpush.msra.mxu0 %v908
  %958 = vmatpush.msra.mxu0 %v904
  %959 = vmatpush.msra.mxu0 %v900
  %960 = vmatpush.msra.mxu0 %v896
  %961 = vmatpush.msra.mxu0 %v892
  %962 = vmatpush.msra.mxu0 %v888
  %963 = vmatpush.msra.mxu0 %v884
  %964 = vmatmul.f32.gmra.mxu0 %v883
  %v965 = vpop.f32.mrf.mxu0
  %v966 = vadd.f32 0.0, %v965
  %967 = vdwg.mxu0
  %968 = vmatpush.msra.mxu0 %v945
  %969 = vmatpush.msra.mxu0 %v941
  %970 = vmatpush.msra.mxu0 %v937
  %971 = vmatpush.msra.mxu0 %v933
  %972 = vmatpush.msra.mxu0 %v929
  %973 = vmatpush.msra.mxu0 %v925
  %974 = vmatpush.msra.mxu0 %v921
  %975 = vmatpush.msra.mxu0 %v917
  %976 = vmatpush.msra.mxu0 %v913
  %977 = vmatpush.msra.mxu0 %v909
  %978 = vmatpush.msra.mxu0 %v905
  %979 = vmatpush.msra.mxu0 %v901
  %980 = vmatpush.msra.mxu0 %v897
  %981 = vmatpush.msra.mxu0 %v893
  %982 = vmatpush.msra.mxu0 %v889
  %983 = vmatpush.msra.mxu0 %v885
  %984 = vmatmul.f32.gmra.mxu0 %v883
  %v985 = vpop.f32.mrf.mxu0
  %v986 = vadd.f32 0.0, %v985
  %987 = vdwg.mxu0
  %988 = vmatpush.msra.mxu0 %v946
  %989 = vmatpush.msra.mxu0 %v942
  %990 = vmatpush.msra.mxu0 %v938
  %991 = vmatpush.msra.mxu0 %v934
  %992 = vmatpush.msra.mxu0 %v930
  %993 = vmatpush.msra.mxu0 %v926
  %994 = vmatpush.msra.mxu0 %v922
  %995 = vmatpush.msra.mxu0 %v918
  %996 = vmatpush.msra.mxu0 %v914
  %997 = vmatpush.msra.mxu0 %v910
  %998 = vmatpush.msra.mxu0 %v906
  %999 = vmatpush.msra.mxu0 %v902
  %1000 = vmatpush.msra.mxu0 %v898
  %1001 = vmatpush.msra.mxu0 %v894
  %1002 = vmatpush.msra.mxu0 %v890
  %1003 = vmatpush.msra.mxu0 %v886
  %1004 = vmatmul.f32.gmra.mxu0 %v883
  %v1005 = vpop.f32.mrf.mxu0
  %v1006 = vadd.f32 0.0, %v1005
  %1007 = vdwg.mxu0
  %1008 = vmatpush.msra.mxu0 %v947
  %1009 = vmatpush.msra.mxu0 %v943
  %1010 = vmatpush.msra.mxu0 %v939
  %1011 = vmatpush.msra.mxu0 %v935
  %1012 = vmatpush.msra.mxu0 %v931
  %1013 = vmatpush.msra.mxu0 %v927
  %1014 = vmatpush.msra.mxu0 %v923
  %1015 = vmatpush.msra.mxu0 %v919
  %1016 = vmatpush.msra.mxu0 %v915
  %1017 = vmatpush.msra.mxu0 %v911
  %1018 = vmatpush.msra.mxu0 %v907
  %1019 = vmatpush.msra.mxu0 %v903
  %1020 = vmatpush.msra.mxu0 %v899
  %1021 = vmatpush.msra.mxu0 %v895
  %1022 = vmatpush.msra.mxu0 %v891
  %1023 = vmatpush.msra.mxu0 %v887
  %1024 = vmatmul.f32.gmra.mxu0 %v883
  %v1025 = vpop.f32.mrf.mxu0
  %v1026 = vadd.f32 0.0, %v1025
  %1027 = vdwg.mxu0
  %v1028 = vadd.f32 %v879, %v966
  %v1029 = vadd.f32 %v880, %v986
  %v1030 = vadd.f32 %v881, %v1006
  %v1031 = vadd.f32 %v882, %v1026
  %v1032 = vxor.u32 %v1028, 2147483648
  %v1033 = vmul.f32 %v1032, 1.442695
  %v1034 = vpow.pop %v1033
  %v1035 = vadd.f32 %v1034, 1.0
  %v1036 = vrcp.pop %v1035
  %v1037 = vmul.f32 %v1035, %v1036
  %v1038 = vsub.f32 1.0, %v1037
  %v1039 = vmul.f32 %v1036, %v1038
  %v1040 = vadd.f32 %v1036, %v1039
  %vm1041 = vweird.f32 %v1035
  %vm1042 = vweird.f32 %v1036
  %vm1043 = vmor %vm1041, %vm1042
  %v1044 = vsel %vm1043, %v1036, %v1040
  %v1045 = vand.u32 2147483647, %v1035
  %vm1046 = vcmp.eq.f32.partialorder %v1045, 8.507059e+37
  %v1047 = vand.u32 %v1035, 2147483648
  %v1048 = vor.u32 1.1754944e-38, %v1047
  %v1049 = vsel %vm1046, %v1048, %v1044
  %v1050 = vmul.f32 1.0, %v1049
  %v1051 = vxor.u32 %v1029, 2147483648
  %v1052 = vmul.f32 %v1051, 1.442695
  %v1053 = vpow.pop %v1052
  %v1054 = vadd.f32 %v1053, 1.0
  %v1055 = vrcp.pop %v1054
  %v1056 = vmul.f32 %v1054, %v1055
  %v1057 = vsub.f32 1.0, %v1056
  %v1058 = vmul.f32 %v1055, %v1057
  %v1059 = vadd.f32 %v1055, %v1058
  %vm1060 = vweird.f32 %v1054
  %vm1061 = vweird.f32 %v1055
  %vm1062 = vmor %vm1060, %vm1061
  %v1063 = vsel %vm1062, %v1055, %v1059
  %v1064 = vand.u32 2147483647, %v1054
  %vm1065 = vcmp.eq.f32.partialorder %v1064, 8.507059e+37
  %v1066 = vand.u32 %v1054, 2147483648
  %v1067 = vor.u32 1.1754944e-38, %v1066
  %v1068 = vsel %vm1065, %v1067, %v1063
  %v1069 = vmul.f32 1.0, %v1068
  %v1070 = vtanh.pop %v1030
  %v1071 = vxor.u32 %v1031, 2147483648
  %v1072 = vmul.f32 %v1071, 1.442695
  %v1073 = vpow.pop %v1072
  %v1074 = vadd.f32 %v1073, 1.0
  %v1075 = vrcp.pop %v1074
  %v1076 = vmul.f32 %v1074, %v1075
  %v1077 = vsub.f32 1.0, %v1076
  %v1078 = vmul.f32 %v1075, %v1077
  %v1079 = vadd.f32 %v1075, %v1078
  %vm1080 = vweird.f32 %v1074
  %vm1081 = vweird.f32 %v1075
  %vm1082 = vmor %vm1080, %vm1081
  %v1083 = vsel %vm1082, %v1075, %v1079
  %v1084 = vand.u32 2147483647, %v1074
  %vm1085 = vcmp.eq.f32.partialorder %v1084, 8.507059e+37
  %v1086 = vand.u32 %v1074, 2147483648
  %v1087 = vor.u32 1.1754944e-38, %v1086
  %v1088 = vsel %vm1085, %v1087, %v1083
  %v1089 = vmul.f32 1.0, %v1088
  %v1090 = vld [vmem:[#allocation5] sm:$0xff]
  %v1091 = vmul.f32 %v1069, %v1090
  %v1092 = vmul.f32 %v1050, %v1070
  %v1093 = vadd.f32 %v1091, %v1092
  %v1094 = vtanh.pop %v1093
  %v1095 = vmul.f32 %v1089, %v1094
  %1096 = vst [vmem:[#allocation5] sm:$0xff] %v1093
  %1097 = vst [vmem:[#allocation3] sm:$0xff] %v1095
  %v1098 = vld [vmem:[%s4] sm:$0xff]
  %v1099 = vld [vmem:[%s4 + $0x8] sm:$0xff]
  %v1100 = vld [vmem:[%s4 + $0x10] sm:$0xff]
  %v1101 = vld [vmem:[%s4 + $0x18] sm:$0xff]
  %v1102 = vld [vmem:[%s4 + $0x20] sm:$0xff]
  %v1103 = vld [vmem:[%s4 + $0x28] sm:$0xff]
  %v1104 = vld [vmem:[%s4 + $0x30] sm:$0xff]
  %v1105 = vld [vmem:[%s4 + $0x38] sm:$0xff]
  %v1106 = vld [vmem:[%s4 + $0x40] sm:$0xff]
  %v1107 = vld [vmem:[%s4 + $0x48] sm:$0xff]
  %v1108 = vld [vmem:[%s4 + $0x50] sm:$0xff]
  %v1109 = vld [vmem:[%s4 + $0x58] sm:$0xff]
  %v1110 = vld [vmem:[%s4 + $0x60] sm:$0xff]
  %v1111 = vld [vmem:[%s4 + $0x68] sm:$0xff]
  %v1112 = vld [vmem:[%s4 + $0x70] sm:$0xff]
  %v1113 = vld [vmem:[%s4 + $0x78] sm:$0xff]
  %v1114 = vld [vmem:[%s4 + $0x80] sm:$0xff]
  %v1115 = vld [vmem:[%s4 + $0x88] sm:$0xff]
  %v1116 = vld [vmem:[%s4 + $0x90] sm:$0xff]
  %v1117 = vld [vmem:[%s4 + $0x98] sm:$0xff]
  %v1118 = vld [vmem:[%s4 + $0xa0] sm:$0xff]
  %v1119 = vld [vmem:[%s4 + $0xa8] sm:$0xff]
  %v1120 = vld [vmem:[%s4 + $0xb0] sm:$0xff]
  %v1121 = vld [vmem:[%s4 + $0xb8] sm:$0xff]
  %v1122 = vld [vmem:[%s4 + $0xc0] sm:$0xff]
  %v1123 = vld [vmem:[%s4 + $0xc8] sm:$0xff]
  %v1124 = vld [vmem:[%s4 + $0xd0] sm:$0xff]
  %v1125 = vld [vmem:[%s4 + $0xd8] sm:$0xff]
  %v1126 = vld [vmem:[%s4 + $0xe0] sm:$0xff]
  %v1127 = vld [vmem:[%s4 + $0xe8] sm:$0xff]
  %v1128 = vld [vmem:[%s4 + $0xf0] sm:$0xff]
  %v1129 = vld [vmem:[%s4 + $0xf8] sm:$0xff]
  %v1130 = vld [vmem:[%s4 + $0x100] sm:$0xff]
  %v1131 = vld [vmem:[%s4 + $0x108] sm:$0xff]
  %v1132 = vld [vmem:[%s4 + $0x110] sm:$0xff]
  %v1133 = vld [vmem:[%s4 + $0x118] sm:$0xff]
  %v1134 = vld [vmem:[%s4 + $0x120] sm:$0xff]
  %v1135 = vld [vmem:[%s4 + $0x128] sm:$0xff]
  %v1136 = vld [vmem:[%s4 + $0x130] sm:$0xff]
  %v1137 = vld [vmem:[%s4 + $0x138] sm:$0xff]
  %v1138 = vld [vmem:[%s4 + $0x140] sm:$0xff]
  %v1139 = vld [vmem:[%s4 + $0x148] sm:$0xff]
  %v1140 = vld [vmem:[%s4 + $0x150] sm:$0xff]
  %v1141 = vld [vmem:[%s4 + $0x158] sm:$0xff]
  %v1142 = vld [vmem:[%s4 + $0x160] sm:$0xff]
  %v1143 = vld [vmem:[%s4 + $0x168] sm:$0xff]
  %v1144 = vld [vmem:[%s4 + $0x170] sm:$0xff]
  %v1145 = vld [vmem:[%s4 + $0x178] sm:$0xff]
  %v1146 = vld [vmem:[%s4 + $0x180] sm:$0xff]
  %v1147 = vld [vmem:[%s4 + $0x188] sm:$0xff]
  %v1148 = vld [vmem:[%s4 + $0x190] sm:$0xff]
  %v1149 = vld [vmem:[%s4 + $0x198] sm:$0xff]
  %v1150 = vld [vmem:[%s4 + $0x1a0] sm:$0xff]
  %v1151 = vld [vmem:[%s4 + $0x1a8] sm:$0xff]
  %v1152 = vld [vmem:[%s4 + $0x1b0] sm:$0xff]
  %v1153 = vld [vmem:[%s4 + $0x1b8] sm:$0xff]
  %v1154 = vld [vmem:[%s4 + $0x1c0] sm:$0xff]
  %v1155 = vld [vmem:[%s4 + $0x1c8] sm:$0xff]
  %v1156 = vld [vmem:[%s4 + $0x1d0] sm:$0xff]
  %v1157 = vld [vmem:[%s4 + $0x1d8] sm:$0xff]
  %v1158 = vld [vmem:[%s4 + $0x1e0] sm:$0xff]
  %v1159 = vld [vmem:[%s4 + $0x1e8] sm:$0xff]
  %v1160 = vld [vmem:[%s4 + $0x1f0] sm:$0xff]
  %v1161 = vld [vmem:[%s4 + $0x1f8] sm:$0xff]
  %v1162 = vld [vmem:[#allocation4] sm:$0xff]
  %v1163 = vld [vmem:[%s5] sm:$0xff]
  %v1164 = vld [vmem:[%s5 + $0x8] sm:$0xff]
  %v1165 = vld [vmem:[%s5 + $0x10] sm:$0xff]
  %v1166 = vld [vmem:[%s5 + $0x18] sm:$0xff]
  %v1167 = vld [vmem:[%s5 + $0x20] sm:$0xff]
  %v1168 = vld [vmem:[%s5 + $0x28] sm:$0xff]
  %v1169 = vld [vmem:[%s5 + $0x30] sm:$0xff]
  %v1170 = vld [vmem:[%s5 + $0x38] sm:$0xff]
  %v1171 = vld [vmem:[%s5 + $0x40] sm:$0xff]
  %v1172 = vld [vmem:[%s5 + $0x48] sm:$0xff]
  %v1173 = vld [vmem:[%s5 + $0x50] sm:$0xff]
  %v1174 = vld [vmem:[%s5 + $0x58] sm:$0xff]
  %v1175 = vld [vmem:[%s5 + $0x60] sm:$0xff]
  %v1176 = vld [vmem:[%s5 + $0x68] sm:$0xff]
  %v1177 = vld [vmem:[%s5 + $0x70] sm:$0xff]
  %v1178 = vld [vmem:[%s5 + $0x78] sm:$0xff]
  %v1179 = vld [vmem:[%s5 + $0x80] sm:$0xff]
  %v1180 = vld [vmem:[%s5 + $0x88] sm:$0xff]
  %v1181 = vld [vmem:[%s5 + $0x90] sm:$0xff]
  %v1182 = vld [vmem:[%s5 + $0x98] sm:$0xff]
  %v1183 = vld [vmem:[%s5 + $0xa0] sm:$0xff]
  %v1184 = vld [vmem:[%s5 + $0xa8] sm:$0xff]
  %v1185 = vld [vmem:[%s5 + $0xb0] sm:$0xff]
  %v1186 = vld [vmem:[%s5 + $0xb8] sm:$0xff]
  %v1187 = vld [vmem:[%s5 + $0xc0] sm:$0xff]
  %v1188 = vld [vmem:[%s5 + $0xc8] sm:$0xff]
  %v1189 = vld [vmem:[%s5 + $0xd0] sm:$0xff]
  %v1190 = vld [vmem:[%s5 + $0xd8] sm:$0xff]
  %v1191 = vld [vmem:[%s5 + $0xe0] sm:$0xff]
  %v1192 = vld [vmem:[%s5 + $0xe8] sm:$0xff]
  %v1193 = vld [vmem:[%s5 + $0xf0] sm:$0xff]
  %v1194 = vld [vmem:[%s5 + $0xf8] sm:$0xff]
  %v1195 = vld [vmem:[%s5 + $0x100] sm:$0xff]
  %v1196 = vld [vmem:[%s5 + $0x108] sm:$0xff]
  %v1197 = vld [vmem:[%s5 + $0x110] sm:$0xff]
  %v1198 = vld [vmem:[%s5 + $0x118] sm:$0xff]
  %v1199 = vld [vmem:[%s5 + $0x120] sm:$0xff]
  %v1200 = vld [vmem:[%s5 + $0x128] sm:$0xff]
  %v1201 = vld [vmem:[%s5 + $0x130] sm:$0xff]
  %v1202 = vld [vmem:[%s5 + $0x138] sm:$0xff]
  %v1203 = vld [vmem:[%s5 + $0x140] sm:$0xff]
  %v1204 = vld [vmem:[%s5 + $0x148] sm:$0xff]
  %v1205 = vld [vmem:[%s5 + $0x150] sm:$0xff]
  %v1206 = vld [vmem:[%s5 + $0x158] sm:$0xff]
  %v1207 = vld [vmem:[%s5 + $0x160] sm:$0xff]
  %v1208 = vld [vmem:[%s5 + $0x168] sm:$0xff]
  %v1209 = vld [vmem:[%s5 + $0x170] sm:$0xff]
  %v1210 = vld [vmem:[%s5 + $0x178] sm:$0xff]
  %v1211 = vld [vmem:[%s5 + $0x180] sm:$0xff]
  %v1212 = vld [vmem:[%s5 + $0x188] sm:$0xff]
  %v1213 = vld [vmem:[%s5 + $0x190] sm:$0xff]
  %v1214 = vld [vmem:[%s5 + $0x198] sm:$0xff]
  %v1215 = vld [vmem:[%s5 + $0x1a0] sm:$0xff]
  %v1216 = vld [vmem:[%s5 + $0x1a8] sm:$0xff]
  %v1217 = vld [vmem:[%s5 + $0x1b0] sm:$0xff]
  %v1218 = vld [vmem:[%s5 + $0x1b8] sm:$0xff]
  %v1219 = vld [vmem:[%s5 + $0x1c0] sm:$0xff]
  %v1220 = vld [vmem:[%s5 + $0x1c8] sm:$0xff]
  %v1221 = vld [vmem:[%s5 + $0x1d0] sm:$0xff]
  %v1222 = vld [vmem:[%s5 + $0x1d8] sm:$0xff]
  %v1223 = vld [vmem:[%s5 + $0x1e0] sm:$0xff]
  %v1224 = vld [vmem:[%s5 + $0x1e8] sm:$0xff]
  %v1225 = vld [vmem:[%s5 + $0x1f0] sm:$0xff]
  %v1226 = vld [vmem:[%s5 + $0x1f8] sm:$0xff]
  %1227 = vmatpush.msra.mxu0 %v1223
  %1228 = vmatpush.msra.mxu0 %v1219
  %1229 = vmatpush.msra.mxu0 %v1215
  %1230 = vmatpush.msra.mxu0 %v1211
  %1231 = vmatpush.msra.mxu0 %v1207
  %1232 = vmatpush.msra.mxu0 %v1203
  %1233 = vmatpush.msra.mxu0 %v1199
  %1234 = vmatpush.msra.mxu0 %v1195
  %1235 = vmatpush.msra.mxu0 %v1191
  %1236 = vmatpush.msra.mxu0 %v1187
  %1237 = vmatpush.msra.mxu0 %v1183
  %1238 = vmatpush.msra.mxu0 %v1179
  %1239 = vmatpush.msra.mxu0 %v1175
  %1240 = vmatpush.msra.mxu0 %v1171
  %1241 = vmatpush.msra.mxu0 %v1167
  %1242 = vmatpush.msra.mxu0 %v1163
  %1243 = vmatmul.f32.gmra.mxu0 %v1162
  %v1244 = vpop.f32.mrf.mxu0
  %v1245 = vadd.f32 0.0, %v1244
  %1246 = vdwg.mxu0
  %1247 = vmatpush.msra.mxu0 %v1224
  %1248 = vmatpush.msra.mxu0 %v1220
  %1249 = vmatpush.msra.mxu0 %v1216
  %1250 = vmatpush.msra.mxu0 %v1212
  %1251 = vmatpush.msra.mxu0 %v1208
  %1252 = vmatpush.msra.mxu0 %v1204
  %1253 = vmatpush.msra.mxu0 %v1200
  %1254 = vmatpush.msra.mxu0 %v1196
  %1255 = vmatpush.msra.mxu0 %v1192
  %1256 = vmatpush.msra.mxu0 %v1188
  %1257 = vmatpush.msra.mxu0 %v1184
  %1258 = vmatpush.msra.mxu0 %v1180
  %1259 = vmatpush.msra.mxu0 %v1176
  %1260 = vmatpush.msra.mxu0 %v1172
  %1261 = vmatpush.msra.mxu0 %v1168
  %1262 = vmatpush.msra.mxu0 %v1164
  %1263 = vmatmul.f32.gmra.mxu0 %v1162
  %v1264 = vpop.f32.mrf.mxu0
  %v1265 = vadd.f32 0.0, %v1264
  %1266 = vdwg.mxu0
  %1267 = vmatpush.msra.mxu0 %v1225
  %1268 = vmatpush.msra.mxu0 %v1221
  %1269 = vmatpush.msra.mxu0 %v1217
  %1270 = vmatpush.msra.mxu0 %v1213
  %1271 = vmatpush.msra.mxu0 %v1209
  %1272 = vmatpush.msra.mxu0 %v1205
  %1273 = vmatpush.msra.mxu0 %v1201
  %1274 = vmatpush.msra.mxu0 %v1197
  %1275 = vmatpush.msra.mxu0 %v1193
  %1276 = vmatpush.msra.mxu0 %v1189
  %1277 = vmatpush.msra.mxu0 %v1185
  %1278 = vmatpush.msra.mxu0 %v1181
  %1279 = vmatpush.msra.mxu0 %v1177
  %1280 = vmatpush.msra.mxu0 %v1173
  %1281 = vmatpush.msra.mxu0 %v1169
  %1282 = vmatpush.msra.mxu0 %v1165
  %1283 = vmatmul.f32.gmra.mxu0 %v1162
  %v1284 = vpop.f32.mrf.mxu0
  %v1285 = vadd.f32 0.0, %v1284
  %1286 = vdwg.mxu0
  %1287 = vmatpush.msra.mxu0 %v1226
  %1288 = vmatpush.msra.mxu0 %v1222
  %1289 = vmatpush.msra.mxu0 %v1218
  %1290 = vmatpush.msra.mxu0 %v1214
  %1291 = vmatpush.msra.mxu0 %v1210
  %1292 = vmatpush.msra.mxu0 %v1206
  %1293 = vmatpush.msra.mxu0 %v1202
  %1294 = vmatpush.msra.mxu0 %v1198
  %1295 = vmatpush.msra.mxu0 %v1194
  %1296 = vmatpush.msra.mxu0 %v1190
  %1297 = vmatpush.msra.mxu0 %v1186
  %1298 = vmatpush.msra.mxu0 %v1182
  %1299 = vmatpush.msra.mxu0 %v1178
  %1300 = vmatpush.msra.mxu0 %v1174
  %1301 = vmatpush.msra.mxu0 %v1170
  %1302 = vmatpush.msra.mxu0 %v1166
  %1303 = vmatmul.f32.gmra.mxu0 %v1162
  %v1304 = vpop.f32.mrf.mxu0
  %v1305 = vadd.f32 0.0, %v1304
  %1306 = vdwg.mxu0
  %1307 = vmatpush.msra.mxu0 %v1158
  %1308 = vmatpush.msra.mxu0 %v1154
  %1309 = vmatpush.msra.mxu0 %v1150
  %1310 = vmatpush.msra.mxu0 %v1146
  %1311 = vmatpush.msra.mxu0 %v1142
  %1312 = vmatpush.msra.mxu0 %v1138
  %1313 = vmatpush.msra.mxu0 %v1134
  %1314 = vmatpush.msra.mxu0 %v1130
  %1315 = vmatpush.msra.mxu0 %v1126
  %1316 = vmatpush.msra.mxu0 %v1122
  %1317 = vmatpush.msra.mxu0 %v1118
  %1318 = vmatpush.msra.mxu0 %v1114
  %1319 = vmatpush.msra.mxu0 %v1110
  %1320 = vmatpush.msra.mxu0 %v1106
  %1321 = vmatpush.msra.mxu0 %v1102
  %1322 = vmatpush.msra.mxu0 %v1098
  %1323 = vmatmul.f32.gmra.mxu0 %v1095
  %v1324 = vpop.f32.mrf.mxu0
  %v1325 = vadd.f32 %v1245, %v1324
  %1326 = vdwg.mxu0
  %1327 = vmatpush.msra.mxu0 %v1159
  %1328 = vmatpush.msra.mxu0 %v1155
  %1329 = vmatpush.msra.mxu0 %v1151
  %1330 = vmatpush.msra.mxu0 %v1147
  %1331 = vmatpush.msra.mxu0 %v1143
  %1332 = vmatpush.msra.mxu0 %v1139
  %1333 = vmatpush.msra.mxu0 %v1135
  %1334 = vmatpush.msra.mxu0 %v1131
  %1335 = vmatpush.msra.mxu0 %v1127
  %1336 = vmatpush.msra.mxu0 %v1123
  %1337 = vmatpush.msra.mxu0 %v1119
  %1338 = vmatpush.msra.mxu0 %v1115
  %1339 = vmatpush.msra.mxu0 %v1111
  %1340 = vmatpush.msra.mxu0 %v1107
  %1341 = vmatpush.msra.mxu0 %v1103
  %1342 = vmatpush.msra.mxu0 %v1099
  %1343 = vmatmul.f32.gmra.mxu0 %v1095
  %v1344 = vpop.f32.mrf.mxu0
  %v1345 = vadd.f32 %v1265, %v1344
  %1346 = vdwg.mxu0
  %1347 = vmatpush.msra.mxu0 %v1160
  %1348 = vmatpush.msra.mxu0 %v1156
  %1349 = vmatpush.msra.mxu0 %v1152
  %1350 = vmatpush.msra.mxu0 %v1148
  %1351 = vmatpush.msra.mxu0 %v1144
  %1352 = vmatpush.msra.mxu0 %v1140
  %1353 = vmatpush.msra.mxu0 %v1136
  %1354 = vmatpush.msra.mxu0 %v1132
  %1355 = vmatpush.msra.mxu0 %v1128
  %1356 = vmatpush.msra.mxu0 %v1124
  %1357 = vmatpush.msra.mxu0 %v1120
  %1358 = vmatpush.msra.mxu0 %v1116
  %1359 = vmatpush.msra.mxu0 %v1112
  %1360 = vmatpush.msra.mxu0 %v1108
  %1361 = vmatpush.msra.mxu0 %v1104
  %1362 = vmatpush.msra.mxu0 %v1100
  %1363 = vmatmul.f32.gmra.mxu0 %v1095
  %v1364 = vpop.f32.mrf.mxu0
  %v1365 = vadd.f32 %v1285, %v1364
  %1366 = vdwg.mxu0
  %1367 = vmatpush.msra.mxu0 %v1161
  %1368 = vmatpush.msra.mxu0 %v1157
  %1369 = vmatpush.msra.mxu0 %v1153
  %1370 = vmatpush.msra.mxu0 %v1149
  %1371 = vmatpush.msra.mxu0 %v1145
  %1372 = vmatpush.msra.mxu0 %v1141
  %1373 = vmatpush.msra.mxu0 %v1137
  %1374 = vmatpush.msra.mxu0 %v1133
  %1375 = vmatpush.msra.mxu0 %v1129
  %1376 = vmatpush.msra.mxu0 %v1125
  %1377 = vmatpush.msra.mxu0 %v1121
  %1378 = vmatpush.msra.mxu0 %v1117
  %1379 = vmatpush.msra.mxu0 %v1113
  %1380 = vmatpush.msra.mxu0 %v1109
  %1381 = vmatpush.msra.mxu0 %v1105
  %1382 = vmatpush.msra.mxu0 %v1101
  %1383 = vmatmul.f32.gmra.mxu0 %v1095
  %v1384 = vpop.f32.mrf.mxu0
  %v1385 = vadd.f32 %v1305, %v1384
  %1386 = vdwg.mxu0
  %v1387 = vadd.f32 %v1325, %v287
  %v1388 = vadd.f32 %v1345, %v288
  %v1389 = vadd.f32 %v1365, %v289
  %v1390 = vadd.f32 %v1385, %v290
  %v1391 = vxor.u32 %v1387, 2147483648
  %v1392 = vmul.f32 %v1391, 1.442695
  %v1393 = vpow.pop %v1392
  %v1394 = vadd.f32 %v1393, 1.0
  %v1395 = vrcp.pop %v1394
  %v1396 = vmul.f32 %v1394, %v1395
  %v1397 = vsub.f32 1.0, %v1396
  %v1398 = vmul.f32 %v1395, %v1397
  %v1399 = vadd.f32 %v1395, %v1398
  %vm1400 = vweird.f32 %v1394
  %vm1401 = vweird.f32 %v1395
  %vm1402 = vmor %vm1400, %vm1401
  %v1403 = vsel %vm1402, %v1395, %v1399
  %v1404 = vand.u32 2147483647, %v1394
  %vm1405 = vcmp.eq.f32.partialorder %v1404, 8.507059e+37
  %v1406 = vand.u32 %v1394, 2147483648
  %v1407 = vor.u32 1.1754944e-38, %v1406
  %v1408 = vsel %vm1405, %v1407, %v1403
  %v1409 = vmul.f32 1.0, %v1408
  %v1410 = vxor.u32 %v1388, 2147483648
  %v1411 = vmul.f32 %v1410, 1.442695
  %v1412 = vpow.pop %v1411
  %v1413 = vadd.f32 %v1412, 1.0
  %v1414 = vrcp.pop %v1413
  %v1415 = vmul.f32 %v1413, %v1414
  %v1416 = vsub.f32 1.0, %v1415
  %v1417 = vmul.f32 %v1414, %v1416
  %v1418 = vadd.f32 %v1414, %v1417
  %vm1419 = vweird.f32 %v1413
  %vm1420 = vweird.f32 %v1414
  %vm1421 = vmor %vm1419, %vm1420
  %v1422 = vsel %vm1421, %v1414, %v1418
  %v1423 = vand.u32 2147483647, %v1413
  %vm1424 = vcmp.eq.f32.partialorder %v1423, 8.507059e+37
  %v1425 = vand.u32 %v1413, 2147483648
  %v1426 = vor.u32 1.1754944e-38, %v1425
  %v1427 = vsel %vm1424, %v1426, %v1422
  %v1428 = vmul.f32 1.0, %v1427
  %v1429 = vtanh.pop %v1389
  %v1430 = vxor.u32 %v1390, 2147483648
  %v1431 = vmul.f32 %v1430, 1.442695
  %v1432 = vpow.pop %v1431
  %v1433 = vadd.f32 %v1432, 1.0
  %v1434 = vrcp.pop %v1433
  %v1435 = vmul.f32 %v1433, %v1434
  %v1436 = vsub.f32 1.0, %v1435
  %v1437 = vmul.f32 %v1434, %v1436
  %v1438 = vadd.f32 %v1434, %v1437
  %vm1439 = vweird.f32 %v1433
  %vm1440 = vweird.f32 %v1434
  %vm1441 = vmor %vm1439, %vm1440
  %v1442 = vsel %vm1441, %v1434, %v1438
  %v1443 = vand.u32 2147483647, %v1433
  %vm1444 = vcmp.eq.f32.partialorder %v1443, 8.507059e+37
  %v1445 = vand.u32 %v1433, 2147483648
  %v1446 = vor.u32 1.1754944e-38, %v1445
  %v1447 = vsel %vm1444, %v1446, %v1442
  %v1448 = vmul.f32 1.0, %v1447
  %v1449 = vld [vmem:[#allocation6] sm:$0xff]
  %v1450 = vmul.f32 %v1428, %v1449
  %v1451 = vmul.f32 %v1409, %v1429
  %v1452 = vadd.f32 %v1450, %v1451
  %v1453 = vtanh.pop %v1452
  %v1454 = vmul.f32 %v1448, %v1453
  %1455 = vst [vmem:[#allocation6] sm:$0xff] %v1452
  %1456 = vst [vmem:[#allocation4] sm:$0xff] %v1454
  %s1457 = smul.u32 2, 4
  %s1458 = smul.addr %s1457, 8
  %s1459 = scalar_lea.vmem [#allocation2], %s1458
  %v1460 = vld [vmem:[%s1459] sm:$0xff]
  %v1461 = vld [vmem:[%s1459 + $0x8] sm:$0xff]
  %v1462 = vld [vmem:[%s1459 + $0x10] sm:$0xff]
  %v1463 = vld [vmem:[%s1459 + $0x18] sm:$0xff]
  %v1464 = vld [vmem:[#allocation3] sm:$0xff]
  %v1465 = vld [vmem:[%s2] sm:$0xff]
  %v1466 = vld [vmem:[%s2 + $0x8] sm:$0xff]
  %v1467 = vld [vmem:[%s2 + $0x10] sm:$0xff]
  %v1468 = vld [vmem:[%s2 + $0x18] sm:$0xff]
  %v1469 = vld [vmem:[%s2 + $0x20] sm:$0xff]
  %v1470 = vld [vmem:[%s2 + $0x28] sm:$0xff]
  %v1471 = vld [vmem:[%s2 + $0x30] sm:$0xff]
  %v1472 = vld [vmem:[%s2 + $0x38] sm:$0xff]
  %v1473 = vld [vmem:[%s2 + $0x40] sm:$0xff]
  %v1474 = vld [vmem:[%s2 + $0x48] sm:$0xff]
  %v1475 = vld [vmem:[%s2 + $0x50] sm:$0xff]
  %v1476 = vld [vmem:[%s2 + $0x58] sm:$0xff]
  %v1477 = vld [vmem:[%s2 + $0x60] sm:$0xff]
  %v1478 = vld [vmem:[%s2 + $0x68] sm:$0xff]
  %v1479 = vld [vmem:[%s2 + $0x70] sm:$0xff]
  %v1480 = vld [vmem:[%s2 + $0x78] sm:$0xff]
  %v1481 = vld [vmem:[%s2 + $0x80] sm:$0xff]
  %v1482 = vld [vmem:[%s2 + $0x88] sm:$0xff]
  %v1483 = vld [vmem:[%s2 + $0x90] sm:$0xff]
  %v1484 = vld [vmem:[%s2 + $0x98] sm:$0xff]
  %v1485 = vld [vmem:[%s2 + $0xa0] sm:$0xff]
  %v1486 = vld [vmem:[%s2 + $0xa8] sm:$0xff]
  %v1487 = vld [vmem:[%s2 + $0xb0] sm:$0xff]
  %v1488 = vld [vmem:[%s2 + $0xb8] sm:$0xff]
  %v1489 = vld [vmem:[%s2 + $0xc0] sm:$0xff]
  %v1490 = vld [vmem:[%s2 + $0xc8] sm:$0xff]
  %v1491 = vld [vmem:[%s2 + $0xd0] sm:$0xff]
  %v1492 = vld [vmem:[%s2 + $0xd8] sm:$0xff]
  %v1493 = vld [vmem:[%s2 + $0xe0] sm:$0xff]
  %v1494 = vld [vmem:[%s2 + $0xe8] sm:$0xff]
  %v1495 = vld [vmem:[%s2 + $0xf0] sm:$0xff]
  %v1496 = vld [vmem:[%s2 + $0xf8] sm:$0xff]
  %v1497 = vld [vmem:[%s2 + $0x100] sm:$0xff]
  %v1498 = vld [vmem:[%s2 + $0x108] sm:$0xff]
  %v1499 = vld [vmem:[%s2 + $0x110] sm:$0xff]
  %v1500 = vld [vmem:[%s2 + $0x118] sm:$0xff]
  %v1501 = vld [vmem:[%s2 + $0x120] sm:$0xff]
  %v1502 = vld [vmem:[%s2 + $0x128] sm:$0xff]
  %v1503 = vld [vmem:[%s2 + $0x130] sm:$0xff]
  %v1504 = vld [vmem:[%s2 + $0x138] sm:$0xff]
  %v1505 = vld [vmem:[%s2 + $0x140] sm:$0xff]
  %v1506 = vld [vmem:[%s2 + $0x148] sm:$0xff]
  %v1507 = vld [vmem:[%s2 + $0x150] sm:$0xff]
  %v1508 = vld [vmem:[%s2 + $0x158] sm:$0xff]
  %v1509 = vld [vmem:[%s2 + $0x160] sm:$0xff]
  %v1510 = vld [vmem:[%s2 + $0x168] sm:$0xff]
  %v1511 = vld [vmem:[%s2 + $0x170] sm:$0xff]
  %v1512 = vld [vmem:[%s2 + $0x178] sm:$0xff]
  %v1513 = vld [vmem:[%s2 + $0x180] sm:$0xff]
  %v1514 = vld [vmem:[%s2 + $0x188] sm:$0xff]
  %v1515 = vld [vmem:[%s2 + $0x190] sm:$0xff]
  %v1516 = vld [vmem:[%s2 + $0x198] sm:$0xff]
  %v1517 = vld [vmem:[%s2 + $0x1a0] sm:$0xff]
  %v1518 = vld [vmem:[%s2 + $0x1a8] sm:$0xff]
  %v1519 = vld [vmem:[%s2 + $0x1b0] sm:$0xff]
  %v1520 = vld [vmem:[%s2 + $0x1b8] sm:$0xff]
  %v1521 = vld [vmem:[%s2 + $0x1c0] sm:$0xff]
  %v1522 = vld [vmem:[%s2 + $0x1c8] sm:$0xff]
  %v1523 = vld [vmem:[%s2 + $0x1d0] sm:$0xff]
  %v1524 = vld [vmem:[%s2 + $0x1d8] sm:$0xff]
  %v1525 = vld [vmem:[%s2 + $0x1e0] sm:$0xff]
  %v1526 = vld [vmem:[%s2 + $0x1e8] sm:$0xff]
  %v1527 = vld [vmem:[%s2 + $0x1f0] sm:$0xff]
  %v1528 = vld [vmem:[%s2 + $0x1f8] sm:$0xff]
  %1529 = vmatpush.msra.mxu0 %v1525
  %1530 = vmatpush.msra.mxu0 %v1521
  %1531 = vmatpush.msra.mxu0 %v1517
  %1532 = vmatpush.msra.mxu0 %v1513
  %1533 = vmatpush.msra.mxu0 %v1509
  %1534 = vmatpush.msra.mxu0 %v1505
  %1535 = vmatpush.msra.mxu0 %v1501
  %1536 = vmatpush.msra.mxu0 %v1497
  %1537 = vmatpush.msra.mxu0 %v1493
  %1538 = vmatpush.msra.mxu0 %v1489
  %1539 = vmatpush.msra.mxu0 %v1485
  %1540 = vmatpush.msra.mxu0 %v1481
  %1541 = vmatpush.msra.mxu0 %v1477
  %1542 = vmatpush.msra.mxu0 %v1473
  %1543 = vmatpush.msra.mxu0 %v1469
  %1544 = vmatpush.msra.mxu0 %v1465
  %1545 = vmatmul.f32.gmra.mxu0 %v1464
  %v1546 = vpop.f32.mrf.mxu0
  %v1547 = vadd.f32 0.0, %v1546
  %1548 = vdwg.mxu0
  %1549 = vmatpush.msra.mxu0 %v1526
  %1550 = vmatpush.msra.mxu0 %v1522
  %1551 = vmatpush.msra.mxu0 %v1518
  %1552 = vmatpush.msra.mxu0 %v1514
  %1553 = vmatpush.msra.mxu0 %v1510
  %1554 = vmatpush.msra.mxu0 %v1506
  %1555 = vmatpush.msra.mxu0 %v1502
  %1556 = vmatpush.msra.mxu0 %v1498
  %1557 = vmatpush.msra.mxu0 %v1494
  %1558 = vmatpush.msra.mxu0 %v1490
  %1559 = vmatpush.msra.mxu0 %v1486
  %1560 = vmatpush.msra.mxu0 %v1482
  %1561 = vmatpush.msra.mxu0 %v1478
  %1562 = vmatpush.msra.mxu0 %v1474
  %1563 = vmatpush.msra.mxu0 %v1470
  %1564 = vmatpush.msra.mxu0 %v1466
  %1565 = vmatmul.f32.gmra.mxu0 %v1464
  %v1566 = vpop.f32.mrf.mxu0
  %v1567 = vadd.f32 0.0, %v1566
  %1568 = vdwg.mxu0
  %1569 = vmatpush.msra.mxu0 %v1527
  %1570 = vmatpush.msra.mxu0 %v1523
  %1571 = vmatpush.msra.mxu0 %v1519
  %1572 = vmatpush.msra.mxu0 %v1515
  %1573 = vmatpush.msra.mxu0 %v1511
  %1574 = vmatpush.msra.mxu0 %v1507
  %1575 = vmatpush.msra.mxu0 %v1503
  %1576 = vmatpush.msra.mxu0 %v1499
  %1577 = vmatpush.msra.mxu0 %v1495
  %1578 = vmatpush.msra.mxu0 %v1491
  %1579 = vmatpush.msra.mxu0 %v1487
  %1580 = vmatpush.msra.mxu0 %v1483
  %1581 = vmatpush.msra.mxu0 %v1479
  %1582 = vmatpush.msra.mxu0 %v1475
  %1583 = vmatpush.msra.mxu0 %v1471
  %1584 = vmatpush.msra.mxu0 %v1467
  %1585 = vmatmul.f32.gmra.mxu0 %v1464
  %v1586 = vpop.f32.mrf.mxu0
  %v1587 = vadd.f32 0.0, %v1586
  %1588 = vdwg.mxu0
  %1589 = vmatpush.msra.mxu0 %v1528
  %1590 = vmatpush.msra.mxu0 %v1524
  %1591 = vmatpush.msra.mxu0 %v1520
  %1592 = vmatpush.msra.mxu0 %v1516
  %1593 = vmatpush.msra.mxu0 %v1512
  %1594 = vmatpush.msra.mxu0 %v1508
  %1595 = vmatpush.msra.mxu0 %v1504
  %1596 = vmatpush.msra.mxu0 %v1500
  %1597 = vmatpush.msra.mxu0 %v1496
  %1598 = vmatpush.msra.mxu0 %v1492
  %1599 = vmatpush.msra.mxu0 %v1488
  %1600 = vmatpush.msra.mxu0 %v1484
  %1601 = vmatpush.msra.mxu0 %v1480
  %1602 = vmatpush.msra.mxu0 %v1476
  %1603 = vmatpush.msra.mxu0 %v1472
  %1604 = vmatpush.msra.mxu0 %v1468
  %1605 = vmatmul.f32.gmra.mxu0 %v1464
  %v1606 = vpop.f32.mrf.mxu0
  %v1607 = vadd.f32 0.0, %v1606
  %1608 = vdwg.mxu0
  %v1609 = vadd.f32 %v1460, %v1547
  %v1610 = vadd.f32 %v1461, %v1567
  %v1611 = vadd.f32 %v1462, %v1587
  %v1612 = vadd.f32 %v1463, %v1607
  %v1613 = vxor.u32 %v1609, 2147483648
  %v1614 = vmul.f32 %v1613, 1.442695
  %v1615 = vpow.pop %v1614
  %v1616 = vadd.f32 %v1615, 1.0
  %v1617 = vrcp.pop %v1616
  %v1618 = vmul.f32 %v1616, %v1617
  %v1619 = vsub.f32 1.0, %v1618
  %v1620 = vmul.f32 %v1617, %v1619
  %v1621 = vadd.f32 %v1617, %v1620
  %vm1622 = vweird.f32 %v1616
  %vm1623 = vweird.f32 %v1617
  %vm1624 = vmor %vm1622, %vm1623
  %v1625 = vsel %vm1624, %v1617, %v1621
  %v1626 = vand.u32 2147483647, %v1616
  %vm1627 = vcmp.eq.f32.partialorder %v1626, 8.507059e+37
  %v1628 = vand.u32 %v1616, 2147483648
  %v1629 = vor.u32 1.1754944e-38, %v1628
  %v1630 = vsel %vm1627, %v1629, %v1625
  %v1631 = vmul.f32 1.0, %v1630
  %v1632 = vxor.u32 %v1610, 2147483648
  %v1633 = vmul.f32 %v1632, 1.442695
  %v1634 = vpow.pop %v1633
  %v1635 = vadd.f32 %v1634, 1.0
  %v1636 = vrcp.pop %v1635
  %v1637 = vmul.f32 %v1635, %v1636
  %v1638 = vsub.f32 1.0, %v1637
  %v1639 = vmul.f32 %v1636, %v1638
  %v1640 = vadd.f32 %v1636, %v1639
  %vm1641 = vweird.f32 %v1635
  %vm1642 = vweird.f32 %v1636
  %vm1643 = vmor %vm1641, %vm1642
  %v1644 = vsel %vm1643, %v1636, %v1640
  %v1645 = vand.u32 2147483647, %v1635
  %vm1646 = vcmp.eq.f32.partialorder %v1645, 8.507059e+37
  %v1647 = vand.u32 %v1635, 2147483648
  %v1648 = vor.u32 1.1754944e-38, %v1647
  %v1649 = vsel %vm1646, %v1648, %v1644
  %v1650 = vmul.f32 1.0, %v1649
  %v1651 = vtanh.pop %v1611
  %v1652 = vxor.u32 %v1612, 2147483648
  %v1653 = vmul.f32 %v1652, 1.442695
  %v1654 = vpow.pop %v1653
  %v1655 = vadd.f32 %v1654, 1.0
  %v1656 = vrcp.pop %v1655
  %v1657 = vmul.f32 %v1655, %v1656
  %v1658 = vsub.f32 1.0, %v1657
  %v1659 = vmul.f32 %v1656, %v1658
  %v1660 = vadd.f32 %v1656, %v1659
  %vm1661 = vweird.f32 %v1655
  %vm1662 = vweird.f32 %v1656
  %vm1663 = vmor %vm1661, %vm1662
  %v1664 = vsel %vm1663, %v1656, %v1660
  %v1665 = vand.u32 2147483647, %v1655
  %vm1666 = vcmp.eq.f32.partialorder %v1665, 8.507059e+37
  %v1667 = vand.u32 %v1655, 2147483648
  %v1668 = vor.u32 1.1754944e-38, %v1667
  %v1669 = vsel %vm1666, %v1668, %v1664
  %v1670 = vmul.f32 1.0, %v1669
  %v1671 = vld [vmem:[#allocation5] sm:$0xff]
  %v1672 = vmul.f32 %v1650, %v1671
  %v1673 = vmul.f32 %v1631, %v1651
  %v1674 = vadd.f32 %v1672, %v1673
  %v1675 = vtanh.pop %v1674
  %v1676 = vmul.f32 %v1670, %v1675
  %1677 = vst [vmem:[#allocation5] sm:$0xff] %v1674
  %1678 = vst [vmem:[#allocation3] sm:$0xff] %v1676
  %v1679 = vld [vmem:[%s4] sm:$0xff]
  %v1680 = vld [vmem:[%s4 + $0x8] sm:$0xff]
  %v1681 = vld [vmem:[%s4 + $0x10] sm:$0xff]
  %v1682 = vld [vmem:[%s4 + $0x18] sm:$0xff]
  %v1683 = vld [vmem:[%s4 + $0x20] sm:$0xff]
  %v1684 = vld [vmem:[%s4 + $0x28] sm:$0xff]
  %v1685 = vld [vmem:[%s4 + $0x30] sm:$0xff]
  %v1686 = vld [vmem:[%s4 + $0x38] sm:$0xff]
  %v1687 = vld [vmem:[%s4 + $0x40] sm:$0xff]
  %v1688 = vld [vmem:[%s4 + $0x48] sm:$0xff]
  %v1689 = vld [vmem:[%s4 + $0x50] sm:$0xff]
  %v1690 = vld [vmem:[%s4 + $0x58] sm:$0xff]
  %v1691 = vld [vmem:[%s4 + $0x60] sm:$0xff]
  %v1692 = vld [vmem:[%s4 + $0x68] sm:$0xff]
  %v1693 = vld [vmem:[%s4 + $0x70] sm:$0xff]
  %v1694 = vld [vmem:[%s4 + $0x78] sm:$0xff]
  %v1695 = vld [vmem:[%s4 + $0x80] sm:$0xff]
  %v1696 = vld [vmem:[%s4 + $0x88] sm:$0xff]
  %v1697 = vld [vmem:[%s4 + $0x90] sm:$0xff]
  %v1698 = vld [vmem:[%s4 + $0x98] sm:$0xff]
  %v1699 = vld [vmem:[%s4 + $0xa0] sm:$0xff]
  %v1700 = vld [vmem:[%s4 + $0xa8] sm:$0xff]
  %v1701 = vld [vmem:[%s4 + $0xb0] sm:$0xff]
  %v1702 = vld [vmem:[%s4 + $0xb8] sm:$0xff]
  %v1703 = vld [vmem:[%s4 + $0xc0] sm:$0xff]
  %v1704 = vld [vmem:[%s4 + $0xc8] sm:$0xff]
  %v1705 = vld [vmem:[%s4 + $0xd0] sm:$0xff]
  %v1706 = vld [vmem:[%s4 + $0xd8] sm:$0xff]
  %v1707 = vld [vmem:[%s4 + $0xe0] sm:$0xff]
  %v1708 = vld [vmem:[%s4 + $0xe8] sm:$0xff]
  %v1709 = vld [vmem:[%s4 + $0xf0] sm:$0xff]
  %v1710 = vld [vmem:[%s4 + $0xf8] sm:$0xff]
  %v1711 = vld [vmem:[%s4 + $0x100] sm:$0xff]
  %v1712 = vld [vmem:[%s4 + $0x108] sm:$0xff]
  %v1713 = vld [vmem:[%s4 + $0x110] sm:$0xff]
  %v1714 = vld [vmem:[%s4 + $0x118] sm:$0xff]
  %v1715 = vld [vmem:[%s4 + $0x120] sm:$0xff]
  %v1716 = vld [vmem:[%s4 + $0x128] sm:$0xff]
  %v1717 = vld [vmem:[%s4 + $0x130] sm:$0xff]
  %v1718 = vld [vmem:[%s4 + $0x138] sm:$0xff]
  %v1719 = vld [vmem:[%s4 + $0x140] sm:$0xff]
  %v1720 = vld [vmem:[%s4 + $0x148] sm:$0xff]
  %v1721 = vld [vmem:[%s4 + $0x150] sm:$0xff]
  %v1722 = vld [vmem:[%s4 + $0x158] sm:$0xff]
  %v1723 = vld [vmem:[%s4 + $0x160] sm:$0xff]
  %v1724 = vld [vmem:[%s4 + $0x168] sm:$0xff]
  %v1725 = vld [vmem:[%s4 + $0x170] sm:$0xff]
  %v1726 = vld [vmem:[%s4 + $0x178] sm:$0xff]
  %v1727 = vld [vmem:[%s4 + $0x180] sm:$0xff]
  %v1728 = vld [vmem:[%s4 + $0x188] sm:$0xff]
  %v1729 = vld [vmem:[%s4 + $0x190] sm:$0xff]
  %v1730 = vld [vmem:[%s4 + $0x198] sm:$0xff]
  %v1731 = vld [vmem:[%s4 + $0x1a0] sm:$0xff]
  %v1732 = vld [vmem:[%s4 + $0x1a8] sm:$0xff]
  %v1733 = vld [vmem:[%s4 + $0x1b0] sm:$0xff]
  %v1734 = vld [vmem:[%s4 + $0x1b8] sm:$0xff]
  %v1735 = vld [vmem:[%s4 + $0x1c0] sm:$0xff]
  %v1736 = vld [vmem:[%s4 + $0x1c8] sm:$0xff]
  %v1737 = vld [vmem:[%s4 + $0x1d0] sm:$0xff]
  %v1738 = vld [vmem:[%s4 + $0x1d8] sm:$0xff]
  %v1739 = vld [vmem:[%s4 + $0x1e0] sm:$0xff]
  %v1740 = vld [vmem:[%s4 + $0x1e8] sm:$0xff]
  %v1741 = vld [vmem:[%s4 + $0x1f0] sm:$0xff]
  %v1742 = vld [vmem:[%s4 + $0x1f8] sm:$0xff]
  %v1743 = vld [vmem:[#allocation4] sm:$0xff]
  %v1744 = vld [vmem:[%s5] sm:$0xff]
  %v1745 = vld [vmem:[%s5 + $0x8] sm:$0xff]
  %v1746 = vld [vmem:[%s5 + $0x10] sm:$0xff]
  %v1747 = vld [vmem:[%s5 + $0x18] sm:$0xff]
  %v1748 = vld [vmem:[%s5 + $0x20] sm:$0xff]
  %v1749 = vld [vmem:[%s5 + $0x28] sm:$0xff]
  %v1750 = vld [vmem:[%s5 + $0x30] sm:$0xff]
  %v1751 = vld [vmem:[%s5 + $0x38] sm:$0xff]
  %v1752 = vld [vmem:[%s5 + $0x40] sm:$0xff]
  %v1753 = vld [vmem:[%s5 + $0x48] sm:$0xff]
  %v1754 = vld [vmem:[%s5 + $0x50] sm:$0xff]
  %v1755 = vld [vmem:[%s5 + $0x58] sm:$0xff]
  %v1756 = vld [vmem:[%s5 + $0x60] sm:$0xff]
  %v1757 = vld [vmem:[%s5 + $0x68] sm:$0xff]
  %v1758 = vld [vmem:[%s5 + $0x70] sm:$0xff]
  %v1759 = vld [vmem:[%s5 + $0x78] sm:$0xff]
  %v1760 = vld [vmem:[%s5 + $0x80] sm:$0xff]
  %v1761 = vld [vmem:[%s5 + $0x88] sm:$0xff]
  %v1762 = vld [vmem:[%s5 + $0x90] sm:$0xff]
  %v1763 = vld [vmem:[%s5 + $0x98] sm:$0xff]
  %v1764 = vld [vmem:[%s5 + $0xa0] sm:$0xff]
  %v1765 = vld [vmem:[%s5 + $0xa8] sm:$0xff]
  %v1766 = vld [vmem:[%s5 + $0xb0] sm:$0xff]
  %v1767 = vld [vmem:[%s5 + $0xb8] sm:$0xff]
  %v1768 = vld [vmem:[%s5 + $0xc0] sm:$0xff]
  %v1769 = vld [vmem:[%s5 + $0xc8] sm:$0xff]
  %v1770 = vld [vmem:[%s5 + $0xd0] sm:$0xff]
  %v1771 = vld [vmem:[%s5 + $0xd8] sm:$0xff]
  %v1772 = vld [vmem:[%s5 + $0xe0] sm:$0xff]
  %v1773 = vld [vmem:[%s5 + $0xe8] sm:$0xff]
  %v1774 = vld [vmem:[%s5 + $0xf0] sm:$0xff]
  %v1775 = vld [vmem:[%s5 + $0xf8] sm:$0xff]
  %v1776 = vld [vmem:[%s5 + $0x100] sm:$0xff]
  %v1777 = vld [vmem:[%s5 + $0x108] sm:$0xff]
  %v1778 = vld [vmem:[%s5 + $0x110] sm:$0xff]
  %v1779 = vld [vmem:[%s5 + $0x118] sm:$0xff]
  %v1780 = vld [vmem:[%s5 + $0x120] sm:$0xff]
  %v1781 = vld [vmem:[%s5 + $0x128] sm:$0xff]
  %v1782 = vld [vmem:[%s5 + $0x130] sm:$0xff]
  %v1783 = vld [vmem:[%s5 + $0x138] sm:$0xff]
  %v1784 = vld [vmem:[%s5 + $0x140] sm:$0xff]
  %v1785 = vld [vmem:[%s5 + $0x148] sm:$0xff]
  %v1786 = vld [vmem:[%s5 + $0x150] sm:$0xff]
  %v1787 = vld [vmem:[%s5 + $0x158] sm:$0xff]
  %v1788 = vld [vmem:[%s5 + $0x160] sm:$0xff]
  %v1789 = vld [vmem:[%s5 + $0x168] sm:$0xff]
  %v1790 = vld [vmem:[%s5 + $0x170] sm:$0xff]
  %v1791 = vld [vmem:[%s5 + $0x178] sm:$0xff]
  %v1792 = vld [vmem:[%s5 + $0x180] sm:$0xff]
  %v1793 = vld [vmem:[%s5 + $0x188] sm:$0xff]
  %v1794 = vld [vmem:[%s5 + $0x190] sm:$0xff]
  %v1795 = vld [vmem:[%s5 + $0x198] sm:$0xff]
  %v1796 = vld [vmem:[%s5 + $0x1a0] sm:$0xff]
  %v1797 = vld [vmem:[%s5 + $0x1a8] sm:$0xff]
  %v1798 = vld [vmem:[%s5 + $0x1b0] sm:$0xff]
  %v1799 = vld [vmem:[%s5 + $0x1b8] sm:$0xff]
  %v1800 = vld [vmem:[%s5 + $0x1c0] sm:$0xff]
  %v1801 = vld [vmem:[%s5 + $0x1c8] sm:$0xff]
  %v1802 = vld [vmem:[%s5 + $0x1d0] sm:$0xff]
  %v1803 = vld [vmem:[%s5 + $0x1d8] sm:$0xff]
  %v1804 = vld [vmem:[%s5 + $0x1e0] sm:$0xff]
  %v1805 = vld [vmem:[%s5 + $0x1e8] sm:$0xff]
  %v1806 = vld [vmem:[%s5 + $0x1f0] sm:$0xff]
  %v1807 = vld [vmem:[%s5 + $0x1f8] sm:$0xff]
  %1808 = vmatpush.msra.mxu0 %v1804
  %1809 = vmatpush.msra.mxu0 %v1800
  %1810 = vmatpush.msra.mxu0 %v1796
  %1811 = vmatpush.msra.mxu0 %v1792
  %1812 = vmatpush.msra.mxu0 %v1788
  %1813 = vmatpush.msra.mxu0 %v1784
  %1814 = vmatpush.msra.mxu0 %v1780
  %1815 = vmatpush.msra.mxu0 %v1776
  %1816 = vmatpush.msra.mxu0 %v1772
  %1817 = vmatpush.msra.mxu0 %v1768
  %1818 = vmatpush.msra.mxu0 %v1764
  %1819 = vmatpush.msra.mxu0 %v1760
  %1820 = vmatpush.msra.mxu0 %v1756
  %1821 = vmatpush.msra.mxu0 %v1752
  %1822 = vmatpush.msra.mxu0 %v1748
  %1823 = vmatpush.msra.mxu0 %v1744
  %1824 = vmatmul.f32.gmra.mxu0 %v1743
  %v1825 = vpop.f32.mrf.mxu0
  %v1826 = vadd.f32 0.0, %v1825
  %1827 = vdwg.mxu0
  %1828 = vmatpush.msra.mxu0 %v1805
  %1829 = vmatpush.msra.mxu0 %v1801
  %1830 = vmatpush.msra.mxu0 %v1797
  %1831 = vmatpush.msra.mxu0 %v1793
  %1832 = vmatpush.msra.mxu0 %v1789
  %1833 = vmatpush.msra.mxu0 %v1785
  %1834 = vmatpush.msra.mxu0 %v1781
  %1835 = vmatpush.msra.mxu0 %v1777
  %1836 = vmatpush.msra.mxu0 %v1773
  %1837 = vmatpush.msra.mxu0 %v1769
  %1838 = vmatpush.msra.mxu0 %v1765
  %1839 = vmatpush.msra.mxu0 %v1761
  %1840 = vmatpush.msra.mxu0 %v1757
  %1841 = vmatpush.msra.mxu0 %v1753
  %1842 = vmatpush.msra.mxu0 %v1749
  %1843 = vmatpush.msra.mxu0 %v1745
  %1844 = vmatmul.f32.gmra.mxu0 %v1743
  %v1845 = vpop.f32.mrf.mxu0
  %v1846 = vadd.f32 0.0, %v1845
  %1847 = vdwg.mxu0
  %1848 = vmatpush.msra.mxu0 %v1806
  %1849 = vmatpush.msra.mxu0 %v1802
  %1850 = vmatpush.msra.mxu0 %v1798
  %1851 = vmatpush.msra.mxu0 %v1794
  %1852 = vmatpush.msra.mxu0 %v1790
  %1853 = vmatpush.msra.mxu0 %v1786
  %1854 = vmatpush.msra.mxu0 %v1782
  %1855 = vmatpush.msra.mxu0 %v1778
  %1856 = vmatpush.msra.mxu0 %v1774
  %1857 = vmatpush.msra.mxu0 %v1770
  %1858 = vmatpush.msra.mxu0 %v1766
  %1859 = vmatpush.msra.mxu0 %v1762
  %1860 = vmatpush.msra.mxu0 %v1758
  %1861 = vmatpush.msra.mxu0 %v1754
  %1862 = vmatpush.msra.mxu0 %v1750
  %1863 = vmatpush.msra.mxu0 %v1746
  %1864 = vmatmul.f32.gmra.mxu0 %v1743
  %v1865 = vpop.f32.mrf.mxu0
  %v1866 = vadd.f32 0.0, %v1865
  %1867 = vdwg.mxu0
  %1868 = vmatpush.msra.mxu0 %v1807
  %1869 = vmatpush.msra.mxu0 %v1803
  %1870 = vmatpush.msra.mxu0 %v1799
  %1871 = vmatpush.msra.mxu0 %v1795
  %1872 = vmatpush.msra.mxu0 %v1791
  %1873 = vmatpush.msra.mxu0 %v1787
  %1874 = vmatpush.msra.mxu0 %v1783
  %1875 = vmatpush.msra.mxu0 %v1779
  %1876 = vmatpush.msra.mxu0 %v1775
  %1877 = vmatpush.msra.mxu0 %v1771
  %1878 = vmatpush.msra.mxu0 %v1767
  %1879 = vmatpush.msra.mxu0 %v1763
  %1880 = vmatpush.msra.mxu0 %v1759
  %1881 = vmatpush.msra.mxu0 %v1755
  %1882 = vmatpush.msra.mxu0 %v1751
  %1883 = vmatpush.msra.mxu0 %v1747
  %1884 = vmatmul.f32.gmra.mxu0 %v1743
  %v1885 = vpop.f32.mrf.mxu0
  %v1886 = vadd.f32 0.0, %v1885
  %1887 = vdwg.mxu0
  %1888 = vmatpush.msra.mxu0 %v1739
  %1889 = vmatpush.msra.mxu0 %v1735
  %1890 = vmatpush.msra.mxu0 %v1731
  %1891 = vmatpush.msra.mxu0 %v1727
  %1892 = vmatpush.msra.mxu0 %v1723
  %1893 = vmatpush.msra.mxu0 %v1719
  %1894 = vmatpush.msra.mxu0 %v1715
  %1895 = vmatpush.msra.mxu0 %v1711
  %1896 = vmatpush.msra.mxu0 %v1707
  %1897 = vmatpush.msra.mxu0 %v1703
  %1898 = vmatpush.msra.mxu0 %v1699
  %1899 = vmatpush.msra.mxu0 %v1695
  %1900 = vmatpush.msra.mxu0 %v1691
  %1901 = vmatpush.msra.mxu0 %v1687
  %1902 = vmatpush.msra.mxu0 %v1683
  %1903 = vmatpush.msra.mxu0 %v1679
  %1904 = vmatmul.f32.gmra.mxu0 %v1676
  %v1905 = vpop.f32.mrf.mxu0
  %v1906 = vadd.f32 %v1826, %v1905
  %1907 = vdwg.mxu0
  %1908 = vmatpush.msra.mxu0 %v1740
  %1909 = vmatpush.msra.mxu0 %v1736
  %1910 = vmatpush.msra.mxu0 %v1732
  %1911 = vmatpush.msra.mxu0 %v1728
  %1912 = vmatpush.msra.mxu0 %v1724
  %1913 = vmatpush.msra.mxu0 %v1720
  %1914 = vmatpush.msra.mxu0 %v1716
  %1915 = vmatpush.msra.mxu0 %v1712
  %1916 = vmatpush.msra.mxu0 %v1708
  %1917 = vmatpush.msra.mxu0 %v1704
  %1918 = vmatpush.msra.mxu0 %v1700
  %1919 = vmatpush.msra.mxu0 %v1696
  %1920 = vmatpush.msra.mxu0 %v1692
  %1921 = vmatpush.msra.mxu0 %v1688
  %1922 = vmatpush.msra.mxu0 %v1684
  %1923 = vmatpush.msra.mxu0 %v1680
  %1924 = vmatmul.f32.gmra.mxu0 %v1676
  %v1925 = vpop.f32.mrf.mxu0
  %v1926 = vadd.f32 %v1846, %v1925
  %1927 = vdwg.mxu0
  %1928 = vmatpush.msra.mxu0 %v1741
  %1929 = vmatpush.msra.mxu0 %v1737
  %1930 = vmatpush.msra.mxu0 %v1733
  %1931 = vmatpush.msra.mxu0 %v1729
  %1932 = vmatpush.msra.mxu0 %v1725
  %1933 = vmatpush.msra.mxu0 %v1721
  %1934 = vmatpush.msra.mxu0 %v1717
  %1935 = vmatpush.msra.mxu0 %v1713
  %1936 = vmatpush.msra.mxu0 %v1709
  %1937 = vmatpush.msra.mxu0 %v1705
  %1938 = vmatpush.msra.mxu0 %v1701
  %1939 = vmatpush.msra.mxu0 %v1697
  %1940 = vmatpush.msra.mxu0 %v1693
  %1941 = vmatpush.msra.mxu0 %v1689
  %1942 = vmatpush.msra.mxu0 %v1685
  %1943 = vmatpush.msra.mxu0 %v1681
  %1944 = vmatmul.f32.gmra.mxu0 %v1676
  %v1945 = vpop.f32.mrf.mxu0
  %v1946 = vadd.f32 %v1866, %v1945
  %1947 = vdwg.mxu0
  %1948 = vmatpush.msra.mxu0 %v1742
  %1949 = vmatpush.msra.mxu0 %v1738
  %1950 = vmatpush.msra.mxu0 %v1734
  %1951 = vmatpush.msra.mxu0 %v1730
  %1952 = vmatpush.msra.mxu0 %v1726
  %1953 = vmatpush.msra.mxu0 %v1722
  %1954 = vmatpush.msra.mxu0 %v1718
  %1955 = vmatpush.msra.mxu0 %v1714
  %1956 = vmatpush.msra.mxu0 %v1710
  %1957 = vmatpush.msra.mxu0 %v1706
  %1958 = vmatpush.msra.mxu0 %v1702
  %1959 = vmatpush.msra.mxu0 %v1698
  %1960 = vmatpush.msra.mxu0 %v1694
  %1961 = vmatpush.msra.mxu0 %v1690
  %1962 = vmatpush.msra.mxu0 %v1686
  %1963 = vmatpush.msra.mxu0 %v1682
  %1964 = vmatmul.f32.gmra.mxu0 %v1676
  %v1965 = vpop.f32.mrf.mxu0
  %v1966 = vadd.f32 %v1886, %v1965
  %1967 = vdwg.mxu0
  %v1968 = vadd.f32 %v1906, %v287
  %v1969 = vadd.f32 %v1926, %v288
  %v1970 = vadd.f32 %v1946, %v289
  %v1971 = vadd.f32 %v1966, %v290
  %v1972 = vxor.u32 %v1968, 2147483648
  %v1973 = vmul.f32 %v1972, 1.442695
  %v1974 = vpow.pop %v1973
  %v1975 = vadd.f32 %v1974, 1.0
  %v1976 = vrcp.pop %v1975
  %v1977 = vmul.f32 %v1975, %v1976
  %v1978 = vsub.f32 1.0, %v1977
  %v1979 = vmul.f32 %v1976, %v1978
  %v1980 = vadd.f32 %v1976, %v1979
  %vm1981 = vweird.f32 %v1975
  %vm1982 = vweird.f32 %v1976
  %vm1983 = vmor %vm1981, %vm1982
  %v1984 = vsel %vm1983, %v1976, %v1980
  %v1985 = vand.u32 2147483647, %v1975
  %vm1986 = vcmp.eq.f32.partialorder %v1985, 8.507059e+37
  %v1987 = vand.u32 %v1975, 2147483648
  %v1988 = vor.u32 1.1754944e-38, %v1987
  %v1989 = vsel %vm1986, %v1988, %v1984
  %v1990 = vmul.f32 1.0, %v1989
  %v1991 = vxor.u32 %v1969, 2147483648
  %v1992 = vmul.f32 %v1991, 1.442695
  %v1993 = vpow.pop %v1992
  %v1994 = vadd.f32 %v1993, 1.0
  %v1995 = vrcp.pop %v1994
  %v1996 = vmul.f32 %v1994, %v1995
  %v1997 = vsub.f32 1.0, %v1996
  %v1998 = vmul.f32 %v1995, %v1997
  %v1999 = vadd.f32 %v1995, %v1998
  %vm2000 = vweird.f32 %v1994
  %vm2001 = vweird.f32 %v1995
  %vm2002 = vmor %vm2000, %vm2001
  %v2003 = vsel %vm2002, %v1995, %v1999
  %v2004 = vand.u32 2147483647, %v1994
  %vm2005 = vcmp.eq.f32.partialorder %v2004, 8.507059e+37
  %v2006 = vand.u32 %v1994, 2147483648
  %v2007 = vor.u32 1.1754944e-38, %v2006
  %v2008 = vsel %vm2005, %v2007, %v2003
  %v2009 = vmul.f32 1.0, %v2008
  %v2010 = vtanh.pop %v1970
  %v2011 = vxor.u32 %v1971, 2147483648
  %v2012 = vmul.f32 %v2011, 1.442695
  %v2013 = vpow.pop %v2012
  %v2014 = vadd.f32 %v2013, 1.0
  %v2015 = vrcp.pop %v2014
  %v2016 = vmul.f32 %v2014, %v2015
  %v2017 = vsub.f32 1.0, %v2016
  %v2018 = vmul.f32 %v2015, %v2017
  %v2019 = vadd.f32 %v2015, %v2018
  %vm2020 = vweird.f32 %v2014
  %vm2021 = vweird.f32 %v2015
  %vm2022 = vmor %vm2020, %vm2021
  %v2023 = vsel %vm2022, %v2015, %v2019
  %v2024 = vand.u32 2147483647, %v2014
  %vm2025 = vcmp.eq.f32.partialorder %v2024, 8.507059e+37
  %v2026 = vand.u32 %v2014, 2147483648
  %v2027 = vor.u32 1.1754944e-38, %v2026
  %v2028 = vsel %vm2025, %v2027, %v2023
  %v2029 = vmul.f32 1.0, %v2028
  %v2030 = vld [vmem:[#allocation6] sm:$0xff]
  %v2031 = vmul.f32 %v2009, %v2030
  %v2032 = vmul.f32 %v1990, %v2010
  %v2033 = vadd.f32 %v2031, %v2032
  %v2034 = vtanh.pop %v2033
  %v2035 = vmul.f32 %v2029, %v2034
  %2036 = vst [vmem:[#allocation6] sm:$0xff] %v2033
  %2037 = vst [vmem:[#allocation4] sm:$0xff] %v2035
  %s2038 = smul.u32 3, 4
  %s2039 = smul.addr %s2038, 8
  %s2040 = scalar_lea.vmem [#allocation2], %s2039
  %v2041 = vld [vmem:[%s2040] sm:$0xff]
  %v2042 = vld [vmem:[%s2040 + $0x8] sm:$0xff]
  %v2043 = vld [vmem:[%s2040 + $0x10] sm:$0xff]
  %v2044 = vld [vmem:[%s2040 + $0x18] sm:$0xff]
  %v2045 = vld [vmem:[#allocation3] sm:$0xff]
  %v2046 = vld [vmem:[%s2] sm:$0xff]
  %v2047 = vld [vmem:[%s2 + $0x8] sm:$0xff]
  %v2048 = vld [vmem:[%s2 + $0x10] sm:$0xff]
  %v2049 = vld [vmem:[%s2 + $0x18] sm:$0xff]
  %v2050 = vld [vmem:[%s2 + $0x20] sm:$0xff]
  %v2051 = vld [vmem:[%s2 + $0x28] sm:$0xff]
  %v2052 = vld [vmem:[%s2 + $0x30] sm:$0xff]
  %v2053 = vld [vmem:[%s2 + $0x38] sm:$0xff]
  %v2054 = vld [vmem:[%s2 + $0x40] sm:$0xff]
  %v2055 = vld [vmem:[%s2 + $0x48] sm:$0xff]
  %v2056 = vld [vmem:[%s2 + $0x50] sm:$0xff]
  %v2057 = vld [vmem:[%s2 + $0x58] sm:$0xff]
  %v2058 = vld [vmem:[%s2 + $0x60] sm:$0xff]
  %v2059 = vld [vmem:[%s2 + $0x68] sm:$0xff]
  %v2060 = vld [vmem:[%s2 + $0x70] sm:$0xff]
  %v2061 = vld [vmem:[%s2 + $0x78] sm:$0xff]
  %v2062 = vld [vmem:[%s2 + $0x80] sm:$0xff]
  %v2063 = vld [vmem:[%s2 + $0x88] sm:$0xff]
  %v2064 = vld [vmem:[%s2 + $0x90] sm:$0xff]
  %v2065 = vld [vmem:[%s2 + $0x98] sm:$0xff]
  %v2066 = vld [vmem:[%s2 + $0xa0] sm:$0xff]
  %v2067 = vld [vmem:[%s2 + $0xa8] sm:$0xff]
  %v2068 = vld [vmem:[%s2 + $0xb0] sm:$0xff]
  %v2069 = vld [vmem:[%s2 + $0xb8] sm:$0xff]
  %v2070 = vld [vmem:[%s2 + $0xc0] sm:$0xff]
  %v2071 = vld [vmem:[%s2 + $0xc8] sm:$0xff]
  %v2072 = vld [vmem:[%s2 + $0xd0] sm:$0xff]
  %v2073 = vld [vmem:[%s2 + $0xd8] sm:$0xff]
  %v2074 = vld [vmem:[%s2 + $0xe0] sm:$0xff]
  %v2075 = vld [vmem:[%s2 + $0xe8] sm:$0xff]
  %v2076 = vld [vmem:[%s2 + $0xf0] sm:$0xff]
  %v2077 = vld [vmem:[%s2 + $0xf8] sm:$0xff]
  %v2078 = vld [vmem:[%s2 + $0x100] sm:$0xff]
  %v2079 = vld [vmem:[%s2 + $0x108] sm:$0xff]
  %v2080 = vld [vmem:[%s2 + $0x110] sm:$0xff]
  %v2081 = vld [vmem:[%s2 + $0x118] sm:$0xff]
  %v2082 = vld [vmem:[%s2 + $0x120] sm:$0xff]
  %v2083 = vld [vmem:[%s2 + $0x128] sm:$0xff]
  %v2084 = vld [vmem:[%s2 + $0x130] sm:$0xff]
  %v2085 = vld [vmem:[%s2 + $0x138] sm:$0xff]
  %v2086 = vld [vmem:[%s2 + $0x140] sm:$0xff]
  %v2087 = vld [vmem:[%s2 + $0x148] sm:$0xff]
  %v2088 = vld [vmem:[%s2 + $0x150] sm:$0xff]
  %v2089 = vld [vmem:[%s2 + $0x158] sm:$0xff]
  %v2090 = vld [vmem:[%s2 + $0x160] sm:$0xff]
  %v2091 = vld [vmem:[%s2 + $0x168] sm:$0xff]
  %v2092 = vld [vmem:[%s2 + $0x170] sm:$0xff]
  %v2093 = vld [vmem:[%s2 + $0x178] sm:$0xff]
  %v2094 = vld [vmem:[%s2 + $0x180] sm:$0xff]
  %v2095 = vld [vmem:[%s2 + $0x188] sm:$0xff]
  %v2096 = vld [vmem:[%s2 + $0x190] sm:$0xff]
  %v2097 = vld [vmem:[%s2 + $0x198] sm:$0xff]
  %v2098 = vld [vmem:[%s2 + $0x1a0] sm:$0xff]
  %v2099 = vld [vmem:[%s2 + $0x1a8] sm:$0xff]
  %v2100 = vld [vmem:[%s2 + $0x1b0] sm:$0xff]
  %v2101 = vld [vmem:[%s2 + $0x1b8] sm:$0xff]
  %v2102 = vld [vmem:[%s2 + $0x1c0] sm:$0xff]
  %v2103 = vld [vmem:[%s2 + $0x1c8] sm:$0xff]
  %v2104 = vld [vmem:[%s2 + $0x1d0] sm:$0xff]
  %v2105 = vld [vmem:[%s2 + $0x1d8] sm:$0xff]
  %v2106 = vld [vmem:[%s2 + $0x1e0] sm:$0xff]
  %v2107 = vld [vmem:[%s2 + $0x1e8] sm:$0xff]
  %v2108 = vld [vmem:[%s2 + $0x1f0] sm:$0xff]
  %v2109 = vld [vmem:[%s2 + $0x1f8] sm:$0xff]
  %2110 = vmatpush.msra.mxu0 %v2106
  %2111 = vmatpush.msra.mxu0 %v2102
  %2112 = vmatpush.msra.mxu0 %v2098
  %2113 = vmatpush.msra.mxu0 %v2094
  %2114 = vmatpush.msra.mxu0 %v2090
  %2115 = vmatpush.msra.mxu0 %v2086
  %2116 = vmatpush.msra.mxu0 %v2082
  %2117 = vmatpush.msra.mxu0 %v2078
  %2118 = vmatpush.msra.mxu0 %v2074
  %2119 = vmatpush.msra.mxu0 %v2070
  %2120 = vmatpush.msra.mxu0 %v2066
  %2121 = vmatpush.msra.mxu0 %v2062
  %2122 = vmatpush.msra.mxu0 %v2058
  %2123 = vmatpush.msra.mxu0 %v2054
  %2124 = vmatpush.msra.mxu0 %v2050
  %2125 = vmatpush.msra.mxu0 %v2046
  %2126 = vmatmul.f32.gmra.mxu0 %v2045
  %v2127 = vpop.f32.mrf.mxu0
  %v2128 = vadd.f32 0.0, %v2127
  %2129 = vdwg.mxu0
  %2130 = vmatpush.msra.mxu0 %v2107
  %2131 = vmatpush.msra.mxu0 %v2103
  %2132 = vmatpush.msra.mxu0 %v2099
  %2133 = vmatpush.msra.mxu0 %v2095
  %2134 = vmatpush.msra.mxu0 %v2091
  %2135 = vmatpush.msra.mxu0 %v2087
  %2136 = vmatpush.msra.mxu0 %v2083
  %2137 = vmatpush.msra.mxu0 %v2079
  %2138 = vmatpush.msra.mxu0 %v2075
  %2139 = vmatpush.msra.mxu0 %v2071
  %2140 = vmatpush.msra.mxu0 %v2067
  %2141 = vmatpush.msra.mxu0 %v2063
  %2142 = vmatpush.msra.mxu0 %v2059
  %2143 = vmatpush.msra.mxu0 %v2055
  %2144 = vmatpush.msra.mxu0 %v2051
  %2145 = vmatpush.msra.mxu0 %v2047
  %2146 = vmatmul.f32.gmra.mxu0 %v2045
  %v2147 = vpop.f32.mrf.mxu0
  %v2148 = vadd.f32 0.0, %v2147
  %2149 = vdwg.mxu0
  %2150 = vmatpush.msra.mxu0 %v2108
  %2151 = vmatpush.msra.mxu0 %v2104
  %2152 = vmatpush.msra.mxu0 %v2100
  %2153 = vmatpush.msra.mxu0 %v2096
  %2154 = vmatpush.msra.mxu0 %v2092
  %2155 = vmatpush.msra.mxu0 %v2088
  %2156 = vmatpush.msra.mxu0 %v2084
  %2157 = vmatpush.msra.mxu0 %v2080
  %2158 = vmatpush.msra.mxu0 %v2076
  %2159 = vmatpush.msra.mxu0 %v2072
  %2160 = vmatpush.msra.mxu0 %v2068
  %2161 = vmatpush.msra.mxu0 %v2064
  %2162 = vmatpush.msra.mxu0 %v2060
  %2163 = vmatpush.msra.mxu0 %v2056
  %2164 = vmatpush.msra.mxu0 %v2052
  %2165 = vmatpush.msra.mxu0 %v2048
  %2166 = vmatmul.f32.gmra.mxu0 %v2045
  %v2167 = vpop.f32.mrf.mxu0
  %v2168 = vadd.f32 0.0, %v2167
  %2169 = vdwg.mxu0
  %2170 = vmatpush.msra.mxu0 %v2109
  %2171 = vmatpush.msra.mxu0 %v2105
  %2172 = vmatpush.msra.mxu0 %v2101
  %2173 = vmatpush.msra.mxu0 %v2097
  %2174 = vmatpush.msra.mxu0 %v2093
  %2175 = vmatpush.msra.mxu0 %v2089
  %2176 = vmatpush.msra.mxu0 %v2085
  %2177 = vmatpush.msra.mxu0 %v2081
  %2178 = vmatpush.msra.mxu0 %v2077
  %2179 = vmatpush.msra.mxu0 %v2073
  %2180 = vmatpush.msra.mxu0 %v2069
  %2181 = vmatpush.msra.mxu0 %v2065
  %2182 = vmatpush.msra.mxu0 %v2061
  %2183 = vmatpush.msra.mxu0 %v2057
  %2184 = vmatpush.msra.mxu0 %v2053
  %2185 = vmatpush.msra.mxu0 %v2049
  %2186 = vmatmul.f32.gmra.mxu0 %v2045
  %v2187 = vpop.f32.mrf.mxu0
  %v2188 = vadd.f32 0.0, %v2187
  %2189 = vdwg.mxu0
  %v2190 = vadd.f32 %v2041, %v2128
  %v2191 = vadd.f32 %v2042, %v2148
  %v2192 = vadd.f32 %v2043, %v2168
  %v2193 = vadd.f32 %v2044, %v2188
  %v2194 = vxor.u32 %v2190, 2147483648
  %v2195 = vmul.f32 %v2194, 1.442695
  %v2196 = vpow.pop %v2195
  %v2197 = vadd.f32 %v2196, 1.0
  %v2198 = vrcp.pop %v2197
  %v2199 = vmul.f32 %v2197, %v2198
  %v2200 = vsub.f32 1.0, %v2199
  %v2201 = vmul.f32 %v2198, %v2200
  %v2202 = vadd.f32 %v2198, %v2201
  %vm2203 = vweird.f32 %v2197
  %vm2204 = vweird.f32 %v2198
  %vm2205 = vmor %vm2203, %vm2204
  %v2206 = vsel %vm2205, %v2198, %v2202
  %v2207 = vand.u32 2147483647, %v2197
  %vm2208 = vcmp.eq.f32.partialorder %v2207, 8.507059e+37
  %v2209 = vand.u32 %v2197, 2147483648
  %v2210 = vor.u32 1.1754944e-38, %v2209
  %v2211 = vsel %vm2208, %v2210, %v2206
  %v2212 = vmul.f32 1.0, %v2211
  %v2213 = vxor.u32 %v2191, 2147483648
  %v2214 = vmul.f32 %v2213, 1.442695
  %v2215 = vpow.pop %v2214
  %v2216 = vadd.f32 %v2215, 1.0
  %v2217 = vrcp.pop %v2216
  %v2218 = vmul.f32 %v2216, %v2217
  %v2219 = vsub.f32 1.0, %v2218
  %v2220 = vmul.f32 %v2217, %v2219
  %v2221 = vadd.f32 %v2217, %v2220
  %vm2222 = vweird.f32 %v2216
  %vm2223 = vweird.f32 %v2217
  %vm2224 = vmor %vm2222, %vm2223
  %v2225 = vsel %vm2224, %v2217, %v2221
  %v2226 = vand.u32 2147483647, %v2216
  %vm2227 = vcmp.eq.f32.partialorder %v2226, 8.507059e+37
  %v2228 = vand.u32 %v2216, 2147483648
  %v2229 = vor.u32 1.1754944e-38, %v2228
  %v2230 = vsel %vm2227, %v2229, %v2225
  %v2231 = vmul.f32 1.0, %v2230
  %v2232 = vtanh.pop %v2192
  %v2233 = vxor.u32 %v2193, 2147483648
  %v2234 = vmul.f32 %v2233, 1.442695
  %v2235 = vpow.pop %v2234
  %v2236 = vadd.f32 %v2235, 1.0
  %v2237 = vrcp.pop %v2236
  %v2238 = vmul.f32 %v2236, %v2237
  %v2239 = vsub.f32 1.0, %v2238
  %v2240 = vmul.f32 %v2237, %v2239
  %v2241 = vadd.f32 %v2237, %v2240
  %vm2242 = vweird.f32 %v2236
  %vm2243 = vweird.f32 %v2237
  %vm2244 = vmor %vm2242, %vm2243
  %v2245 = vsel %vm2244, %v2237, %v2241
  %v2246 = vand.u32 2147483647, %v2236
  %vm2247 = vcmp.eq.f32.partialorder %v2246, 8.507059e+37
  %v2248 = vand.u32 %v2236, 2147483648
  %v2249 = vor.u32 1.1754944e-38, %v2248
  %v2250 = vsel %vm2247, %v2249, %v2245
  %v2251 = vmul.f32 1.0, %v2250
  %v2252 = vld [vmem:[#allocation5] sm:$0xff]
  %v2253 = vmul.f32 %v2231, %v2252
  %v2254 = vmul.f32 %v2212, %v2232
  %v2255 = vadd.f32 %v2253, %v2254
  %v2256 = vtanh.pop %v2255
  %v2257 = vmul.f32 %v2251, %v2256
  %2258 = vst [vmem:[#allocation5] sm:$0xff] %v2255
  %2259 = vst [vmem:[#allocation3] sm:$0xff] %v2257
  %v2260 = vld [vmem:[%s4] sm:$0xff]
  %v2261 = vld [vmem:[%s4 + $0x8] sm:$0xff]
  %v2262 = vld [vmem:[%s4 + $0x10] sm:$0xff]
  %v2263 = vld [vmem:[%s4 + $0x18] sm:$0xff]
  %v2264 = vld [vmem:[%s4 + $0x20] sm:$0xff]
  %v2265 = vld [vmem:[%s4 + $0x28] sm:$0xff]
  %v2266 = vld [vmem:[%s4 + $0x30] sm:$0xff]
  %v2267 = vld [vmem:[%s4 + $0x38] sm:$0xff]
  %v2268 = vld [vmem:[%s4 + $0x40] sm:$0xff]
  %v2269 = vld [vmem:[%s4 + $0x48] sm:$0xff]
  %v2270 = vld [vmem:[%s4 + $0x50] sm:$0xff]
  %v2271 = vld [vmem:[%s4 + $0x58] sm:$0xff]
  %v2272 = vld [vmem:[%s4 + $0x60] sm:$0xff]
  %v2273 = vld [vmem:[%s4 + $0x68] sm:$0xff]
  %v2274 = vld [vmem:[%s4 + $0x70] sm:$0xff]
  %v2275 = vld [vmem:[%s4 + $0x78] sm:$0xff]
  %v2276 = vld [vmem:[%s4 + $0x80] sm:$0xff]
  %v2277 = vld [vmem:[%s4 + $0x88] sm:$0xff]
  %v2278 = vld [vmem:[%s4 + $0x90] sm:$0xff]
  %v2279 = vld [vmem:[%s4 + $0x98] sm:$0xff]
  %v2280 = vld [vmem:[%s4 + $0xa0] sm:$0xff]
  %v2281 = vld [vmem:[%s4 + $0xa8] sm:$0xff]
  %v2282 = vld [vmem:[%s4 + $0xb0] sm:$0xff]
  %v2283 = vld [vmem:[%s4 + $0xb8] sm:$0xff]
  %v2284 = vld [vmem:[%s4 + $0xc0] sm:$0xff]
  %v2285 = vld [vmem:[%s4 + $0xc8] sm:$0xff]
  %v2286 = vld [vmem:[%s4 + $0xd0] sm:$0xff]
  %v2287 = vld [vmem:[%s4 + $0xd8] sm:$0xff]
  %v2288 = vld [vmem:[%s4 + $0xe0] sm:$0xff]
  %v2289 = vld [vmem:[%s4 + $0xe8] sm:$0xff]
  %v2290 = vld [vmem:[%s4 + $0xf0] sm:$0xff]
  %v2291 = vld [vmem:[%s4 + $0xf8] sm:$0xff]
  %v2292 = vld [vmem:[%s4 + $0x100] sm:$0xff]
  %v2293 = vld [vmem:[%s4 + $0x108] sm:$0xff]
  %v2294 = vld [vmem:[%s4 + $0x110] sm:$0xff]
  %v2295 = vld [vmem:[%s4 + $0x118] sm:$0xff]
  %v2296 = vld [vmem:[%s4 + $0x120] sm:$0xff]
  %v2297 = vld [vmem:[%s4 + $0x128] sm:$0xff]
  %v2298 = vld [vmem:[%s4 + $0x130] sm:$0xff]
  %v2299 = vld [vmem:[%s4 + $0x138] sm:$0xff]
  %v2300 = vld [vmem:[%s4 + $0x140] sm:$0xff]
  %v2301 = vld [vmem:[%s4 + $0x148] sm:$0xff]
  %v2302 = vld [vmem:[%s4 + $0x150] sm:$0xff]
  %v2303 = vld [vmem:[%s4 + $0x158] sm:$0xff]
  %v2304 = vld [vmem:[%s4 + $0x160] sm:$0xff]
  %v2305 = vld [vmem:[%s4 + $0x168] sm:$0xff]
  %v2306 = vld [vmem:[%s4 + $0x170] sm:$0xff]
  %v2307 = vld [vmem:[%s4 + $0x178] sm:$0xff]
  %v2308 = vld [vmem:[%s4 + $0x180] sm:$0xff]
  %v2309 = vld [vmem:[%s4 + $0x188] sm:$0xff]
  %v2310 = vld [vmem:[%s4 + $0x190] sm:$0xff]
  %v2311 = vld [vmem:[%s4 + $0x198] sm:$0xff]
  %v2312 = vld [vmem:[%s4 + $0x1a0] sm:$0xff]
  %v2313 = vld [vmem:[%s4 + $0x1a8] sm:$0xff]
  %v2314 = vld [vmem:[%s4 + $0x1b0] sm:$0xff]
  %v2315 = vld [vmem:[%s4 + $0x1b8] sm:$0xff]
  %v2316 = vld [vmem:[%s4 + $0x1c0] sm:$0xff]
  %v2317 = vld [vmem:[%s4 + $0x1c8] sm:$0xff]
  %v2318 = vld [vmem:[%s4 + $0x1d0] sm:$0xff]
  %v2319 = vld [vmem:[%s4 + $0x1d8] sm:$0xff]
  %v2320 = vld [vmem:[%s4 + $0x1e0] sm:$0xff]
  %v2321 = vld [vmem:[%s4 + $0x1e8] sm:$0xff]
  %v2322 = vld [vmem:[%s4 + $0x1f0] sm:$0xff]
  %v2323 = vld [vmem:[%s4 + $0x1f8] sm:$0xff]
  %v2324 = vld [vmem:[#allocation4] sm:$0xff]
  %v2325 = vld [vmem:[%s5] sm:$0xff]
  %v2326 = vld [vmem:[%s5 + $0x8] sm:$0xff]
  %v2327 = vld [vmem:[%s5 + $0x10] sm:$0xff]
  %v2328 = vld [vmem:[%s5 + $0x18] sm:$0xff]
  %v2329 = vld [vmem:[%s5 + $0x20] sm:$0xff]
  %v2330 = vld [vmem:[%s5 + $0x28] sm:$0xff]
  %v2331 = vld [vmem:[%s5 + $0x30] sm:$0xff]
  %v2332 = vld [vmem:[%s5 + $0x38] sm:$0xff]
  %v2333 = vld [vmem:[%s5 + $0x40] sm:$0xff]
  %v2334 = vld [vmem:[%s5 + $0x48] sm:$0xff]
  %v2335 = vld [vmem:[%s5 + $0x50] sm:$0xff]
  %v2336 = vld [vmem:[%s5 + $0x58] sm:$0xff]
  %v2337 = vld [vmem:[%s5 + $0x60] sm:$0xff]
  %v2338 = vld [vmem:[%s5 + $0x68] sm:$0xff]
  %v2339 = vld [vmem:[%s5 + $0x70] sm:$0xff]
  %v2340 = vld [vmem:[%s5 + $0x78] sm:$0xff]
  %v2341 = vld [vmem:[%s5 + $0x80] sm:$0xff]
  %v2342 = vld [vmem:[%s5 + $0x88] sm:$0xff]
  %v2343 = vld [vmem:[%s5 + $0x90] sm:$0xff]
  %v2344 = vld [vmem:[%s5 + $0x98] sm:$0xff]
  %v2345 = vld [vmem:[%s5 + $0xa0] sm:$0xff]
  %v2346 = vld [vmem:[%s5 + $0xa8] sm:$0xff]
  %v2347 = vld [vmem:[%s5 + $0xb0] sm:$0xff]
  %v2348 = vld [vmem:[%s5 + $0xb8] sm:$0xff]
  %v2349 = vld [vmem:[%s5 + $0xc0] sm:$0xff]
  %v2350 = vld [vmem:[%s5 + $0xc8] sm:$0xff]
  %v2351 = vld [vmem:[%s5 + $0xd0] sm:$0xff]
  %v2352 = vld [vmem:[%s5 + $0xd8] sm:$0xff]
  %v2353 = vld [vmem:[%s5 + $0xe0] sm:$0xff]
  %v2354 = vld [vmem:[%s5 + $0xe8] sm:$0xff]
  %v2355 = vld [vmem:[%s5 + $0xf0] sm:$0xff]
  %v2356 = vld [vmem:[%s5 + $0xf8] sm:$0xff]
  %v2357 = vld [vmem:[%s5 + $0x100] sm:$0xff]
  %v2358 = vld [vmem:[%s5 + $0x108] sm:$0xff]
  %v2359 = vld [vmem:[%s5 + $0x110] sm:$0xff]
  %v2360 = vld [vmem:[%s5 + $0x118] sm:$0xff]
  %v2361 = vld [vmem:[%s5 + $0x120] sm:$0xff]
  %v2362 = vld [vmem:[%s5 + $0x128] sm:$0xff]
  %v2363 = vld [vmem:[%s5 + $0x130] sm:$0xff]
  %v2364 = vld [vmem:[%s5 + $0x138] sm:$0xff]
  %v2365 = vld [vmem:[%s5 + $0x140] sm:$0xff]
  %v2366 = vld [vmem:[%s5 + $0x148] sm:$0xff]
  %v2367 = vld [vmem:[%s5 + $0x150] sm:$0xff]
  %v2368 = vld [vmem:[%s5 + $0x158] sm:$0xff]
  %v2369 = vld [vmem:[%s5 + $0x160] sm:$0xff]
  %v2370 = vld [vmem:[%s5 + $0x168] sm:$0xff]
  %v2371 = vld [vmem:[%s5 + $0x170] sm:$0xff]
  %v2372 = vld [vmem:[%s5 + $0x178] sm:$0xff]
  %v2373 = vld [vmem:[%s5 + $0x180] sm:$0xff]
  %v2374 = vld [vmem:[%s5 + $0x188] sm:$0xff]
  %v2375 = vld [vmem:[%s5 + $0x190] sm:$0xff]
  %v2376 = vld [vmem:[%s5 + $0x198] sm:$0xff]
  %v2377 = vld [vmem:[%s5 + $0x1a0] sm:$0xff]
  %v2378 = vld [vmem:[%s5 + $0x1a8] sm:$0xff]
  %v2379 = vld [vmem:[%s5 + $0x1b0] sm:$0xff]
  %v2380 = vld [vmem:[%s5 + $0x1b8] sm:$0xff]
  %v2381 = vld [vmem:[%s5 + $0x1c0] sm:$0xff]
  %v2382 = vld [vmem:[%s5 + $0x1c8] sm:$0xff]
  %v2383 = vld [vmem:[%s5 + $0x1d0] sm:$0xff]
  %v2384 = vld [vmem:[%s5 + $0x1d8] sm:$0xff]
  %v2385 = vld [vmem:[%s5 + $0x1e0] sm:$0xff]
  %v2386 = vld [vmem:[%s5 + $0x1e8] sm:$0xff]
  %v2387 = vld [vmem:[%s5 + $0x1f0] sm:$0xff]
  %v2388 = vld [vmem:[%s5 + $0x1f8] sm:$0xff]
  %2389 = vmatpush.msra.mxu0 %v2385
  %2390 = vmatpush.msra.mxu0 %v2381
  %2391 = vmatpush.msra.mxu0 %v2377
  %2392 = vmatpush.msra.mxu0 %v2373
  %2393 = vmatpush.msra.mxu0 %v2369
  %2394 = vmatpush.msra.mxu0 %v2365
  %2395 = vmatpush.msra.mxu0 %v2361
  %2396 = vmatpush.msra.mxu0 %v2357
  %2397 = vmatpush.msra.mxu0 %v2353
  %2398 = vmatpush.msra.mxu0 %v2349
  %2399 = vmatpush.msra.mxu0 %v2345
  %2400 = vmatpush.msra.mxu0 %v2341
  %2401 = vmatpush.msra.mxu0 %v2337
  %2402 = vmatpush.msra.mxu0 %v2333
  %2403 = vmatpush.msra.mxu0 %v2329
  %2404 = vmatpush.msra.mxu0 %v2325
  %2405 = vmatmul.f32.gmra.mxu0 %v2324
  %v2406 = vpop.f32.mrf.mxu0
  %v2407 = vadd.f32 0.0, %v2406
  %2408 = vdwg.mxu0
  %2409 = vmatpush.msra.mxu0 %v2386
  %2410 = vmatpush.msra.mxu0 %v2382
  %2411 = vmatpush.msra.mxu0 %v2378
  %2412 = vmatpush.msra.mxu0 %v2374
  %2413 = vmatpush.msra.mxu0 %v2370
  %2414 = vmatpush.msra.mxu0 %v2366
  %2415 = vmatpush.msra.mxu0 %v2362
  %2416 = vmatpush.msra.mxu0 %v2358
  %2417 = vmatpush.msra.mxu0 %v2354
  %2418 = vmatpush.msra.mxu0 %v2350
  %2419 = vmatpush.msra.mxu0 %v2346
  %2420 = vmatpush.msra.mxu0 %v2342
  %2421 = vmatpush.msra.mxu0 %v2338
  %2422 = vmatpush.msra.mxu0 %v2334
  %2423 = vmatpush.msra.mxu0 %v2330
  %2424 = vmatpush.msra.mxu0 %v2326
  %2425 = vmatmul.f32.gmra.mxu0 %v2324
  %v2426 = vpop.f32.mrf.mxu0
  %v2427 = vadd.f32 0.0, %v2426
  %2428 = vdwg.mxu0
  %2429 = vmatpush.msra.mxu0 %v2387
  %2430 = vmatpush.msra.mxu0 %v2383
  %2431 = vmatpush.msra.mxu0 %v2379
  %2432 = vmatpush.msra.mxu0 %v2375
  %2433 = vmatpush.msra.mxu0 %v2371
  %2434 = vmatpush.msra.mxu0 %v2367
  %2435 = vmatpush.msra.mxu0 %v2363
  %2436 = vmatpush.msra.mxu0 %v2359
  %2437 = vmatpush.msra.mxu0 %v2355
  %2438 = vmatpush.msra.mxu0 %v2351
  %2439 = vmatpush.msra.mxu0 %v2347
  %2440 = vmatpush.msra.mxu0 %v2343
  %2441 = vmatpush.msra.mxu0 %v2339
  %2442 = vmatpush.msra.mxu0 %v2335
  %2443 = vmatpush.msra.mxu0 %v2331
  %2444 = vmatpush.msra.mxu0 %v2327
  %2445 = vmatmul.f32.gmra.mxu0 %v2324
  %v2446 = vpop.f32.mrf.mxu0
  %v2447 = vadd.f32 0.0, %v2446
  %2448 = vdwg.mxu0
  %2449 = vmatpush.msra.mxu0 %v2388
  %2450 = vmatpush.msra.mxu0 %v2384
  %2451 = vmatpush.msra.mxu0 %v2380
  %2452 = vmatpush.msra.mxu0 %v2376
  %2453 = vmatpush.msra.mxu0 %v2372
  %2454 = vmatpush.msra.mxu0 %v2368
  %2455 = vmatpush.msra.mxu0 %v2364
  %2456 = vmatpush.msra.mxu0 %v2360
  %2457 = vmatpush.msra.mxu0 %v2356
  %2458 = vmatpush.msra.mxu0 %v2352
  %2459 = vmatpush.msra.mxu0 %v2348
  %2460 = vmatpush.msra.mxu0 %v2344
  %2461 = vmatpush.msra.mxu0 %v2340
  %2462 = vmatpush.msra.mxu0 %v2336
  %2463 = vmatpush.msra.mxu0 %v2332
  %2464 = vmatpush.msra.mxu0 %v2328
  %2465 = vmatmul.f32.gmra.mxu0 %v2324
  %v2466 = vpop.f32.mrf.mxu0
  %v2467 = vadd.f32 0.0, %v2466
  %2468 = vdwg.mxu0
  %2469 = vmatpush.msra.mxu0 %v2320
  %2470 = vmatpush.msra.mxu0 %v2316
  %2471 = vmatpush.msra.mxu0 %v2312
  %2472 = vmatpush.msra.mxu0 %v2308
  %2473 = vmatpush.msra.mxu0 %v2304
  %2474 = vmatpush.msra.mxu0 %v2300
  %2475 = vmatpush.msra.mxu0 %v2296
  %2476 = vmatpush.msra.mxu0 %v2292
  %2477 = vmatpush.msra.mxu0 %v2288
  %2478 = vmatpush.msra.mxu0 %v2284
  %2479 = vmatpush.msra.mxu0 %v2280
  %2480 = vmatpush.msra.mxu0 %v2276
  %2481 = vmatpush.msra.mxu0 %v2272
  %2482 = vmatpush.msra.mxu0 %v2268
  %2483 = vmatpush.msra.mxu0 %v2264
  %2484 = vmatpush.msra.mxu0 %v2260
  %2485 = vmatmul.f32.gmra.mxu0 %v2257
  %v2486 = vpop.f32.mrf.mxu0
  %v2487 = vadd.f32 %v2407, %v2486
  %2488 = vdwg.mxu0
  %2489 = vmatpush.msra.mxu0 %v2321
  %2490 = vmatpush.msra.mxu0 %v2317
  %2491 = vmatpush.msra.mxu0 %v2313
  %2492 = vmatpush.msra.mxu0 %v2309
  %2493 = vmatpush.msra.mxu0 %v2305
  %2494 = vmatpush.msra.mxu0 %v2301
  %2495 = vmatpush.msra.mxu0 %v2297
  %2496 = vmatpush.msra.mxu0 %v2293
  %2497 = vmatpush.msra.mxu0 %v2289
  %2498 = vmatpush.msra.mxu0 %v2285
  %2499 = vmatpush.msra.mxu0 %v2281
  %2500 = vmatpush.msra.mxu0 %v2277
  %2501 = vmatpush.msra.mxu0 %v2273
  %2502 = vmatpush.msra.mxu0 %v2269
  %2503 = vmatpush.msra.mxu0 %v2265
  %2504 = vmatpush.msra.mxu0 %v2261
  %2505 = vmatmul.f32.gmra.mxu0 %v2257
  %v2506 = vpop.f32.mrf.mxu0
  %v2507 = vadd.f32 %v2427, %v2506
  %2508 = vdwg.mxu0
  %2509 = vmatpush.msra.mxu0 %v2322
  %2510 = vmatpush.msra.mxu0 %v2318
  %2511 = vmatpush.msra.mxu0 %v2314
  %2512 = vmatpush.msra.mxu0 %v2310
  %2513 = vmatpush.msra.mxu0 %v2306
  %2514 = vmatpush.msra.mxu0 %v2302
  %2515 = vmatpush.msra.mxu0 %v2298
  %2516 = vmatpush.msra.mxu0 %v2294
  %2517 = vmatpush.msra.mxu0 %v2290
  %2518 = vmatpush.msra.mxu0 %v2286
  %2519 = vmatpush.msra.mxu0 %v2282
  %2520 = vmatpush.msra.mxu0 %v2278
  %2521 = vmatpush.msra.mxu0 %v2274
  %2522 = vmatpush.msra.mxu0 %v2270
  %2523 = vmatpush.msra.mxu0 %v2266
  %2524 = vmatpush.msra.mxu0 %v2262
  %2525 = vmatmul.f32.gmra.mxu0 %v2257
  %v2526 = vpop.f32.mrf.mxu0
  %v2527 = vadd.f32 %v2447, %v2526
  %2528 = vdwg.mxu0
  %2529 = vmatpush.msra.mxu0 %v2323
  %2530 = vmatpush.msra.mxu0 %v2319
  %2531 = vmatpush.msra.mxu0 %v2315
  %2532 = vmatpush.msra.mxu0 %v2311
  %2533 = vmatpush.msra.mxu0 %v2307
  %2534 = vmatpush.msra.mxu0 %v2303
  %2535 = vmatpush.msra.mxu0 %v2299
  %2536 = vmatpush.msra.mxu0 %v2295
  %2537 = vmatpush.msra.mxu0 %v2291
  %2538 = vmatpush.msra.mxu0 %v2287
  %2539 = vmatpush.msra.mxu0 %v2283
  %2540 = vmatpush.msra.mxu0 %v2279
  %2541 = vmatpush.msra.mxu0 %v2275
  %2542 = vmatpush.msra.mxu0 %v2271
  %2543 = vmatpush.msra.mxu0 %v2267
  %2544 = vmatpush.msra.mxu0 %v2263
  %2545 = vmatmul.f32.gmra.mxu0 %v2257
  %v2546 = vpop.f32.mrf.mxu0
  %v2547 = vadd.f32 %v2467, %v2546
  %2548 = vdwg.mxu0
  %v2549 = vadd.f32 %v2487, %v287
  %v2550 = vadd.f32 %v2507, %v288
  %v2551 = vadd.f32 %v2527, %v289
  %v2552 = vadd.f32 %v2547, %v290
  %v2553 = vxor.u32 %v2549, 2147483648
  %v2554 = vmul.f32 %v2553, 1.442695
  %v2555 = vpow.pop %v2554
  %v2556 = vadd.f32 %v2555, 1.0
  %v2557 = vrcp.pop %v2556
  %v2558 = vmul.f32 %v2556, %v2557
  %v2559 = vsub.f32 1.0, %v2558
  %v2560 = vmul.f32 %v2557, %v2559
  %v2561 = vadd.f32 %v2557, %v2560
  %vm2562 = vweird.f32 %v2556
  %vm2563 = vweird.f32 %v2557
  %vm2564 = vmor %vm2562, %vm2563
  %v2565 = vsel %vm2564, %v2557, %v2561
  %v2566 = vand.u32 2147483647, %v2556
  %vm2567 = vcmp.eq.f32.partialorder %v2566, 8.507059e+37
  %v2568 = vand.u32 %v2556, 2147483648
  %v2569 = vor.u32 1.1754944e-38, %v2568
  %v2570 = vsel %vm2567, %v2569, %v2565
  %v2571 = vmul.f32 1.0, %v2570
  %v2572 = vxor.u32 %v2550, 2147483648
  %v2573 = vmul.f32 %v2572, 1.442695
  %v2574 = vpow.pop %v2573
  %v2575 = vadd.f32 %v2574, 1.0
  %v2576 = vrcp.pop %v2575
  %v2577 = vmul.f32 %v2575, %v2576
  %v2578 = vsub.f32 1.0, %v2577
  %v2579 = vmul.f32 %v2576, %v2578
  %v2580 = vadd.f32 %v2576, %v2579
  %vm2581 = vweird.f32 %v2575
  %vm2582 = vweird.f32 %v2576
  %vm2583 = vmor %vm2581, %vm2582
  %v2584 = vsel %vm2583, %v2576, %v2580
  %v2585 = vand.u32 2147483647, %v2575
  %vm2586 = vcmp.eq.f32.partialorder %v2585, 8.507059e+37
  %v2587 = vand.u32 %v2575, 2147483648
  %v2588 = vor.u32 1.1754944e-38, %v2587
  %v2589 = vsel %vm2586, %v2588, %v2584
  %v2590 = vmul.f32 1.0, %v2589
  %v2591 = vtanh.pop %v2551
  %v2592 = vxor.u32 %v2552, 2147483648
  %v2593 = vmul.f32 %v2592, 1.442695
  %v2594 = vpow.pop %v2593
  %v2595 = vadd.f32 %v2594, 1.0
  %v2596 = vrcp.pop %v2595
  %v2597 = vmul.f32 %v2595, %v2596
  %v2598 = vsub.f32 1.0, %v2597
  %v2599 = vmul.f32 %v2596, %v2598
  %v2600 = vadd.f32 %v2596, %v2599
  %vm2601 = vweird.f32 %v2595
  %vm2602 = vweird.f32 %v2596
  %vm2603 = vmor %vm2601, %vm2602
  %v2604 = vsel %vm2603, %v2596, %v2600
  %v2605 = vand.u32 2147483647, %v2595
  %vm2606 = vcmp.eq.f32.partialorder %v2605, 8.507059e+37
  %v2607 = vand.u32 %v2595, 2147483648
  %v2608 = vor.u32 1.1754944e-38, %v2607
  %v2609 = vsel %vm2606, %v2608, %v2604
  %v2610 = vmul.f32 1.0, %v2609
  %v2611 = vld [vmem:[#allocation6] sm:$0xff]
  %v2612 = vmul.f32 %v2590, %v2611
  %v2613 = vmul.f32 %v2571, %v2591
  %v2614 = vadd.f32 %v2612, %v2613
  %v2615 = vtanh.pop %v2614
  %v2616 = vmul.f32 %v2610, %v2615
  %2617 = vst [vmem:[#allocation6] sm:$0xff] %v2614
  %2618 = vst [vmem:[#allocation4] sm:$0xff] %v2616
  %s2619 = smul.u32 4, 4
  %s2620 = smul.addr %s2619, 8
  %s2621 = scalar_lea.vmem [#allocation2], %s2620
  %v2622 = vld [vmem:[%s2621] sm:$0xff]
  %v2623 = vld [vmem:[%s2621 + $0x8] sm:$0xff]
  %v2624 = vld [vmem:[%s2621 + $0x10] sm:$0xff]
  %v2625 = vld [vmem:[%s2621 + $0x18] sm:$0xff]
  %v2626 = vld [vmem:[#allocation3] sm:$0xff]
  %v2627 = vld [vmem:[%s2] sm:$0xff]
  %v2628 = vld [vmem:[%s2 + $0x8] sm:$0xff]
  %v2629 = vld [vmem:[%s2 + $0x10] sm:$0xff]
  %v2630 = vld [vmem:[%s2 + $0x18] sm:$0xff]
  %v2631 = vld [vmem:[%s2 + $0x20] sm:$0xff]
  %v2632 = vld [vmem:[%s2 + $0x28] sm:$0xff]
  %v2633 = vld [vmem:[%s2 + $0x30] sm:$0xff]
  %v2634 = vld [vmem:[%s2 + $0x38] sm:$0xff]
  %v2635 = vld [vmem:[%s2 + $0x40] sm:$0xff]
  %v2636 = vld [vmem:[%s2 + $0x48] sm:$0xff]
  %v2637 = vld [vmem:[%s2 + $0x50] sm:$0xff]
  %v2638 = vld [vmem:[%s2 + $0x58] sm:$0xff]
  %v2639 = vld [vmem:[%s2 + $0x60] sm:$0xff]
  %v2640 = vld [vmem:[%s2 + $0x68] sm:$0xff]
  %v2641 = vld [vmem:[%s2 + $0x70] sm:$0xff]
  %v2642 = vld [vmem:[%s2 + $0x78] sm:$0xff]
  %v2643 = vld [vmem:[%s2 + $0x80] sm:$0xff]
  %v2644 = vld [vmem:[%s2 + $0x88] sm:$0xff]
  %v2645 = vld [vmem:[%s2 + $0x90] sm:$0xff]
  %v2646 = vld [vmem:[%s2 + $0x98] sm:$0xff]
  %v2647 = vld [vmem:[%s2 + $0xa0] sm:$0xff]
  %v2648 = vld [vmem:[%s2 + $0xa8] sm:$0xff]
  %v2649 = vld [vmem:[%s2 + $0xb0] sm:$0xff]
  %v2650 = vld [vmem:[%s2 + $0xb8] sm:$0xff]
  %v2651 = vld [vmem:[%s2 + $0xc0] sm:$0xff]
  %v2652 = vld [vmem:[%s2 + $0xc8] sm:$0xff]
  %v2653 = vld [vmem:[%s2 + $0xd0] sm:$0xff]
  %v2654 = vld [vmem:[%s2 + $0xd8] sm:$0xff]
  %v2655 = vld [vmem:[%s2 + $0xe0] sm:$0xff]
  %v2656 = vld [vmem:[%s2 + $0xe8] sm:$0xff]
  %v2657 = vld [vmem:[%s2 + $0xf0] sm:$0xff]
  %v2658 = vld [vmem:[%s2 + $0xf8] sm:$0xff]
  %v2659 = vld [vmem:[%s2 + $0x100] sm:$0xff]
  %v2660 = vld [vmem:[%s2 + $0x108] sm:$0xff]
  %v2661 = vld [vmem:[%s2 + $0x110] sm:$0xff]
  %v2662 = vld [vmem:[%s2 + $0x118] sm:$0xff]
  %v2663 = vld [vmem:[%s2 + $0x120] sm:$0xff]
  %v2664 = vld [vmem:[%s2 + $0x128] sm:$0xff]
  %v2665 = vld [vmem:[%s2 + $0x130] sm:$0xff]
  %v2666 = vld [vmem:[%s2 + $0x138] sm:$0xff]
  %v2667 = vld [vmem:[%s2 + $0x140] sm:$0xff]
  %v2668 = vld [vmem:[%s2 + $0x148] sm:$0xff]
  %v2669 = vld [vmem:[%s2 + $0x150] sm:$0xff]
  %v2670 = vld [vmem:[%s2 + $0x158] sm:$0xff]
  %v2671 = vld [vmem:[%s2 + $0x160] sm:$0xff]
  %v2672 = vld [vmem:[%s2 + $0x168] sm:$0xff]
  %v2673 = vld [vmem:[%s2 + $0x170] sm:$0xff]
  %v2674 = vld [vmem:[%s2 + $0x178] sm:$0xff]
  %v2675 = vld [vmem:[%s2 + $0x180] sm:$0xff]
  %v2676 = vld [vmem:[%s2 + $0x188] sm:$0xff]
  %v2677 = vld [vmem:[%s2 + $0x190] sm:$0xff]
  %v2678 = vld [vmem:[%s2 + $0x198] sm:$0xff]
  %v2679 = vld [vmem:[%s2 + $0x1a0] sm:$0xff]
  %v2680 = vld [vmem:[%s2 + $0x1a8] sm:$0xff]
  %v2681 = vld [vmem:[%s2 + $0x1b0] sm:$0xff]
  %v2682 = vld [vmem:[%s2 + $0x1b8] sm:$0xff]
  %v2683 = vld [vmem:[%s2 + $0x1c0] sm:$0xff]
  %v2684 = vld [vmem:[%s2 + $0x1c8] sm:$0xff]
  %v2685 = vld [vmem:[%s2 + $0x1d0] sm:$0xff]
  %v2686 = vld [vmem:[%s2 + $0x1d8] sm:$0xff]
  %v2687 = vld [vmem:[%s2 + $0x1e0] sm:$0xff]
  %v2688 = vld [vmem:[%s2 + $0x1e8] sm:$0xff]
  %v2689 = vld [vmem:[%s2 + $0x1f0] sm:$0xff]
  %v2690 = vld [vmem:[%s2 + $0x1f8] sm:$0xff]
  %2691 = vmatpush.msra.mxu0 %v2687
  %2692 = vmatpush.msra.mxu0 %v2683
  %2693 = vmatpush.msra.mxu0 %v2679
  %2694 = vmatpush.msra.mxu0 %v2675
  %2695 = vmatpush.msra.mxu0 %v2671
  %2696 = vmatpush.msra.mxu0 %v2667
  %2697 = vmatpush.msra.mxu0 %v2663
  %2698 = vmatpush.msra.mxu0 %v2659
  %2699 = vmatpush.msra.mxu0 %v2655
  %2700 = vmatpush.msra.mxu0 %v2651
  %2701 = vmatpush.msra.mxu0 %v2647
  %2702 = vmatpush.msra.mxu0 %v2643
  %2703 = vmatpush.msra.mxu0 %v2639
  %2704 = vmatpush.msra.mxu0 %v2635
  %2705 = vmatpush.msra.mxu0 %v2631
  %2706 = vmatpush.msra.mxu0 %v2627
  %2707 = vmatmul.f32.gmra.mxu0 %v2626
  %v2708 = vpop.f32.mrf.mxu0
  %v2709 = vadd.f32 0.0, %v2708
  %2710 = vdwg.mxu0
  %2711 = vmatpush.msra.mxu0 %v2688
  %2712 = vmatpush.msra.mxu0 %v2684
  %2713 = vmatpush.msra.mxu0 %v2680
  %2714 = vmatpush.msra.mxu0 %v2676
  %2715 = vmatpush.msra.mxu0 %v2672
  %2716 = vmatpush.msra.mxu0 %v2668
  %2717 = vmatpush.msra.mxu0 %v2664
  %2718 = vmatpush.msra.mxu0 %v2660
  %2719 = vmatpush.msra.mxu0 %v2656
  %2720 = vmatpush.msra.mxu0 %v2652
  %2721 = vmatpush.msra.mxu0 %v2648
  %2722 = vmatpush.msra.mxu0 %v2644
  %2723 = vmatpush.msra.mxu0 %v2640
  %2724 = vmatpush.msra.mxu0 %v2636
  %2725 = vmatpush.msra.mxu0 %v2632
  %2726 = vmatpush.msra.mxu0 %v2628
  %2727 = vmatmul.f32.gmra.mxu0 %v2626
  %v2728 = vpop.f32.mrf.mxu0
  %v2729 = vadd.f32 0.0, %v2728
  %2730 = vdwg.mxu0
  %2731 = vmatpush.msra.mxu0 %v2689
  %2732 = vmatpush.msra.mxu0 %v2685
  %2733 = vmatpush.msra.mxu0 %v2681
  %2734 = vmatpush.msra.mxu0 %v2677
  %2735 = vmatpush.msra.mxu0 %v2673
  %2736 = vmatpush.msra.mxu0 %v2669
  %2737 = vmatpush.msra.mxu0 %v2665
  %2738 = vmatpush.msra.mxu0 %v2661
  %2739 = vmatpush.msra.mxu0 %v2657
  %2740 = vmatpush.msra.mxu0 %v2653
  %2741 = vmatpush.msra.mxu0 %v2649
  %2742 = vmatpush.msra.mxu0 %v2645
  %2743 = vmatpush.msra.mxu0 %v2641
  %2744 = vmatpush.msra.mxu0 %v2637
  %2745 = vmatpush.msra.mxu0 %v2633
  %2746 = vmatpush.msra.mxu0 %v2629
  %2747 = vmatmul.f32.gmra.mxu0 %v2626
  %v2748 = vpop.f32.mrf.mxu0
  %v2749 = vadd.f32 0.0, %v2748
  %2750 = vdwg.mxu0
  %2751 = vmatpush.msra.mxu0 %v2690
  %2752 = vmatpush.msra.mxu0 %v2686
  %2753 = vmatpush.msra.mxu0 %v2682
  %2754 = vmatpush.msra.mxu0 %v2678
  %2755 = vmatpush.msra.mxu0 %v2674
  %2756 = vmatpush.msra.mxu0 %v2670
  %2757 = vmatpush.msra.mxu0 %v2666
  %2758 = vmatpush.msra.mxu0 %v2662
  %2759 = vmatpush.msra.mxu0 %v2658
  %2760 = vmatpush.msra.mxu0 %v2654
  %2761 = vmatpush.msra.mxu0 %v2650
  %2762 = vmatpush.msra.mxu0 %v2646
  %2763 = vmatpush.msra.mxu0 %v2642
  %2764 = vmatpush.msra.mxu0 %v2638
  %2765 = vmatpush.msra.mxu0 %v2634
  %2766 = vmatpush.msra.mxu0 %v2630
  %2767 = vmatmul.f32.gmra.mxu0 %v2626
  %v2768 = vpop.f32.mrf.mxu0
  %v2769 = vadd.f32 0.0, %v2768
  %2770 = vdwg.mxu0
  %v2771 = vadd.f32 %v2622, %v2709
  %v2772 = vadd.f32 %v2623, %v2729
  %v2773 = vadd.f32 %v2624, %v2749
  %v2774 = vadd.f32 %v2625, %v2769
  %v2775 = vxor.u32 %v2771, 2147483648
  %v2776 = vmul.f32 %v2775, 1.442695
  %v2777 = vpow.pop %v2776
  %v2778 = vadd.f32 %v2777, 1.0
  %v2779 = vrcp.pop %v2778
  %v2780 = vmul.f32 %v2778, %v2779
  %v2781 = vsub.f32 1.0, %v2780
  %v2782 = vmul.f32 %v2779, %v2781
  %v2783 = vadd.f32 %v2779, %v2782
  %vm2784 = vweird.f32 %v2778
  %vm2785 = vweird.f32 %v2779
  %vm2786 = vmor %vm2784, %vm2785
  %v2787 = vsel %vm2786, %v2779, %v2783
  %v2788 = vand.u32 2147483647, %v2778
  %vm2789 = vcmp.eq.f32.partialorder %v2788, 8.507059e+37
  %v2790 = vand.u32 %v2778, 2147483648
  %v2791 = vor.u32 1.1754944e-38, %v2790
  %v2792 = vsel %vm2789, %v2791, %v2787
  %v2793 = vmul.f32 1.0, %v2792
  %v2794 = vxor.u32 %v2772, 2147483648
  %v2795 = vmul.f32 %v2794, 1.442695
  %v2796 = vpow.pop %v2795
  %v2797 = vadd.f32 %v2796, 1.0
  %v2798 = vrcp.pop %v2797
  %v2799 = vmul.f32 %v2797, %v2798
  %v2800 = vsub.f32 1.0, %v2799
  %v2801 = vmul.f32 %v2798, %v2800
  %v2802 = vadd.f32 %v2798, %v2801
  %vm2803 = vweird.f32 %v2797
  %vm2804 = vweird.f32 %v2798
  %vm2805 = vmor %vm2803, %vm2804
  %v2806 = vsel %vm2805, %v2798, %v2802
  %v2807 = vand.u32 2147483647, %v2797
  %vm2808 = vcmp.eq.f32.partialorder %v2807, 8.507059e+37
  %v2809 = vand.u32 %v2797, 2147483648
  %v2810 = vor.u32 1.1754944e-38, %v2809
  %v2811 = vsel %vm2808, %v2810, %v2806
  %v2812 = vmul.f32 1.0, %v2811
  %v2813 = vtanh.pop %v2773
  %v2814 = vxor.u32 %v2774, 2147483648
  %v2815 = vmul.f32 %v2814, 1.442695
  %v2816 = vpow.pop %v2815
  %v2817 = vadd.f32 %v2816, 1.0
  %v2818 = vrcp.pop %v2817
  %v2819 = vmul.f32 %v2817, %v2818
  %v2820 = vsub.f32 1.0, %v2819
  %v2821 = vmul.f32 %v2818, %v2820
  %v2822 = vadd.f32 %v2818, %v2821
  %vm2823 = vweird.f32 %v2817
  %vm2824 = vweird.f32 %v2818
  %vm2825 = vmor %vm2823, %vm2824
  %v2826 = vsel %vm2825, %v2818, %v2822
  %v2827 = vand.u32 2147483647, %v2817
  %vm2828 = vcmp.eq.f32.partialorder %v2827, 8.507059e+37
  %v2829 = vand.u32 %v2817, 2147483648
  %v2830 = vor.u32 1.1754944e-38, %v2829
  %v2831 = vsel %vm2828, %v2830, %v2826
  %v2832 = vmul.f32 1.0, %v2831
  %v2833 = vld [vmem:[#allocation5] sm:$0xff]
  %v2834 = vmul.f32 %v2812, %v2833
  %v2835 = vmul.f32 %v2793, %v2813
  %v2836 = vadd.f32 %v2834, %v2835
  %v2837 = vtanh.pop %v2836
  %v2838 = vmul.f32 %v2832, %v2837
  %2839 = vst [vmem:[#allocation5] sm:$0xff] %v2836
  %2840 = vst [vmem:[#allocation3] sm:$0xff] %v2838
  %v2841 = vld [vmem:[%s4] sm:$0xff]
  %v2842 = vld [vmem:[%s4 + $0x8] sm:$0xff]
  %v2843 = vld [vmem:[%s4 + $0x10] sm:$0xff]
  %v2844 = vld [vmem:[%s4 + $0x18] sm:$0xff]
  %v2845 = vld [vmem:[%s4 + $0x20] sm:$0xff]
  %v2846 = vld [vmem:[%s4 + $0x28] sm:$0xff]
  %v2847 = vld [vmem:[%s4 + $0x30] sm:$0xff]
  %v2848 = vld [vmem:[%s4 + $0x38] sm:$0xff]
  %v2849 = vld [vmem:[%s4 + $0x40] sm:$0xff]
  %v2850 = vld [vmem:[%s4 + $0x48] sm:$0xff]
  %v2851 = vld [vmem:[%s4 + $0x50] sm:$0xff]
  %v2852 = vld [vmem:[%s4 + $0x58] sm:$0xff]
  %v2853 = vld [vmem:[%s4 + $0x60] sm:$0xff]
  %v2854 = vld [vmem:[%s4 + $0x68] sm:$0xff]
  %v2855 = vld [vmem:[%s4 + $0x70] sm:$0xff]
  %v2856 = vld [vmem:[%s4 + $0x78] sm:$0xff]
  %v2857 = vld [vmem:[%s4 + $0x80] sm:$0xff]
  %v2858 = vld [vmem:[%s4 + $0x88] sm:$0xff]
  %v2859 = vld [vmem:[%s4 + $0x90] sm:$0xff]
  %v2860 = vld [vmem:[%s4 + $0x98] sm:$0xff]
  %v2861 = vld [vmem:[%s4 + $0xa0] sm:$0xff]
  %v2862 = vld [vmem:[%s4 + $0xa8] sm:$0xff]
  %v2863 = vld [vmem:[%s4 + $0xb0] sm:$0xff]
  %v2864 = vld [vmem:[%s4 + $0xb8] sm:$0xff]
  %v2865 = vld [vmem:[%s4 + $0xc0] sm:$0xff]
  %v2866 = vld [vmem:[%s4 + $0xc8] sm:$0xff]
  %v2867 = vld [vmem:[%s4 + $0xd0] sm:$0xff]
  %v2868 = vld [vmem:[%s4 + $0xd8] sm:$0xff]
  %v2869 = vld [vmem:[%s4 + $0xe0] sm:$0xff]
  %v2870 = vld [vmem:[%s4 + $0xe8] sm:$0xff]
  %v2871 = vld [vmem:[%s4 + $0xf0] sm:$0xff]
  %v2872 = vld [vmem:[%s4 + $0xf8] sm:$0xff]
  %v2873 = vld [vmem:[%s4 + $0x100] sm:$0xff]
  %v2874 = vld [vmem:[%s4 + $0x108] sm:$0xff]
  %v2875 = vld [vmem:[%s4 + $0x110] sm:$0xff]
  %v2876 = vld [vmem:[%s4 + $0x118] sm:$0xff]
  %v2877 = vld [vmem:[%s4 + $0x120] sm:$0xff]
  %v2878 = vld [vmem:[%s4 + $0x128] sm:$0xff]
  %v2879 = vld [vmem:[%s4 + $0x130] sm:$0xff]
  %v2880 = vld [vmem:[%s4 + $0x138] sm:$0xff]
  %v2881 = vld [vmem:[%s4 + $0x140] sm:$0xff]
  %v2882 = vld [vmem:[%s4 + $0x148] sm:$0xff]
  %v2883 = vld [vmem:[%s4 + $0x150] sm:$0xff]
  %v2884 = vld [vmem:[%s4 + $0x158] sm:$0xff]
  %v2885 = vld [vmem:[%s4 + $0x160] sm:$0xff]
  %v2886 = vld [vmem:[%s4 + $0x168] sm:$0xff]
  %v2887 = vld [vmem:[%s4 + $0x170] sm:$0xff]
  %v2888 = vld [vmem:[%s4 + $0x178] sm:$0xff]
  %v2889 = vld [vmem:[%s4 + $0x180] sm:$0xff]
  %v2890 = vld [vmem:[%s4 + $0x188] sm:$0xff]
  %v2891 = vld [vmem:[%s4 + $0x190] sm:$0xff]
  %v2892 = vld [vmem:[%s4 + $0x198] sm:$0xff]
  %v2893 = vld [vmem:[%s4 + $0x1a0] sm:$0xff]
  %v2894 = vld [vmem:[%s4 + $0x1a8] sm:$0xff]
  %v2895 = vld [vmem:[%s4 + $0x1b0] sm:$0xff]
  %v2896 = vld [vmem:[%s4 + $0x1b8] sm:$0xff]
  %v2897 = vld [vmem:[%s4 + $0x1c0] sm:$0xff]
  %v2898 = vld [vmem:[%s4 + $0x1c8] sm:$0xff]
  %v2899 = vld [vmem:[%s4 + $0x1d0] sm:$0xff]
  %v2900 = vld [vmem:[%s4 + $0x1d8] sm:$0xff]
  %v2901 = vld [vmem:[%s4 + $0x1e0] sm:$0xff]
  %v2902 = vld [vmem:[%s4 + $0x1e8] sm:$0xff]
  %v2903 = vld [vmem:[%s4 + $0x1f0] sm:$0xff]
  %v2904 = vld [vmem:[%s4 + $0x1f8] sm:$0xff]
  %v2905 = vld [vmem:[#allocation4] sm:$0xff]
  %v2906 = vld [vmem:[%s5] sm:$0xff]
  %v2907 = vld [vmem:[%s5 + $0x8] sm:$0xff]
  %v2908 = vld [vmem:[%s5 + $0x10] sm:$0xff]
  %v2909 = vld [vmem:[%s5 + $0x18] sm:$0xff]
  %v2910 = vld [vmem:[%s5 + $0x20] sm:$0xff]
  %v2911 = vld [vmem:[%s5 + $0x28] sm:$0xff]
  %v2912 = vld [vmem:[%s5 + $0x30] sm:$0xff]
  %v2913 = vld [vmem:[%s5 + $0x38] sm:$0xff]
  %v2914 = vld [vmem:[%s5 + $0x40] sm:$0xff]
  %v2915 = vld [vmem:[%s5 + $0x48] sm:$0xff]
  %v2916 = vld [vmem:[%s5 + $0x50] sm:$0xff]
  %v2917 = vld [vmem:[%s5 + $0x58] sm:$0xff]
  %v2918 = vld [vmem:[%s5 + $0x60] sm:$0xff]
  %v2919 = vld [vmem:[%s5 + $0x68] sm:$0xff]
  %v2920 = vld [vmem:[%s5 + $0x70] sm:$0xff]
  %v2921 = vld [vmem:[%s5 + $0x78] sm:$0xff]
  %v2922 = vld [vmem:[%s5 + $0x80] sm:$0xff]
  %v2923 = vld [vmem:[%s5 + $0x88] sm:$0xff]
  %v2924 = vld [vmem:[%s5 + $0x90] sm:$0xff]
  %v2925 = vld [vmem:[%s5 + $0x98] sm:$0xff]
  %v2926 = vld [vmem:[%s5 + $0xa0] sm:$0xff]
  %v2927 = vld [vmem:[%s5 + $0xa8] sm:$0xff]
  %v2928 = vld [vmem:[%s5 + $0xb0] sm:$0xff]
  %v2929 = vld [vmem:[%s5 + $0xb8] sm:$0xff]
  %v2930 = vld [vmem:[%s5 + $0xc0] sm:$0xff]
  %v2931 = vld [vmem:[%s5 + $0xc8] sm:$0xff]
  %v2932 = vld [vmem:[%s5 + $0xd0] sm:$0xff]
  %v2933 = vld [vmem:[%s5 + $0xd8] sm:$0xff]
  %v2934 = vld [vmem:[%s5 + $0xe0] sm:$0xff]
  %v2935 = vld [vmem:[%s5 + $0xe8] sm:$0xff]
  %v2936 = vld [vmem:[%s5 + $0xf0] sm:$0xff]
  %v2937 = vld [vmem:[%s5 + $0xf8] sm:$0xff]
  %v2938 = vld [vmem:[%s5 + $0x100] sm:$0xff]
  %v2939 = vld [vmem:[%s5 + $0x108] sm:$0xff]
  %v2940 = vld [vmem:[%s5 + $0x110] sm:$0xff]
  %v2941 = vld [vmem:[%s5 + $0x118] sm:$0xff]
  %v2942 = vld [vmem:[%s5 + $0x120] sm:$0xff]
  %v2943 = vld [vmem:[%s5 + $0x128] sm:$0xff]
  %v2944 = vld [vmem:[%s5 + $0x130] sm:$0xff]
  %v2945 = vld [vmem:[%s5 + $0x138] sm:$0xff]
  %v2946 = vld [vmem:[%s5 + $0x140] sm:$0xff]
  %v2947 = vld [vmem:[%s5 + $0x148] sm:$0xff]
  %v2948 = vld [vmem:[%s5 + $0x150] sm:$0xff]
  %v2949 = vld [vmem:[%s5 + $0x158] sm:$0xff]
  %v2950 = vld [vmem:[%s5 + $0x160] sm:$0xff]
  %v2951 = vld [vmem:[%s5 + $0x168] sm:$0xff]
  %v2952 = vld [vmem:[%s5 + $0x170] sm:$0xff]
  %v2953 = vld [vmem:[%s5 + $0x178] sm:$0xff]
  %v2954 = vld [vmem:[%s5 + $0x180] sm:$0xff]
  %v2955 = vld [vmem:[%s5 + $0x188] sm:$0xff]
  %v2956 = vld [vmem:[%s5 + $0x190] sm:$0xff]
  %v2957 = vld [vmem:[%s5 + $0x198] sm:$0xff]
  %v2958 = vld [vmem:[%s5 + $0x1a0] sm:$0xff]
  %v2959 = vld [vmem:[%s5 + $0x1a8] sm:$0xff]
  %v2960 = vld [vmem:[%s5 + $0x1b0] sm:$0xff]
  %v2961 = vld [vmem:[%s5 + $0x1b8] sm:$0xff]
  %v2962 = vld [vmem:[%s5 + $0x1c0] sm:$0xff]
  %v2963 = vld [vmem:[%s5 + $0x1c8] sm:$0xff]
  %v2964 = vld [vmem:[%s5 + $0x1d0] sm:$0xff]
  %v2965 = vld [vmem:[%s5 + $0x1d8] sm:$0xff]
  %v2966 = vld [vmem:[%s5 + $0x1e0] sm:$0xff]
  %v2967 = vld [vmem:[%s5 + $0x1e8] sm:$0xff]
  %v2968 = vld [vmem:[%s5 + $0x1f0] sm:$0xff]
  %v2969 = vld [vmem:[%s5 + $0x1f8] sm:$0xff]
  %2970 = vmatpush.msra.mxu0 %v2966
  %2971 = vmatpush.msra.mxu0 %v2962
  %2972 = vmatpush.msra.mxu0 %v2958
  %2973 = vmatpush.msra.mxu0 %v2954
  %2974 = vmatpush.msra.mxu0 %v2950
  %2975 = vmatpush.msra.mxu0 %v2946
  %2976 = vmatpush.msra.mxu0 %v2942
  %2977 = vmatpush.msra.mxu0 %v2938
  %2978 = vmatpush.msra.mxu0 %v2934
  %2979 = vmatpush.msra.mxu0 %v2930
  %2980 = vmatpush.msra.mxu0 %v2926
  %2981 = vmatpush.msra.mxu0 %v2922
  %2982 = vmatpush.msra.mxu0 %v2918
  %2983 = vmatpush.msra.mxu0 %v2914
  %2984 = vmatpush.msra.mxu0 %v2910
  %2985 = vmatpush.msra.mxu0 %v2906
  %2986 = vmatmul.f32.gmra.mxu0 %v2905
  %v2987 = vpop.f32.mrf.mxu0
  %v2988 = vadd.f32 0.0, %v2987
  %2989 = vdwg.mxu0
  %2990 = vmatpush.msra.mxu0 %v2967
  %2991 = vmatpush.msra.mxu0 %v2963
  %2992 = vmatpush.msra.mxu0 %v2959
  %2993 = vmatpush.msra.mxu0 %v2955
  %2994 = vmatpush.msra.mxu0 %v2951
  %2995 = vmatpush.msra.mxu0 %v2947
  %2996 = vmatpush.msra.mxu0 %v2943
  %2997 = vmatpush.msra.mxu0 %v2939
  %2998 = vmatpush.msra.mxu0 %v2935
  %2999 = vmatpush.msra.mxu0 %v2931
  %3000 = vmatpush.msra.mxu0 %v2927
  %3001 = vmatpush.msra.mxu0 %v2923
  %3002 = vmatpush.msra.mxu0 %v2919
  %3003 = vmatpush.msra.mxu0 %v2915
  %3004 = vmatpush.msra.mxu0 %v2911
  %3005 = vmatpush.msra.mxu0 %v2907
  %3006 = vmatmul.f32.gmra.mxu0 %v2905
  %v3007 = vpop.f32.mrf.mxu0
  %v3008 = vadd.f32 0.0, %v3007
  %3009 = vdwg.mxu0
  %3010 = vmatpush.msra.mxu0 %v2968
  %3011 = vmatpush.msra.mxu0 %v2964
  %3012 = vmatpush.msra.mxu0 %v2960
  %3013 = vmatpush.msra.mxu0 %v2956
  %3014 = vmatpush.msra.mxu0 %v2952
  %3015 = vmatpush.msra.mxu0 %v2948
  %3016 = vmatpush.msra.mxu0 %v2944
  %3017 = vmatpush.msra.mxu0 %v2940
  %3018 = vmatpush.msra.mxu0 %v2936
  %3019 = vmatpush.msra.mxu0 %v2932
  %3020 = vmatpush.msra.mxu0 %v2928
  %3021 = vmatpush.msra.mxu0 %v2924
  %3022 = vmatpush.msra.mxu0 %v2920
  %3023 = vmatpush.msra.mxu0 %v2916
  %3024 = vmatpush.msra.mxu0 %v2912
  %3025 = vmatpush.msra.mxu0 %v2908
  %3026 = vmatmul.f32.gmra.mxu0 %v2905
  %v3027 = vpop.f32.mrf.mxu0
  %v3028 = vadd.f32 0.0, %v3027
  %3029 = vdwg.mxu0
  %3030 = vmatpush.msra.mxu0 %v2969
  %3031 = vmatpush.msra.mxu0 %v2965
  %3032 = vmatpush.msra.mxu0 %v2961
  %3033 = vmatpush.msra.mxu0 %v2957
  %3034 = vmatpush.msra.mxu0 %v2953
  %3035 = vmatpush.msra.mxu0 %v2949
  %3036 = vmatpush.msra.mxu0 %v2945
  %3037 = vmatpush.msra.mxu0 %v2941
  %3038 = vmatpush.msra.mxu0 %v2937
  %3039 = vmatpush.msra.mxu0 %v2933
  %3040 = vmatpush.msra.mxu0 %v2929
  %3041 = vmatpush.msra.mxu0 %v2925
  %3042 = vmatpush.msra.mxu0 %v2921
  %3043 = vmatpush.msra.mxu0 %v2917
  %3044 = vmatpush.msra.mxu0 %v2913
  %3045 = vmatpush.msra.mxu0 %v2909
  %3046 = vmatmul.f32.gmra.mxu0 %v2905
  %v3047 = vpop.f32.mrf.mxu0
  %v3048 = vadd.f32 0.0, %v3047
  %3049 = vdwg.mxu0
  %3050 = vmatpush.msra.mxu0 %v2901
  %3051 = vmatpush.msra.mxu0 %v2897
  %3052 = vmatpush.msra.mxu0 %v2893
  %3053 = vmatpush.msra.mxu0 %v2889
  %3054 = vmatpush.msra.mxu0 %v2885
  %3055 = vmatpush.msra.mxu0 %v2881
  %3056 = vmatpush.msra.mxu0 %v2877
  %3057 = vmatpush.msra.mxu0 %v2873
  %3058 = vmatpush.msra.mxu0 %v2869
  %3059 = vmatpush.msra.mxu0 %v2865
  %3060 = vmatpush.msra.mxu0 %v2861
  %3061 = vmatpush.msra.mxu0 %v2857
  %3062 = vmatpush.msra.mxu0 %v2853
  %3063 = vmatpush.msra.mxu0 %v2849
  %3064 = vmatpush.msra.mxu0 %v2845
  %3065 = vmatpush.msra.mxu0 %v2841
  %3066 = vmatmul.f32.gmra.mxu0 %v2838
  %v3067 = vpop.f32.mrf.mxu0
  %v3068 = vadd.f32 %v2988, %v3067
  %3069 = vdwg.mxu0
  %3070 = vmatpush.msra.mxu0 %v2902
  %3071 = vmatpush.msra.mxu0 %v2898
  %3072 = vmatpush.msra.mxu0 %v2894
  %3073 = vmatpush.msra.mxu0 %v2890
  %3074 = vmatpush.msra.mxu0 %v2886
  %3075 = vmatpush.msra.mxu0 %v2882
  %3076 = vmatpush.msra.mxu0 %v2878
  %3077 = vmatpush.msra.mxu0 %v2874
  %3078 = vmatpush.msra.mxu0 %v2870
  %3079 = vmatpush.msra.mxu0 %v2866
  %3080 = vmatpush.msra.mxu0 %v2862
  %3081 = vmatpush.msra.mxu0 %v2858
  %3082 = vmatpush.msra.mxu0 %v2854
  %3083 = vmatpush.msra.mxu0 %v2850
  %3084 = vmatpush.msra.mxu0 %v2846
  %3085 = vmatpush.msra.mxu0 %v2842
  %3086 = vmatmul.f32.gmra.mxu0 %v2838
  %v3087 = vpop.f32.mrf.mxu0
  %v3088 = vadd.f32 %v3008, %v3087
  %3089 = vdwg.mxu0
  %3090 = vmatpush.msra.mxu0 %v2903
  %3091 = vmatpush.msra.mxu0 %v2899
  %3092 = vmatpush.msra.mxu0 %v2895
  %3093 = vmatpush.msra.mxu0 %v2891
  %3094 = vmatpush.msra.mxu0 %v2887
  %3095 = vmatpush.msra.mxu0 %v2883
  %3096 = vmatpush.msra.mxu0 %v2879
  %3097 = vmatpush.msra.mxu0 %v2875
  %3098 = vmatpush.msra.mxu0 %v2871
  %3099 = vmatpush.msra.mxu0 %v2867
  %3100 = vmatpush.msra.mxu0 %v2863
  %3101 = vmatpush.msra.mxu0 %v2859
  %3102 = vmatpush.msra.mxu0 %v2855
  %3103 = vmatpush.msra.mxu0 %v2851
  %3104 = vmatpush.msra.mxu0 %v2847
  %3105 = vmatpush.msra.mxu0 %v2843
  %3106 = vmatmul.f32.gmra.mxu0 %v2838
  %v3107 = vpop.f32.mrf.mxu0
  %v3108 = vadd.f32 %v3028, %v3107
  %3109 = vdwg.mxu0
  %3110 = vmatpush.msra.mxu0 %v2904
  %3111 = vmatpush.msra.mxu0 %v2900
  %3112 = vmatpush.msra.mxu0 %v2896
  %3113 = vmatpush.msra.mxu0 %v2892
  %3114 = vmatpush.msra.mxu0 %v2888
  %3115 = vmatpush.msra.mxu0 %v2884
  %3116 = vmatpush.msra.mxu0 %v2880
  %3117 = vmatpush.msra.mxu0 %v2876
  %3118 = vmatpush.msra.mxu0 %v2872
  %3119 = vmatpush.msra.mxu0 %v2868
  %3120 = vmatpush.msra.mxu0 %v2864
  %3121 = vmatpush.msra.mxu0 %v2860
  %3122 = vmatpush.msra.mxu0 %v2856
  %3123 = vmatpush.msra.mxu0 %v2852
  %3124 = vmatpush.msra.mxu0 %v2848
  %3125 = vmatpush.msra.mxu0 %v2844
  %3126 = vmatmul.f32.gmra.mxu0 %v2838
  %v3127 = vpop.f32.mrf.mxu0
  %v3128 = vadd.f32 %v3048, %v3127
  %3129 = vdwg.mxu0
  %v3130 = vadd.f32 %v3068, %v287
  %v3131 = vadd.f32 %v3088, %v288
  %v3132 = vadd.f32 %v3108, %v289
  %v3133 = vadd.f32 %v3128, %v290
  %v3134 = vxor.u32 %v3130, 2147483648
  %v3135 = vmul.f32 %v3134, 1.442695
  %v3136 = vpow.pop %v3135
  %v3137 = vadd.f32 %v3136, 1.0
  %v3138 = vrcp.pop %v3137
  %v3139 = vmul.f32 %v3137, %v3138
  %v3140 = vsub.f32 1.0, %v3139
  %v3141 = vmul.f32 %v3138, %v3140
  %v3142 = vadd.f32 %v3138, %v3141
  %vm3143 = vweird.f32 %v3137
  %vm3144 = vweird.f32 %v3138
  %vm3145 = vmor %vm3143, %vm3144
  %v3146 = vsel %vm3145, %v3138, %v3142
  %v3147 = vand.u32 2147483647, %v3137
  %vm3148 = vcmp.eq.f32.partialorder %v3147, 8.507059e+37
  %v3149 = vand.u32 %v3137, 2147483648
  %v3150 = vor.u32 1.1754944e-38, %v3149
  %v3151 = vsel %vm3148, %v3150, %v3146
  %v3152 = vmul.f32 1.0, %v3151
  %v3153 = vxor.u32 %v3131, 2147483648
  %v3154 = vmul.f32 %v3153, 1.442695
  %v3155 = vpow.pop %v3154
  %v3156 = vadd.f32 %v3155, 1.0
  %v3157 = vrcp.pop %v3156
  %v3158 = vmul.f32 %v3156, %v3157
  %v3159 = vsub.f32 1.0, %v3158
  %v3160 = vmul.f32 %v3157, %v3159
  %v3161 = vadd.f32 %v3157, %v3160
  %vm3162 = vweird.f32 %v3156
  %vm3163 = vweird.f32 %v3157
  %vm3164 = vmor %vm3162, %vm3163
  %v3165 = vsel %vm3164, %v3157, %v3161
  %v3166 = vand.u32 2147483647, %v3156
  %vm3167 = vcmp.eq.f32.partialorder %v3166, 8.507059e+37
  %v3168 = vand.u32 %v3156, 2147483648
  %v3169 = vor.u32 1.1754944e-38, %v3168
  %v3170 = vsel %vm3167, %v3169, %v3165
  %v3171 = vmul.f32 1.0, %v3170
  %v3172 = vtanh.pop %v3132
  %v3173 = vxor.u32 %v3133, 2147483648
  %v3174 = vmul.f32 %v3173, 1.442695
  %v3175 = vpow.pop %v3174
  %v3176 = vadd.f32 %v3175, 1.0
  %v3177 = vrcp.pop %v3176
  %v3178 = vmul.f32 %v3176, %v3177
  %v3179 = vsub.f32 1.0, %v3178
  %v3180 = vmul.f32 %v3177, %v3179
  %v3181 = vadd.f32 %v3177, %v3180
  %vm3182 = vweird.f32 %v3176
  %vm3183 = vweird.f32 %v3177
  %vm3184 = vmor %vm3182, %vm3183
  %v3185 = vsel %vm3184, %v3177, %v3181
  %v3186 = vand.u32 2147483647, %v3176
  %vm3187 = vcmp.eq.f32.partialorder %v3186, 8.507059e+37
  %v3188 = vand.u32 %v3176, 2147483648
  %v3189 = vor.u32 1.1754944e-38, %v3188
  %v3190 = vsel %vm3187, %v3189, %v3185
  %v3191 = vmul.f32 1.0, %v3190
  %v3192 = vld [vmem:[#allocation6] sm:$0xff]
  %v3193 = vmul.f32 %v3171, %v3192
  %v3194 = vmul.f32 %v3152, %v3172
  %v3195 = vadd.f32 %v3193, %v3194
  %v3196 = vtanh.pop %v3195
  %v3197 = vmul.f32 %v3191, %v3196
  %3198 = vst [vmem:[#allocation6] sm:$0xff] %v3195
  %3199 = vst [vmem:[#allocation4] sm:$0xff] %v3197
  %s3200 = smul.u32 5, 4
  %s3201 = smul.addr %s3200, 8
  %s3202 = scalar_lea.vmem [#allocation2], %s3201
  %v3203 = vld [vmem:[%s3202] sm:$0xff]
  %v3204 = vld [vmem:[%s3202 + $0x8] sm:$0xff]
  %v3205 = vld [vmem:[%s3202 + $0x10] sm:$0xff]
  %v3206 = vld [vmem:[%s3202 + $0x18] sm:$0xff]
  %v3207 = vld [vmem:[#allocation3] sm:$0xff]
  %v3208 = vld [vmem:[%s2] sm:$0xff]
  %v3209 = vld [vmem:[%s2 + $0x8] sm:$0xff]
  %v3210 = vld [vmem:[%s2 + $0x10] sm:$0xff]
  %v3211 = vld [vmem:[%s2 + $0x18] sm:$0xff]
  %v3212 = vld [vmem:[%s2 + $0x20] sm:$0xff]
  %v3213 = vld [vmem:[%s2 + $0x28] sm:$0xff]
  %v3214 = vld [vmem:[%s2 + $0x30] sm:$0xff]
  %v3215 = vld [vmem:[%s2 + $0x38] sm:$0xff]
  %v3216 = vld [vmem:[%s2 + $0x40] sm:$0xff]
  %v3217 = vld [vmem:[%s2 + $0x48] sm:$0xff]
  %v3218 = vld [vmem:[%s2 + $0x50] sm:$0xff]
  %v3219 = vld [vmem:[%s2 + $0x58] sm:$0xff]
  %v3220 = vld [vmem:[%s2 + $0x60] sm:$0xff]
  %v3221 = vld [vmem:[%s2 + $0x68] sm:$0xff]
  %v3222 = vld [vmem:[%s2 + $0x70] sm:$0xff]
  %v3223 = vld [vmem:[%s2 + $0x78] sm:$0xff]
  %v3224 = vld [vmem:[%s2 + $0x80] sm:$0xff]
  %v3225 = vld [vmem:[%s2 + $0x88] sm:$0xff]
  %v3226 = vld [vmem:[%s2 + $0x90] sm:$0xff]
  %v3227 = vld [vmem:[%s2 + $0x98] sm:$0xff]
  %v3228 = vld [vmem:[%s2 + $0xa0] sm:$0xff]
  %v3229 = vld [vmem:[%s2 + $0xa8] sm:$0xff]
  %v3230 = vld [vmem:[%s2 + $0xb0] sm:$0xff]
  %v3231 = vld [vmem:[%s2 + $0xb8] sm:$0xff]
  %v3232 = vld [vmem:[%s2 + $0xc0] sm:$0xff]
  %v3233 = vld [vmem:[%s2 + $0xc8] sm:$0xff]
  %v3234 = vld [vmem:[%s2 + $0xd0] sm:$0xff]
  %v3235 = vld [vmem:[%s2 + $0xd8] sm:$0xff]
  %v3236 = vld [vmem:[%s2 + $0xe0] sm:$0xff]
  %v3237 = vld [vmem:[%s2 + $0xe8] sm:$0xff]
  %v3238 = vld [vmem:[%s2 + $0xf0] sm:$0xff]
  %v3239 = vld [vmem:[%s2 + $0xf8] sm:$0xff]
  %v3240 = vld [vmem:[%s2 + $0x100] sm:$0xff]
  %v3241 = vld [vmem:[%s2 + $0x108] sm:$0xff]
  %v3242 = vld [vmem:[%s2 + $0x110] sm:$0xff]
  %v3243 = vld [vmem:[%s2 + $0x118] sm:$0xff]
  %v3244 = vld [vmem:[%s2 + $0x120] sm:$0xff]
  %v3245 = vld [vmem:[%s2 + $0x128] sm:$0xff]
  %v3246 = vld [vmem:[%s2 + $0x130] sm:$0xff]
  %v3247 = vld [vmem:[%s2 + $0x138] sm:$0xff]
  %v3248 = vld [vmem:[%s2 + $0x140] sm:$0xff]
  %v3249 = vld [vmem:[%s2 + $0x148] sm:$0xff]
  %v3250 = vld [vmem:[%s2 + $0x150] sm:$0xff]
  %v3251 = vld [vmem:[%s2 + $0x158] sm:$0xff]
  %v3252 = vld [vmem:[%s2 + $0x160] sm:$0xff]
  %v3253 = vld [vmem:[%s2 + $0x168] sm:$0xff]
  %v3254 = vld [vmem:[%s2 + $0x170] sm:$0xff]
  %v3255 = vld [vmem:[%s2 + $0x178] sm:$0xff]
  %v3256 = vld [vmem:[%s2 + $0x180] sm:$0xff]
  %v3257 = vld [vmem:[%s2 + $0x188] sm:$0xff]
  %v3258 = vld [vmem:[%s2 + $0x190] sm:$0xff]
  %v3259 = vld [vmem:[%s2 + $0x198] sm:$0xff]
  %v3260 = vld [vmem:[%s2 + $0x1a0] sm:$0xff]
  %v3261 = vld [vmem:[%s2 + $0x1a8] sm:$0xff]
  %v3262 = vld [vmem:[%s2 + $0x1b0] sm:$0xff]
  %v3263 = vld [vmem:[%s2 + $0x1b8] sm:$0xff]
  %v3264 = vld [vmem:[%s2 + $0x1c0] sm:$0xff]
  %v3265 = vld [vmem:[%s2 + $0x1c8] sm:$0xff]
  %v3266 = vld [vmem:[%s2 + $0x1d0] sm:$0xff]
  %v3267 = vld [vmem:[%s2 + $0x1d8] sm:$0xff]
  %v3268 = vld [vmem:[%s2 + $0x1e0] sm:$0xff]
  %v3269 = vld [vmem:[%s2 + $0x1e8] sm:$0xff]
  %v3270 = vld [vmem:[%s2 + $0x1f0] sm:$0xff]
  %v3271 = vld [vmem:[%s2 + $0x1f8] sm:$0xff]
  %3272 = vmatpush.msra.mxu0 %v3268
  %3273 = vmatpush.msra.mxu0 %v3264
  %3274 = vmatpush.msra.mxu0 %v3260
  %3275 = vmatpush.msra.mxu0 %v3256
  %3276 = vmatpush.msra.mxu0 %v3252
  %3277 = vmatpush.msra.mxu0 %v3248
  %3278 = vmatpush.msra.mxu0 %v3244
  %3279 = vmatpush.msra.mxu0 %v3240
  %3280 = vmatpush.msra.mxu0 %v3236
  %3281 = vmatpush.msra.mxu0 %v3232
  %3282 = vmatpush.msra.mxu0 %v3228
  %3283 = vmatpush.msra.mxu0 %v3224
  %3284 = vmatpush.msra.mxu0 %v3220
  %3285 = vmatpush.msra.mxu0 %v3216
  %3286 = vmatpush.msra.mxu0 %v3212
  %3287 = vmatpush.msra.mxu0 %v3208
  %3288 = vmatmul.f32.gmra.mxu0 %v3207
  %v3289 = vpop.f32.mrf.mxu0
  %v3290 = vadd.f32 0.0, %v3289
  %3291 = vdwg.mxu0
  %3292 = vmatpush.msra.mxu0 %v3269
  %3293 = vmatpush.msra.mxu0 %v3265
  %3294 = vmatpush.msra.mxu0 %v3261
  %3295 = vmatpush.msra.mxu0 %v3257
  %3296 = vmatpush.msra.mxu0 %v3253
  %3297 = vmatpush.msra.mxu0 %v3249
  %3298 = vmatpush.msra.mxu0 %v3245
  %3299 = vmatpush.msra.mxu0 %v3241
  %3300 = vmatpush.msra.mxu0 %v3237
  %3301 = vmatpush.msra.mxu0 %v3233
  %3302 = vmatpush.msra.mxu0 %v3229
  %3303 = vmatpush.msra.mxu0 %v3225
  %3304 = vmatpush.msra.mxu0 %v3221
  %3305 = vmatpush.msra.mxu0 %v3217
  %3306 = vmatpush.msra.mxu0 %v3213
  %3307 = vmatpush.msra.mxu0 %v3209
  %3308 = vmatmul.f32.gmra.mxu0 %v3207
  %v3309 = vpop.f32.mrf.mxu0
  %v3310 = vadd.f32 0.0, %v3309
  %3311 = vdwg.mxu0
  %3312 = vmatpush.msra.mxu0 %v3270
  %3313 = vmatpush.msra.mxu0 %v3266
  %3314 = vmatpush.msra.mxu0 %v3262
  %3315 = vmatpush.msra.mxu0 %v3258
  %3316 = vmatpush.msra.mxu0 %v3254
  %3317 = vmatpush.msra.mxu0 %v3250
  %3318 = vmatpush.msra.mxu0 %v3246
  %3319 = vmatpush.msra.mxu0 %v3242
  %3320 = vmatpush.msra.mxu0 %v3238
  %3321 = vmatpush.msra.mxu0 %v3234
  %3322 = vmatpush.msra.mxu0 %v3230
  %3323 = vmatpush.msra.mxu0 %v3226
  %3324 = vmatpush.msra.mxu0 %v3222
  %3325 = vmatpush.msra.mxu0 %v3218
  %3326 = vmatpush.msra.mxu0 %v3214
  %3327 = vmatpush.msra.mxu0 %v3210
  %3328 = vmatmul.f32.gmra.mxu0 %v3207
  %v3329 = vpop.f32.mrf.mxu0
  %v3330 = vadd.f32 0.0, %v3329
  %3331 = vdwg.mxu0
  %3332 = vmatpush.msra.mxu0 %v3271
  %3333 = vmatpush.msra.mxu0 %v3267
  %3334 = vmatpush.msra.mxu0 %v3263
  %3335 = vmatpush.msra.mxu0 %v3259
  %3336 = vmatpush.msra.mxu0 %v3255
  %3337 = vmatpush.msra.mxu0 %v3251
  %3338 = vmatpush.msra.mxu0 %v3247
  %3339 = vmatpush.msra.mxu0 %v3243
  %3340 = vmatpush.msra.mxu0 %v3239
  %3341 = vmatpush.msra.mxu0 %v3235
  %3342 = vmatpush.msra.mxu0 %v3231
  %3343 = vmatpush.msra.mxu0 %v3227
  %3344 = vmatpush.msra.mxu0 %v3223
  %3345 = vmatpush.msra.mxu0 %v3219
  %3346 = vmatpush.msra.mxu0 %v3215
  %3347 = vmatpush.msra.mxu0 %v3211
  %3348 = vmatmul.f32.gmra.mxu0 %v3207
  %v3349 = vpop.f32.mrf.mxu0
  %v3350 = vadd.f32 0.0, %v3349
  %3351 = vdwg.mxu0
  %v3352 = vadd.f32 %v3203, %v3290
  %v3353 = vadd.f32 %v3204, %v3310
  %v3354 = vadd.f32 %v3205, %v3330
  %v3355 = vadd.f32 %v3206, %v3350
  %v3356 = vxor.u32 %v3352, 2147483648
  %v3357 = vmul.f32 %v3356, 1.442695
  %v3358 = vpow.pop %v3357
  %v3359 = vadd.f32 %v3358, 1.0
  %v3360 = vrcp.pop %v3359
  %v3361 = vmul.f32 %v3359, %v3360
  %v3362 = vsub.f32 1.0, %v3361
  %v3363 = vmul.f32 %v3360, %v3362
  %v3364 = vadd.f32 %v3360, %v3363
  %vm3365 = vweird.f32 %v3359
  %vm3366 = vweird.f32 %v3360
  %vm3367 = vmor %vm3365, %vm3366
  %v3368 = vsel %vm3367, %v3360, %v3364
  %v3369 = vand.u32 2147483647, %v3359
  %vm3370 = vcmp.eq.f32.partialorder %v3369, 8.507059e+37
  %v3371 = vand.u32 %v3359, 2147483648
  %v3372 = vor.u32 1.1754944e-38, %v3371
  %v3373 = vsel %vm3370, %v3372, %v3368
  %v3374 = vmul.f32 1.0, %v3373
  %v3375 = vxor.u32 %v3353, 2147483648
  %v3376 = vmul.f32 %v3375, 1.442695
  %v3377 = vpow.pop %v3376
  %v3378 = vadd.f32 %v3377, 1.0
  %v3379 = vrcp.pop %v3378
  %v3380 = vmul.f32 %v3378, %v3379
  %v3381 = vsub.f32 1.0, %v3380
  %v3382 = vmul.f32 %v3379, %v3381
  %v3383 = vadd.f32 %v3379, %v3382
  %vm3384 = vweird.f32 %v3378
  %vm3385 = vweird.f32 %v3379
  %vm3386 = vmor %vm3384, %vm3385
  %v3387 = vsel %vm3386, %v3379, %v3383
  %v3388 = vand.u32 2147483647, %v3378
  %vm3389 = vcmp.eq.f32.partialorder %v3388, 8.507059e+37
  %v3390 = vand.u32 %v3378, 2147483648
  %v3391 = vor.u32 1.1754944e-38, %v3390
  %v3392 = vsel %vm3389, %v3391, %v3387
  %v3393 = vmul.f32 1.0, %v3392
  %v3394 = vtanh.pop %v3354
  %v3395 = vxor.u32 %v3355, 2147483648
  %v3396 = vmul.f32 %v3395, 1.442695
  %v3397 = vpow.pop %v3396
  %v3398 = vadd.f32 %v3397, 1.0
  %v3399 = vrcp.pop %v3398
  %v3400 = vmul.f32 %v3398, %v3399
  %v3401 = vsub.f32 1.0, %v3400
  %v3402 = vmul.f32 %v3399, %v3401
  %v3403 = vadd.f32 %v3399, %v3402
  %vm3404 = vweird.f32 %v3398
  %vm3405 = vweird.f32 %v3399
  %vm3406 = vmor %vm3404, %vm3405
  %v3407 = vsel %vm3406, %v3399, %v3403
  %v3408 = vand.u32 2147483647, %v3398
  %vm3409 = vcmp.eq.f32.partialorder %v3408, 8.507059e+37
  %v3410 = vand.u32 %v3398, 2147483648
  %v3411 = vor.u32 1.1754944e-38, %v3410
  %v3412 = vsel %vm3409, %v3411, %v3407
  %v3413 = vmul.f32 1.0, %v3412
  %v3414 = vld [vmem:[#allocation5] sm:$0xff]
  %v3415 = vmul.f32 %v3393, %v3414
  %v3416 = vmul.f32 %v3374, %v3394
  %v3417 = vadd.f32 %v3415, %v3416
  %v3418 = vtanh.pop %v3417
  %v3419 = vmul.f32 %v3413, %v3418
  %3420 = vst [vmem:[#allocation5] sm:$0xff] %v3417
  %3421 = vst [vmem:[#allocation3] sm:$0xff] %v3419
  %v3422 = vld [vmem:[%s4] sm:$0xff]
  %v3423 = vld [vmem:[%s4 + $0x8] sm:$0xff]
  %v3424 = vld [vmem:[%s4 + $0x10] sm:$0xff]
  %v3425 = vld [vmem:[%s4 + $0x18] sm:$0xff]
  %v3426 = vld [vmem:[%s4 + $0x20] sm:$0xff]
  %v3427 = vld [vmem:[%s4 + $0x28] sm:$0xff]
  %v3428 = vld [vmem:[%s4 + $0x30] sm:$0xff]
  %v3429 = vld [vmem:[%s4 + $0x38] sm:$0xff]
  %v3430 = vld [vmem:[%s4 + $0x40] sm:$0xff]
  %v3431 = vld [vmem:[%s4 + $0x48] sm:$0xff]
  %v3432 = vld [vmem:[%s4 + $0x50] sm:$0xff]
  %v3433 = vld [vmem:[%s4 + $0x58] sm:$0xff]
  %v3434 = vld [vmem:[%s4 + $0x60] sm:$0xff]
  %v3435 = vld [vmem:[%s4 + $0x68] sm:$0xff]
  %v3436 = vld [vmem:[%s4 + $0x70] sm:$0xff]
  %v3437 = vld [vmem:[%s4 + $0x78] sm:$0xff]
  %v3438 = vld [vmem:[%s4 + $0x80] sm:$0xff]
  %v3439 = vld [vmem:[%s4 + $0x88] sm:$0xff]
  %v3440 = vld [vmem:[%s4 + $0x90] sm:$0xff]
  %v3441 = vld [vmem:[%s4 + $0x98] sm:$0xff]
  %v3442 = vld [vmem:[%s4 + $0xa0] sm:$0xff]
  %v3443 = vld [vmem:[%s4 + $0xa8] sm:$0xff]
  %v3444 = vld [vmem:[%s4 + $0xb0] sm:$0xff]
  %v3445 = vld [vmem:[%s4 + $0xb8] sm:$0xff]
  %v3446 = vld [vmem:[%s4 + $0xc0] sm:$0xff]
  %v3447 = vld [vmem:[%s4 + $0xc8] sm:$0xff]
  %v3448 = vld [vmem:[%s4 + $0xd0] sm:$0xff]
  %v3449 = vld [vmem:[%s4 + $0xd8] sm:$0xff]
  %v3450 = vld [vmem:[%s4 + $0xe0] sm:$0xff]
  %v3451 = vld [vmem:[%s4 + $0xe8] sm:$0xff]
  %v3452 = vld [vmem:[%s4 + $0xf0] sm:$0xff]
  %v3453 = vld [vmem:[%s4 + $0xf8] sm:$0xff]
  %v3454 = vld [vmem:[%s4 + $0x100] sm:$0xff]
  %v3455 = vld [vmem:[%s4 + $0x108] sm:$0xff]
  %v3456 = vld [vmem:[%s4 + $0x110] sm:$0xff]
  %v3457 = vld [vmem:[%s4 + $0x118] sm:$0xff]
  %v3458 = vld [vmem:[%s4 + $0x120] sm:$0xff]
  %v3459 = vld [vmem:[%s4 + $0x128] sm:$0xff]
  %v3460 = vld [vmem:[%s4 + $0x130] sm:$0xff]
  %v3461 = vld [vmem:[%s4 + $0x138] sm:$0xff]
  %v3462 = vld [vmem:[%s4 + $0x140] sm:$0xff]
  %v3463 = vld [vmem:[%s4 + $0x148] sm:$0xff]
  %v3464 = vld [vmem:[%s4 + $0x150] sm:$0xff]
  %v3465 = vld [vmem:[%s4 + $0x158] sm:$0xff]
  %v3466 = vld [vmem:[%s4 + $0x160] sm:$0xff]
  %v3467 = vld [vmem:[%s4 + $0x168] sm:$0xff]
  %v3468 = vld [vmem:[%s4 + $0x170] sm:$0xff]
  %v3469 = vld [vmem:[%s4 + $0x178] sm:$0xff]
  %v3470 = vld [vmem:[%s4 + $0x180] sm:$0xff]
  %v3471 = vld [vmem:[%s4 + $0x188] sm:$0xff]
  %v3472 = vld [vmem:[%s4 + $0x190] sm:$0xff]
  %v3473 = vld [vmem:[%s4 + $0x198] sm:$0xff]
  %v3474 = vld [vmem:[%s4 + $0x1a0] sm:$0xff]
  %v3475 = vld [vmem:[%s4 + $0x1a8] sm:$0xff]
  %v3476 = vld [vmem:[%s4 + $0x1b0] sm:$0xff]
  %v3477 = vld [vmem:[%s4 + $0x1b8] sm:$0xff]
  %v3478 = vld [vmem:[%s4 + $0x1c0] sm:$0xff]
  %v3479 = vld [vmem:[%s4 + $0x1c8] sm:$0xff]
  %v3480 = vld [vmem:[%s4 + $0x1d0] sm:$0xff]
  %v3481 = vld [vmem:[%s4 + $0x1d8] sm:$0xff]
  %v3482 = vld [vmem:[%s4 + $0x1e0] sm:$0xff]
  %v3483 = vld [vmem:[%s4 + $0x1e8] sm:$0xff]
  %v3484 = vld [vmem:[%s4 + $0x1f0] sm:$0xff]
  %v3485 = vld [vmem:[%s4 + $0x1f8] sm:$0xff]
  %v3486 = vld [vmem:[#allocation4] sm:$0xff]
  %v3487 = vld [vmem:[%s5] sm:$0xff]
  %v3488 = vld [vmem:[%s5 + $0x8] sm:$0xff]
  %v3489 = vld [vmem:[%s5 + $0x10] sm:$0xff]
  %v3490 = vld [vmem:[%s5 + $0x18] sm:$0xff]
  %v3491 = vld [vmem:[%s5 + $0x20] sm:$0xff]
  %v3492 = vld [vmem:[%s5 + $0x28] sm:$0xff]
  %v3493 = vld [vmem:[%s5 + $0x30] sm:$0xff]
  %v3494 = vld [vmem:[%s5 + $0x38] sm:$0xff]
  %v3495 = vld [vmem:[%s5 + $0x40] sm:$0xff]
  %v3496 = vld [vmem:[%s5 + $0x48] sm:$0xff]
  %v3497 = vld [vmem:[%s5 + $0x50] sm:$0xff]
  %v3498 = vld [vmem:[%s5 + $0x58] sm:$0xff]
  %v3499 = vld [vmem:[%s5 + $0x60] sm:$0xff]
  %v3500 = vld [vmem:[%s5 + $0x68] sm:$0xff]
  %v3501 = vld [vmem:[%s5 + $0x70] sm:$0xff]
  %v3502 = vld [vmem:[%s5 + $0x78] sm:$0xff]
  %v3503 = vld [vmem:[%s5 + $0x80] sm:$0xff]
  %v3504 = vld [vmem:[%s5 + $0x88] sm:$0xff]
  %v3505 = vld [vmem:[%s5 + $0x90] sm:$0xff]
  %v3506 = vld [vmem:[%s5 + $0x98] sm:$0xff]
  %v3507 = vld [vmem:[%s5 + $0xa0] sm:$0xff]
  %v3508 = vld [vmem:[%s5 + $0xa8] sm:$0xff]
  %v3509 = vld [vmem:[%s5 + $0xb0] sm:$0xff]
  %v3510 = vld [vmem:[%s5 + $0xb8] sm:$0xff]
  %v3511 = vld [vmem:[%s5 + $0xc0] sm:$0xff]
  %v3512 = vld [vmem:[%s5 + $0xc8] sm:$0xff]
  %v3513 = vld [vmem:[%s5 + $0xd0] sm:$0xff]
  %v3514 = vld [vmem:[%s5 + $0xd8] sm:$0xff]
  %v3515 = vld [vmem:[%s5 + $0xe0] sm:$0xff]
  %v3516 = vld [vmem:[%s5 + $0xe8] sm:$0xff]
  %v3517 = vld [vmem:[%s5 + $0xf0] sm:$0xff]
  %v3518 = vld [vmem:[%s5 + $0xf8] sm:$0xff]
  %v3519 = vld [vmem:[%s5 + $0x100] sm:$0xff]
  %v3520 = vld [vmem:[%s5 + $0x108] sm:$0xff]
  %v3521 = vld [vmem:[%s5 + $0x110] sm:$0xff]
  %v3522 = vld [vmem:[%s5 + $0x118] sm:$0xff]
  %v3523 = vld [vmem:[%s5 + $0x120] sm:$0xff]
  %v3524 = vld [vmem:[%s5 + $0x128] sm:$0xff]
  %v3525 = vld [vmem:[%s5 + $0x130] sm:$0xff]
  %v3526 = vld [vmem:[%s5 + $0x138] sm:$0xff]
  %v3527 = vld [vmem:[%s5 + $0x140] sm:$0xff]
  %v3528 = vld [vmem:[%s5 + $0x148] sm:$0xff]
  %v3529 = vld [vmem:[%s5 + $0x150] sm:$0xff]
  %v3530 = vld [vmem:[%s5 + $0x158] sm:$0xff]
  %v3531 = vld [vmem:[%s5 + $0x160] sm:$0xff]
  %v3532 = vld [vmem:[%s5 + $0x168] sm:$0xff]
  %v3533 = vld [vmem:[%s5 + $0x170] sm:$0xff]
  %v3534 = vld [vmem:[%s5 + $0x178] sm:$0xff]
  %v3535 = vld [vmem:[%s5 + $0x180] sm:$0xff]
  %v3536 = vld [vmem:[%s5 + $0x188] sm:$0xff]
  %v3537 = vld [vmem:[%s5 + $0x190] sm:$0xff]
  %v3538 = vld [vmem:[%s5 + $0x198] sm:$0xff]
  %v3539 = vld [vmem:[%s5 + $0x1a0] sm:$0xff]
  %v3540 = vld [vmem:[%s5 + $0x1a8] sm:$0xff]
  %v3541 = vld [vmem:[%s5 + $0x1b0] sm:$0xff]
  %v3542 = vld [vmem:[%s5 + $0x1b8] sm:$0xff]
  %v3543 = vld [vmem:[%s5 + $0x1c0] sm:$0xff]
  %v3544 = vld [vmem:[%s5 + $0x1c8] sm:$0xff]
  %v3545 = vld [vmem:[%s5 + $0x1d0] sm:$0xff]
  %v3546 = vld [vmem:[%s5 + $0x1d8] sm:$0xff]
  %v3547 = vld [vmem:[%s5 + $0x1e0] sm:$0xff]
  %v3548 = vld [vmem:[%s5 + $0x1e8] sm:$0xff]
  %v3549 = vld [vmem:[%s5 + $0x1f0] sm:$0xff]
  %v3550 = vld [vmem:[%s5 + $0x1f8] sm:$0xff]
  %3551 = vmatpush.msra.mxu0 %v3547
  %3552 = vmatpush.msra.mxu0 %v3543
  %3553 = vmatpush.msra.mxu0 %v3539
  %3554 = vmatpush.msra.mxu0 %v3535
  %3555 = vmatpush.msra.mxu0 %v3531
  %3556 = vmatpush.msra.mxu0 %v3527
  %3557 = vmatpush.msra.mxu0 %v3523
  %3558 = vmatpush.msra.mxu0 %v3519
  %3559 = vmatpush.msra.mxu0 %v3515
  %3560 = vmatpush.msra.mxu0 %v3511
  %3561 = vmatpush.msra.mxu0 %v3507
  %3562 = vmatpush.msra.mxu0 %v3503
  %3563 = vmatpush.msra.mxu0 %v3499
  %3564 = vmatpush.msra.mxu0 %v3495
  %3565 = vmatpush.msra.mxu0 %v3491
  %3566 = vmatpush.msra.mxu0 %v3487
  %3567 = vmatmul.f32.gmra.mxu0 %v3486
  %v3568 = vpop.f32.mrf.mxu0
  %v3569 = vadd.f32 0.0, %v3568
  %3570 = vdwg.mxu0
  %3571 = vmatpush.msra.mxu0 %v3548
  %3572 = vmatpush.msra.mxu0 %v3544
  %3573 = vmatpush.msra.mxu0 %v3540
  %3574 = vmatpush.msra.mxu0 %v3536
  %3575 = vmatpush.msra.mxu0 %v3532
  %3576 = vmatpush.msra.mxu0 %v3528
  %3577 = vmatpush.msra.mxu0 %v3524
  %3578 = vmatpush.msra.mxu0 %v3520
  %3579 = vmatpush.msra.mxu0 %v3516
  %3580 = vmatpush.msra.mxu0 %v3512
  %3581 = vmatpush.msra.mxu0 %v3508
  %3582 = vmatpush.msra.mxu0 %v3504
  %3583 = vmatpush.msra.mxu0 %v3500
  %3584 = vmatpush.msra.mxu0 %v3496
  %3585 = vmatpush.msra.mxu0 %v3492
  %3586 = vmatpush.msra.mxu0 %v3488
  %3587 = vmatmul.f32.gmra.mxu0 %v3486
  %v3588 = vpop.f32.mrf.mxu0
  %v3589 = vadd.f32 0.0, %v3588
  %3590 = vdwg.mxu0
  %3591 = vmatpush.msra.mxu0 %v3549
  %3592 = vmatpush.msra.mxu0 %v3545
  %3593 = vmatpush.msra.mxu0 %v3541
  %3594 = vmatpush.msra.mxu0 %v3537
  %3595 = vmatpush.msra.mxu0 %v3533
  %3596 = vmatpush.msra.mxu0 %v3529
  %3597 = vmatpush.msra.mxu0 %v3525
  %3598 = vmatpush.msra.mxu0 %v3521
  %3599 = vmatpush.msra.mxu0 %v3517
  %3600 = vmatpush.msra.mxu0 %v3513
  %3601 = vmatpush.msra.mxu0 %v3509
  %3602 = vmatpush.msra.mxu0 %v3505
  %3603 = vmatpush.msra.mxu0 %v3501
  %3604 = vmatpush.msra.mxu0 %v3497
  %3605 = vmatpush.msra.mxu0 %v3493
  %3606 = vmatpush.msra.mxu0 %v3489
  %3607 = vmatmul.f32.gmra.mxu0 %v3486
  %v3608 = vpop.f32.mrf.mxu0
  %v3609 = vadd.f32 0.0, %v3608
  %3610 = vdwg.mxu0
  %3611 = vmatpush.msra.mxu0 %v3550
  %3612 = vmatpush.msra.mxu0 %v3546
  %3613 = vmatpush.msra.mxu0 %v3542
  %3614 = vmatpush.msra.mxu0 %v3538
  %3615 = vmatpush.msra.mxu0 %v3534
  %3616 = vmatpush.msra.mxu0 %v3530
  %3617 = vmatpush.msra.mxu0 %v3526
  %3618 = vmatpush.msra.mxu0 %v3522
  %3619 = vmatpush.msra.mxu0 %v3518
  %3620 = vmatpush.msra.mxu0 %v3514
  %3621 = vmatpush.msra.mxu0 %v3510
  %3622 = vmatpush.msra.mxu0 %v3506
  %3623 = vmatpush.msra.mxu0 %v3502
  %3624 = vmatpush.msra.mxu0 %v3498
  %3625 = vmatpush.msra.mxu0 %v3494
  %3626 = vmatpush.msra.mxu0 %v3490
  %3627 = vmatmul.f32.gmra.mxu0 %v3486
  %v3628 = vpop.f32.mrf.mxu0
  %v3629 = vadd.f32 0.0, %v3628
  %3630 = vdwg.mxu0
  %3631 = vmatpush.msra.mxu0 %v3482
  %3632 = vmatpush.msra.mxu0 %v3478
  %3633 = vmatpush.msra.mxu0 %v3474
  %3634 = vmatpush.msra.mxu0 %v3470
  %3635 = vmatpush.msra.mxu0 %v3466
  %3636 = vmatpush.msra.mxu0 %v3462
  %3637 = vmatpush.msra.mxu0 %v3458
  %3638 = vmatpush.msra.mxu0 %v3454
  %3639 = vmatpush.msra.mxu0 %v3450
  %3640 = vmatpush.msra.mxu0 %v3446
  %3641 = vmatpush.msra.mxu0 %v3442
  %3642 = vmatpush.msra.mxu0 %v3438
  %3643 = vmatpush.msra.mxu0 %v3434
  %3644 = vmatpush.msra.mxu0 %v3430
  %3645 = vmatpush.msra.mxu0 %v3426
  %3646 = vmatpush.msra.mxu0 %v3422
  %3647 = vmatmul.f32.gmra.mxu0 %v3419
  %v3648 = vpop.f32.mrf.mxu0
  %v3649 = vadd.f32 %v3569, %v3648
  %3650 = vdwg.mxu0
  %3651 = vmatpush.msra.mxu0 %v3483
  %3652 = vmatpush.msra.mxu0 %v3479
  %3653 = vmatpush.msra.mxu0 %v3475
  %3654 = vmatpush.msra.mxu0 %v3471
  %3655 = vmatpush.msra.mxu0 %v3467
  %3656 = vmatpush.msra.mxu0 %v3463
  %3657 = vmatpush.msra.mxu0 %v3459
  %3658 = vmatpush.msra.mxu0 %v3455
  %3659 = vmatpush.msra.mxu0 %v3451
  %3660 = vmatpush.msra.mxu0 %v3447
  %3661 = vmatpush.msra.mxu0 %v3443
  %3662 = vmatpush.msra.mxu0 %v3439
  %3663 = vmatpush.msra.mxu0 %v3435
  %3664 = vmatpush.msra.mxu0 %v3431
  %3665 = vmatpush.msra.mxu0 %v3427
  %3666 = vmatpush.msra.mxu0 %v3423
  %3667 = vmatmul.f32.gmra.mxu0 %v3419
  %v3668 = vpop.f32.mrf.mxu0
  %v3669 = vadd.f32 %v3589, %v3668
  %3670 = vdwg.mxu0
  %3671 = vmatpush.msra.mxu0 %v3484
  %3672 = vmatpush.msra.mxu0 %v3480
  %3673 = vmatpush.msra.mxu0 %v3476
  %3674 = vmatpush.msra.mxu0 %v3472
  %3675 = vmatpush.msra.mxu0 %v3468
  %3676 = vmatpush.msra.mxu0 %v3464
  %3677 = vmatpush.msra.mxu0 %v3460
  %3678 = vmatpush.msra.mxu0 %v3456
  %3679 = vmatpush.msra.mxu0 %v3452
  %3680 = vmatpush.msra.mxu0 %v3448
  %3681 = vmatpush.msra.mxu0 %v3444
  %3682 = vmatpush.msra.mxu0 %v3440
  %3683 = vmatpush.msra.mxu0 %v3436
  %3684 = vmatpush.msra.mxu0 %v3432
  %3685 = vmatpush.msra.mxu0 %v3428
  %3686 = vmatpush.msra.mxu0 %v3424
  %3687 = vmatmul.f32.gmra.mxu0 %v3419
  %v3688 = vpop.f32.mrf.mxu0
  %v3689 = vadd.f32 %v3609, %v3688
  %3690 = vdwg.mxu0
  %3691 = vmatpush.msra.mxu0 %v3485
  %3692 = vmatpush.msra.mxu0 %v3481
  %3693 = vmatpush.msra.mxu0 %v3477
  %3694 = vmatpush.msra.mxu0 %v3473
  %3695 = vmatpush.msra.mxu0 %v3469
  %3696 = vmatpush.msra.mxu0 %v3465
  %3697 = vmatpush.msra.mxu0 %v3461
  %3698 = vmatpush.msra.mxu0 %v3457
  %3699 = vmatpush.msra.mxu0 %v3453
  %3700 = vmatpush.msra.mxu0 %v3449
  %3701 = vmatpush.msra.mxu0 %v3445
  %3702 = vmatpush.msra.mxu0 %v3441
  %3703 = vmatpush.msra.mxu0 %v3437
  %3704 = vmatpush.msra.mxu0 %v3433
  %3705 = vmatpush.msra.mxu0 %v3429
  %3706 = vmatpush.msra.mxu0 %v3425
  %3707 = vmatmul.f32.gmra.mxu0 %v3419
  %v3708 = vpop.f32.mrf.mxu0
  %v3709 = vadd.f32 %v3629, %v3708
  %3710 = vdwg.mxu0
  %v3711 = vadd.f32 %v3649, %v287
  %v3712 = vadd.f32 %v3669, %v288
  %v3713 = vadd.f32 %v3689, %v289
  %v3714 = vadd.f32 %v3709, %v290
  %v3715 = vxor.u32 %v3711, 2147483648
  %v3716 = vmul.f32 %v3715, 1.442695
  %v3717 = vpow.pop %v3716
  %v3718 = vadd.f32 %v3717, 1.0
  %v3719 = vrcp.pop %v3718
  %v3720 = vmul.f32 %v3718, %v3719
  %v3721 = vsub.f32 1.0, %v3720
  %v3722 = vmul.f32 %v3719, %v3721
  %v3723 = vadd.f32 %v3719, %v3722
  %vm3724 = vweird.f32 %v3718
  %vm3725 = vweird.f32 %v3719
  %vm3726 = vmor %vm3724, %vm3725
  %v3727 = vsel %vm3726, %v3719, %v3723
  %v3728 = vand.u32 2147483647, %v3718
  %vm3729 = vcmp.eq.f32.partialorder %v3728, 8.507059e+37
  %v3730 = vand.u32 %v3718, 2147483648
  %v3731 = vor.u32 1.1754944e-38, %v3730
  %v3732 = vsel %vm3729, %v3731, %v3727
  %v3733 = vmul.f32 1.0, %v3732
  %v3734 = vxor.u32 %v3712, 2147483648
  %v3735 = vmul.f32 %v3734, 1.442695
  %v3736 = vpow.pop %v3735
  %v3737 = vadd.f32 %v3736, 1.0
  %v3738 = vrcp.pop %v3737
  %v3739 = vmul.f32 %v3737, %v3738
  %v3740 = vsub.f32 1.0, %v3739
  %v3741 = vmul.f32 %v3738, %v3740
  %v3742 = vadd.f32 %v3738, %v3741
  %vm3743 = vweird.f32 %v3737
  %vm3744 = vweird.f32 %v3738
  %vm3745 = vmor %vm3743, %vm3744
  %v3746 = vsel %vm3745, %v3738, %v3742
  %v3747 = vand.u32 2147483647, %v3737
  %vm3748 = vcmp.eq.f32.partialorder %v3747, 8.507059e+37
  %v3749 = vand.u32 %v3737, 2147483648
  %v3750 = vor.u32 1.1754944e-38, %v3749
  %v3751 = vsel %vm3748, %v3750, %v3746
  %v3752 = vmul.f32 1.0, %v3751
  %v3753 = vtanh.pop %v3713
  %v3754 = vxor.u32 %v3714, 2147483648
  %v3755 = vmul.f32 %v3754, 1.442695
  %v3756 = vpow.pop %v3755
  %v3757 = vadd.f32 %v3756, 1.0
  %v3758 = vrcp.pop %v3757
  %v3759 = vmul.f32 %v3757, %v3758
  %v3760 = vsub.f32 1.0, %v3759
  %v3761 = vmul.f32 %v3758, %v3760
  %v3762 = vadd.f32 %v3758, %v3761
  %vm3763 = vweird.f32 %v3757
  %vm3764 = vweird.f32 %v3758
  %vm3765 = vmor %vm3763, %vm3764
  %v3766 = vsel %vm3765, %v3758, %v3762
  %v3767 = vand.u32 2147483647, %v3757
  %vm3768 = vcmp.eq.f32.partialorder %v3767, 8.507059e+37
  %v3769 = vand.u32 %v3757, 2147483648
  %v3770 = vor.u32 1.1754944e-38, %v3769
  %v3771 = vsel %vm3768, %v3770, %v3766
  %v3772 = vmul.f32 1.0, %v3771
  %v3773 = vld [vmem:[#allocation6] sm:$0xff]
  %v3774 = vmul.f32 %v3752, %v3773
  %v3775 = vmul.f32 %v3733, %v3753
  %v3776 = vadd.f32 %v3774, %v3775
  %v3777 = vtanh.pop %v3776
  %v3778 = vmul.f32 %v3772, %v3777
  %3779 = vst [vmem:[#allocation6] sm:$0xff] %v3776
  %3780 = vst [vmem:[#allocation4] sm:$0xff] %v3778
  %s3781 = smul.u32 6, 4
  %s3782 = smul.addr %s3781, 8
  %s3783 = scalar_lea.vmem [#allocation2], %s3782
  %v3784 = vld [vmem:[%s3783] sm:$0xff]
  %v3785 = vld [vmem:[%s3783 + $0x8] sm:$0xff]
  %v3786 = vld [vmem:[%s3783 + $0x10] sm:$0xff]
  %v3787 = vld [vmem:[%s3783 + $0x18] sm:$0xff]
  %v3788 = vld [vmem:[#allocation3] sm:$0xff]
  %v3789 = vld [vmem:[%s2] sm:$0xff]
  %v3790 = vld [vmem:[%s2 + $0x8] sm:$0xff]
  %v3791 = vld [vmem:[%s2 + $0x10] sm:$0xff]
  %v3792 = vld [vmem:[%s2 + $0x18] sm:$0xff]
  %v3793 = vld [vmem:[%s2 + $0x20] sm:$0xff]
  %v3794 = vld [vmem:[%s2 + $0x28] sm:$0xff]
  %v3795 = vld [vmem:[%s2 + $0x30] sm:$0xff]
  %v3796 = vld [vmem:[%s2 + $0x38] sm:$0xff]
  %v3797 = vld [vmem:[%s2 + $0x40] sm:$0xff]
  %v3798 = vld [vmem:[%s2 + $0x48] sm:$0xff]
  %v3799 = vld [vmem:[%s2 + $0x50] sm:$0xff]
  %v3800 = vld [vmem:[%s2 + $0x58] sm:$0xff]
  %v3801 = vld [vmem:[%s2 + $0x60] sm:$0xff]
  %v3802 = vld [vmem:[%s2 + $0x68] sm:$0xff]
  %v3803 = vld [vmem:[%s2 + $0x70] sm:$0xff]
  %v3804 = vld [vmem:[%s2 + $0x78] sm:$0xff]
  %v3805 = vld [vmem:[%s2 + $0x80] sm:$0xff]
  %v3806 = vld [vmem:[%s2 + $0x88] sm:$0xff]
  %v3807 = vld [vmem:[%s2 + $0x90] sm:$0xff]
  %v3808 = vld [vmem:[%s2 + $0x98] sm:$0xff]
  %v3809 = vld [vmem:[%s2 + $0xa0] sm:$0xff]
  %v3810 = vld [vmem:[%s2 + $0xa8] sm:$0xff]
  %v3811 = vld [vmem:[%s2 + $0xb0] sm:$0xff]
  %v3812 = vld [vmem:[%s2 + $0xb8] sm:$0xff]
  %v3813 = vld [vmem:[%s2 + $0xc0] sm:$0xff]
  %v3814 = vld [vmem:[%s2 + $0xc8] sm:$0xff]
  %v3815 = vld [vmem:[%s2 + $0xd0] sm:$0xff]
  %v3816 = vld [vmem:[%s2 + $0xd8] sm:$0xff]
  %v3817 = vld [vmem:[%s2 + $0xe0] sm:$0xff]
  %v3818 = vld [vmem:[%s2 + $0xe8] sm:$0xff]
  %v3819 = vld [vmem:[%s2 + $0xf0] sm:$0xff]
  %v3820 = vld [vmem:[%s2 + $0xf8] sm:$0xff]
  %v3821 = vld [vmem:[%s2 + $0x100] sm:$0xff]
  %v3822 = vld [vmem:[%s2 + $0x108] sm:$0xff]
  %v3823 = vld [vmem:[%s2 + $0x110] sm:$0xff]
  %v3824 = vld [vmem:[%s2 + $0x118] sm:$0xff]
  %v3825 = vld [vmem:[%s2 + $0x120] sm:$0xff]
  %v3826 = vld [vmem:[%s2 + $0x128] sm:$0xff]
  %v3827 = vld [vmem:[%s2 + $0x130] sm:$0xff]
  %v3828 = vld [vmem:[%s2 + $0x138] sm:$0xff]
  %v3829 = vld [vmem:[%s2 + $0x140] sm:$0xff]
  %v3830 = vld [vmem:[%s2 + $0x148] sm:$0xff]
  %v3831 = vld [vmem:[%s2 + $0x150] sm:$0xff]
  %v3832 = vld [vmem:[%s2 + $0x158] sm:$0xff]
  %v3833 = vld [vmem:[%s2 + $0x160] sm:$0xff]
  %v3834 = vld [vmem:[%s2 + $0x168] sm:$0xff]
  %v3835 = vld [vmem:[%s2 + $0x170] sm:$0xff]
  %v3836 = vld [vmem:[%s2 + $0x178] sm:$0xff]
  %v3837 = vld [vmem:[%s2 + $0x180] sm:$0xff]
  %v3838 = vld [vmem:[%s2 + $0x188] sm:$0xff]
  %v3839 = vld [vmem:[%s2 + $0x190] sm:$0xff]
  %v3840 = vld [vmem:[%s2 + $0x198] sm:$0xff]
  %v3841 = vld [vmem:[%s2 + $0x1a0] sm:$0xff]
  %v3842 = vld [vmem:[%s2 + $0x1a8] sm:$0xff]
  %v3843 = vld [vmem:[%s2 + $0x1b0] sm:$0xff]
  %v3844 = vld [vmem:[%s2 + $0x1b8] sm:$0xff]
  %v3845 = vld [vmem:[%s2 + $0x1c0] sm:$0xff]
  %v3846 = vld [vmem:[%s2 + $0x1c8] sm:$0xff]
  %v3847 = vld [vmem:[%s2 + $0x1d0] sm:$0xff]
  %v3848 = vld [vmem:[%s2 + $0x1d8] sm:$0xff]
  %v3849 = vld [vmem:[%s2 + $0x1e0] sm:$0xff]
  %v3850 = vld [vmem:[%s2 + $0x1e8] sm:$0xff]
  %v3851 = vld [vmem:[%s2 + $0x1f0] sm:$0xff]
  %v3852 = vld [vmem:[%s2 + $0x1f8] sm:$0xff]
  %3853 = vmatpush.msra.mxu0 %v3849
  %3854 = vmatpush.msra.mxu0 %v3845
  %3855 = vmatpush.msra.mxu0 %v3841
  %3856 = vmatpush.msra.mxu0 %v3837
  %3857 = vmatpush.msra.mxu0 %v3833
  %3858 = vmatpush.msra.mxu0 %v3829
  %3859 = vmatpush.msra.mxu0 %v3825
  %3860 = vmatpush.msra.mxu0 %v3821
  %3861 = vmatpush.msra.mxu0 %v3817
  %3862 = vmatpush.msra.mxu0 %v3813
  %3863 = vmatpush.msra.mxu0 %v3809
  %3864 = vmatpush.msra.mxu0 %v3805
  %3865 = vmatpush.msra.mxu0 %v3801
  %3866 = vmatpush.msra.mxu0 %v3797
  %3867 = vmatpush.msra.mxu0 %v3793
  %3868 = vmatpush.msra.mxu0 %v3789
  %3869 = vmatmul.f32.gmra.mxu0 %v3788
  %v3870 = vpop.f32.mrf.mxu0
  %v3871 = vadd.f32 0.0, %v3870
  %3872 = vdwg.mxu0
  %3873 = vmatpush.msra.mxu0 %v3850
  %3874 = vmatpush.msra.mxu0 %v3846
  %3875 = vmatpush.msra.mxu0 %v3842
  %3876 = vmatpush.msra.mxu0 %v3838
  %3877 = vmatpush.msra.mxu0 %v3834
  %3878 = vmatpush.msra.mxu0 %v3830
  %3879 = vmatpush.msra.mxu0 %v3826
  %3880 = vmatpush.msra.mxu0 %v3822
  %3881 = vmatpush.msra.mxu0 %v3818
  %3882 = vmatpush.msra.mxu0 %v3814
  %3883 = vmatpush.msra.mxu0 %v3810
  %3884 = vmatpush.msra.mxu0 %v3806
  %3885 = vmatpush.msra.mxu0 %v3802
  %3886 = vmatpush.msra.mxu0 %v3798
  %3887 = vmatpush.msra.mxu0 %v3794
  %3888 = vmatpush.msra.mxu0 %v3790
  %3889 = vmatmul.f32.gmra.mxu0 %v3788
  %v3890 = vpop.f32.mrf.mxu0
  %v3891 = vadd.f32 0.0, %v3890
  %3892 = vdwg.mxu0
  %3893 = vmatpush.msra.mxu0 %v3851
  %3894 = vmatpush.msra.mxu0 %v3847
  %3895 = vmatpush.msra.mxu0 %v3843
  %3896 = vmatpush.msra.mxu0 %v3839
  %3897 = vmatpush.msra.mxu0 %v3835
  %3898 = vmatpush.msra.mxu0 %v3831
  %3899 = vmatpush.msra.mxu0 %v3827
  %3900 = vmatpush.msra.mxu0 %v3823
  %3901 = vmatpush.msra.mxu0 %v3819
  %3902 = vmatpush.msra.mxu0 %v3815
  %3903 = vmatpush.msra.mxu0 %v3811
  %3904 = vmatpush.msra.mxu0 %v3807
  %3905 = vmatpush.msra.mxu0 %v3803
  %3906 = vmatpush.msra.mxu0 %v3799
  %3907 = vmatpush.msra.mxu0 %v3795
  %3908 = vmatpush.msra.mxu0 %v3791
  %3909 = vmatmul.f32.gmra.mxu0 %v3788
  %v3910 = vpop.f32.mrf.mxu0
  %v3911 = vadd.f32 0.0, %v3910
  %3912 = vdwg.mxu0
  %3913 = vmatpush.msra.mxu0 %v3852
  %3914 = vmatpush.msra.mxu0 %v3848
  %3915 = vmatpush.msra.mxu0 %v3844
  %3916 = vmatpush.msra.mxu0 %v3840
  %3917 = vmatpush.msra.mxu0 %v3836
  %3918 = vmatpush.msra.mxu0 %v3832
  %3919 = vmatpush.msra.mxu0 %v3828
  %3920 = vmatpush.msra.mxu0 %v3824
  %3921 = vmatpush.msra.mxu0 %v3820
  %3922 = vmatpush.msra.mxu0 %v3816
  %3923 = vmatpush.msra.mxu0 %v3812
  %3924 = vmatpush.msra.mxu0 %v3808
  %3925 = vmatpush.msra.mxu0 %v3804
  %3926 = vmatpush.msra.mxu0 %v3800
  %3927 = vmatpush.msra.mxu0 %v3796
  %3928 = vmatpush.msra.mxu0 %v3792
  %3929 = vmatmul.f32.gmra.mxu0 %v3788
  %v3930 = vpop.f32.mrf.mxu0
  %v3931 = vadd.f32 0.0, %v3930
  %3932 = vdwg.mxu0
  %v3933 = vadd.f32 %v3784, %v3871
  %v3934 = vadd.f32 %v3785, %v3891
  %v3935 = vadd.f32 %v3786, %v3911
  %v3936 = vadd.f32 %v3787, %v3931
  %v3937 = vxor.u32 %v3933, 2147483648
  %v3938 = vmul.f32 %v3937, 1.442695
  %v3939 = vpow.pop %v3938
  %v3940 = vadd.f32 %v3939, 1.0
  %v3941 = vrcp.pop %v3940
  %v3942 = vmul.f32 %v3940, %v3941
  %v3943 = vsub.f32 1.0, %v3942
  %v3944 = vmul.f32 %v3941, %v3943
  %v3945 = vadd.f32 %v3941, %v3944
  %vm3946 = vweird.f32 %v3940
  %vm3947 = vweird.f32 %v3941
  %vm3948 = vmor %vm3946, %vm3947
  %v3949 = vsel %vm3948, %v3941, %v3945
  %v3950 = vand.u32 2147483647, %v3940
  %vm3951 = vcmp.eq.f32.partialorder %v3950, 8.507059e+37
  %v3952 = vand.u32 %v3940, 2147483648
  %v3953 = vor.u32 1.1754944e-38, %v3952
  %v3954 = vsel %vm3951, %v3953, %v3949
  %v3955 = vmul.f32 1.0, %v3954
  %v3956 = vxor.u32 %v3934, 2147483648
  %v3957 = vmul.f32 %v3956, 1.442695
  %v3958 = vpow.pop %v3957
  %v3959 = vadd.f32 %v3958, 1.0
  %v3960 = vrcp.pop %v3959
  %v3961 = vmul.f32 %v3959, %v3960
  %v3962 = vsub.f32 1.0, %v3961
  %v3963 = vmul.f32 %v3960, %v3962
  %v3964 = vadd.f32 %v3960, %v3963
  %vm3965 = vweird.f32 %v3959
  %vm3966 = vweird.f32 %v3960
  %vm3967 = vmor %vm3965, %vm3966
  %v3968 = vsel %vm3967, %v3960, %v3964
  %v3969 = vand.u32 2147483647, %v3959
  %vm3970 = vcmp.eq.f32.partialorder %v3969, 8.507059e+37
  %v3971 = vand.u32 %v3959, 2147483648
  %v3972 = vor.u32 1.1754944e-38, %v3971
  %v3973 = vsel %vm3970, %v3972, %v3968
  %v3974 = vmul.f32 1.0, %v3973
  %v3975 = vtanh.pop %v3935
  %v3976 = vxor.u32 %v3936, 2147483648
  %v3977 = vmul.f32 %v3976, 1.442695
  %v3978 = vpow.pop %v3977
  %v3979 = vadd.f32 %v3978, 1.0
  %v3980 = vrcp.pop %v3979
  %v3981 = vmul.f32 %v3979, %v3980
  %v3982 = vsub.f32 1.0, %v3981
  %v3983 = vmul.f32 %v3980, %v3982
  %v3984 = vadd.f32 %v3980, %v3983
  %vm3985 = vweird.f32 %v3979
  %vm3986 = vweird.f32 %v3980
  %vm3987 = vmor %vm3985, %vm3986
  %v3988 = vsel %vm3987, %v3980, %v3984
  %v3989 = vand.u32 2147483647, %v3979
  %vm3990 = vcmp.eq.f32.partialorder %v3989, 8.507059e+37
  %v3991 = vand.u32 %v3979, 2147483648
  %v3992 = vor.u32 1.1754944e-38, %v3991
  %v3993 = vsel %vm3990, %v3992, %v3988
  %v3994 = vmul.f32 1.0, %v3993
  %v3995 = vld [vmem:[#allocation5] sm:$0xff]
  %v3996 = vmul.f32 %v3974, %v3995
  %v3997 = vmul.f32 %v3955, %v3975
  %v3998 = vadd.f32 %v3996, %v3997
  %v3999 = vtanh.pop %v3998
  %v4000 = vmul.f32 %v3994, %v3999
  %4001 = vst [vmem:[#allocation5] sm:$0xff] %v3998
  %4002 = vst [vmem:[#allocation3] sm:$0xff] %v4000
  %v4003 = vld [vmem:[%s4] sm:$0xff]
  %v4004 = vld [vmem:[%s4 + $0x8] sm:$0xff]
  %v4005 = vld [vmem:[%s4 + $0x10] sm:$0xff]
  %v4006 = vld [vmem:[%s4 + $0x18] sm:$0xff]
  %v4007 = vld [vmem:[%s4 + $0x20] sm:$0xff]
  %v4008 = vld [vmem:[%s4 + $0x28] sm:$0xff]
  %v4009 = vld [vmem:[%s4 + $0x30] sm:$0xff]
  %v4010 = vld [vmem:[%s4 + $0x38] sm:$0xff]
  %v4011 = vld [vmem:[%s4 + $0x40] sm:$0xff]
  %v4012 = vld [vmem:[%s4 + $0x48] sm:$0xff]
  %v4013 = vld [vmem:[%s4 + $0x50] sm:$0xff]
  %v4014 = vld [vmem:[%s4 + $0x58] sm:$0xff]
  %v4015 = vld [vmem:[%s4 + $0x60] sm:$0xff]
  %v4016 = vld [vmem:[%s4 + $0x68] sm:$0xff]
  %v4017 = vld [vmem:[%s4 + $0x70] sm:$0xff]
  %v4018 = vld [vmem:[%s4 + $0x78] sm:$0xff]
  %v4019 = vld [vmem:[%s4 + $0x80] sm:$0xff]
  %v4020 = vld [vmem:[%s4 + $0x88] sm:$0xff]
  %v4021 = vld [vmem:[%s4 + $0x90] sm:$0xff]
  %v4022 = vld [vmem:[%s4 + $0x98] sm:$0xff]
  %v4023 = vld [vmem:[%s4 + $0xa0] sm:$0xff]
  %v4024 = vld [vmem:[%s4 + $0xa8] sm:$0xff]
  %v4025 = vld [vmem:[%s4 + $0xb0] sm:$0xff]
  %v4026 = vld [vmem:[%s4 + $0xb8] sm:$0xff]
  %v4027 = vld [vmem:[%s4 + $0xc0] sm:$0xff]
  %v4028 = vld [vmem:[%s4 + $0xc8] sm:$0xff]
  %v4029 = vld [vmem:[%s4 + $0xd0] sm:$0xff]
  %v4030 = vld [vmem:[%s4 + $0xd8] sm:$0xff]
  %v4031 = vld [vmem:[%s4 + $0xe0] sm:$0xff]
  %v4032 = vld [vmem:[%s4 + $0xe8] sm:$0xff]
  %v4033 = vld [vmem:[%s4 + $0xf0] sm:$0xff]
  %v4034 = vld [vmem:[%s4 + $0xf8] sm:$0xff]
  %v4035 = vld [vmem:[%s4 + $0x100] sm:$0xff]
  %v4036 = vld [vmem:[%s4 + $0x108] sm:$0xff]
  %v4037 = vld [vmem:[%s4 + $0x110] sm:$0xff]
  %v4038 = vld [vmem:[%s4 + $0x118] sm:$0xff]
  %v4039 = vld [vmem:[%s4 + $0x120] sm:$0xff]
  %v4040 = vld [vmem:[%s4 + $0x128] sm:$0xff]
  %v4041 = vld [vmem:[%s4 + $0x130] sm:$0xff]
  %v4042 = vld [vmem:[%s4 + $0x138] sm:$0xff]
  %v4043 = vld [vmem:[%s4 + $0x140] sm:$0xff]
  %v4044 = vld [vmem:[%s4 + $0x148] sm:$0xff]
  %v4045 = vld [vmem:[%s4 + $0x150] sm:$0xff]
  %v4046 = vld [vmem:[%s4 + $0x158] sm:$0xff]
  %v4047 = vld [vmem:[%s4 + $0x160] sm:$0xff]
  %v4048 = vld [vmem:[%s4 + $0x168] sm:$0xff]
  %v4049 = vld [vmem:[%s4 + $0x170] sm:$0xff]
  %v4050 = vld [vmem:[%s4 + $0x178] sm:$0xff]
  %v4051 = vld [vmem:[%s4 + $0x180] sm:$0xff]
  %v4052 = vld [vmem:[%s4 + $0x188] sm:$0xff]
  %v4053 = vld [vmem:[%s4 + $0x190] sm:$0xff]
  %v4054 = vld [vmem:[%s4 + $0x198] sm:$0xff]
  %v4055 = vld [vmem:[%s4 + $0x1a0] sm:$0xff]
  %v4056 = vld [vmem:[%s4 + $0x1a8] sm:$0xff]
  %v4057 = vld [vmem:[%s4 + $0x1b0] sm:$0xff]
  %v4058 = vld [vmem:[%s4 + $0x1b8] sm:$0xff]
  %v4059 = vld [vmem:[%s4 + $0x1c0] sm:$0xff]
  %v4060 = vld [vmem:[%s4 + $0x1c8] sm:$0xff]
  %v4061 = vld [vmem:[%s4 + $0x1d0] sm:$0xff]
  %v4062 = vld [vmem:[%s4 + $0x1d8] sm:$0xff]
  %v4063 = vld [vmem:[%s4 + $0x1e0] sm:$0xff]
  %v4064 = vld [vmem:[%s4 + $0x1e8] sm:$0xff]
  %v4065 = vld [vmem:[%s4 + $0x1f0] sm:$0xff]
  %v4066 = vld [vmem:[%s4 + $0x1f8] sm:$0xff]
  %v4067 = vld [vmem:[#allocation4] sm:$0xff]
  %v4068 = vld [vmem:[%s5] sm:$0xff]
  %v4069 = vld [vmem:[%s5 + $0x8] sm:$0xff]
  %v4070 = vld [vmem:[%s5 + $0x10] sm:$0xff]
  %v4071 = vld [vmem:[%s5 + $0x18] sm:$0xff]
  %v4072 = vld [vmem:[%s5 + $0x20] sm:$0xff]
  %v4073 = vld [vmem:[%s5 + $0x28] sm:$0xff]
  %v4074 = vld [vmem:[%s5 + $0x30] sm:$0xff]
  %v4075 = vld [vmem:[%s5 + $0x38] sm:$0xff]
  %v4076 = vld [vmem:[%s5 + $0x40] sm:$0xff]
  %v4077 = vld [vmem:[%s5 + $0x48] sm:$0xff]
  %v4078 = vld [vmem:[%s5 + $0x50] sm:$0xff]
  %v4079 = vld [vmem:[%s5 + $0x58] sm:$0xff]
  %v4080 = vld [vmem:[%s5 + $0x60] sm:$0xff]
  %v4081 = vld [vmem:[%s5 + $0x68] sm:$0xff]
  %v4082 = vld [vmem:[%s5 + $0x70] sm:$0xff]
  %v4083 = vld [vmem:[%s5 + $0x78] sm:$0xff]
  %v4084 = vld [vmem:[%s5 + $0x80] sm:$0xff]
  %v4085 = vld [vmem:[%s5 + $0x88] sm:$0xff]
  %v4086 = vld [vmem:[%s5 + $0x90] sm:$0xff]
  %v4087 = vld [vmem:[%s5 + $0x98] sm:$0xff]
  %v4088 = vld [vmem:[%s5 + $0xa0] sm:$0xff]
  %v4089 = vld [vmem:[%s5 + $0xa8] sm:$0xff]
  %v4090 = vld [vmem:[%s5 + $0xb0] sm:$0xff]
  %v4091 = vld [vmem:[%s5 + $0xb8] sm:$0xff]
  %v4092 = vld [vmem:[%s5 + $0xc0] sm:$0xff]
  %v4093 = vld [vmem:[%s5 + $0xc8] sm:$0xff]
  %v4094 = vld [vmem:[%s5 + $0xd0] sm:$0xff]
  %v4095 = vld [vmem:[%s5 + $0xd8] sm:$0xff]
  %v4096 = vld [vmem:[%s5 + $0xe0] sm:$0xff]
  %v4097 = vld [vmem:[%s5 + $0xe8] sm:$0xff]
  %v4098 = vld [vmem:[%s5 + $0xf0] sm:$0xff]
  %v4099 = vld [vmem:[%s5 + $0xf8] sm:$0xff]
  %v4100 = vld [vmem:[%s5 + $0x100] sm:$0xff]
  %v4101 = vld [vmem:[%s5 + $0x108] sm:$0xff]
  %v4102 = vld [vmem:[%s5 + $0x110] sm:$0xff]
  %v4103 = vld [vmem:[%s5 + $0x118] sm:$0xff]
  %v4104 = vld [vmem:[%s5 + $0x120] sm:$0xff]
  %v4105 = vld [vmem:[%s5 + $0x128] sm:$0xff]
  %v4106 = vld [vmem:[%s5 + $0x130] sm:$0xff]
  %v4107 = vld [vmem:[%s5 + $0x138] sm:$0xff]
  %v4108 = vld [vmem:[%s5 + $0x140] sm:$0xff]
  %v4109 = vld [vmem:[%s5 + $0x148] sm:$0xff]
  %v4110 = vld [vmem:[%s5 + $0x150] sm:$0xff]
  %v4111 = vld [vmem:[%s5 + $0x158] sm:$0xff]
  %v4112 = vld [vmem:[%s5 + $0x160] sm:$0xff]
  %v4113 = vld [vmem:[%s5 + $0x168] sm:$0xff]
  %v4114 = vld [vmem:[%s5 + $0x170] sm:$0xff]
  %v4115 = vld [vmem:[%s5 + $0x178] sm:$0xff]
  %v4116 = vld [vmem:[%s5 + $0x180] sm:$0xff]
  %v4117 = vld [vmem:[%s5 + $0x188] sm:$0xff]
  %v4118 = vld [vmem:[%s5 + $0x190] sm:$0xff]
  %v4119 = vld [vmem:[%s5 + $0x198] sm:$0xff]
  %v4120 = vld [vmem:[%s5 + $0x1a0] sm:$0xff]
  %v4121 = vld [vmem:[%s5 + $0x1a8] sm:$0xff]
  %v4122 = vld [vmem:[%s5 + $0x1b0] sm:$0xff]
  %v4123 = vld [vmem:[%s5 + $0x1b8] sm:$0xff]
  %v4124 = vld [vmem:[%s5 + $0x1c0] sm:$0xff]
  %v4125 = vld [vmem:[%s5 + $0x1c8] sm:$0xff]
  %v4126 = vld [vmem:[%s5 + $0x1d0] sm:$0xff]
  %v4127 = vld [vmem:[%s5 + $0x1d8] sm:$0xff]
  %v4128 = vld [vmem:[%s5 + $0x1e0] sm:$0xff]
  %v4129 = vld [vmem:[%s5 + $0x1e8] sm:$0xff]
  %v4130 = vld [vmem:[%s5 + $0x1f0] sm:$0xff]
  %v4131 = vld [vmem:[%s5 + $0x1f8] sm:$0xff]
  %4132 = vmatpush.msra.mxu0 %v4128
  %4133 = vmatpush.msra.mxu0 %v4124
  %4134 = vmatpush.msra.mxu0 %v4120
  %4135 = vmatpush.msra.mxu0 %v4116
  %4136 = vmatpush.msra.mxu0 %v4112
  %4137 = vmatpush.msra.mxu0 %v4108
  %4138 = vmatpush.msra.mxu0 %v4104
  %4139 = vmatpush.msra.mxu0 %v4100
  %4140 = vmatpush.msra.mxu0 %v4096
  %4141 = vmatpush.msra.mxu0 %v4092
  %4142 = vmatpush.msra.mxu0 %v4088
  %4143 = vmatpush.msra.mxu0 %v4084
  %4144 = vmatpush.msra.mxu0 %v4080
  %4145 = vmatpush.msra.mxu0 %v4076
  %4146 = vmatpush.msra.mxu0 %v4072
  %4147 = vmatpush.msra.mxu0 %v4068
  %4148 = vmatmul.f32.gmra.mxu0 %v4067
  %v4149 = vpop.f32.mrf.mxu0
  %v4150 = vadd.f32 0.0, %v4149
  %4151 = vdwg.mxu0
  %4152 = vmatpush.msra.mxu0 %v4129
  %4153 = vmatpush.msra.mxu0 %v4125
  %4154 = vmatpush.msra.mxu0 %v4121
  %4155 = vmatpush.msra.mxu0 %v4117
  %4156 = vmatpush.msra.mxu0 %v4113
  %4157 = vmatpush.msra.mxu0 %v4109
  %4158 = vmatpush.msra.mxu0 %v4105
  %4159 = vmatpush.msra.mxu0 %v4101
  %4160 = vmatpush.msra.mxu0 %v4097
  %4161 = vmatpush.msra.mxu0 %v4093
  %4162 = vmatpush.msra.mxu0 %v4089
  %4163 = vmatpush.msra.mxu0 %v4085
  %4164 = vmatpush.msra.mxu0 %v4081
  %4165 = vmatpush.msra.mxu0 %v4077
  %4166 = vmatpush.msra.mxu0 %v4073
  %4167 = vmatpush.msra.mxu0 %v4069
  %4168 = vmatmul.f32.gmra.mxu0 %v4067
  %v4169 = vpop.f32.mrf.mxu0
  %v4170 = vadd.f32 0.0, %v4169
  %4171 = vdwg.mxu0
  %4172 = vmatpush.msra.mxu0 %v4130
  %4173 = vmatpush.msra.mxu0 %v4126
  %4174 = vmatpush.msra.mxu0 %v4122
  %4175 = vmatpush.msra.mxu0 %v4118
  %4176 = vmatpush.msra.mxu0 %v4114
  %4177 = vmatpush.msra.mxu0 %v4110
  %4178 = vmatpush.msra.mxu0 %v4106
  %4179 = vmatpush.msra.mxu0 %v4102
  %4180 = vmatpush.msra.mxu0 %v4098
  %4181 = vmatpush.msra.mxu0 %v4094
  %4182 = vmatpush.msra.mxu0 %v4090
  %4183 = vmatpush.msra.mxu0 %v4086
  %4184 = vmatpush.msra.mxu0 %v4082
  %4185 = vmatpush.msra.mxu0 %v4078
  %4186 = vmatpush.msra.mxu0 %v4074
  %4187 = vmatpush.msra.mxu0 %v4070
  %4188 = vmatmul.f32.gmra.mxu0 %v4067
  %v4189 = vpop.f32.mrf.mxu0
  %v4190 = vadd.f32 0.0, %v4189
  %4191 = vdwg.mxu0
  %4192 = vmatpush.msra.mxu0 %v4131
  %4193 = vmatpush.msra.mxu0 %v4127
  %4194 = vmatpush.msra.mxu0 %v4123
  %4195 = vmatpush.msra.mxu0 %v4119
  %4196 = vmatpush.msra.mxu0 %v4115
  %4197 = vmatpush.msra.mxu0 %v4111
  %4198 = vmatpush.msra.mxu0 %v4107
  %4199 = vmatpush.msra.mxu0 %v4103
  %4200 = vmatpush.msra.mxu0 %v4099
  %4201 = vmatpush.msra.mxu0 %v4095
  %4202 = vmatpush.msra.mxu0 %v4091
  %4203 = vmatpush.msra.mxu0 %v4087
  %4204 = vmatpush.msra.mxu0 %v4083
  %4205 = vmatpush.msra.mxu0 %v4079
  %4206 = vmatpush.msra.mxu0 %v4075
  %4207 = vmatpush.msra.mxu0 %v4071
  %4208 = vmatmul.f32.gmra.mxu0 %v4067
  %v4209 = vpop.f32.mrf.mxu0
  %v4210 = vadd.f32 0.0, %v4209
  %4211 = vdwg.mxu0
  %4212 = vmatpush.msra.mxu0 %v4063
  %4213 = vmatpush.msra.mxu0 %v4059
  %4214 = vmatpush.msra.mxu0 %v4055
  %4215 = vmatpush.msra.mxu0 %v4051
  %4216 = vmatpush.msra.mxu0 %v4047
  %4217 = vmatpush.msra.mxu0 %v4043
  %4218 = vmatpush.msra.mxu0 %v4039
  %4219 = vmatpush.msra.mxu0 %v4035
  %4220 = vmatpush.msra.mxu0 %v4031
  %4221 = vmatpush.msra.mxu0 %v4027
  %4222 = vmatpush.msra.mxu0 %v4023
  %4223 = vmatpush.msra.mxu0 %v4019
  %4224 = vmatpush.msra.mxu0 %v4015
  %4225 = vmatpush.msra.mxu0 %v4011
  %4226 = vmatpush.msra.mxu0 %v4007
  %4227 = vmatpush.msra.mxu0 %v4003
  %4228 = vmatmul.f32.gmra.mxu0 %v4000
  %v4229 = vpop.f32.mrf.mxu0
  %v4230 = vadd.f32 %v4150, %v4229
  %4231 = vdwg.mxu0
  %4232 = vmatpush.msra.mxu0 %v4064
  %4233 = vmatpush.msra.mxu0 %v4060
  %4234 = vmatpush.msra.mxu0 %v4056
  %4235 = vmatpush.msra.mxu0 %v4052
  %4236 = vmatpush.msra.mxu0 %v4048
  %4237 = vmatpush.msra.mxu0 %v4044
  %4238 = vmatpush.msra.mxu0 %v4040
  %4239 = vmatpush.msra.mxu0 %v4036
  %4240 = vmatpush.msra.mxu0 %v4032
  %4241 = vmatpush.msra.mxu0 %v4028
  %4242 = vmatpush.msra.mxu0 %v4024
  %4243 = vmatpush.msra.mxu0 %v4020
  %4244 = vmatpush.msra.mxu0 %v4016
  %4245 = vmatpush.msra.mxu0 %v4012
  %4246 = vmatpush.msra.mxu0 %v4008
  %4247 = vmatpush.msra.mxu0 %v4004
  %4248 = vmatmul.f32.gmra.mxu0 %v4000
  %v4249 = vpop.f32.mrf.mxu0
  %v4250 = vadd.f32 %v4170, %v4249
  %4251 = vdwg.mxu0
  %4252 = vmatpush.msra.mxu0 %v4065
  %4253 = vmatpush.msra.mxu0 %v4061
  %4254 = vmatpush.msra.mxu0 %v4057
  %4255 = vmatpush.msra.mxu0 %v4053
  %4256 = vmatpush.msra.mxu0 %v4049
  %4257 = vmatpush.msra.mxu0 %v4045
  %4258 = vmatpush.msra.mxu0 %v4041
  %4259 = vmatpush.msra.mxu0 %v4037
  %4260 = vmatpush.msra.mxu0 %v4033
  %4261 = vmatpush.msra.mxu0 %v4029
  %4262 = vmatpush.msra.mxu0 %v4025
  %4263 = vmatpush.msra.mxu0 %v4021
  %4264 = vmatpush.msra.mxu0 %v4017
  %4265 = vmatpush.msra.mxu0 %v4013
  %4266 = vmatpush.msra.mxu0 %v4009
  %4267 = vmatpush.msra.mxu0 %v4005
  %4268 = vmatmul.f32.gmra.mxu0 %v4000
  %v4269 = vpop.f32.mrf.mxu0
  %v4270 = vadd.f32 %v4190, %v4269
  %4271 = vdwg.mxu0
  %4272 = vmatpush.msra.mxu0 %v4066
  %4273 = vmatpush.msra.mxu0 %v4062
  %4274 = vmatpush.msra.mxu0 %v4058
  %4275 = vmatpush.msra.mxu0 %v4054
  %4276 = vmatpush.msra.mxu0 %v4050
  %4277 = vmatpush.msra.mxu0 %v4046
  %4278 = vmatpush.msra.mxu0 %v4042
  %4279 = vmatpush.msra.mxu0 %v4038
  %4280 = vmatpush.msra.mxu0 %v4034
  %4281 = vmatpush.msra.mxu0 %v4030
  %4282 = vmatpush.msra.mxu0 %v4026
  %4283 = vmatpush.msra.mxu0 %v4022
  %4284 = vmatpush.msra.mxu0 %v4018
  %4285 = vmatpush.msra.mxu0 %v4014
  %4286 = vmatpush.msra.mxu0 %v4010
  %4287 = vmatpush.msra.mxu0 %v4006
  %4288 = vmatmul.f32.gmra.mxu0 %v4000
  %v4289 = vpop.f32.mrf.mxu0
  %v4290 = vadd.f32 %v4210, %v4289
  %4291 = vdwg.mxu0
  %v4292 = vadd.f32 %v4230, %v287
  %v4293 = vadd.f32 %v4250, %v288
  %v4294 = vadd.f32 %v4270, %v289
  %v4295 = vadd.f32 %v4290, %v290
  %v4296 = vxor.u32 %v4292, 2147483648
  %v4297 = vmul.f32 %v4296, 1.442695
  %v4298 = vpow.pop %v4297
  %v4299 = vadd.f32 %v4298, 1.0
  %v4300 = vrcp.pop %v4299
  %v4301 = vmul.f32 %v4299, %v4300
  %v4302 = vsub.f32 1.0, %v4301
  %v4303 = vmul.f32 %v4300, %v4302
  %v4304 = vadd.f32 %v4300, %v4303
  %vm4305 = vweird.f32 %v4299
  %vm4306 = vweird.f32 %v4300
  %vm4307 = vmor %vm4305, %vm4306
  %v4308 = vsel %vm4307, %v4300, %v4304
  %v4309 = vand.u32 2147483647, %v4299
  %vm4310 = vcmp.eq.f32.partialorder %v4309, 8.507059e+37
  %v4311 = vand.u32 %v4299, 2147483648
  %v4312 = vor.u32 1.1754944e-38, %v4311
  %v4313 = vsel %vm4310, %v4312, %v4308
  %v4314 = vmul.f32 1.0, %v4313
  %v4315 = vxor.u32 %v4293, 2147483648
  %v4316 = vmul.f32 %v4315, 1.442695
  %v4317 = vpow.pop %v4316
  %v4318 = vadd.f32 %v4317, 1.0
  %v4319 = vrcp.pop %v4318
  %v4320 = vmul.f32 %v4318, %v4319
  %v4321 = vsub.f32 1.0, %v4320
  %v4322 = vmul.f32 %v4319, %v4321
  %v4323 = vadd.f32 %v4319, %v4322
  %vm4324 = vweird.f32 %v4318
  %vm4325 = vweird.f32 %v4319
  %vm4326 = vmor %vm4324, %vm4325
  %v4327 = vsel %vm4326, %v4319, %v4323
  %v4328 = vand.u32 2147483647, %v4318
  %vm4329 = vcmp.eq.f32.partialorder %v4328, 8.507059e+37
  %v4330 = vand.u32 %v4318, 2147483648
  %v4331 = vor.u32 1.1754944e-38, %v4330
  %v4332 = vsel %vm4329, %v4331, %v4327
  %v4333 = vmul.f32 1.0, %v4332
  %v4334 = vtanh.pop %v4294
  %v4335 = vxor.u32 %v4295, 2147483648
  %v4336 = vmul.f32 %v4335, 1.442695
  %v4337 = vpow.pop %v4336
  %v4338 = vadd.f32 %v4337, 1.0
  %v4339 = vrcp.pop %v4338
  %v4340 = vmul.f32 %v4338, %v4339
  %v4341 = vsub.f32 1.0, %v4340
  %v4342 = vmul.f32 %v4339, %v4341
  %v4343 = vadd.f32 %v4339, %v4342
  %vm4344 = vweird.f32 %v4338
  %vm4345 = vweird.f32 %v4339
  %vm4346 = vmor %vm4344, %vm4345
  %v4347 = vsel %vm4346, %v4339, %v4343
  %v4348 = vand.u32 2147483647, %v4338
  %vm4349 = vcmp.eq.f32.partialorder %v4348, 8.507059e+37
  %v4350 = vand.u32 %v4338, 2147483648
  %v4351 = vor.u32 1.1754944e-38, %v4350
  %v4352 = vsel %vm4349, %v4351, %v4347
  %v4353 = vmul.f32 1.0, %v4352
  %v4354 = vld [vmem:[#allocation6] sm:$0xff]
  %v4355 = vmul.f32 %v4333, %v4354
  %v4356 = vmul.f32 %v4314, %v4334
  %v4357 = vadd.f32 %v4355, %v4356
  %v4358 = vtanh.pop %v4357
  %v4359 = vmul.f32 %v4353, %v4358
  %4360 = vst [vmem:[#allocation6] sm:$0xff] %v4357
  %4361 = vst [vmem:[#allocation4] sm:$0xff] %v4359
  %s4362 = smul.u32 7, 4
  %s4363 = smul.addr %s4362, 8
  %s4364 = scalar_lea.vmem [#allocation2], %s4363
  %v4365 = vld [vmem:[%s4364] sm:$0xff]
  %v4366 = vld [vmem:[%s4364 + $0x8] sm:$0xff]
  %v4367 = vld [vmem:[%s4364 + $0x10] sm:$0xff]
  %v4368 = vld [vmem:[%s4364 + $0x18] sm:$0xff]
  %v4369 = vld [vmem:[#allocation3] sm:$0xff]
  %v4370 = vld [vmem:[%s2] sm:$0xff]
  %v4371 = vld [vmem:[%s2 + $0x8] sm:$0xff]
  %v4372 = vld [vmem:[%s2 + $0x10] sm:$0xff]
  %v4373 = vld [vmem:[%s2 + $0x18] sm:$0xff]
  %v4374 = vld [vmem:[%s2 + $0x20] sm:$0xff]
  %v4375 = vld [vmem:[%s2 + $0x28] sm:$0xff]
  %v4376 = vld [vmem:[%s2 + $0x30] sm:$0xff]
  %v4377 = vld [vmem:[%s2 + $0x38] sm:$0xff]
  %v4378 = vld [vmem:[%s2 + $0x40] sm:$0xff]
  %v4379 = vld [vmem:[%s2 + $0x48] sm:$0xff]
  %v4380 = vld [vmem:[%s2 + $0x50] sm:$0xff]
  %v4381 = vld [vmem:[%s2 + $0x58] sm:$0xff]
  %v4382 = vld [vmem:[%s2 + $0x60] sm:$0xff]
  %v4383 = vld [vmem:[%s2 + $0x68] sm:$0xff]
  %v4384 = vld [vmem:[%s2 + $0x70] sm:$0xff]
  %v4385 = vld [vmem:[%s2 + $0x78] sm:$0xff]
  %v4386 = vld [vmem:[%s2 + $0x80] sm:$0xff]
  %v4387 = vld [vmem:[%s2 + $0x88] sm:$0xff]
  %v4388 = vld [vmem:[%s2 + $0x90] sm:$0xff]
  %v4389 = vld [vmem:[%s2 + $0x98] sm:$0xff]
  %v4390 = vld [vmem:[%s2 + $0xa0] sm:$0xff]
  %v4391 = vld [vmem:[%s2 + $0xa8] sm:$0xff]
  %v4392 = vld [vmem:[%s2 + $0xb0] sm:$0xff]
  %v4393 = vld [vmem:[%s2 + $0xb8] sm:$0xff]
  %v4394 = vld [vmem:[%s2 + $0xc0] sm:$0xff]
  %v4395 = vld [vmem:[%s2 + $0xc8] sm:$0xff]
  %v4396 = vld [vmem:[%s2 + $0xd0] sm:$0xff]
  %v4397 = vld [vmem:[%s2 + $0xd8] sm:$0xff]
  %v4398 = vld [vmem:[%s2 + $0xe0] sm:$0xff]
  %v4399 = vld [vmem:[%s2 + $0xe8] sm:$0xff]
  %v4400 = vld [vmem:[%s2 + $0xf0] sm:$0xff]
  %v4401 = vld [vmem:[%s2 + $0xf8] sm:$0xff]
  %v4402 = vld [vmem:[%s2 + $0x100] sm:$0xff]
  %v4403 = vld [vmem:[%s2 + $0x108] sm:$0xff]
  %v4404 = vld [vmem:[%s2 + $0x110] sm:$0xff]
  %v4405 = vld [vmem:[%s2 + $0x118] sm:$0xff]
  %v4406 = vld [vmem:[%s2 + $0x120] sm:$0xff]
  %v4407 = vld [vmem:[%s2 + $0x128] sm:$0xff]
  %v4408 = vld [vmem:[%s2 + $0x130] sm:$0xff]
  %v4409 = vld [vmem:[%s2 + $0x138] sm:$0xff]
  %v4410 = vld [vmem:[%s2 + $0x140] sm:$0xff]
  %v4411 = vld [vmem:[%s2 + $0x148] sm:$0xff]
  %v4412 = vld [vmem:[%s2 + $0x150] sm:$0xff]
  %v4413 = vld [vmem:[%s2 + $0x158] sm:$0xff]
  %v4414 = vld [vmem:[%s2 + $0x160] sm:$0xff]
  %v4415 = vld [vmem:[%s2 + $0x168] sm:$0xff]
  %v4416 = vld [vmem:[%s2 + $0x170] sm:$0xff]
  %v4417 = vld [vmem:[%s2 + $0x178] sm:$0xff]
  %v4418 = vld [vmem:[%s2 + $0x180] sm:$0xff]
  %v4419 = vld [vmem:[%s2 + $0x188] sm:$0xff]
  %v4420 = vld [vmem:[%s2 + $0x190] sm:$0xff]
  %v4421 = vld [vmem:[%s2 + $0x198] sm:$0xff]
  %v4422 = vld [vmem:[%s2 + $0x1a0] sm:$0xff]
  %v4423 = vld [vmem:[%s2 + $0x1a8] sm:$0xff]
  %v4424 = vld [vmem:[%s2 + $0x1b0] sm:$0xff]
  %v4425 = vld [vmem:[%s2 + $0x1b8] sm:$0xff]
  %v4426 = vld [vmem:[%s2 + $0x1c0] sm:$0xff]
  %v4427 = vld [vmem:[%s2 + $0x1c8] sm:$0xff]
  %v4428 = vld [vmem:[%s2 + $0x1d0] sm:$0xff]
  %v4429 = vld [vmem:[%s2 + $0x1d8] sm:$0xff]
  %v4430 = vld [vmem:[%s2 + $0x1e0] sm:$0xff]
  %v4431 = vld [vmem:[%s2 + $0x1e8] sm:$0xff]
  %v4432 = vld [vmem:[%s2 + $0x1f0] sm:$0xff]
  %v4433 = vld [vmem:[%s2 + $0x1f8] sm:$0xff]
  %4434 = vmatpush.msra.mxu0 %v4430
  %4435 = vmatpush.msra.mxu0 %v4426
  %4436 = vmatpush.msra.mxu0 %v4422
  %4437 = vmatpush.msra.mxu0 %v4418
  %4438 = vmatpush.msra.mxu0 %v4414
  %4439 = vmatpush.msra.mxu0 %v4410
  %4440 = vmatpush.msra.mxu0 %v4406
  %4441 = vmatpush.msra.mxu0 %v4402
  %4442 = vmatpush.msra.mxu0 %v4398
  %4443 = vmatpush.msra.mxu0 %v4394
  %4444 = vmatpush.msra.mxu0 %v4390
  %4445 = vmatpush.msra.mxu0 %v4386
  %4446 = vmatpush.msra.mxu0 %v4382
  %4447 = vmatpush.msra.mxu0 %v4378
  %4448 = vmatpush.msra.mxu0 %v4374
  %4449 = vmatpush.msra.mxu0 %v4370
  %4450 = vmatmul.f32.gmra.mxu0 %v4369
  %v4451 = vpop.f32.mrf.mxu0
  %v4452 = vadd.f32 0.0, %v4451
  %4453 = vdwg.mxu0
  %4454 = vmatpush.msra.mxu0 %v4431
  %4455 = vmatpush.msra.mxu0 %v4427
  %4456 = vmatpush.msra.mxu0 %v4423
  %4457 = vmatpush.msra.mxu0 %v4419
  %4458 = vmatpush.msra.mxu0 %v4415
  %4459 = vmatpush.msra.mxu0 %v4411
  %4460 = vmatpush.msra.mxu0 %v4407
  %4461 = vmatpush.msra.mxu0 %v4403
  %4462 = vmatpush.msra.mxu0 %v4399
  %4463 = vmatpush.msra.mxu0 %v4395
  %4464 = vmatpush.msra.mxu0 %v4391
  %4465 = vmatpush.msra.mxu0 %v4387
  %4466 = vmatpush.msra.mxu0 %v4383
  %4467 = vmatpush.msra.mxu0 %v4379
  %4468 = vmatpush.msra.mxu0 %v4375
  %4469 = vmatpush.msra.mxu0 %v4371
  %4470 = vmatmul.f32.gmra.mxu0 %v4369
  %v4471 = vpop.f32.mrf.mxu0
  %v4472 = vadd.f32 0.0, %v4471
  %4473 = vdwg.mxu0
  %4474 = vmatpush.msra.mxu0 %v4432
  %4475 = vmatpush.msra.mxu0 %v4428
  %4476 = vmatpush.msra.mxu0 %v4424
  %4477 = vmatpush.msra.mxu0 %v4420
  %4478 = vmatpush.msra.mxu0 %v4416
  %4479 = vmatpush.msra.mxu0 %v4412
  %4480 = vmatpush.msra.mxu0 %v4408
  %4481 = vmatpush.msra.mxu0 %v4404
  %4482 = vmatpush.msra.mxu0 %v4400
  %4483 = vmatpush.msra.mxu0 %v4396
  %4484 = vmatpush.msra.mxu0 %v4392
  %4485 = vmatpush.msra.mxu0 %v4388
  %4486 = vmatpush.msra.mxu0 %v4384
  %4487 = vmatpush.msra.mxu0 %v4380
  %4488 = vmatpush.msra.mxu0 %v4376
  %4489 = vmatpush.msra.mxu0 %v4372
  %4490 = vmatmul.f32.gmra.mxu0 %v4369
  %v4491 = vpop.f32.mrf.mxu0
  %v4492 = vadd.f32 0.0, %v4491
  %4493 = vdwg.mxu0
  %4494 = vmatpush.msra.mxu0 %v4433
  %4495 = vmatpush.msra.mxu0 %v4429
  %4496 = vmatpush.msra.mxu0 %v4425
  %4497 = vmatpush.msra.mxu0 %v4421
  %4498 = vmatpush.msra.mxu0 %v4417
  %4499 = vmatpush.msra.mxu0 %v4413
  %4500 = vmatpush.msra.mxu0 %v4409
  %4501 = vmatpush.msra.mxu0 %v4405
  %4502 = vmatpush.msra.mxu0 %v4401
  %4503 = vmatpush.msra.mxu0 %v4397
  %4504 = vmatpush.msra.mxu0 %v4393
  %4505 = vmatpush.msra.mxu0 %v4389
  %4506 = vmatpush.msra.mxu0 %v4385
  %4507 = vmatpush.msra.mxu0 %v4381
  %4508 = vmatpush.msra.mxu0 %v4377
  %4509 = vmatpush.msra.mxu0 %v4373
  %4510 = vmatmul.f32.gmra.mxu0 %v4369
  %v4511 = vpop.f32.mrf.mxu0
  %v4512 = vadd.f32 0.0, %v4511
  %4513 = vdwg.mxu0
  %v4514 = vadd.f32 %v4365, %v4452
  %v4515 = vadd.f32 %v4366, %v4472
  %v4516 = vadd.f32 %v4367, %v4492
  %v4517 = vadd.f32 %v4368, %v4512
  %v4518 = vxor.u32 %v4514, 2147483648
  %v4519 = vmul.f32 %v4518, 1.442695
  %v4520 = vpow.pop %v4519
  %v4521 = vadd.f32 %v4520, 1.0
  %v4522 = vrcp.pop %v4521
  %v4523 = vmul.f32 %v4521, %v4522
  %v4524 = vsub.f32 1.0, %v4523
  %v4525 = vmul.f32 %v4522, %v4524
  %v4526 = vadd.f32 %v4522, %v4525
  %vm4527 = vweird.f32 %v4521
  %vm4528 = vweird.f32 %v4522
  %vm4529 = vmor %vm4527, %vm4528
  %v4530 = vsel %vm4529, %v4522, %v4526
  %v4531 = vand.u32 2147483647, %v4521
  %vm4532 = vcmp.eq.f32.partialorder %v4531, 8.507059e+37
  %v4533 = vand.u32 %v4521, 2147483648
  %v4534 = vor.u32 1.1754944e-38, %v4533
  %v4535 = vsel %vm4532, %v4534, %v4530
  %v4536 = vmul.f32 1.0, %v4535
  %v4537 = vxor.u32 %v4515, 2147483648
  %v4538 = vmul.f32 %v4537, 1.442695
  %v4539 = vpow.pop %v4538
  %v4540 = vadd.f32 %v4539, 1.0
  %v4541 = vrcp.pop %v4540
  %v4542 = vmul.f32 %v4540, %v4541
  %v4543 = vsub.f32 1.0, %v4542
  %v4544 = vmul.f32 %v4541, %v4543
  %v4545 = vadd.f32 %v4541, %v4544
  %vm4546 = vweird.f32 %v4540
  %vm4547 = vweird.f32 %v4541
  %vm4548 = vmor %vm4546, %vm4547
  %v4549 = vsel %vm4548, %v4541, %v4545
  %v4550 = vand.u32 2147483647, %v4540
  %vm4551 = vcmp.eq.f32.partialorder %v4550, 8.507059e+37
  %v4552 = vand.u32 %v4540, 2147483648
  %v4553 = vor.u32 1.1754944e-38, %v4552
  %v4554 = vsel %vm4551, %v4553, %v4549
  %v4555 = vmul.f32 1.0, %v4554
  %v4556 = vtanh.pop %v4516
  %v4557 = vxor.u32 %v4517, 2147483648
  %v4558 = vmul.f32 %v4557, 1.442695
  %v4559 = vpow.pop %v4558
  %v4560 = vadd.f32 %v4559, 1.0
  %v4561 = vrcp.pop %v4560
  %v4562 = vmul.f32 %v4560, %v4561
  %v4563 = vsub.f32 1.0, %v4562
  %v4564 = vmul.f32 %v4561, %v4563
  %v4565 = vadd.f32 %v4561, %v4564
  %vm4566 = vweird.f32 %v4560
  %vm4567 = vweird.f32 %v4561
  %vm4568 = vmor %vm4566, %vm4567
  %v4569 = vsel %vm4568, %v4561, %v4565
  %v4570 = vand.u32 2147483647, %v4560
  %vm4571 = vcmp.eq.f32.partialorder %v4570, 8.507059e+37
  %v4572 = vand.u32 %v4560, 2147483648
  %v4573 = vor.u32 1.1754944e-38, %v4572
  %v4574 = vsel %vm4571, %v4573, %v4569
  %v4575 = vmul.f32 1.0, %v4574
  %v4576 = vld [vmem:[#allocation5] sm:$0xff]
  %v4577 = vmul.f32 %v4555, %v4576
  %v4578 = vmul.f32 %v4536, %v4556
  %v4579 = vadd.f32 %v4577, %v4578
  %v4580 = vtanh.pop %v4579
  %v4581 = vmul.f32 %v4575, %v4580
  %4582 = vst [vmem:[#allocation5] sm:$0xff] %v4579
  %4583 = vst [vmem:[#allocation3] sm:$0xff] %v4581
  %v4584 = vld [vmem:[%s4] sm:$0xff]
  %v4585 = vld [vmem:[%s4 + $0x8] sm:$0xff]
  %v4586 = vld [vmem:[%s4 + $0x10] sm:$0xff]
  %v4587 = vld [vmem:[%s4 + $0x18] sm:$0xff]
  %v4588 = vld [vmem:[%s4 + $0x20] sm:$0xff]
  %v4589 = vld [vmem:[%s4 + $0x28] sm:$0xff]
  %v4590 = vld [vmem:[%s4 + $0x30] sm:$0xff]
  %v4591 = vld [vmem:[%s4 + $0x38] sm:$0xff]
  %v4592 = vld [vmem:[%s4 + $0x40] sm:$0xff]
  %v4593 = vld [vmem:[%s4 + $0x48] sm:$0xff]
  %v4594 = vld [vmem:[%s4 + $0x50] sm:$0xff]
  %v4595 = vld [vmem:[%s4 + $0x58] sm:$0xff]
  %v4596 = vld [vmem:[%s4 + $0x60] sm:$0xff]
  %v4597 = vld [vmem:[%s4 + $0x68] sm:$0xff]
  %v4598 = vld [vmem:[%s4 + $0x70] sm:$0xff]
  %v4599 = vld [vmem:[%s4 + $0x78] sm:$0xff]
  %v4600 = vld [vmem:[%s4 + $0x80] sm:$0xff]
  %v4601 = vld [vmem:[%s4 + $0x88] sm:$0xff]
  %v4602 = vld [vmem:[%s4 + $0x90] sm:$0xff]
  %v4603 = vld [vmem:[%s4 + $0x98] sm:$0xff]
  %v4604 = vld [vmem:[%s4 + $0xa0] sm:$0xff]
  %v4605 = vld [vmem:[%s4 + $0xa8] sm:$0xff]
  %v4606 = vld [vmem:[%s4 + $0xb0] sm:$0xff]
  %v4607 = vld [vmem:[%s4 + $0xb8] sm:$0xff]
  %v4608 = vld [vmem:[%s4 + $0xc0] sm:$0xff]
  %v4609 = vld [vmem:[%s4 + $0xc8] sm:$0xff]
  %v4610 = vld [vmem:[%s4 + $0xd0] sm:$0xff]
  %v4611 = vld [vmem:[%s4 + $0xd8] sm:$0xff]
  %v4612 = vld [vmem:[%s4 + $0xe0] sm:$0xff]
  %v4613 = vld [vmem:[%s4 + $0xe8] sm:$0xff]
  %v4614 = vld [vmem:[%s4 + $0xf0] sm:$0xff]
  %v4615 = vld [vmem:[%s4 + $0xf8] sm:$0xff]
  %v4616 = vld [vmem:[%s4 + $0x100] sm:$0xff]
  %v4617 = vld [vmem:[%s4 + $0x108] sm:$0xff]
  %v4618 = vld [vmem:[%s4 + $0x110] sm:$0xff]
  %v4619 = vld [vmem:[%s4 + $0x118] sm:$0xff]
  %v4620 = vld [vmem:[%s4 + $0x120] sm:$0xff]
  %v4621 = vld [vmem:[%s4 + $0x128] sm:$0xff]
  %v4622 = vld [vmem:[%s4 + $0x130] sm:$0xff]
  %v4623 = vld [vmem:[%s4 + $0x138] sm:$0xff]
  %v4624 = vld [vmem:[%s4 + $0x140] sm:$0xff]
  %v4625 = vld [vmem:[%s4 + $0x148] sm:$0xff]
  %v4626 = vld [vmem:[%s4 + $0x150] sm:$0xff]
  %v4627 = vld [vmem:[%s4 + $0x158] sm:$0xff]
  %v4628 = vld [vmem:[%s4 + $0x160] sm:$0xff]
  %v4629 = vld [vmem:[%s4 + $0x168] sm:$0xff]
  %v4630 = vld [vmem:[%s4 + $0x170] sm:$0xff]
  %v4631 = vld [vmem:[%s4 + $0x178] sm:$0xff]
  %v4632 = vld [vmem:[%s4 + $0x180] sm:$0xff]
  %v4633 = vld [vmem:[%s4 + $0x188] sm:$0xff]
  %v4634 = vld [vmem:[%s4 + $0x190] sm:$0xff]
  %v4635 = vld [vmem:[%s4 + $0x198] sm:$0xff]
  %v4636 = vld [vmem:[%s4 + $0x1a0] sm:$0xff]
  %v4637 = vld [vmem:[%s4 + $0x1a8] sm:$0xff]
  %v4638 = vld [vmem:[%s4 + $0x1b0] sm:$0xff]
  %v4639 = vld [vmem:[%s4 + $0x1b8] sm:$0xff]
  %v4640 = vld [vmem:[%s4 + $0x1c0] sm:$0xff]
  %v4641 = vld [vmem:[%s4 + $0x1c8] sm:$0xff]
  %v4642 = vld [vmem:[%s4 + $0x1d0] sm:$0xff]
  %v4643 = vld [vmem:[%s4 + $0x1d8] sm:$0xff]
  %v4644 = vld [vmem:[%s4 + $0x1e0] sm:$0xff]
  %v4645 = vld [vmem:[%s4 + $0x1e8] sm:$0xff]
  %v4646 = vld [vmem:[%s4 + $0x1f0] sm:$0xff]
  %v4647 = vld [vmem:[%s4 + $0x1f8] sm:$0xff]
  %v4648 = vld [vmem:[#allocation4] sm:$0xff]
  %v4649 = vld [vmem:[%s5] sm:$0xff]
  %v4650 = vld [vmem:[%s5 + $0x8] sm:$0xff]
  %v4651 = vld [vmem:[%s5 + $0x10] sm:$0xff]
  %v4652 = vld [vmem:[%s5 + $0x18] sm:$0xff]
  %v4653 = vld [vmem:[%s5 + $0x20] sm:$0xff]
  %v4654 = vld [vmem:[%s5 + $0x28] sm:$0xff]
  %v4655 = vld [vmem:[%s5 + $0x30] sm:$0xff]
  %v4656 = vld [vmem:[%s5 + $0x38] sm:$0xff]
  %v4657 = vld [vmem:[%s5 + $0x40] sm:$0xff]
  %v4658 = vld [vmem:[%s5 + $0x48] sm:$0xff]
  %v4659 = vld [vmem:[%s5 + $0x50] sm:$0xff]
  %v4660 = vld [vmem:[%s5 + $0x58] sm:$0xff]
  %v4661 = vld [vmem:[%s5 + $0x60] sm:$0xff]
  %v4662 = vld [vmem:[%s5 + $0x68] sm:$0xff]
  %v4663 = vld [vmem:[%s5 + $0x70] sm:$0xff]
  %v4664 = vld [vmem:[%s5 + $0x78] sm:$0xff]
  %v4665 = vld [vmem:[%s5 + $0x80] sm:$0xff]
  %v4666 = vld [vmem:[%s5 + $0x88] sm:$0xff]
  %v4667 = vld [vmem:[%s5 + $0x90] sm:$0xff]
  %v4668 = vld [vmem:[%s5 + $0x98] sm:$0xff]
  %v4669 = vld [vmem:[%s5 + $0xa0] sm:$0xff]
  %v4670 = vld [vmem:[%s5 + $0xa8] sm:$0xff]
  %v4671 = vld [vmem:[%s5 + $0xb0] sm:$0xff]
  %v4672 = vld [vmem:[%s5 + $0xb8] sm:$0xff]
  %v4673 = vld [vmem:[%s5 + $0xc0] sm:$0xff]
  %v4674 = vld [vmem:[%s5 + $0xc8] sm:$0xff]
  %v4675 = vld [vmem:[%s5 + $0xd0] sm:$0xff]
  %v4676 = vld [vmem:[%s5 + $0xd8] sm:$0xff]
  %v4677 = vld [vmem:[%s5 + $0xe0] sm:$0xff]
  %v4678 = vld [vmem:[%s5 + $0xe8] sm:$0xff]
  %v4679 = vld [vmem:[%s5 + $0xf0] sm:$0xff]
  %v4680 = vld [vmem:[%s5 + $0xf8] sm:$0xff]
  %v4681 = vld [vmem:[%s5 + $0x100] sm:$0xff]
  %v4682 = vld [vmem:[%s5 + $0x108] sm:$0xff]
  %v4683 = vld [vmem:[%s5 + $0x110] sm:$0xff]
  %v4684 = vld [vmem:[%s5 + $0x118] sm:$0xff]
  %v4685 = vld [vmem:[%s5 + $0x120] sm:$0xff]
  %v4686 = vld [vmem:[%s5 + $0x128] sm:$0xff]
  %v4687 = vld [vmem:[%s5 + $0x130] sm:$0xff]
  %v4688 = vld [vmem:[%s5 + $0x138] sm:$0xff]
  %v4689 = vld [vmem:[%s5 + $0x140] sm:$0xff]
  %v4690 = vld [vmem:[%s5 + $0x148] sm:$0xff]
  %v4691 = vld [vmem:[%s5 + $0x150] sm:$0xff]
  %v4692 = vld [vmem:[%s5 + $0x158] sm:$0xff]
  %v4693 = vld [vmem:[%s5 + $0x160] sm:$0xff]
  %v4694 = vld [vmem:[%s5 + $0x168] sm:$0xff]
  %v4695 = vld [vmem:[%s5 + $0x170] sm:$0xff]
  %v4696 = vld [vmem:[%s5 + $0x178] sm:$0xff]
  %v4697 = vld [vmem:[%s5 + $0x180] sm:$0xff]
  %v4698 = vld [vmem:[%s5 + $0x188] sm:$0xff]
  %v4699 = vld [vmem:[%s5 + $0x190] sm:$0xff]
  %v4700 = vld [vmem:[%s5 + $0x198] sm:$0xff]
  %v4701 = vld [vmem:[%s5 + $0x1a0] sm:$0xff]
  %v4702 = vld [vmem:[%s5 + $0x1a8] sm:$0xff]
  %v4703 = vld [vmem:[%s5 + $0x1b0] sm:$0xff]
  %v4704 = vld [vmem:[%s5 + $0x1b8] sm:$0xff]
  %v4705 = vld [vmem:[%s5 + $0x1c0] sm:$0xff]
  %v4706 = vld [vmem:[%s5 + $0x1c8] sm:$0xff]
  %v4707 = vld [vmem:[%s5 + $0x1d0] sm:$0xff]
  %v4708 = vld [vmem:[%s5 + $0x1d8] sm:$0xff]
  %v4709 = vld [vmem:[%s5 + $0x1e0] sm:$0xff]
  %v4710 = vld [vmem:[%s5 + $0x1e8] sm:$0xff]
  %v4711 = vld [vmem:[%s5 + $0x1f0] sm:$0xff]
  %v4712 = vld [vmem:[%s5 + $0x1f8] sm:$0xff]
  %4713 = vmatpush.msra.mxu0 %v4709
  %4714 = vmatpush.msra.mxu0 %v4705
  %4715 = vmatpush.msra.mxu0 %v4701
  %4716 = vmatpush.msra.mxu0 %v4697
  %4717 = vmatpush.msra.mxu0 %v4693
  %4718 = vmatpush.msra.mxu0 %v4689
  %4719 = vmatpush.msra.mxu0 %v4685
  %4720 = vmatpush.msra.mxu0 %v4681
  %4721 = vmatpush.msra.mxu0 %v4677
  %4722 = vmatpush.msra.mxu0 %v4673
  %4723 = vmatpush.msra.mxu0 %v4669
  %4724 = vmatpush.msra.mxu0 %v4665
  %4725 = vmatpush.msra.mxu0 %v4661
  %4726 = vmatpush.msra.mxu0 %v4657
  %4727 = vmatpush.msra.mxu0 %v4653
  %4728 = vmatpush.msra.mxu0 %v4649
  %4729 = vmatmul.f32.gmra.mxu0 %v4648
  %v4730 = vpop.f32.mrf.mxu0
  %v4731 = vadd.f32 0.0, %v4730
  %4732 = vdwg.mxu0
  %4733 = vmatpush.msra.mxu0 %v4710
  %4734 = vmatpush.msra.mxu0 %v4706
  %4735 = vmatpush.msra.mxu0 %v4702
  %4736 = vmatpush.msra.mxu0 %v4698
  %4737 = vmatpush.msra.mxu0 %v4694
  %4738 = vmatpush.msra.mxu0 %v4690
  %4739 = vmatpush.msra.mxu0 %v4686
  %4740 = vmatpush.msra.mxu0 %v4682
  %4741 = vmatpush.msra.mxu0 %v4678
  %4742 = vmatpush.msra.mxu0 %v4674
  %4743 = vmatpush.msra.mxu0 %v4670
  %4744 = vmatpush.msra.mxu0 %v4666
  %4745 = vmatpush.msra.mxu0 %v4662
  %4746 = vmatpush.msra.mxu0 %v4658
  %4747 = vmatpush.msra.mxu0 %v4654
  %4748 = vmatpush.msra.mxu0 %v4650
  %4749 = vmatmul.f32.gmra.mxu0 %v4648
  %v4750 = vpop.f32.mrf.mxu0
  %v4751 = vadd.f32 0.0, %v4750
  %4752 = vdwg.mxu0
  %4753 = vmatpush.msra.mxu0 %v4711
  %4754 = vmatpush.msra.mxu0 %v4707
  %4755 = vmatpush.msra.mxu0 %v4703
  %4756 = vmatpush.msra.mxu0 %v4699
  %4757 = vmatpush.msra.mxu0 %v4695
  %4758 = vmatpush.msra.mxu0 %v4691
  %4759 = vmatpush.msra.mxu0 %v4687
  %4760 = vmatpush.msra.mxu0 %v4683
  %4761 = vmatpush.msra.mxu0 %v4679
  %4762 = vmatpush.msra.mxu0 %v4675
  %4763 = vmatpush.msra.mxu0 %v4671
  %4764 = vmatpush.msra.mxu0 %v4667
  %4765 = vmatpush.msra.mxu0 %v4663
  %4766 = vmatpush.msra.mxu0 %v4659
  %4767 = vmatpush.msra.mxu0 %v4655
  %4768 = vmatpush.msra.mxu0 %v4651
  %4769 = vmatmul.f32.gmra.mxu0 %v4648
  %v4770 = vpop.f32.mrf.mxu0
  %v4771 = vadd.f32 0.0, %v4770
  %4772 = vdwg.mxu0
  %4773 = vmatpush.msra.mxu0 %v4712
  %4774 = vmatpush.msra.mxu0 %v4708
  %4775 = vmatpush.msra.mxu0 %v4704
  %4776 = vmatpush.msra.mxu0 %v4700
  %4777 = vmatpush.msra.mxu0 %v4696
  %4778 = vmatpush.msra.mxu0 %v4692
  %4779 = vmatpush.msra.mxu0 %v4688
  %4780 = vmatpush.msra.mxu0 %v4684
  %4781 = vmatpush.msra.mxu0 %v4680
  %4782 = vmatpush.msra.mxu0 %v4676
  %4783 = vmatpush.msra.mxu0 %v4672
  %4784 = vmatpush.msra.mxu0 %v4668
  %4785 = vmatpush.msra.mxu0 %v4664
  %4786 = vmatpush.msra.mxu0 %v4660
  %4787 = vmatpush.msra.mxu0 %v4656
  %4788 = vmatpush.msra.mxu0 %v4652
  %4789 = vmatmul.f32.gmra.mxu0 %v4648
  %v4790 = vpop.f32.mrf.mxu0
  %v4791 = vadd.f32 0.0, %v4790
  %4792 = vdwg.mxu0
  %4793 = vmatpush.msra.mxu0 %v4644
  %4794 = vmatpush.msra.mxu0 %v4640
  %4795 = vmatpush.msra.mxu0 %v4636
  %4796 = vmatpush.msra.mxu0 %v4632
  %4797 = vmatpush.msra.mxu0 %v4628
  %4798 = vmatpush.msra.mxu0 %v4624
  %4799 = vmatpush.msra.mxu0 %v4620
  %4800 = vmatpush.msra.mxu0 %v4616
  %4801 = vmatpush.msra.mxu0 %v4612
  %4802 = vmatpush.msra.mxu0 %v4608
  %4803 = vmatpush.msra.mxu0 %v4604
  %4804 = vmatpush.msra.mxu0 %v4600
  %4805 = vmatpush.msra.mxu0 %v4596
  %4806 = vmatpush.msra.mxu0 %v4592
  %4807 = vmatpush.msra.mxu0 %v4588
  %4808 = vmatpush.msra.mxu0 %v4584
  %4809 = vmatmul.f32.gmra.mxu0 %v4581
  %v4810 = vpop.f32.mrf.mxu0
  %v4811 = vadd.f32 %v4731, %v4810
  %4812 = vdwg.mxu0
  %4813 = vmatpush.msra.mxu0 %v4645
  %4814 = vmatpush.msra.mxu0 %v4641
  %4815 = vmatpush.msra.mxu0 %v4637
  %4816 = vmatpush.msra.mxu0 %v4633
  %4817 = vmatpush.msra.mxu0 %v4629
  %4818 = vmatpush.msra.mxu0 %v4625
  %4819 = vmatpush.msra.mxu0 %v4621
  %4820 = vmatpush.msra.mxu0 %v4617
  %4821 = vmatpush.msra.mxu0 %v4613
  %4822 = vmatpush.msra.mxu0 %v4609
  %4823 = vmatpush.msra.mxu0 %v4605
  %4824 = vmatpush.msra.mxu0 %v4601
  %4825 = vmatpush.msra.mxu0 %v4597
  %4826 = vmatpush.msra.mxu0 %v4593
  %4827 = vmatpush.msra.mxu0 %v4589
  %4828 = vmatpush.msra.mxu0 %v4585
  %4829 = vmatmul.f32.gmra.mxu0 %v4581
  %v4830 = vpop.f32.mrf.mxu0
  %v4831 = vadd.f32 %v4751, %v4830
  %4832 = vdwg.mxu0
  %4833 = vmatpush.msra.mxu0 %v4646
  %4834 = vmatpush.msra.mxu0 %v4642
  %4835 = vmatpush.msra.mxu0 %v4638
  %4836 = vmatpush.msra.mxu0 %v4634
  %4837 = vmatpush.msra.mxu0 %v4630
  %4838 = vmatpush.msra.mxu0 %v4626
  %4839 = vmatpush.msra.mxu0 %v4622
  %4840 = vmatpush.msra.mxu0 %v4618
  %4841 = vmatpush.msra.mxu0 %v4614
  %4842 = vmatpush.msra.mxu0 %v4610
  %4843 = vmatpush.msra.mxu0 %v4606
  %4844 = vmatpush.msra.mxu0 %v4602
  %4845 = vmatpush.msra.mxu0 %v4598
  %4846 = vmatpush.msra.mxu0 %v4594
  %4847 = vmatpush.msra.mxu0 %v4590
  %4848 = vmatpush.msra.mxu0 %v4586
  %4849 = vmatmul.f32.gmra.mxu0 %v4581
  %v4850 = vpop.f32.mrf.mxu0
  %v4851 = vadd.f32 %v4771, %v4850
  %4852 = vdwg.mxu0
  %4853 = vmatpush.msra.mxu0 %v4647
  %4854 = vmatpush.msra.mxu0 %v4643
  %4855 = vmatpush.msra.mxu0 %v4639
  %4856 = vmatpush.msra.mxu0 %v4635
  %4857 = vmatpush.msra.mxu0 %v4631
  %4858 = vmatpush.msra.mxu0 %v4627
  %4859 = vmatpush.msra.mxu0 %v4623
  %4860 = vmatpush.msra.mxu0 %v4619
  %4861 = vmatpush.msra.mxu0 %v4615
  %4862 = vmatpush.msra.mxu0 %v4611
  %4863 = vmatpush.msra.mxu0 %v4607
  %4864 = vmatpush.msra.mxu0 %v4603
  %4865 = vmatpush.msra.mxu0 %v4599
  %4866 = vmatpush.msra.mxu0 %v4595
  %4867 = vmatpush.msra.mxu0 %v4591
  %4868 = vmatpush.msra.mxu0 %v4587
  %4869 = vmatmul.f32.gmra.mxu0 %v4581
  %v4870 = vpop.f32.mrf.mxu0
  %v4871 = vadd.f32 %v4791, %v4870
  %4872 = vdwg.mxu0
  %v4873 = vadd.f32 %v4811, %v287
  %v4874 = vadd.f32 %v4831, %v288
  %v4875 = vadd.f32 %v4851, %v289
  %v4876 = vadd.f32 %v4871, %v290
  %v4877 = vxor.u32 %v4873, 2147483648
  %v4878 = vmul.f32 %v4877, 1.442695
  %v4879 = vpow.pop %v4878
  %v4880 = vadd.f32 %v4879, 1.0
  %v4881 = vrcp.pop %v4880
  %v4882 = vmul.f32 %v4880, %v4881
  %v4883 = vsub.f32 1.0, %v4882
  %v4884 = vmul.f32 %v4881, %v4883
  %v4885 = vadd.f32 %v4881, %v4884
  %vm4886 = vweird.f32 %v4880
  %vm4887 = vweird.f32 %v4881
  %vm4888 = vmor %vm4886, %vm4887
  %v4889 = vsel %vm4888, %v4881, %v4885
  %v4890 = vand.u32 2147483647, %v4880
  %vm4891 = vcmp.eq.f32.partialorder %v4890, 8.507059e+37
  %v4892 = vand.u32 %v4880, 2147483648
  %v4893 = vor.u32 1.1754944e-38, %v4892
  %v4894 = vsel %vm4891, %v4893, %v4889
  %v4895 = vmul.f32 1.0, %v4894
  %v4896 = vxor.u32 %v4874, 2147483648
  %v4897 = vmul.f32 %v4896, 1.442695
  %v4898 = vpow.pop %v4897
  %v4899 = vadd.f32 %v4898, 1.0
  %v4900 = vrcp.pop %v4899
  %v4901 = vmul.f32 %v4899, %v4900
  %v4902 = vsub.f32 1.0, %v4901
  %v4903 = vmul.f32 %v4900, %v4902
  %v4904 = vadd.f32 %v4900, %v4903
  %vm4905 = vweird.f32 %v4899
  %vm4906 = vweird.f32 %v4900
  %vm4907 = vmor %vm4905, %vm4906
  %v4908 = vsel %vm4907, %v4900, %v4904
  %v4909 = vand.u32 2147483647, %v4899
  %vm4910 = vcmp.eq.f32.partialorder %v4909, 8.507059e+37
  %v4911 = vand.u32 %v4899, 2147483648
  %v4912 = vor.u32 1.1754944e-38, %v4911
  %v4913 = vsel %vm4910, %v4912, %v4908
  %v4914 = vmul.f32 1.0, %v4913
  %v4915 = vtanh.pop %v4875
  %v4916 = vxor.u32 %v4876, 2147483648
  %v4917 = vmul.f32 %v4916, 1.442695
  %v4918 = vpow.pop %v4917
  %v4919 = vadd.f32 %v4918, 1.0
  %v4920 = vrcp.pop %v4919
  %v4921 = vmul.f32 %v4919, %v4920
  %v4922 = vsub.f32 1.0, %v4921
  %v4923 = vmul.f32 %v4920, %v4922
  %v4924 = vadd.f32 %v4920, %v4923
  %vm4925 = vweird.f32 %v4919
  %vm4926 = vweird.f32 %v4920
  %vm4927 = vmor %vm4925, %vm4926
  %v4928 = vsel %vm4927, %v4920, %v4924
  %v4929 = vand.u32 2147483647, %v4919
  %vm4930 = vcmp.eq.f32.partialorder %v4929, 8.507059e+37
  %v4931 = vand.u32 %v4919, 2147483648
  %v4932 = vor.u32 1.1754944e-38, %v4931
  %v4933 = vsel %vm4930, %v4932, %v4928
  %v4934 = vmul.f32 1.0, %v4933
  %v4935 = vld [vmem:[#allocation6] sm:$0xff]
  %v4936 = vmul.f32 %v4914, %v4935
  %v4937 = vmul.f32 %v4895, %v4915
  %v4938 = vadd.f32 %v4936, %v4937
  %v4939 = vtanh.pop %v4938
  %v4940 = vmul.f32 %v4934, %v4939
  %4941 = vst [vmem:[#allocation6] sm:$0xff] %v4938
  %4942 = vst [vmem:[#allocation4] sm:$0xff] %v4940
  %v4943 = vld [vmem:[#allocation4] sm:$0xff]
  %v4944 = vld [vmem:[%s7] sm:$0x1]
  %v4946 = vperm.slane %v4944, 0
  %v4948 = vmul.f32 %v4943, %v4946
  %4949 = vadd.xlane.f32.xlu0 %v4948
  %v4950 = vpop.xlane.xlu0 %4949
  %v4951 = vld [vmem:[#allocation7] sm:$0x1]
  %v4953 = vperm.slane %v4951, 0
  %v4955 = vadd.f32 %v4950, %v4953
  %vm4956 = vcmask 7168
  %4957 = vst.msk [vmem:[%s9] sm:$0xff] %vm4956, %v4955
  // Predicated region
  $region38: #{stock_lstm_forward.1} parent=0 // pred_check
    _
  $region39: #{stock_lstm_forward.1} parent=0 // pred_check_branch
    %4959 = sbr.rel (0) target = $region41
  $region40: #{stock_lstm_forward.1} parent=0 // pred_region
    _
  $region41: #{stock_lstm_forward.1} parent=0 // pred_fallthru
    _
  // Predicated region
  $region42: #{stock_lstm_forward.1} parent=0 // pred_check
    _
  $region43: #{stock_lstm_forward.1} parent=0 // pred_check_branch
    %4961 = sbr.rel (0) target = $region45
  $region44: #{stock_lstm_forward.1} parent=0 // pred_region
    _
  $region45: #{stock_lstm_forward.1} parent=0 // pred_fallthru
    _

</llo_original>
